<compile_context>
chip_gen: v7x
topology: tpu7x:2x2x1
jax: 0.10.0
libtpu: 0.0.40
codegen_flags: <defaults>
</compile_context>

<pallas_src>
import jax
import jax.numpy as jnp
from jax.experimental import pallas as pl
from jax.experimental.pallas import tpu as pltpu

BN_EPS = 1e-5
LN_EPS = 1e-5


# ----------------------------------------------------------------------------
# Fused kernel: one grid step == one batch element, everything in VMEM.
# ----------------------------------------------------------------------------
def _fused_kernel(x_ref,
                  kg_ref, bg_ref,
                  wq_ref, bq_ref, wk_ref, bk_ref, wv_ref, bv_ref,
                  wo_ref, bo_ref, ln1g_ref, ln1b_ref,
                  w1_ref, b1_ref, w2_ref, b2_ref, ln2g_ref, ln2b_ref,
                  s2_ref, beta2_ref, poolw_ref, mask_ref, beta1_ref,
                  fcw_ref, fcb_ref,
                  o_ref):
    f32 = jnp.float32
    bf16 = jnp.bfloat16

    def mm(a, w_ref_):
        # bf16 inputs on the MXU, f32 accumulation.
        return jnp.dot(a.astype(bf16), w_ref_[...], preferred_element_type=f32)

    def ln(h, gamma, beta):
        mu = jnp.mean(h, axis=-1, keepdims=True)
        var = jnp.mean((h - mu) ** 2, axis=-1, keepdims=True)
        return (h - mu) * jax.lax.rsqrt(var + LN_EPS) * gamma + beta

    x = x_ref[0]                                               # (T, D) f32

    # --- spatial GCN: ReLU(BN(A_hat @ X @ W + b)); BN folded, kron form ---
    g = jnp.maximum(mm(x, kg_ref) + bg_ref[...], 0.0)          # (T, D)

    # --- temporal transformer (single-head, post-norm encoder layer) ---
    # 1/sqrt(d_model) already folded into wq/bq at prep time.
    q = mm(g, wq_ref) + bq_ref[...]
    k = mm(g, wk_ref) + bk_ref[...]
    v = mm(g, wv_ref) + bv_ref[...]
    s = jnp.dot(q, k.T, preferred_element_type=f32)            # (T, T)
    s = s - jnp.max(s, axis=-1, keepdims=True)
    e = jnp.exp(s)
    p = e * pl.reciprocal(jnp.sum(e, axis=-1, keepdims=True), approx=True)
    a = jnp.dot(p, v, preferred_element_type=f32)              # (T, D)
    a = mm(a, wo_ref) + bo_ref[...]
    h1 = ln(g + a, ln1g_ref[...], ln1b_ref[...])
    ffn = jnp.maximum(mm(h1, w1_ref) + b1_ref[...], 0.0)
    ffn = mm(ffn, w2_ref) + b2_ref[...]
    t_out = ln(h1 + ffn, ln2g_ref[...], ln2b_ref[...])         # (T, D)

    # --- head: residual + BN2d(eval) + ReLU + pool(N->1)+flatten + BN1d + FC
    r = jnp.maximum((x + t_out) * s2_ref[...] + beta2_ref[...], 0.0)  # (T, D)
    s_pool = mm(r, poolw_ref)                                   # (T, T*C)
    flat = jnp.sum(s_pool * mask_ref[...], axis=0, keepdims=True)     # (1, T*C)
    flat = jnp.maximum(flat + beta1_ref[...], 0.0)               # BN1d folded
    logits = mm(flat, fcw_ref) + fcb_ref[...]                   # (1, NCLS)
    o_ref[0] = logits


# ----------------------------------------------------------------------------
# One-time parameter prep (plain JAX, outside the kernel): constant folding of
# eval-mode BatchNorms, kron-folded GCN, lane-dense pooling matrix, attention
# scale fold, bf16 cast.
# ----------------------------------------------------------------------------
def prepare_params(p, a_hat, *, N, C, T):
    D = N * C
    bf16 = jnp.bfloat16
    f32 = jnp.float32
    inv = 1.0 / jnp.sqrt(1.0 + BN_EPS)          # eval BN: running_var = 1

    # GCN: fold BN affine into W / b, then kron with A_hat so that
    # A_hat @ X @ W  ==  X_flat @ K_gcn  with X_flat = reshape(X, (T, N*C)).
    s_gcn = p["gcn_bng"] * inv                                   # (C,)
    w_eff = p["gcn_w"] * s_gcn[None, :]                          # (C, C)
    k_gcn = jnp.einsum("nm,ij->minj", a_hat, w_eff).reshape(D, D)
    b_gcn = jnp.tile(p["gcn_b"] * s_gcn + p["gcn_bnb"], N).reshape(1, D)

    # Attention scale folded into W_q / b_q (single-head, d_head == D).
    att_scale = 1.0 / (float(D) ** 0.5)

    # BatchNorm2d (eval) affine, tiled per-node in the flattened layout.
    s2 = jnp.tile(p["bn2d_g"] * inv, N).reshape(1, D)
    beta2 = jnp.tile(p["bn2d_b"], N).reshape(1, D)

    # Node pooling Linear(N -> 1) + flatten(1,-1) as a lane-dense matmul:
    #   pool_big[n*C + c', t*C + c] = pool_w[n] * (c' == c)
    #   pool_mask[t, t'*C + c]      = (t == t')
    # BatchNorm1d (eval) scale is folded into the pool_big columns.
    pool_block = jnp.einsum("n,ij->nij", p["pool_w"],
                            jnp.eye(C, dtype=f32)).reshape(D, C)
    s1 = (p["bn1d_g"] * inv).reshape(1, T * C)
    pool_big = jnp.tile(pool_block, (1, T)) * s1                 # (D, T*C)
    pool_mask = jnp.repeat(jnp.eye(T, dtype=f32), C, axis=1)     # (T, T*C)
    beta1 = p["pool_b"][0] * s1 + p["bn1d_b"].reshape(1, T * C)

    ncls = p["fc_w"].shape[1]
    return dict(
        k_gcn=k_gcn.astype(bf16), b_gcn=b_gcn,
        wq=(p["t_wq"] * att_scale).astype(bf16),
        bq=(p["t_bq"] * att_scale).reshape(1, D),
        wk=p["t_wk"].astype(bf16), bk=p["t_bk"].reshape(1, D),
        wv=p["t_wv"].astype(bf16), bv=p["t_bv"].reshape(1, D),
        wo=p["t_wo"].astype(bf16), bo=p["t_bo"].reshape(1, D),
        ln1g=p["t_ln1g"].reshape(1, D), ln1b=p["t_ln1b"].reshape(1, D),
        w1=p["t_w1"].astype(bf16), b1=p["t_b1"].reshape(1, -1),
        w2=p["t_w2"].astype(bf16), b2=p["t_b2"].reshape(1, D),
        ln2g=p["t_ln2g"].reshape(1, D), ln2b=p["t_ln2b"].reshape(1, D),
        s2=s2, beta2=beta2,
        pool_big=pool_big.astype(bf16), pool_mask=pool_mask, beta1=beta1,
        fc_w=p["fc_w"].astype(bf16), fc_b=p["fc_b"].reshape(1, ncls),
    )


# ----------------------------------------------------------------------------
# Full forward: one pallas_call, grid over batch ("parallel" for v7x 2 TCs).
# ----------------------------------------------------------------------------
def joints_gnn_trans_forward(features, a_hat, params):
    B, T, N, C = features.shape
    D = N * C
    TC = T * C
    kp = prepare_params(params, a_hat, N=N, C=C, T=T)
    Ff = kp["w1"].shape[1]
    NCLS = kp["fc_w"].shape[1]

    x_flat = features.reshape(B, T, D)

    def full(shape):
        n = len(shape)
        return pl.BlockSpec(shape, lambda b, n=n: (0,) * n)

    in_specs = [
        pl.BlockSpec((1, T, D), lambda b: (b, 0, 0)),   # features (flattened)
        full((D, D)), full((1, D)),                     # k_gcn, b_gcn
        full((D, D)), full((1, D)),                     # wq, bq
        full((D, D)), full((1, D)),                     # wk, bk
        full((D, D)), full((1, D)),                     # wv, bv
        full((D, D)), full((1, D)),                     # wo, bo
        full((1, D)), full((1, D)),                     # ln1 gamma, beta
        full((D, Ff)), full((1, Ff)),                   # w1, b1
        full((Ff, D)), full((1, D)),                    # w2, b2
        full((1, D)), full((1, D)),                     # ln2 gamma, beta
        full((1, D)), full((1, D)),                     # bn2d scale, beta
        full((D, TC)), full((T, TC)), full((1, TC)),    # pool_big, mask, beta1
        full((TC, NCLS)), full((1, NCLS)),              # fc_w, fc_b
    ]

    out = pl.pallas_call(
        _fused_kernel,
        out_shape=jax.ShapeDtypeStruct((B, 1, NCLS), jnp.float32),
        grid=(B,),
        in_specs=in_specs,
        out_specs=pl.BlockSpec((1, 1, NCLS), lambda b: (b, 0, 0)),
        compiler_params=pltpu.CompilerParams(
            dimension_semantics=("parallel",)),
    )(x_flat,
      kp["k_gcn"], kp["b_gcn"],
      kp["wq"], kp["bq"], kp["wk"], kp["bk"], kp["wv"], kp["bv"],
      kp["wo"], kp["bo"], kp["ln1g"], kp["ln1b"],
      kp["w1"], kp["b1"], kp["w2"], kp["b2"], kp["ln2g"], kp["ln2b"],
      kp["s2"], kp["beta2"], kp["pool_big"], kp["pool_mask"], kp["beta1"],
      kp["fc_w"], kp["fc_b"])
    return out.reshape(B, NCLS)


# ----------------------------------------------------------------------------
# Deterministic parameter construction + example run
# ----------------------------------------------------------------------------
def make_params(key, N, C, T, D, F, num_classes):
    ks = iter(jax.random.split(key, 32))
    nrm = lambda shape, s=0.1: s * jax.random.normal(next(ks), shape, jnp.float32)
    ones = lambda shape: jnp.ones(shape, jnp.float32)
    zeros = lambda shape: jnp.zeros(shape, jnp.float32)
    return dict(
        gcn_w=nrm((C, C)), gcn_b=zeros((C,)),
        gcn_bng=ones((C,)), gcn_bnb=zeros((C,)),
        t_wq=nrm((D, D)), t_bq=zeros((D,)),
        t_wk=nrm((D, D)), t_bk=zeros((D,)),
        t_wv=nrm((D, D)), t_bv=zeros((D,)),
        t_wo=nrm((D, D)), t_bo=zeros((D,)),
        t_ln1g=ones((D,)), t_ln1b=zeros((D,)),
        t_w1=nrm((D, F)), t_b1=zeros((F,)),
        t_w2=nrm((F, D)), t_b2=zeros((D,)),
        t_ln2g=ones((D,)), t_ln2b=zeros((D,)),
        bn2d_g=ones((C,)), bn2d_b=zeros((C,)),
        pool_w=nrm((N,), 0.2), pool_b=zeros((1,)),
        bn1d_g=ones((T * C,)), bn1d_b=zeros((T * C,)),
        fc_w=nrm((T * C, num_classes)), fc_b=zeros((num_classes,)),
    )


if __name__ == "__main__":
    B, T, N, C = 2, 8, 25, 16          # batch, time, num_nodes, hidden_size
    NUM_CLASSES = 10
    D = N * C                          # transformer hidden = num_nodes * hidden
    F = D                              # filter_size = num_nodes * hidden

    key = jax.random.PRNGKey(0)
    k_feat, k_adj, k_par = jax.random.split(key, 3)

    features = jax.random.normal(k_feat, (B, T, N, C), jnp.float32)

    # adjacency + symmetric normalization with self-loops (glue, plain JAX)
    A = jax.random.uniform(k_adj, (N, N), jnp.float32)
    A = (A + A.T) * 0.5
    A = A + jnp.eye(N, dtype=jnp.float32)
    deg = jnp.sum(A, axis=-1)
    d_inv_sqrt = 1.0 / jnp.sqrt(deg)
    a_hat = A * d_inv_sqrt[:, None] * d_inv_sqrt[None, :]

    params = make_params(k_par, N, C, T, D, F, NUM_CLASSES)

    logits = joints_gnn_trans_forward(features, a_hat, params)
    logits = jax.block_until_ready(logits)

    assert logits.shape == (B, NUM_CLASSES)
    assert bool(jnp.all(jnp.isfinite(logits)))
    print("KERNEL_OK")
</pallas_src>

<mosaic_0001>
module attributes {stable_mosaic.version = 11 : i64} {
  func.func @_fused_kernel(%arg0: i32, %arg1: memref<1x8x400xf32, #tpu.memory_space<vmem>>, %arg2: memref<400x400xbf16, #tpu.memory_space<vmem>>, %arg3: memref<1x400xf32, #tpu.memory_space<vmem>>, %arg4: memref<400x400xbf16, #tpu.memory_space<vmem>>, %arg5: memref<1x400xf32, #tpu.memory_space<vmem>>, %arg6: memref<400x400xbf16, #tpu.memory_space<vmem>>, %arg7: memref<1x400xf32, #tpu.memory_space<vmem>>, %arg8: memref<400x400xbf16, #tpu.memory_space<vmem>>, %arg9: memref<1x400xf32, #tpu.memory_space<vmem>>, %arg10: memref<400x400xbf16, #tpu.memory_space<vmem>>, %arg11: memref<1x400xf32, #tpu.memory_space<vmem>>, %arg12: memref<1x400xf32, #tpu.memory_space<vmem>>, %arg13: memref<1x400xf32, #tpu.memory_space<vmem>>, %arg14: memref<400x400xbf16, #tpu.memory_space<vmem>>, %arg15: memref<1x400xf32, #tpu.memory_space<vmem>>, %arg16: memref<400x400xbf16, #tpu.memory_space<vmem>>, %arg17: memref<1x400xf32, #tpu.memory_space<vmem>>, %arg18: memref<1x400xf32, #tpu.memory_space<vmem>>, %arg19: memref<1x400xf32, #tpu.memory_space<vmem>>, %arg20: memref<1x400xf32, #tpu.memory_space<vmem>>, %arg21: memref<1x400xf32, #tpu.memory_space<vmem>>, %arg22: memref<400x128xbf16, #tpu.memory_space<vmem>>, %arg23: memref<8x128xf32, #tpu.memory_space<vmem>>, %arg24: memref<1x128xf32, #tpu.memory_space<vmem>>, %arg25: memref<128x10xbf16, #tpu.memory_space<vmem>>, %arg26: memref<1x10xf32, #tpu.memory_space<vmem>>, %arg27: memref<1x1x10xf32, #tpu.memory_space<vmem>>) attributes {dimension_semantics = [#tpu.dimension_semantics<parallel>], iteration_bounds = array<i64: 2>, scalar_prefetch = 0 : i64, scratch_operands = 0 : i64, tpu.core_type = #tpu.core_type<tc>, window_params = [{transform_indices = @transform_0, window_bounds = array<i64: 1, 8, 400>}, {pipeline_mode = #tpu.pipeline_mode<synchronous>, transform_indices = @transform_1, window_bounds = array<i64: 400, 400>}, {pipeline_mode = #tpu.pipeline_mode<synchronous>, transform_indices = @transform_2, window_bounds = array<i64: 1, 400>}, {pipeline_mode = #tpu.pipeline_mode<synchronous>, transform_indices = @transform_3, window_bounds = array<i64: 400, 400>}, {pipeline_mode = #tpu.pipeline_mode<synchronous>, transform_indices = @transform_4, window_bounds = array<i64: 1, 400>}, {pipeline_mode = #tpu.pipeline_mode<synchronous>, transform_indices = @transform_5, window_bounds = array<i64: 400, 400>}, {pipeline_mode = #tpu.pipeline_mode<synchronous>, transform_indices = @transform_6, window_bounds = array<i64: 1, 400>}, {pipeline_mode = #tpu.pipeline_mode<synchronous>, transform_indices = @transform_7, window_bounds = array<i64: 400, 400>}, {pipeline_mode = #tpu.pipeline_mode<synchronous>, transform_indices = @transform_8, window_bounds = array<i64: 1, 400>}, {pipeline_mode = #tpu.pipeline_mode<synchronous>, transform_indices = @transform_9, window_bounds = array<i64: 400, 400>}, {pipeline_mode = #tpu.pipeline_mode<synchronous>, transform_indices = @transform_10, window_bounds = array<i64: 1, 400>}, {pipeline_mode = #tpu.pipeline_mode<synchronous>, transform_indices = @transform_11, window_bounds = array<i64: 1, 400>}, {pipeline_mode = #tpu.pipeline_mode<synchronous>, transform_indices = @transform_12, window_bounds = array<i64: 1, 400>}, {pipeline_mode = #tpu.pipeline_mode<synchronous>, transform_indices = @transform_13, window_bounds = array<i64: 400, 400>}, {pipeline_mode = #tpu.pipeline_mode<synchronous>, transform_indices = @transform_14, window_bounds = array<i64: 1, 400>}, {pipeline_mode = #tpu.pipeline_mode<synchronous>, transform_indices = @transform_15, window_bounds = array<i64: 400, 400>}, {pipeline_mode = #tpu.pipeline_mode<synchronous>, transform_indices = @transform_16, window_bounds = array<i64: 1, 400>}, {pipeline_mode = #tpu.pipeline_mode<synchronous>, transform_indices = @transform_17, window_bounds = array<i64: 1, 400>}, {pipeline_mode = #tpu.pipeline_mode<synchronous>, transform_indices = @transform_18, window_bounds = array<i64: 1, 400>}, {pipeline_mode = #tpu.pipeline_mode<synchronous>, transform_indices = @transform_19, window_bounds = array<i64: 1, 400>}, {pipeline_mode = #tpu.pipeline_mode<synchronous>, transform_indices = @transform_20, window_bounds = array<i64: 1, 400>}, {pipeline_mode = #tpu.pipeline_mode<synchronous>, transform_indices = @transform_21, window_bounds = array<i64: 400, 128>}, {pipeline_mode = #tpu.pipeline_mode<synchronous>, transform_indices = @transform_22, window_bounds = array<i64: 8, 128>}, {pipeline_mode = #tpu.pipeline_mode<synchronous>, transform_indices = @transform_23, window_bounds = array<i64: 1, 128>}, {pipeline_mode = #tpu.pipeline_mode<synchronous>, transform_indices = @transform_24, window_bounds = array<i64: 128, 10>}, {pipeline_mode = #tpu.pipeline_mode<synchronous>, transform_indices = @transform_25, window_bounds = array<i64: 1, 10>}, {transform_indices = @transform_26, window_bounds = array<i64: 1, 1, 10>}]} {
    %c0 = arith.constant 0 : index
    %c0_0 = arith.constant 0 : index
    %c0_1 = arith.constant 0 : index
    %0 = vector.load %arg1[%c0, %c0_0, %c0_1] : memref<1x8x400xf32, #tpu.memory_space<vmem>>, vector<1x8x400xf32>
    %1 = vector.shape_cast %0 : vector<1x8x400xf32> to vector<8x400xf32>
    %2 = arith.truncf %1 : vector<8x400xf32> to vector<8x400xbf16>
    %c0_2 = arith.constant 0 : index
    %c0_3 = arith.constant 0 : index
    %3 = vector.load %arg2[%c0_2, %c0_3] : memref<400x400xbf16, #tpu.memory_space<vmem>>, vector<400x400xbf16>
    %cst = arith.constant dense<0.000000e+00> : vector<8x400xf32>
    %4 = tpu.matmul %2, %3, %cst {dimension_numbers = #tpu.dot_dimension_numbers<[1], [0], [0], [1], [0, 0, 1, 1], [], []>} : vector<8x400xbf16>, vector<400x400xbf16>, vector<8x400xf32> -> vector<8x400xf32>
    %c0_4 = arith.constant 0 : index
    %c0_5 = arith.constant 0 : index
    %5 = vector.load %arg3[%c0_4, %c0_5] : memref<1x400xf32, #tpu.memory_space<vmem>>, vector<1x400xf32>
    %6 = vector.broadcast %5 : vector<1x400xf32> to vector<8x400xf32>
    %7 = arith.addf %4, %6 : vector<8x400xf32>
    %cst_6 = arith.constant 0.000000e+00 : f32
    %8 = vector.broadcast %cst_6 : f32 to vector<8x400xf32>
    %9 = arith.maximumf %7, %8 : vector<8x400xf32>
    %10 = arith.truncf %9 : vector<8x400xf32> to vector<8x400xbf16>
    %c0_7 = arith.constant 0 : index
    %c0_8 = arith.constant 0 : index
    %11 = vector.load %arg4[%c0_7, %c0_8] : memref<400x400xbf16, #tpu.memory_space<vmem>>, vector<400x400xbf16>
    %cst_9 = arith.constant dense<0.000000e+00> : vector<8x400xf32>
    %12 = tpu.matmul %10, %11, %cst_9 {dimension_numbers = #tpu.dot_dimension_numbers<[1], [0], [0], [1], [0, 0, 1, 1], [], []>} : vector<8x400xbf16>, vector<400x400xbf16>, vector<8x400xf32> -> vector<8x400xf32>
    %c0_10 = arith.constant 0 : index
    %c0_11 = arith.constant 0 : index
    %13 = vector.load %arg5[%c0_10, %c0_11] : memref<1x400xf32, #tpu.memory_space<vmem>>, vector<1x400xf32>
    %14 = vector.broadcast %13 : vector<1x400xf32> to vector<8x400xf32>
    %15 = arith.addf %12, %14 : vector<8x400xf32>
    %16 = arith.truncf %9 : vector<8x400xf32> to vector<8x400xbf16>
    %c0_12 = arith.constant 0 : index
    %c0_13 = arith.constant 0 : index
    %17 = vector.load %arg6[%c0_12, %c0_13] : memref<400x400xbf16, #tpu.memory_space<vmem>>, vector<400x400xbf16>
    %cst_14 = arith.constant dense<0.000000e+00> : vector<8x400xf32>
    %18 = tpu.matmul %16, %17, %cst_14 {dimension_numbers = #tpu.dot_dimension_numbers<[1], [0], [0], [1], [0, 0, 1, 1], [], []>} : vector<8x400xbf16>, vector<400x400xbf16>, vector<8x400xf32> -> vector<8x400xf32>
    %c0_15 = arith.constant 0 : index
    %c0_16 = arith.constant 0 : index
    %19 = vector.load %arg7[%c0_15, %c0_16] : memref<1x400xf32, #tpu.memory_space<vmem>>, vector<1x400xf32>
    %20 = vector.broadcast %19 : vector<1x400xf32> to vector<8x400xf32>
    %21 = arith.addf %18, %20 : vector<8x400xf32>
    %22 = arith.truncf %9 : vector<8x400xf32> to vector<8x400xbf16>
    %c0_17 = arith.constant 0 : index
    %c0_18 = arith.constant 0 : index
    %23 = vector.load %arg8[%c0_17, %c0_18] : memref<400x400xbf16, #tpu.memory_space<vmem>>, vector<400x400xbf16>
    %cst_19 = arith.constant dense<0.000000e+00> : vector<8x400xf32>
    %24 = tpu.matmul %22, %23, %cst_19 {dimension_numbers = #tpu.dot_dimension_numbers<[1], [0], [0], [1], [0, 0, 1, 1], [], []>} : vector<8x400xbf16>, vector<400x400xbf16>, vector<8x400xf32> -> vector<8x400xf32>
    %c0_20 = arith.constant 0 : index
    %c0_21 = arith.constant 0 : index
    %25 = vector.load %arg9[%c0_20, %c0_21] : memref<1x400xf32, #tpu.memory_space<vmem>>, vector<1x400xf32>
    %26 = vector.broadcast %25 : vector<1x400xf32> to vector<8x400xf32>
    %27 = arith.addf %24, %26 : vector<8x400xf32>
    %28 = tpu.transpose %21, [1, 0] : vector<8x400xf32> -> vector<400x8xf32>
    %cst_22 = arith.constant dense<0.000000e+00> : vector<8x8xf32>
    %29 = tpu.matmul %15, %28, %cst_22 {dimension_numbers = #tpu.dot_dimension_numbers<[1], [0], [0], [1], [0, 0, 1, 1], [], []>} : vector<8x400xf32>, vector<400x8xf32>, vector<8x8xf32> -> vector<8x8xf32>
    %cst_23 = arith.constant dense<0xFF800000> : vector<8xf32>
    %30 = vector.multi_reduction <maximumf>, %29, %cst_23 [1] : vector<8x8xf32> to vector<8xf32>
    %31 = vector.shape_cast %30 : vector<8xf32> to vector<8x1xf32>
    %32 = vector.broadcast %31 : vector<8x1xf32> to vector<8x8xf32>
    %33 = arith.subf %29, %32 : vector<8x8xf32>
    %34 = math.exp %33 : vector<8x8xf32>
    %cst_24 = arith.constant dense<0.000000e+00> : vector<8xf32>
    %35 = vector.multi_reduction <add>, %34, %cst_24 [1] : vector<8x8xf32> to vector<8xf32>
    %36 = vector.shape_cast %35 : vector<8xf32> to vector<8x1xf32>
    %37 = tpu.reciprocal %36 {approx = true} : vector<8x1xf32> -> vector<8x1xf32>
    %38 = vector.broadcast %37 : vector<8x1xf32> to vector<8x8xf32>
    %39 = arith.mulf %34, %38 : vector<8x8xf32>
    %cst_25 = arith.constant dense<0.000000e+00> : vector<8x400xf32>
    %40 = tpu.matmul %39, %27, %cst_25 {dimension_numbers = #tpu.dot_dimension_numbers<[1], [0], [0], [1], [0, 0, 1, 1], [], []>} : vector<8x8xf32>, vector<8x400xf32>, vector<8x400xf32> -> vector<8x400xf32>
    %41 = arith.truncf %40 : vector<8x400xf32> to vector<8x400xbf16>
    %c0_26 = arith.constant 0 : index
    %c0_27 = arith.constant 0 : index
    %42 = vector.load %arg10[%c0_26, %c0_27] : memref<400x400xbf16, #tpu.memory_space<vmem>>, vector<400x400xbf16>
    %cst_28 = arith.constant dense<0.000000e+00> : vector<8x400xf32>
    %43 = tpu.matmul %41, %42, %cst_28 {dimension_numbers = #tpu.dot_dimension_numbers<[1], [0], [0], [1], [0, 0, 1, 1], [], []>} : vector<8x400xbf16>, vector<400x400xbf16>, vector<8x400xf32> -> vector<8x400xf32>
    %c0_29 = arith.constant 0 : index
    %c0_30 = arith.constant 0 : index
    %44 = vector.load %arg11[%c0_29, %c0_30] : memref<1x400xf32, #tpu.memory_space<vmem>>, vector<1x400xf32>
    %45 = vector.broadcast %44 : vector<1x400xf32> to vector<8x400xf32>
    %46 = arith.addf %43, %45 : vector<8x400xf32>
    %47 = arith.addf %9, %46 : vector<8x400xf32>
    %c0_31 = arith.constant 0 : index
    %c0_32 = arith.constant 0 : index
    %48 = vector.load %arg12[%c0_31, %c0_32] : memref<1x400xf32, #tpu.memory_space<vmem>>, vector<1x400xf32>
    %c0_33 = arith.constant 0 : index
    %c0_34 = arith.constant 0 : index
    %49 = vector.load %arg13[%c0_33, %c0_34] : memref<1x400xf32, #tpu.memory_space<vmem>>, vector<1x400xf32>
    %cst_35 = arith.constant dense<0.000000e+00> : vector<8xf32>
    %50 = vector.multi_reduction <add>, %47, %cst_35 [1] : vector<8x400xf32> to vector<8xf32>
    %51 = vector.shape_cast %50 : vector<8xf32> to vector<8x1xf32>
    %cst_36 = arith.constant 4.000000e+02 : f32
    %52 = vector.broadcast %cst_36 : f32 to vector<8x1xf32>
    %53 = arith.divf %51, %52 : vector<8x1xf32>
    %54 = vector.broadcast %53 : vector<8x1xf32> to vector<8x400xf32>
    %55 = arith.subf %47, %54 : vector<8x400xf32>
    %56 = arith.mulf %55, %55 : vector<8x400xf32>
    %cst_37 = arith.constant dense<0.000000e+00> : vector<8xf32>
    %57 = vector.multi_reduction <add>, %56, %cst_37 [1] : vector<8x400xf32> to vector<8xf32>
    %58 = vector.shape_cast %57 : vector<8xf32> to vector<8x1xf32>
    %cst_38 = arith.constant 4.000000e+02 : f32
    %59 = vector.broadcast %cst_38 : f32 to vector<8x1xf32>
    %60 = arith.divf %58, %59 : vector<8x1xf32>
    %61 = vector.broadcast %53 : vector<8x1xf32> to vector<8x400xf32>
    %62 = arith.subf %47, %61 : vector<8x400xf32>
    %cst_39 = arith.constant 9.99999974E-6 : f32
    %63 = vector.broadcast %cst_39 : f32 to vector<8x1xf32>
    %64 = arith.addf %60, %63 : vector<8x1xf32>
    %65 = math.rsqrt %64 : vector<8x1xf32>
    %66 = vector.broadcast %65 : vector<8x1xf32> to vector<8x400xf32>
    %67 = arith.mulf %62, %66 : vector<8x400xf32>
    %68 = vector.broadcast %48 : vector<1x400xf32> to vector<8x400xf32>
    %69 = arith.mulf %67, %68 : vector<8x400xf32>
    %70 = vector.broadcast %49 : vector<1x400xf32> to vector<8x400xf32>
    %71 = arith.addf %69, %70 : vector<8x400xf32>
    %72 = arith.truncf %71 : vector<8x400xf32> to vector<8x400xbf16>
    %c0_40 = arith.constant 0 : index
    %c0_41 = arith.constant 0 : index
    %73 = vector.load %arg14[%c0_40, %c0_41] : memref<400x400xbf16, #tpu.memory_space<vmem>>, vector<400x400xbf16>
    %cst_42 = arith.constant dense<0.000000e+00> : vector<8x400xf32>
    %74 = tpu.matmul %72, %73, %cst_42 {dimension_numbers = #tpu.dot_dimension_numbers<[1], [0], [0], [1], [0, 0, 1, 1], [], []>} : vector<8x400xbf16>, vector<400x400xbf16>, vector<8x400xf32> -> vector<8x400xf32>
    %c0_43 = arith.constant 0 : index
    %c0_44 = arith.constant 0 : index
    %75 = vector.load %arg15[%c0_43, %c0_44] : memref<1x400xf32, #tpu.memory_space<vmem>>, vector<1x400xf32>
    %76 = vector.broadcast %75 : vector<1x400xf32> to vector<8x400xf32>
    %77 = arith.addf %74, %76 : vector<8x400xf32>
    %cst_45 = arith.constant 0.000000e+00 : f32
    %78 = vector.broadcast %cst_45 : f32 to vector<8x400xf32>
    %79 = arith.maximumf %77, %78 : vector<8x400xf32>
    %80 = arith.truncf %79 : vector<8x400xf32> to vector<8x400xbf16>
    %c0_46 = arith.constant 0 : index
    %c0_47 = arith.constant 0 : index
    %81 = vector.load %arg16[%c0_46, %c0_47] : memref<400x400xbf16, #tpu.memory_space<vmem>>, vector<400x400xbf16>
    %cst_48 = arith.constant dense<0.000000e+00> : vector<8x400xf32>
    %82 = tpu.matmul %80, %81, %cst_48 {dimension_numbers = #tpu.dot_dimension_numbers<[1], [0], [0], [1], [0, 0, 1, 1], [], []>} : vector<8x400xbf16>, vector<400x400xbf16>, vector<8x400xf32> -> vector<8x400xf32>
    %c0_49 = arith.constant 0 : index
    %c0_50 = arith.constant 0 : index
    %83 = vector.load %arg17[%c0_49, %c0_50] : memref<1x400xf32, #tpu.memory_space<vmem>>, vector<1x400xf32>
    %84 = vector.broadcast %83 : vector<1x400xf32> to vector<8x400xf32>
    %85 = arith.addf %82, %84 : vector<8x400xf32>
    %86 = arith.addf %71, %85 : vector<8x400xf32>
    %c0_51 = arith.constant 0 : index
    %c0_52 = arith.constant 0 : index
    %87 = vector.load %arg18[%c0_51, %c0_52] : memref<1x400xf32, #tpu.memory_space<vmem>>, vector<1x400xf32>
    %c0_53 = arith.constant 0 : index
    %c0_54 = arith.constant 0 : index
    %88 = vector.load %arg19[%c0_53, %c0_54] : memref<1x400xf32, #tpu.memory_space<vmem>>, vector<1x400xf32>
    %cst_55 = arith.constant dense<0.000000e+00> : vector<8xf32>
    %89 = vector.multi_reduction <add>, %86, %cst_55 [1] : vector<8x400xf32> to vector<8xf32>
    %90 = vector.shape_cast %89 : vector<8xf32> to vector<8x1xf32>
    %cst_56 = arith.constant 4.000000e+02 : f32
    %91 = vector.broadcast %cst_56 : f32 to vector<8x1xf32>
    %92 = arith.divf %90, %91 : vector<8x1xf32>
    %93 = vector.broadcast %92 : vector<8x1xf32> to vector<8x400xf32>
    %94 = arith.subf %86, %93 : vector<8x400xf32>
    %95 = arith.mulf %94, %94 : vector<8x400xf32>
    %cst_57 = arith.constant dense<0.000000e+00> : vector<8xf32>
    %96 = vector.multi_reduction <add>, %95, %cst_57 [1] : vector<8x400xf32> to vector<8xf32>
    %97 = vector.shape_cast %96 : vector<8xf32> to vector<8x1xf32>
    %cst_58 = arith.constant 4.000000e+02 : f32
    %98 = vector.broadcast %cst_58 : f32 to vector<8x1xf32>
    %99 = arith.divf %97, %98 : vector<8x1xf32>
    %100 = vector.broadcast %92 : vector<8x1xf32> to vector<8x400xf32>
    %101 = arith.subf %86, %100 : vector<8x400xf32>
    %cst_59 = arith.constant 9.99999974E-6 : f32
    %102 = vector.broadcast %cst_59 : f32 to vector<8x1xf32>
    %103 = arith.addf %99, %102 : vector<8x1xf32>
    %104 = math.rsqrt %103 : vector<8x1xf32>
    %105 = vector.broadcast %104 : vector<8x1xf32> to vector<8x400xf32>
    %106 = arith.mulf %101, %105 : vector<8x400xf32>
    %107 = vector.broadcast %87 : vector<1x400xf32> to vector<8x400xf32>
    %108 = arith.mulf %106, %107 : vector<8x400xf32>
    %109 = vector.broadcast %88 : vector<1x400xf32> to vector<8x400xf32>
    %110 = arith.addf %108, %109 : vector<8x400xf32>
    %111 = arith.addf %1, %110 : vector<8x400xf32>
    %c0_60 = arith.constant 0 : index
    %c0_61 = arith.constant 0 : index
    %112 = vector.load %arg20[%c0_60, %c0_61] : memref<1x400xf32, #tpu.memory_space<vmem>>, vector<1x400xf32>
    %113 = vector.broadcast %112 : vector<1x400xf32> to vector<8x400xf32>
    %114 = arith.mulf %111, %113 : vector<8x400xf32>
    %c0_62 = arith.constant 0 : index
    %c0_63 = arith.constant 0 : index
    %115 = vector.load %arg21[%c0_62, %c0_63] : memref<1x400xf32, #tpu.memory_space<vmem>>, vector<1x400xf32>
    %116 = vector.broadcast %115 : vector<1x400xf32> to vector<8x400xf32>
    %117 = arith.addf %114, %116 : vector<8x400xf32>
    %cst_64 = arith.constant 0.000000e+00 : f32
    %118 = vector.broadcast %cst_64 : f32 to vector<8x400xf32>
    %119 = arith.maximumf %117, %118 : vector<8x400xf32>
    %120 = arith.truncf %119 : vector<8x400xf32> to vector<8x400xbf16>
    %c0_65 = arith.constant 0 : index
    %c0_66 = arith.constant 0 : index
    %121 = vector.load %arg22[%c0_65, %c0_66] : memref<400x128xbf16, #tpu.memory_space<vmem>>, vector<400x128xbf16>
    %cst_67 = arith.constant dense<0.000000e+00> : vector<8x128xf32>
    %122 = tpu.matmul %120, %121, %cst_67 {dimension_numbers = #tpu.dot_dimension_numbers<[1], [0], [0], [1], [0, 0, 1, 1], [], []>} : vector<8x400xbf16>, vector<400x128xbf16>, vector<8x128xf32> -> vector<8x128xf32>
    %c0_68 = arith.constant 0 : index
    %c0_69 = arith.constant 0 : index
    %123 = vector.load %arg23[%c0_68, %c0_69] : memref<8x128xf32, #tpu.memory_space<vmem>>, vector<8x128xf32>
    %124 = arith.mulf %122, %123 : vector<8x128xf32>
    %cst_70 = arith.constant dense<0.000000e+00> : vector<128xf32>
    %125 = vector.multi_reduction <add>, %124, %cst_70 [0] : vector<8x128xf32> to vector<128xf32>
    %126 = vector.shape_cast %125 : vector<128xf32> to vector<1x128xf32>
    %c0_71 = arith.constant 0 : index
    %c0_72 = arith.constant 0 : index
    %127 = vector.load %arg24[%c0_71, %c0_72] : memref<1x128xf32, #tpu.memory_space<vmem>>, vector<1x128xf32>
    %128 = arith.addf %126, %127 : vector<1x128xf32>
    %cst_73 = arith.constant 0.000000e+00 : f32
    %129 = vector.broadcast %cst_73 : f32 to vector<1x128xf32>
    %130 = arith.maximumf %128, %129 : vector<1x128xf32>
    %131 = arith.truncf %130 : vector<1x128xf32> to vector<1x128xbf16>
    %c0_74 = arith.constant 0 : index
    %c0_75 = arith.constant 0 : index
    %132 = vector.load %arg25[%c0_74, %c0_75] : memref<128x10xbf16, #tpu.memory_space<vmem>>, vector<128x10xbf16>
    %cst_76 = arith.constant dense<0.000000e+00> : vector<1x10xf32>
    %133 = tpu.matmul %131, %132, %cst_76 {dimension_numbers = #tpu.dot_dimension_numbers<[1], [0], [0], [1], [0, 0, 1, 1], [], []>} : vector<1x128xbf16>, vector<128x10xbf16>, vector<1x10xf32> -> vector<1x10xf32>
    %c0_77 = arith.constant 0 : index
    %c0_78 = arith.constant 0 : index
    %134 = vector.load %arg26[%c0_77, %c0_78] : memref<1x10xf32, #tpu.memory_space<vmem>>, vector<1x10xf32>
    %135 = arith.addf %133, %134 : vector<1x10xf32>
    %c0_79 = arith.constant 0 : index
    %c0_80 = arith.constant 0 : index
    %c0_81 = arith.constant 0 : index
    %136 = vector.load %arg27[%c0_79, %c0_80, %c0_81] : memref<1x1x10xf32, #tpu.memory_space<vmem>>, vector<1x1x10xf32>
    %137 = vector.shape_cast %136 : vector<1x1x10xf32> to vector<1x10xf32>
    %138 = vector.shape_cast %135 : vector<1x10xf32> to vector<1x1x10xf32>
    tpu.vector_store %arg27[%c0_79, %c0_80, %c0_81], %138 {strides = array<i32>} : memref<1x1x10xf32, #tpu.memory_space<vmem>>, vector<1x1x10xf32>,
    return
  }
  func.func @transform_0(%arg0: i32) -> (i32, i32, i32) {
    %c0_i32 = arith.constant 0 : i32
    %c0_i32_0 = arith.constant 0 : i32
    %c0_i32_1 = arith.constant 0 : i32
    return %arg0, %c0_i32, %c0_i32_0 : i32, i32, i32
  }
  func.func @transform_1(%arg0: i32) -> (i32, i32) {
    %c0_i32 = arith.constant 0 : i32
    %c0_i32_0 = arith.constant 0 : i32
    %c0_i32_1 = arith.constant 0 : i32
    return %c0_i32, %c0_i32_0 : i32, i32
  }
  func.func @transform_2(%arg0: i32) -> (i32, i32) {
    %c0_i32 = arith.constant 0 : i32
    %c0_i32_0 = arith.constant 0 : i32
    %c0_i32_1 = arith.constant 0 : i32
    return %c0_i32, %c0_i32_0 : i32, i32
  }
  func.func @transform_3(%arg0: i32) -> (i32, i32) {
    %c0_i32 = arith.constant 0 : i32
    %c0_i32_0 = arith.constant 0 : i32
    %c0_i32_1 = arith.constant 0 : i32
    return %c0_i32, %c0_i32_0 : i32, i32
  }
  func.func @transform_4(%arg0: i32) -> (i32, i32) {
    %c0_i32 = arith.constant 0 : i32
    %c0_i32_0 = arith.constant 0 : i32
    %c0_i32_1 = arith.constant 0 : i32
    return %c0_i32, %c0_i32_0 : i32, i32
  }
  func.func @transform_5(%arg0: i32) -> (i32, i32) {
    %c0_i32 = arith.constant 0 : i32
    %c0_i32_0 = arith.constant 0 : i32
    %c0_i32_1 = arith.constant 0 : i32
    return %c0_i32, %c0_i32_0 : i32, i32
  }
  func.func @transform_6(%arg0: i32) -> (i32, i32) {
    %c0_i32 = arith.constant 0 : i32
    %c0_i32_0 = arith.constant 0 : i32
    %c0_i32_1 = arith.constant 0 : i32
    return %c0_i32, %c0_i32_0 : i32, i32
  }
  func.func @transform_7(%arg0: i32) -> (i32, i32) {
    %c0_i32 = arith.constant 0 : i32
    %c0_i32_0 = arith.constant 0 : i32
    %c0_i32_1 = arith.constant 0 : i32
    return %c0_i32, %c0_i32_0 : i32, i32
  }
  func.func @transform_8(%arg0: i32) -> (i32, i32) {
    %c0_i32 = arith.constant 0 : i32
    %c0_i32_0 = arith.constant 0 : i32
    %c0_i32_1 = arith.constant 0 : i32
    return %c0_i32, %c0_i32_0 : i32, i32
  }
  func.func @transform_9(%arg0: i32) -> (i32, i32) {
    %c0_i32 = arith.constant 0 : i32
    %c0_i32_0 = arith.constant 0 : i32
    %c0_i32_1 = arith.constant 0 : i32
    return %c0_i32, %c0_i32_0 : i32, i32
  }
  func.func @transform_10(%arg0: i32) -> (i32, i32) {
    %c0_i32 = arith.constant 0 : i32
    %c0_i32_0 = arith.constant 0 : i32
    %c0_i32_1 = arith.constant 0 : i32
    return %c0_i32, %c0_i32_0 : i32, i32
  }
  func.func @transform_11(%arg0: i32) -> (i32, i32) {
    %c0_i32 = arith.constant 0 : i32
    %c0_i32_0 = arith.constant 0 : i32
    %c0_i32_1 = arith.constant 0 : i32
    return %c0_i32, %c0_i32_0 : i32, i32
  }
  func.func @transform_12(%arg0: i32) -> (i32, i32) {
    %c0_i32 = arith.constant 0 : i32
    %c0_i32_0 = arith.constant 0 : i32
    %c0_i32_1 = arith.constant 0 : i32
    return %c0_i32, %c0_i32_0 : i32, i32
  }
  func.func @transform_13(%arg0: i32) -> (i32, i32) {
    %c0_i32 = arith.constant 0 : i32
    %c0_i32_0 = arith.constant 0 : i32
    %c0_i32_1 = arith.constant 0 : i32
    return %c0_i32, %c0_i32_0 : i32, i32
  }
  func.func @transform_14(%arg0: i32) -> (i32, i32) {
    %c0_i32 = arith.constant 0 : i32
    %c0_i32_0 = arith.constant 0 : i32
    %c0_i32_1 = arith.constant 0 : i32
    return %c0_i32, %c0_i32_0 : i32, i32
  }
  func.func @transform_15(%arg0: i32) -> (i32, i32) {
    %c0_i32 = arith.constant 0 : i32
    %c0_i32_0 = arith.constant 0 : i32
    %c0_i32_1 = arith.constant 0 : i32
    return %c0_i32, %c0_i32_0 : i32, i32
  }
  func.func @transform_16(%arg0: i32) -> (i32, i32) {
    %c0_i32 = arith.constant 0 : i32
    %c0_i32_0 = arith.constant 0 : i32
    %c0_i32_1 = arith.constant 0 : i32
    return %c0_i32, %c0_i32_0 : i32, i32
  }
  func.func @transform_17(%arg0: i32) -> (i32, i32) {
    %c0_i32 = arith.constant 0 : i32
    %c0_i32_0 = arith.constant 0 : i32
    %c0_i32_1 = arith.constant 0 : i32
    return %c0_i32, %c0_i32_0 : i32, i32
  }
  func.func @transform_18(%arg0: i32) -> (i32, i32) {
    %c0_i32 = arith.constant 0 : i32
    %c0_i32_0 = arith.constant 0 : i32
    %c0_i32_1 = arith.constant 0 : i32
    return %c0_i32, %c0_i32_0 : i32, i32
  }
  func.func @transform_19(%arg0: i32) -> (i32, i32) {
    %c0_i32 = arith.constant 0 : i32
    %c0_i32_0 = arith.constant 0 : i32
    %c0_i32_1 = arith.constant 0 : i32
    return %c0_i32, %c0_i32_0 : i32, i32
  }
  func.func @transform_20(%arg0: i32) -> (i32, i32) {
    %c0_i32 = arith.constant 0 : i32
    %c0_i32_0 = arith.constant 0 : i32
    %c0_i32_1 = arith.constant 0 : i32
    return %c0_i32, %c0_i32_0 : i32, i32
  }
  func.func @transform_21(%arg0: i32) -> (i32, i32) {
    %c0_i32 = arith.constant 0 : i32
    %c0_i32_0 = arith.constant 0 : i32
    %c0_i32_1 = arith.constant 0 : i32
    return %c0_i32, %c0_i32_0 : i32, i32
  }
  func.func @transform_22(%arg0: i32) -> (i32, i32) {
    %c0_i32 = arith.constant 0 : i32
    %c0_i32_0 = arith.constant 0 : i32
    %c0_i32_1 = arith.constant 0 : i32
    return %c0_i32, %c0_i32_0 : i32, i32
  }
  func.func @transform_23(%arg0: i32) -> (i32, i32) {
    %c0_i32 = arith.constant 0 : i32
    %c0_i32_0 = arith.constant 0 : i32
    %c0_i32_1 = arith.constant 0 : i32
    return %c0_i32, %c0_i32_0 : i32, i32
  }
  func.func @transform_24(%arg0: i32) -> (i32, i32) {
    %c0_i32 = arith.constant 0 : i32
    %c0_i32_0 = arith.constant 0 : i32
    %c0_i32_1 = arith.constant 0 : i32
    return %c0_i32, %c0_i32_0 : i32, i32
  }
  func.func @transform_25(%arg0: i32) -> (i32, i32) {
    %c0_i32 = arith.constant 0 : i32
    %c0_i32_0 = arith.constant 0 : i32
    %c0_i32_1 = arith.constant 0 : i32
    return %c0_i32, %c0_i32_0 : i32, i32
  }
  func.func @transform_26(%arg0: i32) -> (i32, i32, i32) {
    %c0_i32 = arith.constant 0 : i32
    %c0_i32_0 = arith.constant 0 : i32
    %c0_i32_1 = arith.constant 0 : i32
    return %arg0, %c0_i32, %c0_i32_0 : i32, i32, i32
  }
}

</mosaic_0001>

<llo_original>
// kernel: tpu_custom_call.1
$region0: #{tpu_custom_call.1}
  #allocation0 [shape = 'u32[]', space=smem, size = 0x4, offset = 0x4, fixed_abs, tag = 'smem constant byte address 0x4 - core index']
  #allocation1 [shape = 'u32[144,128]{1,0:T(1,128)}', space=vmem, size = 0x12000, scoped, tag = 'internal scratch']
  %s0 = inlined_call_operand.vmem [shape: f32[2,8,400], index: 0, kind: input, shape index: {}]
  %s1 = inlined_call_operand.hbm [shape: bf16[400,400], index: 1, kind: input, shape index: {}]
  %s2 = inlined_call_operand.vmem [shape: f32[1,400], index: 2, kind: input, shape index: {}]
  %s3 = inlined_call_operand.hbm [shape: bf16[400,400], index: 3, kind: input, shape index: {}]
  %s4 = inlined_call_operand.hbm [shape: f32[1,400], index: 4, kind: input, shape index: {}]
  %s5 = inlined_call_operand.hbm [shape: bf16[400,400], index: 5, kind: input, shape index: {}]
  %s6 = inlined_call_operand.vmem [shape: f32[1,400], index: 6, kind: input, shape index: {}]
  %s7 = inlined_call_operand.hbm [shape: bf16[400,400], index: 7, kind: input, shape index: {}]
  %s8 = inlined_call_operand.vmem [shape: f32[1,400], index: 8, kind: input, shape index: {}]
  %s9 = inlined_call_operand.hbm [shape: bf16[400,400], index: 9, kind: input, shape index: {}]
  %s10 = inlined_call_operand.vmem [shape: f32[1,400], index: 10, kind: input, shape index: {}]
  %s11 = inlined_call_operand.vmem [shape: f32[1,400], index: 11, kind: input, shape index: {}]
  %s12 = inlined_call_operand.vmem [shape: f32[1,400], index: 12, kind: input, shape index: {}]
  %s13 = inlined_call_operand.hbm [shape: bf16[400,400], index: 13, kind: input, shape index: {}]
  %s14 = inlined_call_operand.vmem [shape: f32[1,400], index: 14, kind: input, shape index: {}]
  %s15 = inlined_call_operand.hbm [shape: bf16[400,400], index: 15, kind: input, shape index: {}]
  %s16 = inlined_call_operand.vmem [shape: f32[1,400], index: 16, kind: input, shape index: {}]
  %s17 = inlined_call_operand.vmem [shape: f32[1,400], index: 17, kind: input, shape index: {}]
  %s18 = inlined_call_operand.vmem [shape: f32[1,400], index: 18, kind: input, shape index: {}]
  %s19 = inlined_call_operand.vmem [shape: f32[1,400], index: 19, kind: input, shape index: {}]
  %s20 = inlined_call_operand.vmem [shape: f32[1,400], index: 20, kind: input, shape index: {}]
  %s21 = inlined_call_operand.hbm [shape: bf16[400,128], index: 21, kind: input, shape index: {}]
  %s22 = inlined_call_operand.vmem [shape: f32[8,128], index: 22, kind: input, shape index: {}]
  %s23 = inlined_call_operand.vmem [shape: f32[1,128], index: 23, kind: input, shape index: {}]
  %s24 = inlined_call_operand.vmem [shape: bf16[128,10], index: 24, kind: input, shape index: {}]
  %s25 = inlined_call_operand.vmem [shape: f32[1,10], index: 25, kind: input, shape index: {}]
  %s26 = inlined_call_operand.hbm [shape: f32[2,1,10], index: 26, kind: output, shape index: {}]
  %s27 = sld [smem:[#allocation0]]
  $region173: #{tpu_custom_call.1} parent=0
    _
  %s29 = ssub.s32 1, %s27
  %s30 = scalar_select 0, %s29, %s27
  $region1: #{tpu_custom_call.1} parent=0
    #allocation2 [shape = 'u8[409600]{0}', space=vmem, size = 0x64000, scoped, tag = 'input window, operand 1, single buffered']
    #allocation3 [shape = 's32[2]{0}', space=sflag, size = 0x8, scoped, tag = 'scoped memory for tpu_custom_call.1']
    #allocation4 [shape = 's32[2]{0}', space=sflag, size = 0x8, scoped, tag = 'scoped memory for tpu_custom_call.1']
    #allocation5 [shape = 'u8[409600]{0}', space=vmem, size = 0x64000, scoped, tag = 'input window, operand 3, single buffered']
    #allocation6 [shape = 's32[1]{0}', space=sflag, size = 0x4, scoped, tag = 'scoped memory for tpu_custom_call.1']
    #allocation7 [shape = 'u8[2048]{0}', space=vmem, size = 0x800, scoped, tag = 'input window, operand 4, single buffered']
    #allocation8 [shape = 'u8[409600]{0}', space=vmem, size = 0x64000, scoped, tag = 'input window, operand 5, single buffered']
    #allocation9 [shape = 's32[1]{0}', space=sflag, size = 0x4, scoped, tag = 'scoped memory for tpu_custom_call.1']
    #allocation10 [shape = 'u8[409600]{0}', space=vmem, size = 0x64000, scoped, tag = 'input window, operand 7, single buffered']
    #allocation11 [shape = 'u8[409600]{0}', space=vmem, size = 0x64000, scoped, tag = 'input window, operand 9, single buffered']
    #allocation12 [shape = 's32[1]{0}', space=sflag, size = 0x4, scoped, tag = 'scoped memory for tpu_custom_call.1']
    #allocation13 [shape = 'u8[409600]{0}', space=vmem, size = 0x64000, scoped, tag = 'input window, operand 13, single buffered']
    #allocation14 [shape = 'u8[409600]{0}', space=vmem, size = 0x64000, scoped, tag = 'input window, operand 15, single buffered']
    #allocation15 [shape = 's32[1]{0}', space=sflag, size = 0x4, scoped, tag = 'scoped memory for tpu_custom_call.1']
    #allocation16 [shape = 'u8[102400]{0}', space=vmem, size = 0x19000, scoped, tag = 'input window, operand 21, single buffered']
    #allocation17 [shape = 'u8[1024]{0}', space=vmem, size = 0x400, scoped, tag = 'output window, operand 0']
    %31 = vsyncpa [#allocation3], 0
    %32 = vsyncpa [#allocation6], 0
    %33 = vsyncpa [#allocation9], 0
    %34 = vsyncpa [#allocation12], 0
    %35 = vsyncpa [#allocation15], 0
    %36 = vsyncpa [#allocation4], 0
    %s37 = scalar_lea.sflag [#allocation4], 1
    %38 = vsyncpa %s37, 0
    loop: start=0, step=1, limit=4
    $region2: #{tpu_custom_call.1} parent=1 // loop_pre_header
      _
    $region3: #{tpu_custom_call.1} parent=1 // loop_header
      %s40 = sphi 0, %s44
      %p41 = scmp.ge.s32.totalorder %s40, 4
      %s50 = sphi 0, %s52
      %s53 = sphi 0, %s50
      %s54 = sphi 0, %s53
      %s70 = sphi 0, %s54
      %s74 = sphi 0, %s74
      %s76 = sphi 0, %s74
      %s77 = sphi 0, %s76
      %s91 = sphi 0, %s77
      %s95 = sphi 0, %s95
      %s97 = sphi 0, %s95
      %s98 = sphi 0, %s97
      %s112 = sphi 0, %s98
      %s116 = sphi 0, %s116
      %s118 = sphi 0, %s116
      %s119 = sphi 0, %s118
      %s133 = sphi 0, %s119
      %s137 = sphi 0, %s137
      %s139 = sphi 0, %s137
      %s140 = sphi 0, %s139
      %s154 = sphi 0, %s140
      %s158 = sphi 0, %s158
      %s160 = sphi 0, %s158
      %s161 = sphi 0, %s160
      %s175 = sphi 0, %s161
      %s179 = sphi 0, %s179
      %s181 = sphi 0, %s179
      %s182 = sphi 0, %s181
      %s196 = sphi 0, %s182
      %s200 = sphi 0, %s200
      %s202 = sphi 0, %s200
      %s203 = sphi 0, %s202
      %s217 = sphi 0, %s203
      %s221 = sphi 0, %s221
      %s223 = sphi 0, %s221
      %s224 = sphi 0, %s223
      %s238 = sphi 0, %s224
      %s242 = sphi 0, %s242
      %s244 = sphi 0, %s242
      %s245 = sphi 0, %s244
      %s259 = sphi 0, %s245
      %s263 = sphi 0, %s263
      %s265 = sphi 0, %s263
      %s266 = sphi 0, %s265
      %s280 = sphi 0, %s266
      %s284 = sphi 0, %s284
      %s286 = sphi 0, %s284
      %s287 = sphi 0, %s286
      %s301 = sphi 0, %s287
      %s305 = sphi 0, %s305
      %s307 = sphi 0, %s305
      %s308 = sphi 0, %s307
      %s322 = sphi 0, %s308
      %s326 = sphi 0, %s326
      %s328 = sphi 0, %s326
      %s329 = sphi 0, %s328
      %s343 = sphi 0, %s329
      %s347 = sphi 0, %s347
      %s349 = sphi 0, %s347
      %s350 = sphi 0, %s349
      %s364 = sphi 0, %s350
      %s368 = sphi 0, %s368
      %s370 = sphi 0, %s368
      %s371 = sphi 0, %s370
      %s385 = sphi 0, %s371
      %s389 = sphi 0, %s389
      %s391 = sphi 0, %s389
      %s392 = sphi 0, %s391
      %s406 = sphi 0, %s392
      %s410 = sphi 0, %s410
      %s412 = sphi 0, %s410
      %s413 = sphi 0, %s412
      %s427 = sphi 0, %s413
      %s431 = sphi 0, %s431
      %s433 = sphi 0, %s431
      %s434 = sphi 0, %s433
      %s448 = sphi 0, %s434
      %s452 = sphi 0, %s452
      %s454 = sphi 0, %s452
      %s455 = sphi 0, %s454
      %s469 = sphi 0, %s455
      %s473 = sphi 0, %s473
      %s475 = sphi 0, %s473
      %s476 = sphi 0, %s475
      %s490 = sphi 0, %s476
      %s494 = sphi 0, %s494
      %s496 = sphi 0, %s494
      %s497 = sphi 0, %s496
      %s511 = sphi 0, %s497
      %s515 = sphi 0, %s515
      %s517 = sphi 0, %s515
      %s518 = sphi 0, %s517
      %s532 = sphi 0, %s518
      %s536 = sphi 0, %s536
      %s538 = sphi 0, %s536
      %s539 = sphi 0, %s538
      %s553 = sphi 0, %s539
      %s557 = sphi 0, %s557
      %s559 = sphi 0, %s557
      %s560 = sphi 0, %s559
      %s574 = sphi 0, %s560
      %s578 = sphi 0, %s578
      %s580 = sphi 0, %s578
      %s581 = sphi 0, %s580
      %s595 = sphi 0, %s581
      %s601 = sphi 0, %s603
      %s604 = sphi 0, %s601
      %s605 = sphi 0, %s604
      %s621 = sphi 0, %s605
    $region4: #{tpu_custom_call.1} parent=1 // loop_header_branch
      %43 = sbr.rel (%p41) target = $region8
    $region5: #{tpu_custom_call.1} parent=1 // loop_body
      %s45 = ssub.s32 %s40, 1
      %s46 = ssub.s32 %s40, 2
      %s47 = sadd.s32 %s40, 1
      %s48 = ssub.s32 %s40, %s47
      %p49 = scmp.eq.s32.totalorder %s48, 0
      %s51 = sadd.s32 %s50, 1
      %s52 = scalar_select %p49, %s50, %s51
      %p55 = pneg %p49
      %p56 = scmp.eq.s32.totalorder %s40, 1
      %p57 = por %p55, %p56
      %p58 = scmp.ne.s32.totalorder %s50, %s53
      %p59 = scmp.eq.s32.totalorder %s40, 0
      %p60 = por %p58, %p59
      %p61 = scmp.ne.s32.totalorder %s50, %s53
      %p62 = scmp.eq.s32.totalorder %s45, 1
      %p63 = por %p61, %p62
      %p64 = scmp.ne.s32.totalorder %s53, %s54
      %p65 = scmp.eq.s32.totalorder %s45, 0
      %p66 = por %p64, %p65
      %p67 = scmp.ne.s32.totalorder %s53, %s54
      %p68 = scmp.eq.s32.totalorder %s46, 1
      %p69 = por %p67, %p68
      %p71 = scmp.ne.s32.totalorder %s54, %s70
      %p72 = scmp.eq.s32.totalorder %s46, 0
      %p73 = por %p71, %p72
      %s75 = sadd.s32 %s74, 1
      %p78 = scmp.eq.s32.totalorder %s40, 1
      %p79 = scmp.ne.s32.totalorder %s74, %s76
      %p80 = scmp.eq.s32.totalorder %s40, 0
      %p81 = por %p79, %p80
      %p82 = scmp.ne.s32.totalorder %s74, %s76
      %p83 = scmp.eq.s32.totalorder %s45, 1
      %p84 = por %p82, %p83
      %p85 = scmp.ne.s32.totalorder %s76, %s77
      %p86 = scmp.eq.s32.totalorder %s45, 0
      %p87 = por %p85, %p86
      %p88 = scmp.ne.s32.totalorder %s76, %s77
      %p89 = scmp.eq.s32.totalorder %s46, 1
      %p90 = por %p88, %p89
      %p92 = scmp.ne.s32.totalorder %s77, %s91
      %p93 = scmp.eq.s32.totalorder %s46, 0
      %p94 = por %p92, %p93
      %s96 = sadd.s32 %s95, 1
      %p99 = scmp.eq.s32.totalorder %s40, 1
      %p100 = scmp.ne.s32.totalorder %s95, %s97
      %p101 = scmp.eq.s32.totalorder %s40, 0
      %p102 = por %p100, %p101
      %p103 = scmp.ne.s32.totalorder %s95, %s97
      %p104 = scmp.eq.s32.totalorder %s45, 1
      %p105 = por %p103, %p104
      %p106 = scmp.ne.s32.totalorder %s97, %s98
      %p107 = scmp.eq.s32.totalorder %s45, 0
      %p108 = por %p106, %p107
      %p109 = scmp.ne.s32.totalorder %s97, %s98
      %p110 = scmp.eq.s32.totalorder %s46, 1
      %p111 = por %p109, %p110
      %p113 = scmp.ne.s32.totalorder %s98, %s112
      %p114 = scmp.eq.s32.totalorder %s46, 0
      %p115 = por %p113, %p114
      %s117 = sadd.s32 %s116, 1
      %p120 = scmp.eq.s32.totalorder %s40, 1
      %p121 = scmp.ne.s32.totalorder %s116, %s118
      %p122 = scmp.eq.s32.totalorder %s40, 0
      %p123 = por %p121, %p122
      %p124 = scmp.ne.s32.totalorder %s116, %s118
      %p125 = scmp.eq.s32.totalorder %s45, 1
      %p126 = por %p124, %p125
      %p127 = scmp.ne.s32.totalorder %s118, %s119
      %p128 = scmp.eq.s32.totalorder %s45, 0
      %p129 = por %p127, %p128
      %p130 = scmp.ne.s32.totalorder %s118, %s119
      %p131 = scmp.eq.s32.totalorder %s46, 1
      %p132 = por %p130, %p131
      %p134 = scmp.ne.s32.totalorder %s119, %s133
      %p135 = scmp.eq.s32.totalorder %s46, 0
      %p136 = por %p134, %p135
      %s138 = sadd.s32 %s137, 1
      %p141 = scmp.eq.s32.totalorder %s40, 1
      %p142 = scmp.ne.s32.totalorder %s137, %s139
      %p143 = scmp.eq.s32.totalorder %s40, 0
      %p144 = por %p142, %p143
      %p145 = scmp.ne.s32.totalorder %s137, %s139
      %p146 = scmp.eq.s32.totalorder %s45, 1
      %p147 = por %p145, %p146
      %p148 = scmp.ne.s32.totalorder %s139, %s140
      %p149 = scmp.eq.s32.totalorder %s45, 0
      %p150 = por %p148, %p149
      %p151 = scmp.ne.s32.totalorder %s139, %s140
      %p152 = scmp.eq.s32.totalorder %s46, 1
      %p153 = por %p151, %p152
      %p155 = scmp.ne.s32.totalorder %s140, %s154
      %p156 = scmp.eq.s32.totalorder %s46, 0
      %p157 = por %p155, %p156
      %s159 = sadd.s32 %s158, 1
      %p162 = scmp.eq.s32.totalorder %s40, 1
      %p163 = scmp.ne.s32.totalorder %s158, %s160
      %p164 = scmp.eq.s32.totalorder %s40, 0
      %p165 = por %p163, %p164
      %p166 = scmp.ne.s32.totalorder %s158, %s160
      %p167 = scmp.eq.s32.totalorder %s45, 1
      %p168 = por %p166, %p167
      %p169 = scmp.ne.s32.totalorder %s160, %s161
      %p170 = scmp.eq.s32.totalorder %s45, 0
      %p171 = por %p169, %p170
      %p172 = scmp.ne.s32.totalorder %s160, %s161
      %p173 = scmp.eq.s32.totalorder %s46, 1
      %p174 = por %p172, %p173
      %p176 = scmp.ne.s32.totalorder %s161, %s175
      %p177 = scmp.eq.s32.totalorder %s46, 0
      %p178 = por %p176, %p177
      %s180 = sadd.s32 %s179, 1
      %p183 = scmp.eq.s32.totalorder %s40, 1
      %p184 = scmp.ne.s32.totalorder %s179, %s181
      %p185 = scmp.eq.s32.totalorder %s40, 0
      %p186 = por %p184, %p185
      %p187 = scmp.ne.s32.totalorder %s179, %s181
      %p188 = scmp.eq.s32.totalorder %s45, 1
      %p189 = por %p187, %p188
      %p190 = scmp.ne.s32.totalorder %s181, %s182
      %p191 = scmp.eq.s32.totalorder %s45, 0
      %p192 = por %p190, %p191
      %p193 = scmp.ne.s32.totalorder %s181, %s182
      %p194 = scmp.eq.s32.totalorder %s46, 1
      %p195 = por %p193, %p194
      %p197 = scmp.ne.s32.totalorder %s182, %s196
      %p198 = scmp.eq.s32.totalorder %s46, 0
      %p199 = por %p197, %p198
      %s201 = sadd.s32 %s200, 1
      %p204 = scmp.eq.s32.totalorder %s40, 1
      %p205 = scmp.ne.s32.totalorder %s200, %s202
      %p206 = scmp.eq.s32.totalorder %s40, 0
      %p207 = por %p205, %p206
      %p208 = scmp.ne.s32.totalorder %s200, %s202
      %p209 = scmp.eq.s32.totalorder %s45, 1
      %p210 = por %p208, %p209
      %p211 = scmp.ne.s32.totalorder %s202, %s203
      %p212 = scmp.eq.s32.totalorder %s45, 0
      %p213 = por %p211, %p212
      %p214 = scmp.ne.s32.totalorder %s202, %s203
      %p215 = scmp.eq.s32.totalorder %s46, 1
      %p216 = por %p214, %p215
      %p218 = scmp.ne.s32.totalorder %s203, %s217
      %p219 = scmp.eq.s32.totalorder %s46, 0
      %p220 = por %p218, %p219
      %s222 = sadd.s32 %s221, 1
      %p225 = scmp.eq.s32.totalorder %s40, 1
      %p226 = scmp.ne.s32.totalorder %s221, %s223
      %p227 = scmp.eq.s32.totalorder %s40, 0
      %p228 = por %p226, %p227
      %p229 = scmp.ne.s32.totalorder %s221, %s223
      %p230 = scmp.eq.s32.totalorder %s45, 1
      %p231 = por %p229, %p230
      %p232 = scmp.ne.s32.totalorder %s223, %s224
      %p233 = scmp.eq.s32.totalorder %s45, 0
      %p234 = por %p232, %p233
      %p235 = scmp.ne.s32.totalorder %s223, %s224
      %p236 = scmp.eq.s32.totalorder %s46, 1
      %p237 = por %p235, %p236
      %p239 = scmp.ne.s32.totalorder %s224, %s238
      %p240 = scmp.eq.s32.totalorder %s46, 0
      %p241 = por %p239, %p240
      %s243 = sadd.s32 %s242, 1
      %p246 = scmp.eq.s32.totalorder %s40, 1
      %p247 = scmp.ne.s32.totalorder %s242, %s244
      %p248 = scmp.eq.s32.totalorder %s40, 0
      %p249 = por %p247, %p248
      %p250 = scmp.ne.s32.totalorder %s242, %s244
      %p251 = scmp.eq.s32.totalorder %s45, 1
      %p252 = por %p250, %p251
      %p253 = scmp.ne.s32.totalorder %s244, %s245
      %p254 = scmp.eq.s32.totalorder %s45, 0
      %p255 = por %p253, %p254
      %p256 = scmp.ne.s32.totalorder %s244, %s245
      %p257 = scmp.eq.s32.totalorder %s46, 1
      %p258 = por %p256, %p257
      %p260 = scmp.ne.s32.totalorder %s245, %s259
      %p261 = scmp.eq.s32.totalorder %s46, 0
      %p262 = por %p260, %p261
      %s264 = sadd.s32 %s263, 1
      %p267 = scmp.eq.s32.totalorder %s40, 1
      %p268 = scmp.ne.s32.totalorder %s263, %s265
      %p269 = scmp.eq.s32.totalorder %s40, 0
      %p270 = por %p268, %p269
      %p271 = scmp.ne.s32.totalorder %s263, %s265
      %p272 = scmp.eq.s32.totalorder %s45, 1
      %p273 = por %p271, %p272
      %p274 = scmp.ne.s32.totalorder %s265, %s266
      %p275 = scmp.eq.s32.totalorder %s45, 0
      %p276 = por %p274, %p275
      %p277 = scmp.ne.s32.totalorder %s265, %s266
      %p278 = scmp.eq.s32.totalorder %s46, 1
      %p279 = por %p277, %p278
      %p281 = scmp.ne.s32.totalorder %s266, %s280
      %p282 = scmp.eq.s32.totalorder %s46, 0
      %p283 = por %p281, %p282
      %s285 = sadd.s32 %s284, 1
      %p288 = scmp.eq.s32.totalorder %s40, 1
      %p289 = scmp.ne.s32.totalorder %s284, %s286
      %p290 = scmp.eq.s32.totalorder %s40, 0
      %p291 = por %p289, %p290
      %p292 = scmp.ne.s32.totalorder %s284, %s286
      %p293 = scmp.eq.s32.totalorder %s45, 1
      %p294 = por %p292, %p293
      %p295 = scmp.ne.s32.totalorder %s286, %s287
      %p296 = scmp.eq.s32.totalorder %s45, 0
      %p297 = por %p295, %p296
      %p298 = scmp.ne.s32.totalorder %s286, %s287
      %p299 = scmp.eq.s32.totalorder %s46, 1
      %p300 = por %p298, %p299
      %p302 = scmp.ne.s32.totalorder %s287, %s301
      %p303 = scmp.eq.s32.totalorder %s46, 0
      %p304 = por %p302, %p303
      %s306 = sadd.s32 %s305, 1
      %p309 = scmp.eq.s32.totalorder %s40, 1
      %p310 = scmp.ne.s32.totalorder %s305, %s307
      %p311 = scmp.eq.s32.totalorder %s40, 0
      %p312 = por %p310, %p311
      %p313 = scmp.ne.s32.totalorder %s305, %s307
      %p314 = scmp.eq.s32.totalorder %s45, 1
      %p315 = por %p313, %p314
      %p316 = scmp.ne.s32.totalorder %s307, %s308
      %p317 = scmp.eq.s32.totalorder %s45, 0
      %p318 = por %p316, %p317
      %p319 = scmp.ne.s32.totalorder %s307, %s308
      %p320 = scmp.eq.s32.totalorder %s46, 1
      %p321 = por %p319, %p320
      %p323 = scmp.ne.s32.totalorder %s308, %s322
      %p324 = scmp.eq.s32.totalorder %s46, 0
      %p325 = por %p323, %p324
      %s327 = sadd.s32 %s326, 1
      %p330 = scmp.eq.s32.totalorder %s40, 1
      %p331 = scmp.ne.s32.totalorder %s326, %s328
      %p332 = scmp.eq.s32.totalorder %s40, 0
      %p333 = por %p331, %p332
      %p334 = scmp.ne.s32.totalorder %s326, %s328
      %p335 = scmp.eq.s32.totalorder %s45, 1
      %p336 = por %p334, %p335
      %p337 = scmp.ne.s32.totalorder %s328, %s329
      %p338 = scmp.eq.s32.totalorder %s45, 0
      %p339 = por %p337, %p338
      %p340 = scmp.ne.s32.totalorder %s328, %s329
      %p341 = scmp.eq.s32.totalorder %s46, 1
      %p342 = por %p340, %p341
      %p344 = scmp.ne.s32.totalorder %s329, %s343
      %p345 = scmp.eq.s32.totalorder %s46, 0
      %p346 = por %p344, %p345
      %s348 = sadd.s32 %s347, 1
      %p351 = scmp.eq.s32.totalorder %s40, 1
      %p352 = scmp.ne.s32.totalorder %s347, %s349
      %p353 = scmp.eq.s32.totalorder %s40, 0
      %p354 = por %p352, %p353
      %p355 = scmp.ne.s32.totalorder %s347, %s349
      %p356 = scmp.eq.s32.totalorder %s45, 1
      %p357 = por %p355, %p356
      %p358 = scmp.ne.s32.totalorder %s349, %s350
      %p359 = scmp.eq.s32.totalorder %s45, 0
      %p360 = por %p358, %p359
      %p361 = scmp.ne.s32.totalorder %s349, %s350
      %p362 = scmp.eq.s32.totalorder %s46, 1
      %p363 = por %p361, %p362
      %p365 = scmp.ne.s32.totalorder %s350, %s364
      %p366 = scmp.eq.s32.totalorder %s46, 0
      %p367 = por %p365, %p366
      %s369 = sadd.s32 %s368, 1
      %p372 = scmp.eq.s32.totalorder %s40, 1
      %p373 = scmp.ne.s32.totalorder %s368, %s370
      %p374 = scmp.eq.s32.totalorder %s40, 0
      %p375 = por %p373, %p374
      %p376 = scmp.ne.s32.totalorder %s368, %s370
      %p377 = scmp.eq.s32.totalorder %s45, 1
      %p378 = por %p376, %p377
      %p379 = scmp.ne.s32.totalorder %s370, %s371
      %p380 = scmp.eq.s32.totalorder %s45, 0
      %p381 = por %p379, %p380
      %p382 = scmp.ne.s32.totalorder %s370, %s371
      %p383 = scmp.eq.s32.totalorder %s46, 1
      %p384 = por %p382, %p383
      %p386 = scmp.ne.s32.totalorder %s371, %s385
      %p387 = scmp.eq.s32.totalorder %s46, 0
      %p388 = por %p386, %p387
      %s390 = sadd.s32 %s389, 1
      %p393 = scmp.eq.s32.totalorder %s40, 1
      %p394 = scmp.ne.s32.totalorder %s389, %s391
      %p395 = scmp.eq.s32.totalorder %s40, 0
      %p396 = por %p394, %p395
      %p397 = scmp.ne.s32.totalorder %s389, %s391
      %p398 = scmp.eq.s32.totalorder %s45, 1
      %p399 = por %p397, %p398
      %p400 = scmp.ne.s32.totalorder %s391, %s392
      %p401 = scmp.eq.s32.totalorder %s45, 0
      %p402 = por %p400, %p401
      %p403 = scmp.ne.s32.totalorder %s391, %s392
      %p404 = scmp.eq.s32.totalorder %s46, 1
      %p405 = por %p403, %p404
      %p407 = scmp.ne.s32.totalorder %s392, %s406
      %p408 = scmp.eq.s32.totalorder %s46, 0
      %p409 = por %p407, %p408
      %s411 = sadd.s32 %s410, 1
      %p414 = scmp.eq.s32.totalorder %s40, 1
      %p415 = scmp.ne.s32.totalorder %s410, %s412
      %p416 = scmp.eq.s32.totalorder %s40, 0
      %p417 = por %p415, %p416
      %p418 = scmp.ne.s32.totalorder %s410, %s412
      %p419 = scmp.eq.s32.totalorder %s45, 1
      %p420 = por %p418, %p419
      %p421 = scmp.ne.s32.totalorder %s412, %s413
      %p422 = scmp.eq.s32.totalorder %s45, 0
      %p423 = por %p421, %p422
      %p424 = scmp.ne.s32.totalorder %s412, %s413
      %p425 = scmp.eq.s32.totalorder %s46, 1
      %p426 = por %p424, %p425
      %p428 = scmp.ne.s32.totalorder %s413, %s427
      %p429 = scmp.eq.s32.totalorder %s46, 0
      %p430 = por %p428, %p429
      %s432 = sadd.s32 %s431, 1
      %p435 = scmp.eq.s32.totalorder %s40, 1
      %p436 = scmp.ne.s32.totalorder %s431, %s433
      %p437 = scmp.eq.s32.totalorder %s40, 0
      %p438 = por %p436, %p437
      %p439 = scmp.ne.s32.totalorder %s431, %s433
      %p440 = scmp.eq.s32.totalorder %s45, 1
      %p441 = por %p439, %p440
      %p442 = scmp.ne.s32.totalorder %s433, %s434
      %p443 = scmp.eq.s32.totalorder %s45, 0
      %p444 = por %p442, %p443
      %p445 = scmp.ne.s32.totalorder %s433, %s434
      %p446 = scmp.eq.s32.totalorder %s46, 1
      %p447 = por %p445, %p446
      %p449 = scmp.ne.s32.totalorder %s434, %s448
      %p450 = scmp.eq.s32.totalorder %s46, 0
      %p451 = por %p449, %p450
      %s453 = sadd.s32 %s452, 1
      %p456 = scmp.eq.s32.totalorder %s40, 1
      %p457 = scmp.ne.s32.totalorder %s452, %s454
      %p458 = scmp.eq.s32.totalorder %s40, 0
      %p459 = por %p457, %p458
      %p460 = scmp.ne.s32.totalorder %s452, %s454
      %p461 = scmp.eq.s32.totalorder %s45, 1
      %p462 = por %p460, %p461
      %p463 = scmp.ne.s32.totalorder %s454, %s455
      %p464 = scmp.eq.s32.totalorder %s45, 0
      %p465 = por %p463, %p464
      %p466 = scmp.ne.s32.totalorder %s454, %s455
      %p467 = scmp.eq.s32.totalorder %s46, 1
      %p468 = por %p466, %p467
      %p470 = scmp.ne.s32.totalorder %s455, %s469
      %p471 = scmp.eq.s32.totalorder %s46, 0
      %p472 = por %p470, %p471
      %s474 = sadd.s32 %s473, 1
      %p477 = scmp.eq.s32.totalorder %s40, 1
      %p478 = scmp.ne.s32.totalorder %s473, %s475
      %p479 = scmp.eq.s32.totalorder %s40, 0
      %p480 = por %p478, %p479
      %p481 = scmp.ne.s32.totalorder %s473, %s475
      %p482 = scmp.eq.s32.totalorder %s45, 1
      %p483 = por %p481, %p482
      %p484 = scmp.ne.s32.totalorder %s475, %s476
      %p485 = scmp.eq.s32.totalorder %s45, 0
      %p486 = por %p484, %p485
      %p487 = scmp.ne.s32.totalorder %s475, %s476
      %p488 = scmp.eq.s32.totalorder %s46, 1
      %p489 = por %p487, %p488
      %p491 = scmp.ne.s32.totalorder %s476, %s490
      %p492 = scmp.eq.s32.totalorder %s46, 0
      %p493 = por %p491, %p492
      %s495 = sadd.s32 %s494, 1
      %p498 = scmp.eq.s32.totalorder %s40, 1
      %p499 = scmp.ne.s32.totalorder %s494, %s496
      %p500 = scmp.eq.s32.totalorder %s40, 0
      %p501 = por %p499, %p500
      %p502 = scmp.ne.s32.totalorder %s494, %s496
      %p503 = scmp.eq.s32.totalorder %s45, 1
      %p504 = por %p502, %p503
      %p505 = scmp.ne.s32.totalorder %s496, %s497
      %p506 = scmp.eq.s32.totalorder %s45, 0
      %p507 = por %p505, %p506
      %p508 = scmp.ne.s32.totalorder %s496, %s497
      %p509 = scmp.eq.s32.totalorder %s46, 1
      %p510 = por %p508, %p509
      %p512 = scmp.ne.s32.totalorder %s497, %s511
      %p513 = scmp.eq.s32.totalorder %s46, 0
      %p514 = por %p512, %p513
      %s516 = sadd.s32 %s515, 1
      %p519 = scmp.eq.s32.totalorder %s40, 1
      %p520 = scmp.ne.s32.totalorder %s515, %s517
      %p521 = scmp.eq.s32.totalorder %s40, 0
      %p522 = por %p520, %p521
      %p523 = scmp.ne.s32.totalorder %s515, %s517
      %p524 = scmp.eq.s32.totalorder %s45, 1
      %p525 = por %p523, %p524
      %p526 = scmp.ne.s32.totalorder %s517, %s518
      %p527 = scmp.eq.s32.totalorder %s45, 0
      %p528 = por %p526, %p527
      %p529 = scmp.ne.s32.totalorder %s517, %s518
      %p530 = scmp.eq.s32.totalorder %s46, 1
      %p531 = por %p529, %p530
      %p533 = scmp.ne.s32.totalorder %s518, %s532
      %p534 = scmp.eq.s32.totalorder %s46, 0
      %p535 = por %p533, %p534
      %s537 = sadd.s32 %s536, 1
      %p540 = scmp.eq.s32.totalorder %s40, 1
      %p541 = scmp.ne.s32.totalorder %s536, %s538
      %p542 = scmp.eq.s32.totalorder %s40, 0
      %p543 = por %p541, %p542
      %p544 = scmp.ne.s32.totalorder %s536, %s538
      %p545 = scmp.eq.s32.totalorder %s45, 1
      %p546 = por %p544, %p545
      %p547 = scmp.ne.s32.totalorder %s538, %s539
      %p548 = scmp.eq.s32.totalorder %s45, 0
      %p549 = por %p547, %p548
      %p550 = scmp.ne.s32.totalorder %s538, %s539
      %p551 = scmp.eq.s32.totalorder %s46, 1
      %p552 = por %p550, %p551
      %p554 = scmp.ne.s32.totalorder %s539, %s553
      %p555 = scmp.eq.s32.totalorder %s46, 0
      %p556 = por %p554, %p555
      %s558 = sadd.s32 %s557, 1
      %p561 = scmp.eq.s32.totalorder %s40, 1
      %p562 = scmp.ne.s32.totalorder %s557, %s559
      %p563 = scmp.eq.s32.totalorder %s40, 0
      %p564 = por %p562, %p563
      %p565 = scmp.ne.s32.totalorder %s557, %s559
      %p566 = scmp.eq.s32.totalorder %s45, 1
      %p567 = por %p565, %p566
      %p568 = scmp.ne.s32.totalorder %s559, %s560
      %p569 = scmp.eq.s32.totalorder %s45, 0
      %p570 = por %p568, %p569
      %p571 = scmp.ne.s32.totalorder %s559, %s560
      %p572 = scmp.eq.s32.totalorder %s46, 1
      %p573 = por %p571, %p572
      %p575 = scmp.ne.s32.totalorder %s560, %s574
      %p576 = scmp.eq.s32.totalorder %s46, 0
      %p577 = por %p575, %p576
      %s579 = sadd.s32 %s578, 1
      %p582 = scmp.eq.s32.totalorder %s40, 1
      %p583 = scmp.ne.s32.totalorder %s578, %s580
      %p584 = scmp.eq.s32.totalorder %s40, 0
      %p585 = por %p583, %p584
      %p586 = scmp.ne.s32.totalorder %s578, %s580
      %p587 = scmp.eq.s32.totalorder %s45, 1
      %p588 = por %p586, %p587
      %p589 = scmp.ne.s32.totalorder %s580, %s581
      %p590 = scmp.eq.s32.totalorder %s45, 0
      %p591 = por %p589, %p590
      %p592 = scmp.ne.s32.totalorder %s580, %s581
      %p593 = scmp.eq.s32.totalorder %s46, 1
      %p594 = por %p592, %p593
      %p596 = scmp.ne.s32.totalorder %s581, %s595
      %p597 = scmp.eq.s32.totalorder %s46, 0
      %p598 = por %p596, %p597
      %s599 = ssub.s32 %s40, %s47
      %p600 = scmp.eq.s32.totalorder %s599, 0
      %s602 = sadd.s32 %s601, 1
      %s603 = scalar_select %p600, %s601, %s602
      %p606 = pneg %p600
      %p607 = scmp.eq.s32.totalorder %s40, 1
      %p608 = por %p606, %p607
      %p609 = scmp.ne.s32.totalorder %s601, %s604
      %p610 = scmp.eq.s32.totalorder %s40, 0
      %p611 = por %p609, %p610
      %p612 = scmp.ne.s32.totalorder %s601, %s604
      %p613 = scmp.eq.s32.totalorder %s45, 1
      %p614 = por %p612, %p613
      %p615 = scmp.ne.s32.totalorder %s604, %s605
      %p616 = scmp.eq.s32.totalorder %s45, 0
      %p617 = por %p615, %p616
      %p618 = scmp.ne.s32.totalorder %s604, %s605
      %p619 = scmp.eq.s32.totalorder %s46, 1
      %p620 = por %p618, %p619
      %p622 = scmp.ne.s32.totalorder %s605, %s621
      %p623 = scmp.eq.s32.totalorder %s46, 0
      %p624 = por %p622, %p623
      %p625 = scmp.le.s32.totalorder 1, %s40
      %p626 = scmp.lt.s32.totalorder %s40, 3
      %p627 = pnand %p625, %p626
      %p628 = pneg %p627
      // Predicated region
      $region9: #{tpu_custom_call.1} parent=5 // pred_check
        _
      $region10: #{tpu_custom_call.1} parent=5 // pred_check_branch
        %630 = sbr.rel (%p627) target = $region12
      $region11: #{tpu_custom_call.1} parent=5 // pred_region
        %s631 = ssub.s32 %s40, 1
        // Predicated region
        $region13: #{tpu_custom_call.1} parent=11 // pred_check
          %p632 = pneg %p87
        $region14: #{tpu_custom_call.1} parent=11 // pred_check_branch
          %634 = sbr.rel (%p632) target = $region16
        $region15: #{tpu_custom_call.1} parent=11 // pred_region
          %s636 = ssub.s32 12800, 12800
          %637 = vsyncadd [#allocation3], %s636
          %s638 = sshll.u32 [#allocation2], 4
          %s639 = int_to_ptr.vmem [resolvable:$true] %s638
          %644 = dma.hbm_to_vmem [thread:$0]  %s1, 12800, %s639, [#allocation3], 256, 256, 16
        $region16: #{tpu_custom_call.1} parent=11 // pred_fallthru
          _
        // Predicated region
        $region17: #{tpu_custom_call.1} parent=11 // pred_check
          %p645 = pneg %p108
        $region18: #{tpu_custom_call.1} parent=11 // pred_check_branch
          %647 = sbr.rel (%p645) target = $region20
        $region19: #{tpu_custom_call.1} parent=11 // pred_region
          _
        $region20: #{tpu_custom_call.1} parent=11 // pred_fallthru
          _
        // Predicated region
        $region21: #{tpu_custom_call.1} parent=11 // pred_check
          %p648 = pneg %p129
        $region22: #{tpu_custom_call.1} parent=11 // pred_check_branch
          %650 = sbr.rel (%p648) target = $region24
        $region23: #{tpu_custom_call.1} parent=11 // pred_region
          %s652 = ssub.s32 12800, 12800
          %653 = vsyncadd [#allocation6], %s652
          %s654 = sshll.u32 [#allocation5], 4
          %s655 = int_to_ptr.vmem [resolvable:$true] %s654
          %660 = dma.hbm_to_vmem [thread:$0]  %s3, 12800, %s655, [#allocation6], 256, 256, 16
        $region24: #{tpu_custom_call.1} parent=11 // pred_fallthru
          _
        // Predicated region
        $region25: #{tpu_custom_call.1} parent=11 // pred_check
          %p661 = pneg %p150
        $region26: #{tpu_custom_call.1} parent=11 // pred_check_branch
          %663 = sbr.rel (%p661) target = $region28
        $region27: #{tpu_custom_call.1} parent=11 // pred_region
          %s665 = ssub.s32 64, 64
          %666 = vsyncadd [#allocation6], %s665
          %s668 = sshll.u32 [#allocation7], 4
          %s669 = int_to_ptr.vmem [resolvable:$true] %s668
          %671 = dma.hbm_to_vmem [thread:$0]  %s4, 64, %s669, [#allocation6]
        $region28: #{tpu_custom_call.1} parent=11 // pred_fallthru
          _
        // Predicated region
        $region29: #{tpu_custom_call.1} parent=11 // pred_check
          %p672 = pneg %p171
        $region30: #{tpu_custom_call.1} parent=11 // pred_check_branch
          %674 = sbr.rel (%p672) target = $region32
        $region31: #{tpu_custom_call.1} parent=11 // pred_region
          %s676 = ssub.s32 12800, 12800
          %677 = vsyncadd [#allocation9], %s676
          %s678 = sshll.u32 [#allocation8], 4
          %s679 = int_to_ptr.vmem [resolvable:$true] %s678
          %684 = dma.hbm_to_vmem [thread:$0]  %s5, 12800, %s679, [#allocation9], 256, 256, 16
        $region32: #{tpu_custom_call.1} parent=11 // pred_fallthru
          _
        // Predicated region
        $region33: #{tpu_custom_call.1} parent=11 // pred_check
          %p685 = pneg %p192
        $region34: #{tpu_custom_call.1} parent=11 // pred_check_branch
          %687 = sbr.rel (%p685) target = $region36
        $region35: #{tpu_custom_call.1} parent=11 // pred_region
          _
        $region36: #{tpu_custom_call.1} parent=11 // pred_fallthru
          _
        // Predicated region
        $region37: #{tpu_custom_call.1} parent=11 // pred_check
          %p688 = pneg %p213
        $region38: #{tpu_custom_call.1} parent=11 // pred_check_branch
          %690 = sbr.rel (%p688) target = $region40
        $region39: #{tpu_custom_call.1} parent=11 // pred_region
          %s692 = ssub.s32 12800, 12800
          %693 = vsyncadd [#allocation9], %s692
          %s694 = sshll.u32 [#allocation10], 4
          %s695 = int_to_ptr.vmem [resolvable:$true] %s694
          %700 = dma.hbm_to_vmem [thread:$0]  %s7, 12800, %s695, [#allocation9], 256, 256, 16
        $region40: #{tpu_custom_call.1} parent=11 // pred_fallthru
          _
        // Predicated region
        $region41: #{tpu_custom_call.1} parent=11 // pred_check
          %p701 = pneg %p234
        $region42: #{tpu_custom_call.1} parent=11 // pred_check_branch
          %703 = sbr.rel (%p701) target = $region44
        $region43: #{tpu_custom_call.1} parent=11 // pred_region
          _
        $region44: #{tpu_custom_call.1} parent=11 // pred_fallthru
          _
        // Predicated region
        $region45: #{tpu_custom_call.1} parent=11 // pred_check
          %p704 = pneg %p255
        $region46: #{tpu_custom_call.1} parent=11 // pred_check_branch
          %706 = sbr.rel (%p704) target = $region48
        $region47: #{tpu_custom_call.1} parent=11 // pred_region
          %s708 = ssub.s32 12800, 12800
          %709 = vsyncadd [#allocation12], %s708
          %s710 = sshll.u32 [#allocation11], 4
          %s711 = int_to_ptr.vmem [resolvable:$true] %s710
          %716 = dma.hbm_to_vmem [thread:$0]  %s9, 12800, %s711, [#allocation12], 256, 256, 16
        $region48: #{tpu_custom_call.1} parent=11 // pred_fallthru
          _
        // Predicated region
        $region49: #{tpu_custom_call.1} parent=11 // pred_check
          %p717 = pneg %p276
        $region50: #{tpu_custom_call.1} parent=11 // pred_check_branch
          %719 = sbr.rel (%p717) target = $region52
        $region51: #{tpu_custom_call.1} parent=11 // pred_region
          _
        $region52: #{tpu_custom_call.1} parent=11 // pred_fallthru
          _
        // Predicated region
        $region53: #{tpu_custom_call.1} parent=11 // pred_check
          %p720 = pneg %p297
        $region54: #{tpu_custom_call.1} parent=11 // pred_check_branch
          %722 = sbr.rel (%p720) target = $region56
        $region55: #{tpu_custom_call.1} parent=11 // pred_region
          _
        $region56: #{tpu_custom_call.1} parent=11 // pred_fallthru
          _
        // Predicated region
        $region57: #{tpu_custom_call.1} parent=11 // pred_check
          %p723 = pneg %p318
        $region58: #{tpu_custom_call.1} parent=11 // pred_check_branch
          %725 = sbr.rel (%p723) target = $region60
        $region59: #{tpu_custom_call.1} parent=11 // pred_region
          _
        $region60: #{tpu_custom_call.1} parent=11 // pred_fallthru
          _
        // Predicated region
        $region61: #{tpu_custom_call.1} parent=11 // pred_check
          %p726 = pneg %p339
        $region62: #{tpu_custom_call.1} parent=11 // pred_check_branch
          %728 = sbr.rel (%p726) target = $region64
        $region63: #{tpu_custom_call.1} parent=11 // pred_region
          %s730 = ssub.s32 12800, 12800
          %731 = vsyncadd [#allocation12], %s730
          %s732 = sshll.u32 [#allocation13], 4
          %s733 = int_to_ptr.vmem [resolvable:$true] %s732
          %738 = dma.hbm_to_vmem [thread:$0]  %s13, 12800, %s733, [#allocation12], 256, 256, 16
        $region64: #{tpu_custom_call.1} parent=11 // pred_fallthru
          _
        // Predicated region
        $region65: #{tpu_custom_call.1} parent=11 // pred_check
          %p739 = pneg %p360
        $region66: #{tpu_custom_call.1} parent=11 // pred_check_branch
          %741 = sbr.rel (%p739) target = $region68
        $region67: #{tpu_custom_call.1} parent=11 // pred_region
          _
        $region68: #{tpu_custom_call.1} parent=11 // pred_fallthru
          _
        // Predicated region
        $region69: #{tpu_custom_call.1} parent=11 // pred_check
          %p742 = pneg %p381
        $region70: #{tpu_custom_call.1} parent=11 // pred_check_branch
          %744 = sbr.rel (%p742) target = $region72
        $region71: #{tpu_custom_call.1} parent=11 // pred_region
          %s746 = ssub.s32 12800, 12800
          %747 = vsyncadd [#allocation15], %s746
          %s748 = sshll.u32 [#allocation14], 4
          %s749 = int_to_ptr.vmem [resolvable:$true] %s748
          %754 = dma.hbm_to_vmem [thread:$0]  %s15, 12800, %s749, [#allocation15], 256, 256, 16
        $region72: #{tpu_custom_call.1} parent=11 // pred_fallthru
          _
        // Predicated region
        $region73: #{tpu_custom_call.1} parent=11 // pred_check
          %p755 = pneg %p402
        $region74: #{tpu_custom_call.1} parent=11 // pred_check_branch
          %757 = sbr.rel (%p755) target = $region76
        $region75: #{tpu_custom_call.1} parent=11 // pred_region
          _
        $region76: #{tpu_custom_call.1} parent=11 // pred_fallthru
          _
        // Predicated region
        $region77: #{tpu_custom_call.1} parent=11 // pred_check
          %p758 = pneg %p423
        $region78: #{tpu_custom_call.1} parent=11 // pred_check_branch
          %760 = sbr.rel (%p758) target = $region80
        $region79: #{tpu_custom_call.1} parent=11 // pred_region
          _
        $region80: #{tpu_custom_call.1} parent=11 // pred_fallthru
          _
        // Predicated region
        $region81: #{tpu_custom_call.1} parent=11 // pred_check
          %p761 = pneg %p444
        $region82: #{tpu_custom_call.1} parent=11 // pred_check_branch
          %763 = sbr.rel (%p761) target = $region84
        $region83: #{tpu_custom_call.1} parent=11 // pred_region
          _
        $region84: #{tpu_custom_call.1} parent=11 // pred_fallthru
          _
        // Predicated region
        $region85: #{tpu_custom_call.1} parent=11 // pred_check
          %p764 = pneg %p465
        $region86: #{tpu_custom_call.1} parent=11 // pred_check_branch
          %766 = sbr.rel (%p764) target = $region88
        $region87: #{tpu_custom_call.1} parent=11 // pred_region
          _
        $region88: #{tpu_custom_call.1} parent=11 // pred_fallthru
          _
        // Predicated region
        $region89: #{tpu_custom_call.1} parent=11 // pred_check
          %p767 = pneg %p486
        $region90: #{tpu_custom_call.1} parent=11 // pred_check_branch
          %769 = sbr.rel (%p767) target = $region92
        $region91: #{tpu_custom_call.1} parent=11 // pred_region
          _
        $region92: #{tpu_custom_call.1} parent=11 // pred_fallthru
          _
        // Predicated region
        $region93: #{tpu_custom_call.1} parent=11 // pred_check
          %p770 = pneg %p507
        $region94: #{tpu_custom_call.1} parent=11 // pred_check_branch
          %772 = sbr.rel (%p770) target = $region96
        $region95: #{tpu_custom_call.1} parent=11 // pred_region
          %s774 = ssub.s32 3200, 3200
          %775 = vsyncadd [#allocation15], %s774
          %s776 = sshll.u32 [#allocation16], 4
          %s777 = int_to_ptr.vmem [resolvable:$true] %s776
          %782 = dma.hbm_to_vmem [thread:$0]  %s21, 3200, %s777, [#allocation15], 64, 64, 4
        $region96: #{tpu_custom_call.1} parent=11 // pred_fallthru
          _
        // Predicated region
        $region97: #{tpu_custom_call.1} parent=11 // pred_check
          %p783 = pneg %p528
        $region98: #{tpu_custom_call.1} parent=11 // pred_check_branch
          %785 = sbr.rel (%p783) target = $region100
        $region99: #{tpu_custom_call.1} parent=11 // pred_region
          _
        $region100: #{tpu_custom_call.1} parent=11 // pred_fallthru
          _
        // Predicated region
        $region101: #{tpu_custom_call.1} parent=11 // pred_check
          %p786 = pneg %p549
        $region102: #{tpu_custom_call.1} parent=11 // pred_check_branch
          %788 = sbr.rel (%p786) target = $region104
        $region103: #{tpu_custom_call.1} parent=11 // pred_region
          _
        $region104: #{tpu_custom_call.1} parent=11 // pred_fallthru
          _
        // Predicated region
        $region105: #{tpu_custom_call.1} parent=11 // pred_check
          %p789 = pneg %p570
        $region106: #{tpu_custom_call.1} parent=11 // pred_check_branch
          %791 = sbr.rel (%p789) target = $region108
        $region107: #{tpu_custom_call.1} parent=11 // pred_region
          _
        $region108: #{tpu_custom_call.1} parent=11 // pred_fallthru
          _
        // Predicated region
        $region109: #{tpu_custom_call.1} parent=11 // pred_check
          %p792 = pneg %p591
        $region110: #{tpu_custom_call.1} parent=11 // pred_check_branch
          %794 = sbr.rel (%p792) target = $region112
        $region111: #{tpu_custom_call.1} parent=11 // pred_region
          _
        $region112: #{tpu_custom_call.1} parent=11 // pred_fallthru
          _
      $region12: #{tpu_custom_call.1} parent=5 // pred_fallthru
        _
      %p795 = scmp.lt.s32.totalorder %s40, 2
      // Predicated region
      $region113: #{tpu_custom_call.1} parent=5 // pred_check
        %p796 = pneg %p795
      $region114: #{tpu_custom_call.1} parent=5 // pred_check_branch
        %798 = sbr.rel (%p796) target = $region116
      $region115: #{tpu_custom_call.1} parent=5 // pred_region
        // Predicated region
        $region117: #{tpu_custom_call.1} parent=115 // pred_check
          %p799 = pneg %p60
        $region118: #{tpu_custom_call.1} parent=115 // pred_check_branch
          %801 = sbr.rel (%p799) target = $region120
        $region119: #{tpu_custom_call.1} parent=115 // pred_region
          %p802 = scmp.lt.s32.totalorder %s40, 1
          %s803 = scalar_select %p802, %s40, 1
          %s804 = smul.addr %s803, 4
          %s805 = smul.addr %s804, 8
          %s806 = scalar_lea.vmem %s0, %s805
        $region120: #{tpu_custom_call.1} parent=115 // pred_fallthru
          _
      $region116: #{tpu_custom_call.1} parent=5 // pred_fallthru
        _
      %p807 = scmp.le.s32.totalorder 1, %s40
      %p808 = scmp.lt.s32.totalorder %s40, 3
      %p809 = pnand %p807, %p808
      %p810 = pneg %p809
      // Predicated region
      $region121: #{tpu_custom_call.1} parent=5 // pred_check
        _
      $region122: #{tpu_custom_call.1} parent=5 // pred_check_branch
        %812 = sbr.rel (%p809) target = $region124
      $region123: #{tpu_custom_call.1} parent=5 // pred_region
        %s813 = ssub.s32 %s40, 1
        // Predicated region
        $region125: #{tpu_custom_call.1} parent=123 // pred_check
          %p814 = pneg %p87
        $region126: #{tpu_custom_call.1} parent=123 // pred_check_branch
          %816 = sbr.rel (%p814) target = $region128
        $region127: #{tpu_custom_call.1} parent=123 // pred_region
          %817 = dma.done [#allocation3], 12800
        $region128: #{tpu_custom_call.1} parent=123 // pred_fallthru
          _
        // Predicated region
        $region129: #{tpu_custom_call.1} parent=123 // pred_check
          %p818 = pneg %p129
        $region130: #{tpu_custom_call.1} parent=123 // pred_check_branch
          %820 = sbr.rel (%p818) target = $region132
        $region131: #{tpu_custom_call.1} parent=123 // pred_region
          %821 = dma.done [#allocation6], 12800
        $region132: #{tpu_custom_call.1} parent=123 // pred_fallthru
          _
        // Predicated region
        $region133: #{tpu_custom_call.1} parent=123 // pred_check
          %p822 = pneg %p150
        $region134: #{tpu_custom_call.1} parent=123 // pred_check_branch
          %824 = sbr.rel (%p822) target = $region136
        $region135: #{tpu_custom_call.1} parent=123 // pred_region
          %825 = dma.done [#allocation6], 64
        $region136: #{tpu_custom_call.1} parent=123 // pred_fallthru
          _
        // Predicated region
        $region137: #{tpu_custom_call.1} parent=123 // pred_check
          %p826 = pneg %p171
        $region138: #{tpu_custom_call.1} parent=123 // pred_check_branch
          %828 = sbr.rel (%p826) target = $region140
        $region139: #{tpu_custom_call.1} parent=123 // pred_region
          %829 = dma.done [#allocation9], 12800
        $region140: #{tpu_custom_call.1} parent=123 // pred_fallthru
          _
        // Predicated region
        $region141: #{tpu_custom_call.1} parent=123 // pred_check
          %p830 = pneg %p213
        $region142: #{tpu_custom_call.1} parent=123 // pred_check_branch
          %832 = sbr.rel (%p830) target = $region144
        $region143: #{tpu_custom_call.1} parent=123 // pred_region
          %833 = dma.done [#allocation9], 12800
        $region144: #{tpu_custom_call.1} parent=123 // pred_fallthru
          _
        // Predicated region
        $region145: #{tpu_custom_call.1} parent=123 // pred_check
          %p834 = pneg %p255
        $region146: #{tpu_custom_call.1} parent=123 // pred_check_branch
          %836 = sbr.rel (%p834) target = $region148
        $region147: #{tpu_custom_call.1} parent=123 // pred_region
          %837 = dma.done [#allocation12], 12800
        $region148: #{tpu_custom_call.1} parent=123 // pred_fallthru
          _
        // Predicated region
        $region149: #{tpu_custom_call.1} parent=123 // pred_check
          %p838 = pneg %p339
        $region150: #{tpu_custom_call.1} parent=123 // pred_check_branch
          %840 = sbr.rel (%p838) target = $region152
        $region151: #{tpu_custom_call.1} parent=123 // pred_region
          %841 = dma.done [#allocation12], 12800
        $region152: #{tpu_custom_call.1} parent=123 // pred_fallthru
          _
        // Predicated region
        $region153: #{tpu_custom_call.1} parent=123 // pred_check
          %p842 = pneg %p381
        $region154: #{tpu_custom_call.1} parent=123 // pred_check_branch
          %844 = sbr.rel (%p842) target = $region156
        $region155: #{tpu_custom_call.1} parent=123 // pred_region
          %845 = dma.done [#allocation15], 12800
        $region156: #{tpu_custom_call.1} parent=123 // pred_fallthru
          _
        // Predicated region
        $region157: #{tpu_custom_call.1} parent=123 // pred_check
          %p846 = pneg %p507
        $region158: #{tpu_custom_call.1} parent=123 // pred_check_branch
          %848 = sbr.rel (%p846) target = $region160
        $region159: #{tpu_custom_call.1} parent=123 // pred_region
          %849 = dma.done [#allocation15], 3200
        $region160: #{tpu_custom_call.1} parent=123 // pred_fallthru
          _
        %p850 = scmp.lt.s32.totalorder %s45, 1
        %s851 = scalar_select %p850, %s45, 1
        %s852 = smul.addr %s851, 4
        %s853 = smul.addr %s852, 8
        %s854 = scalar_lea.vmem %s0, %s853
        %p855 = pneg %p66
        %p856 = pneg %p63
        %p857 = pneg %p87
        %p858 = pneg %p84
        %p859 = pneg %p108
        %p860 = pneg %p105
        %p861 = pneg %p129
        %p862 = pneg %p126
        %p863 = pneg %p150
        %p864 = pneg %p147
        %p865 = pneg %p171
        %p866 = pneg %p168
        %p867 = pneg %p192
        %p868 = pneg %p189
        %p869 = pneg %p213
        %p870 = pneg %p210
        %p871 = pneg %p234
        %p872 = pneg %p231
        %p873 = pneg %p255
        %p874 = pneg %p252
        %p875 = pneg %p276
        %p876 = pneg %p273
        %p877 = pneg %p297
        %p878 = pneg %p294
        %p879 = pneg %p318
        %p880 = pneg %p315
        %p881 = pneg %p339
        %p882 = pneg %p336
        %p883 = pneg %p360
        %p884 = pneg %p357
        %p885 = pneg %p381
        %p886 = pneg %p378
        %p887 = pneg %p402
        %p888 = pneg %p399
        %p889 = pneg %p423
        %p890 = pneg %p420
        %p891 = pneg %p444
        %p892 = pneg %p441
        %p893 = pneg %p465
        %p894 = pneg %p462
        %p895 = pneg %p486
        %p896 = pneg %p483
        %p897 = pneg %p507
        %p898 = pneg %p504
        %p899 = pneg %p528
        %p900 = pneg %p525
        %p901 = pneg %p549
        %p902 = pneg %p546
        %p903 = pneg %p570
        %p904 = pneg %p567
        %p905 = pneg %p591
        %p906 = pneg %p588
        %p907 = pneg %p617
        %p908 = pneg %p614
        %s909 = sand.u32 %s604, 1
        %s910 = scalar_lea.sflag [#allocation4], %s909
        %s911 = sand.u32 %s604, 1
        %s912 = scalar_lea.vmem [#allocation17], %s911
        %p913 = scmp.lt.s32.totalorder %s45, 1
        %s914 = scalar_select %p913, %s45, 1
        %s915 = smul.addr %s914, 4
        %s916 = smul.addr %s915, 8
        %s917 = scalar_lea.vmem %s0, %s916
        %v919 = vld [vmem:[%s917] sm:$0xff]
        %v920 = vld [vmem:[%s917 + $0x8] sm:$0xff]
        %v921 = vld [vmem:[%s917 + $0x10] sm:$0xff]
        %v922 = vld [vmem:[%s917 + $0x18] sm:$0xff]
        %v923 = vpack.c.bf16 %v919, %v919
        %v924 = vpack.c.bf16 %v920, %v920
        %v925 = vpack.c.bf16 %v921, %v921
        %v926 = vpack.c.bf16 %v922, %v922
        %v927 = vld [vmem:[#allocation2] sm:$0xff]
        %v928 = vld [vmem:[#allocation2 + $0x8] sm:$0xff]
        %v929 = vld [vmem:[#allocation2 + $0x10] sm:$0xff]
        %v930 = vld [vmem:[#allocation2 + $0x18] sm:$0xff]
        %v931 = vld [vmem:[#allocation2 + $0x20] sm:$0xff]
        %v932 = vld [vmem:[#allocation2 + $0x28] sm:$0xff]
        %v933 = vld [vmem:[#allocation2 + $0x30] sm:$0xff]
        %v934 = vld [vmem:[#allocation2 + $0x38] sm:$0xff]
        %v935 = vld [vmem:[#allocation2 + $0x40] sm:$0xff]
        %v936 = vld [vmem:[#allocation2 + $0x48] sm:$0xff]
        %v937 = vld [vmem:[#allocation2 + $0x50] sm:$0xff]
        %v938 = vld [vmem:[#allocation2 + $0x58] sm:$0xff]
        %v939 = vld [vmem:[#allocation2 + $0x60] sm:$0xff]
        %v940 = vld [vmem:[#allocation2 + $0x68] sm:$0xff]
        %v941 = vld [vmem:[#allocation2 + $0x70] sm:$0xff]
        %v942 = vld [vmem:[#allocation2 + $0x78] sm:$0xff]
        %v943 = vld [vmem:[#allocation2 + $0x80] sm:$0xff]
        %v944 = vld [vmem:[#allocation2 + $0x88] sm:$0xff]
        %v945 = vld [vmem:[#allocation2 + $0x90] sm:$0xff]
        %v946 = vld [vmem:[#allocation2 + $0x98] sm:$0xff]
        %v947 = vld [vmem:[#allocation2 + $0xa0] sm:$0xff]
        %v948 = vld [vmem:[#allocation2 + $0xa8] sm:$0xff]
        %v949 = vld [vmem:[#allocation2 + $0xb0] sm:$0xff]
        %v950 = vld [vmem:[#allocation2 + $0xb8] sm:$0xff]
        %v951 = vld [vmem:[#allocation2 + $0xc0] sm:$0xff]
        %v952 = vld [vmem:[#allocation2 + $0xc8] sm:$0xff]
        %v953 = vld [vmem:[#allocation2 + $0xd0] sm:$0xff]
        %v954 = vld [vmem:[#allocation2 + $0xd8] sm:$0xff]
        %v955 = vld [vmem:[#allocation2 + $0xe0] sm:$0xff]
        %v956 = vld [vmem:[#allocation2 + $0xe8] sm:$0xff]
        %v957 = vld [vmem:[#allocation2 + $0xf0] sm:$0xff]
        %v958 = vld [vmem:[#allocation2 + $0xf8] sm:$0xff]
        %v959 = vld [vmem:[#allocation2 + $0x100] sm:$0xff]
        %v960 = vld [vmem:[#allocation2 + $0x108] sm:$0xff]
        %v961 = vld [vmem:[#allocation2 + $0x110] sm:$0xff]
        %v962 = vld [vmem:[#allocation2 + $0x118] sm:$0xff]
        %v963 = vld [vmem:[#allocation2 + $0x120] sm:$0xff]
        %v964 = vld [vmem:[#allocation2 + $0x128] sm:$0xff]
        %v965 = vld [vmem:[#allocation2 + $0x130] sm:$0xff]
        %v966 = vld [vmem:[#allocation2 + $0x138] sm:$0xff]
        %v967 = vld [vmem:[#allocation2 + $0x140] sm:$0xff]
        %v968 = vld [vmem:[#allocation2 + $0x148] sm:$0xff]
        %v969 = vld [vmem:[#allocation2 + $0x150] sm:$0xff]
        %v970 = vld [vmem:[#allocation2 + $0x158] sm:$0xff]
        %v971 = vld [vmem:[#allocation2 + $0x160] sm:$0xff]
        %v972 = vld [vmem:[#allocation2 + $0x168] sm:$0xff]
        %v973 = vld [vmem:[#allocation2 + $0x170] sm:$0xff]
        %v974 = vld [vmem:[#allocation2 + $0x178] sm:$0xff]
        %v975 = vld [vmem:[#allocation2 + $0x180] sm:$0xff]
        %v976 = vld [vmem:[#allocation2 + $0x188] sm:$0xff]
        %v977 = vld [vmem:[#allocation2 + $0x190] sm:$0xff]
        %v978 = vld [vmem:[#allocation2 + $0x198] sm:$0xff]
        %v979 = vld [vmem:[#allocation2 + $0x1a0] sm:$0xff]
        %v980 = vld [vmem:[#allocation2 + $0x1a8] sm:$0xff]
        %v981 = vld [vmem:[#allocation2 + $0x1b0] sm:$0xff]
        %v982 = vld [vmem:[#allocation2 + $0x1b8] sm:$0xff]
        %v983 = vld [vmem:[#allocation2 + $0x1c0] sm:$0xff]
        %v984 = vld [vmem:[#allocation2 + $0x1c8] sm:$0xff]
        %v985 = vld [vmem:[#allocation2 + $0x1d0] sm:$0xff]
        %v986 = vld [vmem:[#allocation2 + $0x1d8] sm:$0xff]
        %v987 = vld [vmem:[#allocation2 + $0x1e0] sm:$0xff]
        %v988 = vld [vmem:[#allocation2 + $0x1e8] sm:$0xff]
        %v989 = vld [vmem:[#allocation2 + $0x1f0] sm:$0xff]
        %v990 = vld [vmem:[#allocation2 + $0x1f8] sm:$0xff]
        %v991 = vld [vmem:[#allocation2 + $0x200] sm:$0xff]
        %v992 = vld [vmem:[#allocation2 + $0x208] sm:$0xff]
        %v993 = vld [vmem:[#allocation2 + $0x210] sm:$0xff]
        %v994 = vld [vmem:[#allocation2 + $0x218] sm:$0xff]
        %v995 = vld [vmem:[#allocation2 + $0x220] sm:$0xff]
        %v996 = vld [vmem:[#allocation2 + $0x228] sm:$0xff]
        %v997 = vld [vmem:[#allocation2 + $0x230] sm:$0xff]
        %v998 = vld [vmem:[#allocation2 + $0x238] sm:$0xff]
        %v999 = vld [vmem:[#allocation2 + $0x240] sm:$0xff]
        %v1000 = vld [vmem:[#allocation2 + $0x248] sm:$0xff]
        %v1001 = vld [vmem:[#allocation2 + $0x250] sm:$0xff]
        %v1002 = vld [vmem:[#allocation2 + $0x258] sm:$0xff]
        %v1003 = vld [vmem:[#allocation2 + $0x260] sm:$0xff]
        %v1004 = vld [vmem:[#allocation2 + $0x268] sm:$0xff]
        %v1005 = vld [vmem:[#allocation2 + $0x270] sm:$0xff]
        %v1006 = vld [vmem:[#allocation2 + $0x278] sm:$0xff]
        %v1007 = vld [vmem:[#allocation2 + $0x280] sm:$0xff]
        %v1008 = vld [vmem:[#allocation2 + $0x288] sm:$0xff]
        %v1009 = vld [vmem:[#allocation2 + $0x290] sm:$0xff]
        %v1010 = vld [vmem:[#allocation2 + $0x298] sm:$0xff]
        %v1011 = vld [vmem:[#allocation2 + $0x2a0] sm:$0xff]
        %v1012 = vld [vmem:[#allocation2 + $0x2a8] sm:$0xff]
        %v1013 = vld [vmem:[#allocation2 + $0x2b0] sm:$0xff]
        %v1014 = vld [vmem:[#allocation2 + $0x2b8] sm:$0xff]
        %v1015 = vld [vmem:[#allocation2 + $0x2c0] sm:$0xff]
        %v1016 = vld [vmem:[#allocation2 + $0x2c8] sm:$0xff]
        %v1017 = vld [vmem:[#allocation2 + $0x2d0] sm:$0xff]
        %v1018 = vld [vmem:[#allocation2 + $0x2d8] sm:$0xff]
        %v1019 = vld [vmem:[#allocation2 + $0x2e0] sm:$0xff]
        %v1020 = vld [vmem:[#allocation2 + $0x2e8] sm:$0xff]
        %v1021 = vld [vmem:[#allocation2 + $0x2f0] sm:$0xff]
        %v1022 = vld [vmem:[#allocation2 + $0x2f8] sm:$0xff]
        %v1023 = vld [vmem:[#allocation2 + $0x300] sm:$0xff]
        %v1024 = vld [vmem:[#allocation2 + $0x308] sm:$0xff]
        %v1025 = vld [vmem:[#allocation2 + $0x310] sm:$0xff]
        %v1026 = vld [vmem:[#allocation2 + $0x318] sm:$0xff]
        %v1027 = vld [vmem:[%s2] sm:$0xf]
        %v1029 = vlaneseq
        %v1030 = vshrl.u32 %v1029, 7
        %v1031 = vsub.s32 0, %v1030
        %v1032 = vrot.slane %v1027, %v1031
        %v1033 = vlaneseq
        %v1034 = vshrl.u32 %v1033, 7
        %v1035 = vsub.s32 1, %v1034
        %v1036 = vrot.slane %v1027, %v1035
        %v1037 = vlaneseq
        %v1038 = vshrl.u32 %v1037, 7
        %v1039 = vsub.s32 2, %v1038
        %v1040 = vrot.slane %v1027, %v1039
        %v1041 = vlaneseq
        %v1042 = vshrl.u32 %v1041, 7
        %v1043 = vsub.s32 3, %v1042
        %v1044 = vrot.slane %v1027, %v1043
        %v1149 = vunpack.c.l.b16 %v927
        %v1150 = vunpack.c.h.b16 %v927
        %v1151 = vunpack.c.l.b16 %v928
        %v1152 = vunpack.c.h.b16 %v928
        %v1153 = vunpack.c.l.b16 %v929
        %v1154 = vunpack.c.h.b16 %v929
        %v1155 = vunpack.c.l.b16 %v930
        %v1156 = vunpack.c.h.b16 %v930
        %v1157 = vunpack.c.l.b16 %v931
        %v1158 = vunpack.c.h.b16 %v931
        %v1159 = vunpack.c.l.b16 %v932
        %v1160 = vunpack.c.h.b16 %v932
        %v1161 = vunpack.c.l.b16 %v933
        %v1162 = vunpack.c.h.b16 %v933
        %v1163 = vunpack.c.l.b16 %v934
        %v1164 = vunpack.c.h.b16 %v934
        %v1165 = vunpack.c.l.b16 %v935
        %v1166 = vunpack.c.h.b16 %v935
        %v1167 = vunpack.c.l.b16 %v936
        %v1168 = vunpack.c.h.b16 %v936
        %v1169 = vunpack.c.l.b16 %v937
        %v1170 = vunpack.c.h.b16 %v937
        %v1171 = vunpack.c.l.b16 %v938
        %v1172 = vunpack.c.h.b16 %v938
        %v1173 = vunpack.c.l.b16 %v939
        %v1174 = vunpack.c.h.b16 %v939
        %v1175 = vunpack.c.l.b16 %v940
        %v1176 = vunpack.c.h.b16 %v940
        %v1177 = vunpack.c.l.b16 %v941
        %v1178 = vunpack.c.h.b16 %v941
        %v1179 = vunpack.c.l.b16 %v942
        %v1180 = vunpack.c.h.b16 %v942
        %v1181 = vunpack.c.l.b16 %v943
        %v1182 = vunpack.c.h.b16 %v943
        %v1183 = vunpack.c.l.b16 %v944
        %v1184 = vunpack.c.h.b16 %v944
        %v1185 = vunpack.c.l.b16 %v945
        %v1186 = vunpack.c.h.b16 %v945
        %v1187 = vunpack.c.l.b16 %v946
        %v1188 = vunpack.c.h.b16 %v946
        %v1189 = vunpack.c.l.b16 %v947
        %v1190 = vunpack.c.h.b16 %v947
        %v1191 = vunpack.c.l.b16 %v948
        %v1192 = vunpack.c.h.b16 %v948
        %v1193 = vunpack.c.l.b16 %v949
        %v1194 = vunpack.c.h.b16 %v949
        %v1195 = vunpack.c.l.b16 %v950
        %v1196 = vunpack.c.h.b16 %v950
        %v1197 = vunpack.c.l.b16 %v951
        %v1198 = vunpack.c.h.b16 %v951
        %v1199 = vunpack.c.l.b16 %v952
        %v1200 = vunpack.c.h.b16 %v952
        %v1201 = vunpack.c.l.b16 %v953
        %v1202 = vunpack.c.h.b16 %v953
        %v1203 = vunpack.c.l.b16 %v954
        %v1204 = vunpack.c.h.b16 %v954
        %v1205 = vunpack.c.l.b16 %v955
        %v1206 = vunpack.c.h.b16 %v955
        %v1207 = vunpack.c.l.b16 %v956
        %v1208 = vunpack.c.h.b16 %v956
        %v1209 = vunpack.c.l.b16 %v957
        %v1210 = vunpack.c.h.b16 %v957
        %v1211 = vunpack.c.l.b16 %v958
        %v1212 = vunpack.c.h.b16 %v958
        %v1213 = vunpack.c.l.b16 %v959
        %v1214 = vunpack.c.h.b16 %v959
        %v1215 = vunpack.c.l.b16 %v960
        %v1216 = vunpack.c.h.b16 %v960
        %v1217 = vunpack.c.l.b16 %v961
        %v1218 = vunpack.c.h.b16 %v961
        %v1219 = vunpack.c.l.b16 %v962
        %v1220 = vunpack.c.h.b16 %v962
        %v1221 = vunpack.c.l.b16 %v963
        %v1222 = vunpack.c.h.b16 %v963
        %v1223 = vunpack.c.l.b16 %v964
        %v1224 = vunpack.c.h.b16 %v964
        %v1225 = vunpack.c.l.b16 %v965
        %v1226 = vunpack.c.h.b16 %v965
        %v1227 = vunpack.c.l.b16 %v966
        %v1228 = vunpack.c.h.b16 %v966
        %v1229 = vunpack.c.l.b16 %v967
        %v1230 = vunpack.c.h.b16 %v967
        %v1231 = vunpack.c.l.b16 %v968
        %v1232 = vunpack.c.h.b16 %v968
        %v1233 = vunpack.c.l.b16 %v969
        %v1234 = vunpack.c.h.b16 %v969
        %v1235 = vunpack.c.l.b16 %v970
        %v1236 = vunpack.c.h.b16 %v970
        %v1237 = vunpack.c.l.b16 %v971
        %v1238 = vunpack.c.h.b16 %v971
        %v1239 = vunpack.c.l.b16 %v972
        %v1240 = vunpack.c.h.b16 %v972
        %v1241 = vunpack.c.l.b16 %v973
        %v1242 = vunpack.c.h.b16 %v973
        %v1243 = vunpack.c.l.b16 %v974
        %v1244 = vunpack.c.h.b16 %v974
        %v1245 = vunpack.c.l.b16 %v975
        %v1246 = vunpack.c.h.b16 %v975
        %v1247 = vunpack.c.l.b16 %v976
        %v1248 = vunpack.c.h.b16 %v976
        %v1249 = vunpack.c.l.b16 %v977
        %v1250 = vunpack.c.h.b16 %v977
        %v1251 = vunpack.c.l.b16 %v978
        %v1252 = vunpack.c.h.b16 %v978
        %v1253 = vunpack.c.l.b16 %v979
        %v1254 = vunpack.c.h.b16 %v979
        %v1255 = vunpack.c.l.b16 %v980
        %v1256 = vunpack.c.h.b16 %v980
        %v1257 = vunpack.c.l.b16 %v981
        %v1258 = vunpack.c.h.b16 %v981
        %v1259 = vunpack.c.l.b16 %v982
        %v1260 = vunpack.c.h.b16 %v982
        %v1261 = vunpack.c.l.b16 %v983
        %v1262 = vunpack.c.h.b16 %v983
        %v1263 = vunpack.c.l.b16 %v984
        %v1264 = vunpack.c.h.b16 %v984
        %v1265 = vunpack.c.l.b16 %v985
        %v1266 = vunpack.c.h.b16 %v985
        %v1267 = vunpack.c.l.b16 %v986
        %v1268 = vunpack.c.h.b16 %v986
        %v1269 = vunpack.c.l.b16 %v987
        %v1270 = vunpack.c.h.b16 %v987
        %v1271 = vunpack.c.l.b16 %v988
        %v1272 = vunpack.c.h.b16 %v988
        %v1273 = vunpack.c.l.b16 %v989
        %v1274 = vunpack.c.h.b16 %v989
        %v1275 = vunpack.c.l.b16 %v990
        %v1276 = vunpack.c.h.b16 %v990
        %v1277 = vunpack.c.l.b16 %v991
        %v1278 = vunpack.c.h.b16 %v991
        %v1279 = vunpack.c.l.b16 %v992
        %v1280 = vunpack.c.h.b16 %v992
        %v1281 = vunpack.c.l.b16 %v993
        %v1282 = vunpack.c.h.b16 %v993
        %v1283 = vunpack.c.l.b16 %v994
        %v1284 = vunpack.c.h.b16 %v994
        %v1285 = vunpack.c.l.b16 %v995
        %v1286 = vunpack.c.h.b16 %v995
        %v1287 = vunpack.c.l.b16 %v996
        %v1288 = vunpack.c.h.b16 %v996
        %v1289 = vunpack.c.l.b16 %v997
        %v1290 = vunpack.c.h.b16 %v997
        %v1291 = vunpack.c.l.b16 %v998
        %v1292 = vunpack.c.h.b16 %v998
        %v1293 = vunpack.c.l.b16 %v999
        %v1294 = vunpack.c.h.b16 %v999
        %v1295 = vunpack.c.l.b16 %v1000
        %v1296 = vunpack.c.h.b16 %v1000
        %v1297 = vunpack.c.l.b16 %v1001
        %v1298 = vunpack.c.h.b16 %v1001
        %v1299 = vunpack.c.l.b16 %v1002
        %v1300 = vunpack.c.h.b16 %v1002
        %v1301 = vunpack.c.l.b16 %v1003
        %v1302 = vunpack.c.h.b16 %v1003
        %v1303 = vunpack.c.l.b16 %v1004
        %v1304 = vunpack.c.h.b16 %v1004
        %v1305 = vunpack.c.l.b16 %v1005
        %v1306 = vunpack.c.h.b16 %v1005
        %v1307 = vunpack.c.l.b16 %v1006
        %v1308 = vunpack.c.h.b16 %v1006
        %v1309 = vunpack.c.l.b16 %v1007
        %v1310 = vunpack.c.h.b16 %v1007
        %v1311 = vunpack.c.l.b16 %v1008
        %v1312 = vunpack.c.h.b16 %v1008
        %v1313 = vunpack.c.l.b16 %v1009
        %v1314 = vunpack.c.h.b16 %v1009
        %v1315 = vunpack.c.l.b16 %v1010
        %v1316 = vunpack.c.h.b16 %v1010
        %v1317 = vunpack.c.l.b16 %v1011
        %v1318 = vunpack.c.h.b16 %v1011
        %v1319 = vunpack.c.l.b16 %v1012
        %v1320 = vunpack.c.h.b16 %v1012
        %v1321 = vunpack.c.l.b16 %v1013
        %v1322 = vunpack.c.h.b16 %v1013
        %v1323 = vunpack.c.l.b16 %v1014
        %v1324 = vunpack.c.h.b16 %v1014
        %v1325 = vunpack.c.l.b16 %v1015
        %v1326 = vunpack.c.h.b16 %v1015
        %v1327 = vunpack.c.l.b16 %v1016
        %v1328 = vunpack.c.h.b16 %v1016
        %v1329 = vunpack.c.l.b16 %v1017
        %v1330 = vunpack.c.h.b16 %v1017
        %v1331 = vunpack.c.l.b16 %v1018
        %v1332 = vunpack.c.h.b16 %v1018
        %v1333 = vunpack.c.l.b16 %v1019
        %v1334 = vunpack.c.h.b16 %v1019
        %v1335 = vunpack.c.l.b16 %v1020
        %v1336 = vunpack.c.h.b16 %v1020
        %v1337 = vunpack.c.l.b16 %v1021
        %v1338 = vunpack.c.h.b16 %v1021
        %v1339 = vunpack.c.l.b16 %v1022
        %v1340 = vunpack.c.h.b16 %v1022
        %v1341 = vunpack.c.l.b16 %v1023
        %v1342 = vunpack.c.h.b16 %v1023
        %v1343 = vunpack.c.l.b16 %v1024
        %v1344 = vunpack.c.h.b16 %v1024
        %v1345 = vunpack.c.l.b16 %v1025
        %v1346 = vunpack.c.h.b16 %v1025
        %v1347 = vunpack.c.l.b16 %v1026
        %v1348 = vunpack.c.h.b16 %v1026
        %v1349 = vpack.c.b16 %v1153, %v1149
        %v1350 = vpack.c.b16 %v1154, %v1150
        %v1351 = vpack.c.b16 %v1155, %v1151
        %v1352 = vpack.c.b16 %v1156, %v1152
        %v1353 = vpack.c.b16 %v1161, %v1157
        %v1354 = vpack.c.b16 %v1162, %v1158
        %v1355 = vpack.c.b16 %v1163, %v1159
        %v1356 = vpack.c.b16 %v1164, %v1160
        %v1357 = vpack.c.b16 %v1169, %v1165
        %v1358 = vpack.c.b16 %v1170, %v1166
        %v1359 = vpack.c.b16 %v1171, %v1167
        %v1360 = vpack.c.b16 %v1172, %v1168
        %v1361 = vpack.c.b16 %v1177, %v1173
        %v1362 = vpack.c.b16 %v1178, %v1174
        %v1363 = vpack.c.b16 %v1179, %v1175
        %v1364 = vpack.c.b16 %v1180, %v1176
        %v1365 = vpack.c.b16 %v1185, %v1181
        %v1366 = vpack.c.b16 %v1186, %v1182
        %v1367 = vpack.c.b16 %v1187, %v1183
        %v1368 = vpack.c.b16 %v1188, %v1184
        %v1369 = vpack.c.b16 %v1193, %v1189
        %v1370 = vpack.c.b16 %v1194, %v1190
        %v1371 = vpack.c.b16 %v1195, %v1191
        %v1372 = vpack.c.b16 %v1196, %v1192
        %v1373 = vpack.c.b16 %v1201, %v1197
        %v1374 = vpack.c.b16 %v1202, %v1198
        %v1375 = vpack.c.b16 %v1203, %v1199
        %v1376 = vpack.c.b16 %v1204, %v1200
        %v1377 = vpack.c.b16 %v1209, %v1205
        %v1378 = vpack.c.b16 %v1210, %v1206
        %v1379 = vpack.c.b16 %v1211, %v1207
        %v1380 = vpack.c.b16 %v1212, %v1208
        %v1381 = vpack.c.b16 %v1217, %v1213
        %v1382 = vpack.c.b16 %v1218, %v1214
        %v1383 = vpack.c.b16 %v1219, %v1215
        %v1384 = vpack.c.b16 %v1220, %v1216
        %v1385 = vpack.c.b16 %v1225, %v1221
        %v1386 = vpack.c.b16 %v1226, %v1222
        %v1387 = vpack.c.b16 %v1227, %v1223
        %v1388 = vpack.c.b16 %v1228, %v1224
        %v1389 = vpack.c.b16 %v1233, %v1229
        %v1390 = vpack.c.b16 %v1234, %v1230
        %v1391 = vpack.c.b16 %v1235, %v1231
        %v1392 = vpack.c.b16 %v1236, %v1232
        %v1393 = vpack.c.b16 %v1241, %v1237
        %v1394 = vpack.c.b16 %v1242, %v1238
        %v1395 = vpack.c.b16 %v1243, %v1239
        %v1396 = vpack.c.b16 %v1244, %v1240
        %v1397 = vpack.c.b16 %v1249, %v1245
        %v1398 = vpack.c.b16 %v1250, %v1246
        %v1399 = vpack.c.b16 %v1251, %v1247
        %v1400 = vpack.c.b16 %v1252, %v1248
        %v1401 = vpack.c.b16 %v1257, %v1253
        %v1402 = vpack.c.b16 %v1258, %v1254
        %v1403 = vpack.c.b16 %v1259, %v1255
        %v1404 = vpack.c.b16 %v1260, %v1256
        %v1405 = vpack.c.b16 %v1265, %v1261
        %v1406 = vpack.c.b16 %v1266, %v1262
        %v1407 = vpack.c.b16 %v1267, %v1263
        %v1408 = vpack.c.b16 %v1268, %v1264
        %v1409 = vpack.c.b16 %v1273, %v1269
        %v1410 = vpack.c.b16 %v1274, %v1270
        %v1411 = vpack.c.b16 %v1275, %v1271
        %v1412 = vpack.c.b16 %v1276, %v1272
        %v1413 = vpack.c.b16 %v1281, %v1277
        %v1414 = vpack.c.b16 %v1282, %v1278
        %v1415 = vpack.c.b16 %v1283, %v1279
        %v1416 = vpack.c.b16 %v1284, %v1280
        %v1417 = vpack.c.b16 %v1289, %v1285
        %v1418 = vpack.c.b16 %v1290, %v1286
        %v1419 = vpack.c.b16 %v1291, %v1287
        %v1420 = vpack.c.b16 %v1292, %v1288
        %v1421 = vpack.c.b16 %v1297, %v1293
        %v1422 = vpack.c.b16 %v1298, %v1294
        %v1423 = vpack.c.b16 %v1299, %v1295
        %v1424 = vpack.c.b16 %v1300, %v1296
        %v1425 = vpack.c.b16 %v1305, %v1301
        %v1426 = vpack.c.b16 %v1306, %v1302
        %v1427 = vpack.c.b16 %v1307, %v1303
        %v1428 = vpack.c.b16 %v1308, %v1304
        %v1429 = vpack.c.b16 %v1313, %v1309
        %v1430 = vpack.c.b16 %v1314, %v1310
        %v1431 = vpack.c.b16 %v1315, %v1311
        %v1432 = vpack.c.b16 %v1316, %v1312
        %v1433 = vpack.c.b16 %v1321, %v1317
        %v1434 = vpack.c.b16 %v1322, %v1318
        %v1435 = vpack.c.b16 %v1323, %v1319
        %v1436 = vpack.c.b16 %v1324, %v1320
        %v1437 = vpack.c.b16 %v1329, %v1325
        %v1438 = vpack.c.b16 %v1330, %v1326
        %v1439 = vpack.c.b16 %v1331, %v1327
        %v1440 = vpack.c.b16 %v1332, %v1328
        %v1441 = vpack.c.b16 %v1337, %v1333
        %v1442 = vpack.c.b16 %v1338, %v1334
        %v1443 = vpack.c.b16 %v1339, %v1335
        %v1444 = vpack.c.b16 %v1340, %v1336
        %v1445 = vpack.c.b16 %v1345, %v1341
        %v1446 = vpack.c.b16 %v1346, %v1342
        %v1447 = vpack.c.b16 %v1347, %v1343
        %v1448 = vpack.c.b16 %v1348, %v1344
        %vm1549 = vcmask 130048
        %v1551 = vsel %vm1549, %v926, 0
        %1553 = vmatprep.subr.bf16.mxu0 %v1350
        %1554 = vmatpush1.bf16.msra.mxu0 %v1349
        %1555 = vmatprep.subr.bf16.mxu0 %v1354
        %1556 = vmatpush1.bf16.msra.mxu0 %v1353
        %1557 = vmatprep.subr.bf16.mxu0 %v1358
        %1558 = vmatpush1.bf16.msra.mxu0 %v1357
        %1559 = vmatprep.subr.bf16.mxu0 %v1362
        %1560 = vmatpush1.bf16.msra.mxu0 %v1361
        %1561 = vmatprep.subr.bf16.mxu0 %v1366
        %1562 = vmatpush1.bf16.msra.mxu0 %v1365
        %1563 = vmatprep.subr.bf16.mxu0 %v1370
        %1564 = vmatpush1.bf16.msra.mxu0 %v1369
        %1565 = vmatprep.subr.bf16.mxu0 %v1374
        %1566 = vmatpush1.bf16.msra.mxu0 %v1373
        %1567 = vmatprep.subr.bf16.mxu0 %v1378
        %1568 = vmatpush1.bf16.msra.mxu0 %v1377
        %1569 = vmatprep.subr.bf16.mxu0 %v1382
        %1570 = vmatpush1.bf16.msra.mxu0 %v1381
        %1571 = vmatprep.subr.bf16.mxu0 %v1386
        %1572 = vmatpush1.bf16.msra.mxu0 %v1385
        %1573 = vmatprep.subr.bf16.mxu0 %v1390
        %1574 = vmatpush1.bf16.msra.mxu0 %v1389
        %1575 = vmatprep.subr.bf16.mxu0 %v1394
        %1576 = vmatpush1.bf16.msra.mxu0 %v1393
        %1577 = vmatprep.subr.bf16.mxu0 %v1398
        %1578 = vmatpush1.bf16.msra.mxu0 %v1397
        %1579 = vmatprep.subr.bf16.mxu0 %v1402
        %1580 = vmatpush1.bf16.msra.mxu0 %v1401
        %1581 = vmatprep.subr.bf16.mxu0 %v1406
        %1582 = vmatpush1.bf16.msra.mxu0 %v1405
        %1583 = vmatprep.subr.bf16.mxu0 %v1410
        %1584 = vmatpush1.bf16.msra.mxu0 %v1409
        %1585 = vmatprep.mubr.bf16.mxu0 %v924
        %1586 = vmatmul.mubr.bf16.gmra.mrb[0].mxu0 %v923
        %v1587 = vpop.f32.mrb[0].mxu0
        %v1588 = vadd.f32 %v1032, %v1587
        %v1589 = vpop.f32.mrb[0].mxu0
        %v1590 = vadd.f32 %v1036, %v1589
        %v1591 = vpop.f32.mrb[0].mxu0
        %v1592 = vpop.f32.mrb[0].mxu0
        %1593 = vdwg.mxu0
        %1594 = vmatprep.subr.bf16.mxu0 %v1414
        %1595 = vmatpush1.bf16.msra.mxu0 %v1413
        %1596 = vmatprep.subr.bf16.mxu0 %v1418
        %1597 = vmatpush1.bf16.msra.mxu0 %v1417
        %1598 = vmatprep.subr.bf16.mxu0 %v1422
        %1599 = vmatpush1.bf16.msra.mxu0 %v1421
        %1600 = vmatprep.subr.bf16.mxu0 %v1426
        %1601 = vmatpush1.bf16.msra.mxu0 %v1425
        %1602 = vmatprep.subr.bf16.mxu0 %v1430
        %1603 = vmatpush1.bf16.msra.mxu0 %v1429
        %1604 = vmatprep.subr.bf16.mxu0 %v1434
        %1605 = vmatpush1.bf16.msra.mxu0 %v1433
        %1606 = vmatprep.subr.bf16.mxu0 %v1438
        %1607 = vmatpush1.bf16.msra.mxu0 %v1437
        %1608 = vmatprep.subr.bf16.mxu0 %v1442
        %1609 = vmatpush1.bf16.msra.mxu0 %v1441
        %1610 = vmatprep.subr.bf16.mxu0 %v1446
        %1611 = vmatpush1.bf16.msra.mxu0 %v1445
        %1612 = vmatprep.subr.bf16.mxu0 0
        %1613 = vmatpush1.bf16.msra.mxu0 0
        %1614 = vmatprep.subr.bf16.mxu0 0
        %1615 = vmatpush1.bf16.msra.mxu0 0
        %1616 = vmatprep.subr.bf16.mxu0 0
        %1617 = vmatpush1.bf16.msra.mxu0 0
        %1618 = vmatprep.subr.bf16.mxu0 0
        %1619 = vmatpush1.bf16.msra.mxu0 0
        %1620 = vmatprep.subr.bf16.mxu0 0
        %1621 = vmatpush1.bf16.msra.mxu0 0
        %1622 = vmatprep.subr.bf16.mxu0 0
        %1623 = vmatpush1.bf16.msra.mxu0 0
        %1624 = vmatprep.subr.bf16.mxu0 0
        %1625 = vmatpush1.bf16.msra.mxu0 0
        %1626 = vmatprep.mubr.bf16.mxu0 %v1551
        %1627 = vmatmul.mubr.bf16.gmra.mrb[0].mxu0 %v925
        %v1628 = vpop.f32.mrb[0].mxu0
        %v1629 = vadd.f32 %v1588, %v1628
        %v1630 = vpop.f32.mrb[0].mxu0
        %v1631 = vadd.f32 %v1590, %v1630
        %v1632 = vpop.f32.mrb[0].mxu0
        %v1633 = vpop.f32.mrb[0].mxu0
        %1634 = vdwg.mxu0
        %1635 = vmatprep.subr.bf16.mxu0 %v1352
        %1636 = vmatpush1.bf16.msra.mxu0 %v1351
        %1637 = vmatprep.subr.bf16.mxu0 %v1356
        %1638 = vmatpush1.bf16.msra.mxu0 %v1355
        %1639 = vmatprep.subr.bf16.mxu0 %v1360
        %1640 = vmatpush1.bf16.msra.mxu0 %v1359
        %1641 = vmatprep.subr.bf16.mxu0 %v1364
        %1642 = vmatpush1.bf16.msra.mxu0 %v1363
        %1643 = vmatprep.subr.bf16.mxu0 %v1368
        %1644 = vmatpush1.bf16.msra.mxu0 %v1367
        %1645 = vmatprep.subr.bf16.mxu0 %v1372
        %1646 = vmatpush1.bf16.msra.mxu0 %v1371
        %1647 = vmatprep.subr.bf16.mxu0 %v1376
        %1648 = vmatpush1.bf16.msra.mxu0 %v1375
        %1649 = vmatprep.subr.bf16.mxu0 %v1380
        %1650 = vmatpush1.bf16.msra.mxu0 %v1379
        %1651 = vmatprep.subr.bf16.mxu0 %v1384
        %1652 = vmatpush1.bf16.msra.mxu0 %v1383
        %1653 = vmatprep.subr.bf16.mxu0 %v1388
        %1654 = vmatpush1.bf16.msra.mxu0 %v1387
        %1655 = vmatprep.subr.bf16.mxu0 %v1392
        %1656 = vmatpush1.bf16.msra.mxu0 %v1391
        %1657 = vmatprep.subr.bf16.mxu0 %v1396
        %1658 = vmatpush1.bf16.msra.mxu0 %v1395
        %1659 = vmatprep.subr.bf16.mxu0 %v1400
        %1660 = vmatpush1.bf16.msra.mxu0 %v1399
        %1661 = vmatprep.subr.bf16.mxu0 %v1404
        %1662 = vmatpush1.bf16.msra.mxu0 %v1403
        %1663 = vmatprep.subr.bf16.mxu0 %v1408
        %1664 = vmatpush1.bf16.msra.mxu0 %v1407
        %1665 = vmatprep.subr.bf16.mxu0 %v1412
        %1666 = vmatpush1.bf16.msra.mxu0 %v1411
        %1667 = vmatprep.mubr.bf16.mxu0 %v924
        %1668 = vmatmul.mubr.bf16.gmra.mrb[0].mxu0 %v923
        %v1669 = vpop.f32.mrb[0].mxu0
        %v1670 = vadd.f32 %v1040, %v1669
        %v1671 = vpop.f32.mrb[0].mxu0
        %v1672 = vadd.f32 %v1044, %v1671
        %v1673 = vpop.f32.mrb[0].mxu0
        %v1674 = vpop.f32.mrb[0].mxu0
        %1675 = vdwg.mxu0
        %1676 = vmatprep.subr.bf16.mxu0 %v1416
        %1677 = vmatpush1.bf16.msra.mxu0 %v1415
        %1678 = vmatprep.subr.bf16.mxu0 %v1420
        %1679 = vmatpush1.bf16.msra.mxu0 %v1419
        %1680 = vmatprep.subr.bf16.mxu0 %v1424
        %1681 = vmatpush1.bf16.msra.mxu0 %v1423
        %1682 = vmatprep.subr.bf16.mxu0 %v1428
        %1683 = vmatpush1.bf16.msra.mxu0 %v1427
        %1684 = vmatprep.subr.bf16.mxu0 %v1432
        %1685 = vmatpush1.bf16.msra.mxu0 %v1431
        %1686 = vmatprep.subr.bf16.mxu0 %v1436
        %1687 = vmatpush1.bf16.msra.mxu0 %v1435
        %1688 = vmatprep.subr.bf16.mxu0 %v1440
        %1689 = vmatpush1.bf16.msra.mxu0 %v1439
        %1690 = vmatprep.subr.bf16.mxu0 %v1444
        %1691 = vmatpush1.bf16.msra.mxu0 %v1443
        %1692 = vmatprep.subr.bf16.mxu0 %v1448
        %1693 = vmatpush1.bf16.msra.mxu0 %v1447
        %1694 = vmatprep.subr.bf16.mxu0 0
        %1695 = vmatpush1.bf16.msra.mxu0 0
        %1696 = vmatprep.subr.bf16.mxu0 0
        %1697 = vmatpush1.bf16.msra.mxu0 0
        %1698 = vmatprep.subr.bf16.mxu0 0
        %1699 = vmatpush1.bf16.msra.mxu0 0
        %1700 = vmatprep.subr.bf16.mxu0 0
        %1701 = vmatpush1.bf16.msra.mxu0 0
        %1702 = vmatprep.subr.bf16.mxu0 0
        %1703 = vmatpush1.bf16.msra.mxu0 0
        %1704 = vmatprep.subr.bf16.mxu0 0
        %1705 = vmatpush1.bf16.msra.mxu0 0
        %1706 = vmatprep.subr.bf16.mxu0 0
        %1707 = vmatpush1.bf16.msra.mxu0 0
        %1708 = vmatprep.mubr.bf16.mxu0 %v1551
        %1709 = vmatmul.mubr.bf16.gmra.mrb[0].mxu0 %v925
        %v1710 = vpop.f32.mrb[0].mxu0
        %v1711 = vadd.f32 %v1670, %v1710
        %v1712 = vpop.f32.mrb[0].mxu0
        %v1713 = vadd.f32 %v1672, %v1712
        %v1714 = vpop.f32.mrb[0].mxu0
        %v1715 = vpop.f32.mrb[0].mxu0
        %1716 = vdwg.mxu0
        %v1717 = vmax.f32 %v1629, 0.0
        %v1718 = vmax.f32 %v1631, 0.0
        %v1719 = vmax.f32 %v1711, 0.0
        %v1720 = vmax.f32 %v1713, 0.0
        %v1721 = vpack.c.bf16 %v1717, %v1717
        %v1722 = vpack.c.bf16 %v1718, %v1718
        %v1723 = vpack.c.bf16 %v1719, %v1719
        %v1724 = vpack.c.bf16 %v1720, %v1720
        %v1725 = vld [vmem:[#allocation5] sm:$0xff]
        %v1726 = vld [vmem:[#allocation5 + $0x8] sm:$0xff]
        %v1727 = vld [vmem:[#allocation5 + $0x10] sm:$0xff]
        %v1728 = vld [vmem:[#allocation5 + $0x18] sm:$0xff]
        %v1729 = vld [vmem:[#allocation5 + $0x20] sm:$0xff]
        %v1730 = vld [vmem:[#allocation5 + $0x28] sm:$0xff]
        %v1731 = vld [vmem:[#allocation5 + $0x30] sm:$0xff]
        %v1732 = vld [vmem:[#allocation5 + $0x38] sm:$0xff]
        %v1733 = vld [vmem:[#allocation5 + $0x40] sm:$0xff]
        %v1734 = vld [vmem:[#allocation5 + $0x48] sm:$0xff]
        %v1735 = vld [vmem:[#allocation5 + $0x50] sm:$0xff]
        %v1736 = vld [vmem:[#allocation5 + $0x58] sm:$0xff]
        %v1737 = vld [vmem:[#allocation5 + $0x60] sm:$0xff]
        %v1738 = vld [vmem:[#allocation5 + $0x68] sm:$0xff]
        %v1739 = vld [vmem:[#allocation5 + $0x70] sm:$0xff]
        %v1740 = vld [vmem:[#allocation5 + $0x78] sm:$0xff]
        %v1741 = vld [vmem:[#allocation5 + $0x80] sm:$0xff]
        %v1742 = vld [vmem:[#allocation5 + $0x88] sm:$0xff]
        %v1743 = vld [vmem:[#allocation5 + $0x90] sm:$0xff]
        %v1744 = vld [vmem:[#allocation5 + $0x98] sm:$0xff]
        %v1745 = vld [vmem:[#allocation5 + $0xa0] sm:$0xff]
        %v1746 = vld [vmem:[#allocation5 + $0xa8] sm:$0xff]
        %v1747 = vld [vmem:[#allocation5 + $0xb0] sm:$0xff]
        %v1748 = vld [vmem:[#allocation5 + $0xb8] sm:$0xff]
        %v1749 = vld [vmem:[#allocation5 + $0xc0] sm:$0xff]
        %v1750 = vld [vmem:[#allocation5 + $0xc8] sm:$0xff]
        %v1751 = vld [vmem:[#allocation5 + $0xd0] sm:$0xff]
        %v1752 = vld [vmem:[#allocation5 + $0xd8] sm:$0xff]
        %v1753 = vld [vmem:[#allocation5 + $0xe0] sm:$0xff]
        %v1754 = vld [vmem:[#allocation5 + $0xe8] sm:$0xff]
        %v1755 = vld [vmem:[#allocation5 + $0xf0] sm:$0xff]
        %v1756 = vld [vmem:[#allocation5 + $0xf8] sm:$0xff]
        %v1757 = vld [vmem:[#allocation5 + $0x100] sm:$0xff]
        %v1758 = vld [vmem:[#allocation5 + $0x108] sm:$0xff]
        %v1759 = vld [vmem:[#allocation5 + $0x110] sm:$0xff]
        %v1760 = vld [vmem:[#allocation5 + $0x118] sm:$0xff]
        %v1761 = vld [vmem:[#allocation5 + $0x120] sm:$0xff]
        %v1762 = vld [vmem:[#allocation5 + $0x128] sm:$0xff]
        %v1763 = vld [vmem:[#allocation5 + $0x130] sm:$0xff]
        %v1764 = vld [vmem:[#allocation5 + $0x138] sm:$0xff]
        %v1765 = vld [vmem:[#allocation5 + $0x140] sm:$0xff]
        %v1766 = vld [vmem:[#allocation5 + $0x148] sm:$0xff]
        %v1767 = vld [vmem:[#allocation5 + $0x150] sm:$0xff]
        %v1768 = vld [vmem:[#allocation5 + $0x158] sm:$0xff]
        %v1769 = vld [vmem:[#allocation5 + $0x160] sm:$0xff]
        %v1770 = vld [vmem:[#allocation5 + $0x168] sm:$0xff]
        %v1771 = vld [vmem:[#allocation5 + $0x170] sm:$0xff]
        %v1772 = vld [vmem:[#allocation5 + $0x178] sm:$0xff]
        %v1773 = vld [vmem:[#allocation5 + $0x180] sm:$0xff]
        %v1774 = vld [vmem:[#allocation5 + $0x188] sm:$0xff]
        %v1775 = vld [vmem:[#allocation5 + $0x190] sm:$0xff]
        %v1776 = vld [vmem:[#allocation5 + $0x198] sm:$0xff]
        %v1777 = vld [vmem:[#allocation5 + $0x1a0] sm:$0xff]
        %v1778 = vld [vmem:[#allocation5 + $0x1a8] sm:$0xff]
        %v1779 = vld [vmem:[#allocation5 + $0x1b0] sm:$0xff]
        %v1780 = vld [vmem:[#allocation5 + $0x1b8] sm:$0xff]
        %v1781 = vld [vmem:[#allocation5 + $0x1c0] sm:$0xff]
        %v1782 = vld [vmem:[#allocation5 + $0x1c8] sm:$0xff]
        %v1783 = vld [vmem:[#allocation5 + $0x1d0] sm:$0xff]
        %v1784 = vld [vmem:[#allocation5 + $0x1d8] sm:$0xff]
        %v1785 = vld [vmem:[#allocation5 + $0x1e0] sm:$0xff]
        %v1786 = vld [vmem:[#allocation5 + $0x1e8] sm:$0xff]
        %v1787 = vld [vmem:[#allocation5 + $0x1f0] sm:$0xff]
        %v1788 = vld [vmem:[#allocation5 + $0x1f8] sm:$0xff]
        %v1789 = vld [vmem:[#allocation5 + $0x200] sm:$0xff]
        %v1790 = vld [vmem:[#allocation5 + $0x208] sm:$0xff]
        %v1791 = vld [vmem:[#allocation5 + $0x210] sm:$0xff]
        %v1792 = vld [vmem:[#allocation5 + $0x218] sm:$0xff]
        %v1793 = vld [vmem:[#allocation5 + $0x220] sm:$0xff]
        %v1794 = vld [vmem:[#allocation5 + $0x228] sm:$0xff]
        %v1795 = vld [vmem:[#allocation5 + $0x230] sm:$0xff]
        %v1796 = vld [vmem:[#allocation5 + $0x238] sm:$0xff]
        %v1797 = vld [vmem:[#allocation5 + $0x240] sm:$0xff]
        %v1798 = vld [vmem:[#allocation5 + $0x248] sm:$0xff]
        %v1799 = vld [vmem:[#allocation5 + $0x250] sm:$0xff]
        %v1800 = vld [vmem:[#allocation5 + $0x258] sm:$0xff]
        %v1801 = vld [vmem:[#allocation5 + $0x260] sm:$0xff]
        %v1802 = vld [vmem:[#allocation5 + $0x268] sm:$0xff]
        %v1803 = vld [vmem:[#allocation5 + $0x270] sm:$0xff]
        %v1804 = vld [vmem:[#allocation5 + $0x278] sm:$0xff]
        %v1805 = vld [vmem:[#allocation5 + $0x280] sm:$0xff]
        %v1806 = vld [vmem:[#allocation5 + $0x288] sm:$0xff]
        %v1807 = vld [vmem:[#allocation5 + $0x290] sm:$0xff]
        %v1808 = vld [vmem:[#allocation5 + $0x298] sm:$0xff]
        %v1809 = vld [vmem:[#allocation5 + $0x2a0] sm:$0xff]
        %v1810 = vld [vmem:[#allocation5 + $0x2a8] sm:$0xff]
        %v1811 = vld [vmem:[#allocation5 + $0x2b0] sm:$0xff]
        %v1812 = vld [vmem:[#allocation5 + $0x2b8] sm:$0xff]
        %v1813 = vld [vmem:[#allocation5 + $0x2c0] sm:$0xff]
        %v1814 = vld [vmem:[#allocation5 + $0x2c8] sm:$0xff]
        %v1815 = vld [vmem:[#allocation5 + $0x2d0] sm:$0xff]
        %v1816 = vld [vmem:[#allocation5 + $0x2d8] sm:$0xff]
        %v1817 = vld [vmem:[#allocation5 + $0x2e0] sm:$0xff]
        %v1818 = vld [vmem:[#allocation5 + $0x2e8] sm:$0xff]
        %v1819 = vld [vmem:[#allocation5 + $0x2f0] sm:$0xff]
        %v1820 = vld [vmem:[#allocation5 + $0x2f8] sm:$0xff]
        %v1821 = vld [vmem:[#allocation5 + $0x300] sm:$0xff]
        %v1822 = vld [vmem:[#allocation5 + $0x308] sm:$0xff]
        %v1823 = vld [vmem:[#allocation5 + $0x310] sm:$0xff]
        %v1824 = vld [vmem:[#allocation5 + $0x318] sm:$0xff]
        %v1825 = vld [vmem:[#allocation7] sm:$0xf]
        %v1827 = vlaneseq
        %v1828 = vshrl.u32 %v1827, 7
        %v1829 = vsub.s32 0, %v1828
        %v1830 = vrot.slane %v1825, %v1829
        %v1831 = vlaneseq
        %v1832 = vshrl.u32 %v1831, 7
        %v1833 = vsub.s32 1, %v1832
        %v1834 = vrot.slane %v1825, %v1833
        %v1835 = vlaneseq
        %v1836 = vshrl.u32 %v1835, 7
        %v1837 = vsub.s32 2, %v1836
        %v1838 = vrot.slane %v1825, %v1837
        %v1839 = vlaneseq
        %v1840 = vshrl.u32 %v1839, 7
        %v1841 = vsub.s32 3, %v1840
        %v1842 = vrot.slane %v1825, %v1841
        %v1947 = vunpack.c.l.b16 %v1725
        %v1948 = vunpack.c.h.b16 %v1725
        %v1949 = vunpack.c.l.b16 %v1726
        %v1950 = vunpack.c.h.b16 %v1726
        %v1951 = vunpack.c.l.b16 %v1727
        %v1952 = vunpack.c.h.b16 %v1727
        %v1953 = vunpack.c.l.b16 %v1728
        %v1954 = vunpack.c.h.b16 %v1728
        %v1955 = vunpack.c.l.b16 %v1729
        %v1956 = vunpack.c.h.b16 %v1729
        %v1957 = vunpack.c.l.b16 %v1730
        %v1958 = vunpack.c.h.b16 %v1730
        %v1959 = vunpack.c.l.b16 %v1731
        %v1960 = vunpack.c.h.b16 %v1731
        %v1961 = vunpack.c.l.b16 %v1732
        %v1962 = vunpack.c.h.b16 %v1732
        %v1963 = vunpack.c.l.b16 %v1733
        %v1964 = vunpack.c.h.b16 %v1733
        %v1965 = vunpack.c.l.b16 %v1734
        %v1966 = vunpack.c.h.b16 %v1734
        %v1967 = vunpack.c.l.b16 %v1735
        %v1968 = vunpack.c.h.b16 %v1735
        %v1969 = vunpack.c.l.b16 %v1736
        %v1970 = vunpack.c.h.b16 %v1736
        %v1971 = vunpack.c.l.b16 %v1737
        %v1972 = vunpack.c.h.b16 %v1737
        %v1973 = vunpack.c.l.b16 %v1738
        %v1974 = vunpack.c.h.b16 %v1738
        %v1975 = vunpack.c.l.b16 %v1739
        %v1976 = vunpack.c.h.b16 %v1739
        %v1977 = vunpack.c.l.b16 %v1740
        %v1978 = vunpack.c.h.b16 %v1740
        %v1979 = vunpack.c.l.b16 %v1741
        %v1980 = vunpack.c.h.b16 %v1741
        %v1981 = vunpack.c.l.b16 %v1742
        %v1982 = vunpack.c.h.b16 %v1742
        %v1983 = vunpack.c.l.b16 %v1743
        %v1984 = vunpack.c.h.b16 %v1743
        %v1985 = vunpack.c.l.b16 %v1744
        %v1986 = vunpack.c.h.b16 %v1744
        %v1987 = vunpack.c.l.b16 %v1745
        %v1988 = vunpack.c.h.b16 %v1745
        %v1989 = vunpack.c.l.b16 %v1746
        %v1990 = vunpack.c.h.b16 %v1746
        %v1991 = vunpack.c.l.b16 %v1747
        %v1992 = vunpack.c.h.b16 %v1747
        %v1993 = vunpack.c.l.b16 %v1748
        %v1994 = vunpack.c.h.b16 %v1748
        %v1995 = vunpack.c.l.b16 %v1749
        %v1996 = vunpack.c.h.b16 %v1749
        %v1997 = vunpack.c.l.b16 %v1750
        %v1998 = vunpack.c.h.b16 %v1750
        %v1999 = vunpack.c.l.b16 %v1751
        %v2000 = vunpack.c.h.b16 %v1751
        %v2001 = vunpack.c.l.b16 %v1752
        %v2002 = vunpack.c.h.b16 %v1752
        %v2003 = vunpack.c.l.b16 %v1753
        %v2004 = vunpack.c.h.b16 %v1753
        %v2005 = vunpack.c.l.b16 %v1754
        %v2006 = vunpack.c.h.b16 %v1754
        %v2007 = vunpack.c.l.b16 %v1755
        %v2008 = vunpack.c.h.b16 %v1755
        %v2009 = vunpack.c.l.b16 %v1756
        %v2010 = vunpack.c.h.b16 %v1756
        %v2011 = vunpack.c.l.b16 %v1757
        %v2012 = vunpack.c.h.b16 %v1757
        %v2013 = vunpack.c.l.b16 %v1758
        %v2014 = vunpack.c.h.b16 %v1758
        %v2015 = vunpack.c.l.b16 %v1759
        %v2016 = vunpack.c.h.b16 %v1759
        %v2017 = vunpack.c.l.b16 %v1760
        %v2018 = vunpack.c.h.b16 %v1760
        %v2019 = vunpack.c.l.b16 %v1761
        %v2020 = vunpack.c.h.b16 %v1761
        %v2021 = vunpack.c.l.b16 %v1762
        %v2022 = vunpack.c.h.b16 %v1762
        %v2023 = vunpack.c.l.b16 %v1763
        %v2024 = vunpack.c.h.b16 %v1763
        %v2025 = vunpack.c.l.b16 %v1764
        %v2026 = vunpack.c.h.b16 %v1764
        %v2027 = vunpack.c.l.b16 %v1765
        %v2028 = vunpack.c.h.b16 %v1765
        %v2029 = vunpack.c.l.b16 %v1766
        %v2030 = vunpack.c.h.b16 %v1766
        %v2031 = vunpack.c.l.b16 %v1767
        %v2032 = vunpack.c.h.b16 %v1767
        %v2033 = vunpack.c.l.b16 %v1768
        %v2034 = vunpack.c.h.b16 %v1768
        %v2035 = vunpack.c.l.b16 %v1769
        %v2036 = vunpack.c.h.b16 %v1769
        %v2037 = vunpack.c.l.b16 %v1770
        %v2038 = vunpack.c.h.b16 %v1770
        %v2039 = vunpack.c.l.b16 %v1771
        %v2040 = vunpack.c.h.b16 %v1771
        %v2041 = vunpack.c.l.b16 %v1772
        %v2042 = vunpack.c.h.b16 %v1772
        %v2043 = vunpack.c.l.b16 %v1773
        %v2044 = vunpack.c.h.b16 %v1773
        %v2045 = vunpack.c.l.b16 %v1774
        %v2046 = vunpack.c.h.b16 %v1774
        %v2047 = vunpack.c.l.b16 %v1775
        %v2048 = vunpack.c.h.b16 %v1775
        %v2049 = vunpack.c.l.b16 %v1776
        %v2050 = vunpack.c.h.b16 %v1776
        %v2051 = vunpack.c.l.b16 %v1777
        %v2052 = vunpack.c.h.b16 %v1777
        %v2053 = vunpack.c.l.b16 %v1778
        %v2054 = vunpack.c.h.b16 %v1778
        %v2055 = vunpack.c.l.b16 %v1779
        %v2056 = vunpack.c.h.b16 %v1779
        %v2057 = vunpack.c.l.b16 %v1780
        %v2058 = vunpack.c.h.b16 %v1780
        %v2059 = vunpack.c.l.b16 %v1781
        %v2060 = vunpack.c.h.b16 %v1781
        %v2061 = vunpack.c.l.b16 %v1782
        %v2062 = vunpack.c.h.b16 %v1782
        %v2063 = vunpack.c.l.b16 %v1783
        %v2064 = vunpack.c.h.b16 %v1783
        %v2065 = vunpack.c.l.b16 %v1784
        %v2066 = vunpack.c.h.b16 %v1784
        %v2067 = vunpack.c.l.b16 %v1785
        %v2068 = vunpack.c.h.b16 %v1785
        %v2069 = vunpack.c.l.b16 %v1786
        %v2070 = vunpack.c.h.b16 %v1786
        %v2071 = vunpack.c.l.b16 %v1787
        %v2072 = vunpack.c.h.b16 %v1787
        %v2073 = vunpack.c.l.b16 %v1788
        %v2074 = vunpack.c.h.b16 %v1788
        %v2075 = vunpack.c.l.b16 %v1789
        %v2076 = vunpack.c.h.b16 %v1789
        %v2077 = vunpack.c.l.b16 %v1790
        %v2078 = vunpack.c.h.b16 %v1790
        %v2079 = vunpack.c.l.b16 %v1791
        %v2080 = vunpack.c.h.b16 %v1791
        %v2081 = vunpack.c.l.b16 %v1792
        %v2082 = vunpack.c.h.b16 %v1792
        %v2083 = vunpack.c.l.b16 %v1793
        %v2084 = vunpack.c.h.b16 %v1793
        %v2085 = vunpack.c.l.b16 %v1794
        %v2086 = vunpack.c.h.b16 %v1794
        %v2087 = vunpack.c.l.b16 %v1795
        %v2088 = vunpack.c.h.b16 %v1795
        %v2089 = vunpack.c.l.b16 %v1796
        %v2090 = vunpack.c.h.b16 %v1796
        %v2091 = vunpack.c.l.b16 %v1797
        %v2092 = vunpack.c.h.b16 %v1797
        %v2093 = vunpack.c.l.b16 %v1798
        %v2094 = vunpack.c.h.b16 %v1798
        %v2095 = vunpack.c.l.b16 %v1799
        %v2096 = vunpack.c.h.b16 %v1799
        %v2097 = vunpack.c.l.b16 %v1800
        %v2098 = vunpack.c.h.b16 %v1800
        %v2099 = vunpack.c.l.b16 %v1801
        %v2100 = vunpack.c.h.b16 %v1801
        %v2101 = vunpack.c.l.b16 %v1802
        %v2102 = vunpack.c.h.b16 %v1802
        %v2103 = vunpack.c.l.b16 %v1803
        %v2104 = vunpack.c.h.b16 %v1803
        %v2105 = vunpack.c.l.b16 %v1804
        %v2106 = vunpack.c.h.b16 %v1804
        %v2107 = vunpack.c.l.b16 %v1805
        %v2108 = vunpack.c.h.b16 %v1805
        %v2109 = vunpack.c.l.b16 %v1806
        %v2110 = vunpack.c.h.b16 %v1806
        %v2111 = vunpack.c.l.b16 %v1807
        %v2112 = vunpack.c.h.b16 %v1807
        %v2113 = vunpack.c.l.b16 %v1808
        %v2114 = vunpack.c.h.b16 %v1808
        %v2115 = vunpack.c.l.b16 %v1809
        %v2116 = vunpack.c.h.b16 %v1809
        %v2117 = vunpack.c.l.b16 %v1810
        %v2118 = vunpack.c.h.b16 %v1810
        %v2119 = vunpack.c.l.b16 %v1811
        %v2120 = vunpack.c.h.b16 %v1811
        %v2121 = vunpack.c.l.b16 %v1812
        %v2122 = vunpack.c.h.b16 %v1812
        %v2123 = vunpack.c.l.b16 %v1813
        %v2124 = vunpack.c.h.b16 %v1813
        %v2125 = vunpack.c.l.b16 %v1814
        %v2126 = vunpack.c.h.b16 %v1814
        %v2127 = vunpack.c.l.b16 %v1815
        %v2128 = vunpack.c.h.b16 %v1815
        %v2129 = vunpack.c.l.b16 %v1816
        %v2130 = vunpack.c.h.b16 %v1816
        %v2131 = vunpack.c.l.b16 %v1817
        %v2132 = vunpack.c.h.b16 %v1817
        %v2133 = vunpack.c.l.b16 %v1818
        %v2134 = vunpack.c.h.b16 %v1818
        %v2135 = vunpack.c.l.b16 %v1819
        %v2136 = vunpack.c.h.b16 %v1819
        %v2137 = vunpack.c.l.b16 %v1820
        %v2138 = vunpack.c.h.b16 %v1820
        %v2139 = vunpack.c.l.b16 %v1821
        %v2140 = vunpack.c.h.b16 %v1821
        %v2141 = vunpack.c.l.b16 %v1822
        %v2142 = vunpack.c.h.b16 %v1822
        %v2143 = vunpack.c.l.b16 %v1823
        %v2144 = vunpack.c.h.b16 %v1823
        %v2145 = vunpack.c.l.b16 %v1824
        %v2146 = vunpack.c.h.b16 %v1824
        %v2147 = vpack.c.b16 %v1951, %v1947
        %v2148 = vpack.c.b16 %v1952, %v1948
        %v2149 = vpack.c.b16 %v1953, %v1949
        %v2150 = vpack.c.b16 %v1954, %v1950
        %v2151 = vpack.c.b16 %v1959, %v1955
        %v2152 = vpack.c.b16 %v1960, %v1956
        %v2153 = vpack.c.b16 %v1961, %v1957
        %v2154 = vpack.c.b16 %v1962, %v1958
        %v2155 = vpack.c.b16 %v1967, %v1963
        %v2156 = vpack.c.b16 %v1968, %v1964
        %v2157 = vpack.c.b16 %v1969, %v1965
        %v2158 = vpack.c.b16 %v1970, %v1966
        %v2159 = vpack.c.b16 %v1975, %v1971
        %v2160 = vpack.c.b16 %v1976, %v1972
        %v2161 = vpack.c.b16 %v1977, %v1973
        %v2162 = vpack.c.b16 %v1978, %v1974
        %v2163 = vpack.c.b16 %v1983, %v1979
        %v2164 = vpack.c.b16 %v1984, %v1980
        %v2165 = vpack.c.b16 %v1985, %v1981
        %v2166 = vpack.c.b16 %v1986, %v1982
        %v2167 = vpack.c.b16 %v1991, %v1987
        %v2168 = vpack.c.b16 %v1992, %v1988
        %v2169 = vpack.c.b16 %v1993, %v1989
        %v2170 = vpack.c.b16 %v1994, %v1990
        %v2171 = vpack.c.b16 %v1999, %v1995
        %v2172 = vpack.c.b16 %v2000, %v1996
        %v2173 = vpack.c.b16 %v2001, %v1997
        %v2174 = vpack.c.b16 %v2002, %v1998
        %v2175 = vpack.c.b16 %v2007, %v2003
        %v2176 = vpack.c.b16 %v2008, %v2004
        %v2177 = vpack.c.b16 %v2009, %v2005
        %v2178 = vpack.c.b16 %v2010, %v2006
        %v2179 = vpack.c.b16 %v2015, %v2011
        %v2180 = vpack.c.b16 %v2016, %v2012
        %v2181 = vpack.c.b16 %v2017, %v2013
        %v2182 = vpack.c.b16 %v2018, %v2014
        %v2183 = vpack.c.b16 %v2023, %v2019
        %v2184 = vpack.c.b16 %v2024, %v2020
        %v2185 = vpack.c.b16 %v2025, %v2021
        %v2186 = vpack.c.b16 %v2026, %v2022
        %v2187 = vpack.c.b16 %v2031, %v2027
        %v2188 = vpack.c.b16 %v2032, %v2028
        %v2189 = vpack.c.b16 %v2033, %v2029
        %v2190 = vpack.c.b16 %v2034, %v2030
        %v2191 = vpack.c.b16 %v2039, %v2035
        %v2192 = vpack.c.b16 %v2040, %v2036
        %v2193 = vpack.c.b16 %v2041, %v2037
        %v2194 = vpack.c.b16 %v2042, %v2038
        %v2195 = vpack.c.b16 %v2047, %v2043
        %v2196 = vpack.c.b16 %v2048, %v2044
        %v2197 = vpack.c.b16 %v2049, %v2045
        %v2198 = vpack.c.b16 %v2050, %v2046
        %v2199 = vpack.c.b16 %v2055, %v2051
        %v2200 = vpack.c.b16 %v2056, %v2052
        %v2201 = vpack.c.b16 %v2057, %v2053
        %v2202 = vpack.c.b16 %v2058, %v2054
        %v2203 = vpack.c.b16 %v2063, %v2059
        %v2204 = vpack.c.b16 %v2064, %v2060
        %v2205 = vpack.c.b16 %v2065, %v2061
        %v2206 = vpack.c.b16 %v2066, %v2062
        %v2207 = vpack.c.b16 %v2071, %v2067
        %v2208 = vpack.c.b16 %v2072, %v2068
        %v2209 = vpack.c.b16 %v2073, %v2069
        %v2210 = vpack.c.b16 %v2074, %v2070
        %v2211 = vpack.c.b16 %v2079, %v2075
        %v2212 = vpack.c.b16 %v2080, %v2076
        %v2213 = vpack.c.b16 %v2081, %v2077
        %v2214 = vpack.c.b16 %v2082, %v2078
        %v2215 = vpack.c.b16 %v2087, %v2083
        %v2216 = vpack.c.b16 %v2088, %v2084
        %v2217 = vpack.c.b16 %v2089, %v2085
        %v2218 = vpack.c.b16 %v2090, %v2086
        %v2219 = vpack.c.b16 %v2095, %v2091
        %v2220 = vpack.c.b16 %v2096, %v2092
        %v2221 = vpack.c.b16 %v2097, %v2093
        %v2222 = vpack.c.b16 %v2098, %v2094
        %v2223 = vpack.c.b16 %v2103, %v2099
        %v2224 = vpack.c.b16 %v2104, %v2100
        %v2225 = vpack.c.b16 %v2105, %v2101
        %v2226 = vpack.c.b16 %v2106, %v2102
        %v2227 = vpack.c.b16 %v2111, %v2107
        %v2228 = vpack.c.b16 %v2112, %v2108
        %v2229 = vpack.c.b16 %v2113, %v2109
        %v2230 = vpack.c.b16 %v2114, %v2110
        %v2231 = vpack.c.b16 %v2119, %v2115
        %v2232 = vpack.c.b16 %v2120, %v2116
        %v2233 = vpack.c.b16 %v2121, %v2117
        %v2234 = vpack.c.b16 %v2122, %v2118
        %v2235 = vpack.c.b16 %v2127, %v2123
        %v2236 = vpack.c.b16 %v2128, %v2124
        %v2237 = vpack.c.b16 %v2129, %v2125
        %v2238 = vpack.c.b16 %v2130, %v2126
        %v2239 = vpack.c.b16 %v2135, %v2131
        %v2240 = vpack.c.b16 %v2136, %v2132
        %v2241 = vpack.c.b16 %v2137, %v2133
        %v2242 = vpack.c.b16 %v2138, %v2134
        %v2243 = vpack.c.b16 %v2143, %v2139
        %v2244 = vpack.c.b16 %v2144, %v2140
        %v2245 = vpack.c.b16 %v2145, %v2141
        %v2246 = vpack.c.b16 %v2146, %v2142
        %v2348 = vsel %vm1549, %v1724, 0
        %2350 = vmatprep.subr.bf16.mxu0 %v2148
        %2351 = vmatpush1.bf16.msra.mxu0 %v2147
        %2352 = vmatprep.subr.bf16.mxu0 %v2152
        %2353 = vmatpush1.bf16.msra.mxu0 %v2151
        %2354 = vmatprep.subr.bf16.mxu0 %v2156
        %2355 = vmatpush1.bf16.msra.mxu0 %v2155
        %2356 = vmatprep.subr.bf16.mxu0 %v2160
        %2357 = vmatpush1.bf16.msra.mxu0 %v2159
        %2358 = vmatprep.subr.bf16.mxu0 %v2164
        %2359 = vmatpush1.bf16.msra.mxu0 %v2163
        %2360 = vmatprep.subr.bf16.mxu0 %v2168
        %2361 = vmatpush1.bf16.msra.mxu0 %v2167
        %2362 = vmatprep.subr.bf16.mxu0 %v2172
        %2363 = vmatpush1.bf16.msra.mxu0 %v2171
        %2364 = vmatprep.subr.bf16.mxu0 %v2176
        %2365 = vmatpush1.bf16.msra.mxu0 %v2175
        %2366 = vmatprep.subr.bf16.mxu0 %v2180
        %2367 = vmatpush1.bf16.msra.mxu0 %v2179
        %2368 = vmatprep.subr.bf16.mxu0 %v2184
        %2369 = vmatpush1.bf16.msra.mxu0 %v2183
        %2370 = vmatprep.subr.bf16.mxu0 %v2188
        %2371 = vmatpush1.bf16.msra.mxu0 %v2187
        %2372 = vmatprep.subr.bf16.mxu0 %v2192
        %2373 = vmatpush1.bf16.msra.mxu0 %v2191
        %2374 = vmatprep.subr.bf16.mxu0 %v2196
        %2375 = vmatpush1.bf16.msra.mxu0 %v2195
        %2376 = vmatprep.subr.bf16.mxu0 %v2200
        %2377 = vmatpush1.bf16.msra.mxu0 %v2199
        %2378 = vmatprep.subr.bf16.mxu0 %v2204
        %2379 = vmatpush1.bf16.msra.mxu0 %v2203
        %2380 = vmatprep.subr.bf16.mxu0 %v2208
        %2381 = vmatpush1.bf16.msra.mxu0 %v2207
        %2382 = vmatprep.mubr.bf16.mxu0 %v1722
        %2383 = vmatmul.mubr.bf16.gmra.mrb[0].mxu0 %v1721
        %v2384 = vpop.f32.mrb[0].mxu0
        %v2385 = vadd.f32 %v1830, %v2384
        %v2386 = vpop.f32.mrb[0].mxu0
        %v2387 = vadd.f32 %v1834, %v2386
        %v2388 = vpop.f32.mrb[0].mxu0
        %v2389 = vpop.f32.mrb[0].mxu0
        %2390 = vdwg.mxu0
        %2391 = vmatprep.subr.bf16.mxu0 %v2212
        %2392 = vmatpush1.bf16.msra.mxu0 %v2211
        %2393 = vmatprep.subr.bf16.mxu0 %v2216
        %2394 = vmatpush1.bf16.msra.mxu0 %v2215
        %2395 = vmatprep.subr.bf16.mxu0 %v2220
        %2396 = vmatpush1.bf16.msra.mxu0 %v2219
        %2397 = vmatprep.subr.bf16.mxu0 %v2224
        %2398 = vmatpush1.bf16.msra.mxu0 %v2223
        %2399 = vmatprep.subr.bf16.mxu0 %v2228
        %2400 = vmatpush1.bf16.msra.mxu0 %v2227
        %2401 = vmatprep.subr.bf16.mxu0 %v2232
        %2402 = vmatpush1.bf16.msra.mxu0 %v2231
        %2403 = vmatprep.subr.bf16.mxu0 %v2236
        %2404 = vmatpush1.bf16.msra.mxu0 %v2235
        %2405 = vmatprep.subr.bf16.mxu0 %v2240
        %2406 = vmatpush1.bf16.msra.mxu0 %v2239
        %2407 = vmatprep.subr.bf16.mxu0 %v2244
        %2408 = vmatpush1.bf16.msra.mxu0 %v2243
        %2409 = vmatprep.subr.bf16.mxu0 0
        %2410 = vmatpush1.bf16.msra.mxu0 0
        %2411 = vmatprep.subr.bf16.mxu0 0
        %2412 = vmatpush1.bf16.msra.mxu0 0
        %2413 = vmatprep.subr.bf16.mxu0 0
        %2414 = vmatpush1.bf16.msra.mxu0 0
        %2415 = vmatprep.subr.bf16.mxu0 0
        %2416 = vmatpush1.bf16.msra.mxu0 0
        %2417 = vmatprep.subr.bf16.mxu0 0
        %2418 = vmatpush1.bf16.msra.mxu0 0
        %2419 = vmatprep.subr.bf16.mxu0 0
        %2420 = vmatpush1.bf16.msra.mxu0 0
        %2421 = vmatprep.subr.bf16.mxu0 0
        %2422 = vmatpush1.bf16.msra.mxu0 0
        %2423 = vmatprep.mubr.bf16.mxu0 %v2348
        %2424 = vmatmul.mubr.bf16.gmra.mrb[0].mxu0 %v1723
        %v2425 = vpop.f32.mrb[0].mxu0
        %v2426 = vadd.f32 %v2385, %v2425
        %v2427 = vpop.f32.mrb[0].mxu0
        %v2428 = vadd.f32 %v2387, %v2427
        %v2429 = vpop.f32.mrb[0].mxu0
        %v2430 = vpop.f32.mrb[0].mxu0
        %2431 = vdwg.mxu0
        %2432 = vmatprep.subr.bf16.mxu0 %v2150
        %2433 = vmatpush1.bf16.msra.mxu0 %v2149
        %2434 = vmatprep.subr.bf16.mxu0 %v2154
        %2435 = vmatpush1.bf16.msra.mxu0 %v2153
        %2436 = vmatprep.subr.bf16.mxu0 %v2158
        %2437 = vmatpush1.bf16.msra.mxu0 %v2157
        %2438 = vmatprep.subr.bf16.mxu0 %v2162
        %2439 = vmatpush1.bf16.msra.mxu0 %v2161
        %2440 = vmatprep.subr.bf16.mxu0 %v2166
        %2441 = vmatpush1.bf16.msra.mxu0 %v2165
        %2442 = vmatprep.subr.bf16.mxu0 %v2170
        %2443 = vmatpush1.bf16.msra.mxu0 %v2169
        %2444 = vmatprep.subr.bf16.mxu0 %v2174
        %2445 = vmatpush1.bf16.msra.mxu0 %v2173
        %2446 = vmatprep.subr.bf16.mxu0 %v2178
        %2447 = vmatpush1.bf16.msra.mxu0 %v2177
        %2448 = vmatprep.subr.bf16.mxu0 %v2182
        %2449 = vmatpush1.bf16.msra.mxu0 %v2181
        %2450 = vmatprep.subr.bf16.mxu0 %v2186
        %2451 = vmatpush1.bf16.msra.mxu0 %v2185
        %2452 = vmatprep.subr.bf16.mxu0 %v2190
        %2453 = vmatpush1.bf16.msra.mxu0 %v2189
        %2454 = vmatprep.subr.bf16.mxu0 %v2194
        %2455 = vmatpush1.bf16.msra.mxu0 %v2193
        %2456 = vmatprep.subr.bf16.mxu0 %v2198
        %2457 = vmatpush1.bf16.msra.mxu0 %v2197
        %2458 = vmatprep.subr.bf16.mxu0 %v2202
        %2459 = vmatpush1.bf16.msra.mxu0 %v2201
        %2460 = vmatprep.subr.bf16.mxu0 %v2206
        %2461 = vmatpush1.bf16.msra.mxu0 %v2205
        %2462 = vmatprep.subr.bf16.mxu0 %v2210
        %2463 = vmatpush1.bf16.msra.mxu0 %v2209
        %2464 = vmatprep.mubr.bf16.mxu0 %v1722
        %2465 = vmatmul.mubr.bf16.gmra.mrb[0].mxu0 %v1721
        %v2466 = vpop.f32.mrb[0].mxu0
        %v2467 = vadd.f32 %v1838, %v2466
        %v2468 = vpop.f32.mrb[0].mxu0
        %v2469 = vadd.f32 %v1842, %v2468
        %v2470 = vpop.f32.mrb[0].mxu0
        %v2471 = vpop.f32.mrb[0].mxu0
        %2472 = vdwg.mxu0
        %2473 = vmatprep.subr.bf16.mxu0 %v2214
        %2474 = vmatpush1.bf16.msra.mxu0 %v2213
        %2475 = vmatprep.subr.bf16.mxu0 %v2218
        %2476 = vmatpush1.bf16.msra.mxu0 %v2217
        %2477 = vmatprep.subr.bf16.mxu0 %v2222
        %2478 = vmatpush1.bf16.msra.mxu0 %v2221
        %2479 = vmatprep.subr.bf16.mxu0 %v2226
        %2480 = vmatpush1.bf16.msra.mxu0 %v2225
        %2481 = vmatprep.subr.bf16.mxu0 %v2230
        %2482 = vmatpush1.bf16.msra.mxu0 %v2229
        %2483 = vmatprep.subr.bf16.mxu0 %v2234
        %2484 = vmatpush1.bf16.msra.mxu0 %v2233
        %2485 = vmatprep.subr.bf16.mxu0 %v2238
        %2486 = vmatpush1.bf16.msra.mxu0 %v2237
        %2487 = vmatprep.subr.bf16.mxu0 %v2242
        %2488 = vmatpush1.bf16.msra.mxu0 %v2241
        %2489 = vmatprep.subr.bf16.mxu0 %v2246
        %2490 = vmatpush1.bf16.msra.mxu0 %v2245
        %2491 = vmatprep.subr.bf16.mxu0 0
        %2492 = vmatpush1.bf16.msra.mxu0 0
        %2493 = vmatprep.subr.bf16.mxu0 0
        %2494 = vmatpush1.bf16.msra.mxu0 0
        %2495 = vmatprep.subr.bf16.mxu0 0
        %2496 = vmatpush1.bf16.msra.mxu0 0
        %2497 = vmatprep.subr.bf16.mxu0 0
        %2498 = vmatpush1.bf16.msra.mxu0 0
        %2499 = vmatprep.subr.bf16.mxu0 0
        %2500 = vmatpush1.bf16.msra.mxu0 0
        %2501 = vmatprep.subr.bf16.mxu0 0
        %2502 = vmatpush1.bf16.msra.mxu0 0
        %2503 = vmatprep.subr.bf16.mxu0 0
        %2504 = vmatpush1.bf16.msra.mxu0 0
        %2505 = vmatprep.mubr.bf16.mxu0 %v2348
        %2506 = vmatmul.mubr.bf16.gmra.mrb[0].mxu0 %v1723
        %v2507 = vpop.f32.mrb[0].mxu0
        %v2508 = vadd.f32 %v2467, %v2507
        %v2509 = vpop.f32.mrb[0].mxu0
        %v2510 = vadd.f32 %v2469, %v2509
        %v2511 = vpop.f32.mrb[0].mxu0
        %v2512 = vpop.f32.mrb[0].mxu0
        %2513 = vdwg.mxu0
        %v2514 = vld [vmem:[#allocation8] sm:$0xff]
        %v2515 = vld [vmem:[#allocation8 + $0x8] sm:$0xff]
        %v2516 = vld [vmem:[#allocation8 + $0x10] sm:$0xff]
        %v2517 = vld [vmem:[#allocation8 + $0x18] sm:$0xff]
        %v2518 = vld [vmem:[#allocation8 + $0x20] sm:$0xff]
        %v2519 = vld [vmem:[#allocation8 + $0x28] sm:$0xff]
        %v2520 = vld [vmem:[#allocation8 + $0x30] sm:$0xff]
        %v2521 = vld [vmem:[#allocation8 + $0x38] sm:$0xff]
        %v2522 = vld [vmem:[#allocation8 + $0x40] sm:$0xff]
        %v2523 = vld [vmem:[#allocation8 + $0x48] sm:$0xff]
        %v2524 = vld [vmem:[#allocation8 + $0x50] sm:$0xff]
        %v2525 = vld [vmem:[#allocation8 + $0x58] sm:$0xff]
        %v2526 = vld [vmem:[#allocation8 + $0x60] sm:$0xff]
        %v2527 = vld [vmem:[#allocation8 + $0x68] sm:$0xff]
        %v2528 = vld [vmem:[#allocation8 + $0x70] sm:$0xff]
        %v2529 = vld [vmem:[#allocation8 + $0x78] sm:$0xff]
        %v2530 = vld [vmem:[#allocation8 + $0x80] sm:$0xff]
        %v2531 = vld [vmem:[#allocation8 + $0x88] sm:$0xff]
        %v2532 = vld [vmem:[#allocation8 + $0x90] sm:$0xff]
        %v2533 = vld [vmem:[#allocation8 + $0x98] sm:$0xff]
        %v2534 = vld [vmem:[#allocation8 + $0xa0] sm:$0xff]
        %v2535 = vld [vmem:[#allocation8 + $0xa8] sm:$0xff]
        %v2536 = vld [vmem:[#allocation8 + $0xb0] sm:$0xff]
        %v2537 = vld [vmem:[#allocation8 + $0xb8] sm:$0xff]
        %v2538 = vld [vmem:[#allocation8 + $0xc0] sm:$0xff]
        %v2539 = vld [vmem:[#allocation8 + $0xc8] sm:$0xff]
        %v2540 = vld [vmem:[#allocation8 + $0xd0] sm:$0xff]
        %v2541 = vld [vmem:[#allocation8 + $0xd8] sm:$0xff]
        %v2542 = vld [vmem:[#allocation8 + $0xe0] sm:$0xff]
        %v2543 = vld [vmem:[#allocation8 + $0xe8] sm:$0xff]
        %v2544 = vld [vmem:[#allocation8 + $0xf0] sm:$0xff]
        %v2545 = vld [vmem:[#allocation8 + $0xf8] sm:$0xff]
        %v2546 = vld [vmem:[#allocation8 + $0x100] sm:$0xff]
        %v2547 = vld [vmem:[#allocation8 + $0x108] sm:$0xff]
        %v2548 = vld [vmem:[#allocation8 + $0x110] sm:$0xff]
        %v2549 = vld [vmem:[#allocation8 + $0x118] sm:$0xff]
        %v2550 = vld [vmem:[#allocation8 + $0x120] sm:$0xff]
        %v2551 = vld [vmem:[#allocation8 + $0x128] sm:$0xff]
        %v2552 = vld [vmem:[#allocation8 + $0x130] sm:$0xff]
        %v2553 = vld [vmem:[#allocation8 + $0x138] sm:$0xff]
        %v2554 = vld [vmem:[#allocation8 + $0x140] sm:$0xff]
        %v2555 = vld [vmem:[#allocation8 + $0x148] sm:$0xff]
        %v2556 = vld [vmem:[#allocation8 + $0x150] sm:$0xff]
        %v2557 = vld [vmem:[#allocation8 + $0x158] sm:$0xff]
        %v2558 = vld [vmem:[#allocation8 + $0x160] sm:$0xff]
        %v2559 = vld [vmem:[#allocation8 + $0x168] sm:$0xff]
        %v2560 = vld [vmem:[#allocation8 + $0x170] sm:$0xff]
        %v2561 = vld [vmem:[#allocation8 + $0x178] sm:$0xff]
        %v2562 = vld [vmem:[#allocation8 + $0x180] sm:$0xff]
        %v2563 = vld [vmem:[#allocation8 + $0x188] sm:$0xff]
        %v2564 = vld [vmem:[#allocation8 + $0x190] sm:$0xff]
        %v2565 = vld [vmem:[#allocation8 + $0x198] sm:$0xff]
        %v2566 = vld [vmem:[#allocation8 + $0x1a0] sm:$0xff]
        %v2567 = vld [vmem:[#allocation8 + $0x1a8] sm:$0xff]
        %v2568 = vld [vmem:[#allocation8 + $0x1b0] sm:$0xff]
        %v2569 = vld [vmem:[#allocation8 + $0x1b8] sm:$0xff]
        %v2570 = vld [vmem:[#allocation8 + $0x1c0] sm:$0xff]
        %v2571 = vld [vmem:[#allocation8 + $0x1c8] sm:$0xff]
        %v2572 = vld [vmem:[#allocation8 + $0x1d0] sm:$0xff]
        %v2573 = vld [vmem:[#allocation8 + $0x1d8] sm:$0xff]
        %v2574 = vld [vmem:[#allocation8 + $0x1e0] sm:$0xff]
        %v2575 = vld [vmem:[#allocation8 + $0x1e8] sm:$0xff]
        %v2576 = vld [vmem:[#allocation8 + $0x1f0] sm:$0xff]
        %v2577 = vld [vmem:[#allocation8 + $0x1f8] sm:$0xff]
        %v2578 = vld [vmem:[#allocation8 + $0x200] sm:$0xff]
        %v2579 = vld [vmem:[#allocation8 + $0x208] sm:$0xff]
        %v2580 = vld [vmem:[#allocation8 + $0x210] sm:$0xff]
        %v2581 = vld [vmem:[#allocation8 + $0x218] sm:$0xff]
        %v2582 = vld [vmem:[#allocation8 + $0x220] sm:$0xff]
        %v2583 = vld [vmem:[#allocation8 + $0x228] sm:$0xff]
        %v2584 = vld [vmem:[#allocation8 + $0x230] sm:$0xff]
        %v2585 = vld [vmem:[#allocation8 + $0x238] sm:$0xff]
        %v2586 = vld [vmem:[#allocation8 + $0x240] sm:$0xff]
        %v2587 = vld [vmem:[#allocation8 + $0x248] sm:$0xff]
        %v2588 = vld [vmem:[#allocation8 + $0x250] sm:$0xff]
        %v2589 = vld [vmem:[#allocation8 + $0x258] sm:$0xff]
        %v2590 = vld [vmem:[#allocation8 + $0x260] sm:$0xff]
        %v2591 = vld [vmem:[#allocation8 + $0x268] sm:$0xff]
        %v2592 = vld [vmem:[#allocation8 + $0x270] sm:$0xff]
        %v2593 = vld [vmem:[#allocation8 + $0x278] sm:$0xff]
        %v2594 = vld [vmem:[#allocation8 + $0x280] sm:$0xff]
        %v2595 = vld [vmem:[#allocation8 + $0x288] sm:$0xff]
        %v2596 = vld [vmem:[#allocation8 + $0x290] sm:$0xff]
        %v2597 = vld [vmem:[#allocation8 + $0x298] sm:$0xff]
        %v2598 = vld [vmem:[#allocation8 + $0x2a0] sm:$0xff]
        %v2599 = vld [vmem:[#allocation8 + $0x2a8] sm:$0xff]
        %v2600 = vld [vmem:[#allocation8 + $0x2b0] sm:$0xff]
        %v2601 = vld [vmem:[#allocation8 + $0x2b8] sm:$0xff]
        %v2602 = vld [vmem:[#allocation8 + $0x2c0] sm:$0xff]
        %v2603 = vld [vmem:[#allocation8 + $0x2c8] sm:$0xff]
        %v2604 = vld [vmem:[#allocation8 + $0x2d0] sm:$0xff]
        %v2605 = vld [vmem:[#allocation8 + $0x2d8] sm:$0xff]
        %v2606 = vld [vmem:[#allocation8 + $0x2e0] sm:$0xff]
        %v2607 = vld [vmem:[#allocation8 + $0x2e8] sm:$0xff]
        %v2608 = vld [vmem:[#allocation8 + $0x2f0] sm:$0xff]
        %v2609 = vld [vmem:[#allocation8 + $0x2f8] sm:$0xff]
        %v2610 = vld [vmem:[#allocation8 + $0x300] sm:$0xff]
        %v2611 = vld [vmem:[#allocation8 + $0x308] sm:$0xff]
        %v2612 = vld [vmem:[#allocation8 + $0x310] sm:$0xff]
        %v2613 = vld [vmem:[#allocation8 + $0x318] sm:$0xff]
        %v2614 = vld [vmem:[%s6] sm:$0xf]
        %v2616 = vlaneseq
        %v2617 = vshrl.u32 %v2616, 7
        %v2618 = vsub.s32 0, %v2617
        %v2619 = vrot.slane %v2614, %v2618
        %v2620 = vlaneseq
        %v2621 = vshrl.u32 %v2620, 7
        %v2622 = vsub.s32 1, %v2621
        %v2623 = vrot.slane %v2614, %v2622
        %v2624 = vlaneseq
        %v2625 = vshrl.u32 %v2624, 7
        %v2626 = vsub.s32 2, %v2625
        %v2627 = vrot.slane %v2614, %v2626
        %v2628 = vlaneseq
        %v2629 = vshrl.u32 %v2628, 7
        %v2630 = vsub.s32 3, %v2629
        %v2631 = vrot.slane %v2614, %v2630
        %v2736 = vunpack.c.l.b16 %v2514
        %v2737 = vunpack.c.h.b16 %v2514
        %v2738 = vunpack.c.l.b16 %v2515
        %v2739 = vunpack.c.h.b16 %v2515
        %v2740 = vunpack.c.l.b16 %v2516
        %v2741 = vunpack.c.h.b16 %v2516
        %v2742 = vunpack.c.l.b16 %v2517
        %v2743 = vunpack.c.h.b16 %v2517
        %v2744 = vunpack.c.l.b16 %v2518
        %v2745 = vunpack.c.h.b16 %v2518
        %v2746 = vunpack.c.l.b16 %v2519
        %v2747 = vunpack.c.h.b16 %v2519
        %v2748 = vunpack.c.l.b16 %v2520
        %v2749 = vunpack.c.h.b16 %v2520
        %v2750 = vunpack.c.l.b16 %v2521
        %v2751 = vunpack.c.h.b16 %v2521
        %v2752 = vunpack.c.l.b16 %v2522
        %v2753 = vunpack.c.h.b16 %v2522
        %v2754 = vunpack.c.l.b16 %v2523
        %v2755 = vunpack.c.h.b16 %v2523
        %v2756 = vunpack.c.l.b16 %v2524
        %v2757 = vunpack.c.h.b16 %v2524
        %v2758 = vunpack.c.l.b16 %v2525
        %v2759 = vunpack.c.h.b16 %v2525
        %v2760 = vunpack.c.l.b16 %v2526
        %v2761 = vunpack.c.h.b16 %v2526
        %v2762 = vunpack.c.l.b16 %v2527
        %v2763 = vunpack.c.h.b16 %v2527
        %v2764 = vunpack.c.l.b16 %v2528
        %v2765 = vunpack.c.h.b16 %v2528
        %v2766 = vunpack.c.l.b16 %v2529
        %v2767 = vunpack.c.h.b16 %v2529
        %v2768 = vunpack.c.l.b16 %v2530
        %v2769 = vunpack.c.h.b16 %v2530
        %v2770 = vunpack.c.l.b16 %v2531
        %v2771 = vunpack.c.h.b16 %v2531
        %v2772 = vunpack.c.l.b16 %v2532
        %v2773 = vunpack.c.h.b16 %v2532
        %v2774 = vunpack.c.l.b16 %v2533
        %v2775 = vunpack.c.h.b16 %v2533
        %v2776 = vunpack.c.l.b16 %v2534
        %v2777 = vunpack.c.h.b16 %v2534
        %v2778 = vunpack.c.l.b16 %v2535
        %v2779 = vunpack.c.h.b16 %v2535
        %v2780 = vunpack.c.l.b16 %v2536
        %v2781 = vunpack.c.h.b16 %v2536
        %v2782 = vunpack.c.l.b16 %v2537
        %v2783 = vunpack.c.h.b16 %v2537
        %v2784 = vunpack.c.l.b16 %v2538
        %v2785 = vunpack.c.h.b16 %v2538
        %v2786 = vunpack.c.l.b16 %v2539
        %v2787 = vunpack.c.h.b16 %v2539
        %v2788 = vunpack.c.l.b16 %v2540
        %v2789 = vunpack.c.h.b16 %v2540
        %v2790 = vunpack.c.l.b16 %v2541
        %v2791 = vunpack.c.h.b16 %v2541
        %v2792 = vunpack.c.l.b16 %v2542
        %v2793 = vunpack.c.h.b16 %v2542
        %v2794 = vunpack.c.l.b16 %v2543
        %v2795 = vunpack.c.h.b16 %v2543
        %v2796 = vunpack.c.l.b16 %v2544
        %v2797 = vunpack.c.h.b16 %v2544
        %v2798 = vunpack.c.l.b16 %v2545
        %v2799 = vunpack.c.h.b16 %v2545
        %v2800 = vunpack.c.l.b16 %v2546
        %v2801 = vunpack.c.h.b16 %v2546
        %v2802 = vunpack.c.l.b16 %v2547
        %v2803 = vunpack.c.h.b16 %v2547
        %v2804 = vunpack.c.l.b16 %v2548
        %v2805 = vunpack.c.h.b16 %v2548
        %v2806 = vunpack.c.l.b16 %v2549
        %v2807 = vunpack.c.h.b16 %v2549
        %v2808 = vunpack.c.l.b16 %v2550
        %v2809 = vunpack.c.h.b16 %v2550
        %v2810 = vunpack.c.l.b16 %v2551
        %v2811 = vunpack.c.h.b16 %v2551
        %v2812 = vunpack.c.l.b16 %v2552
        %v2813 = vunpack.c.h.b16 %v2552
        %v2814 = vunpack.c.l.b16 %v2553
        %v2815 = vunpack.c.h.b16 %v2553
        %v2816 = vunpack.c.l.b16 %v2554
        %v2817 = vunpack.c.h.b16 %v2554
        %v2818 = vunpack.c.l.b16 %v2555
        %v2819 = vunpack.c.h.b16 %v2555
        %v2820 = vunpack.c.l.b16 %v2556
        %v2821 = vunpack.c.h.b16 %v2556
        %v2822 = vunpack.c.l.b16 %v2557
        %v2823 = vunpack.c.h.b16 %v2557
        %v2824 = vunpack.c.l.b16 %v2558
        %v2825 = vunpack.c.h.b16 %v2558
        %v2826 = vunpack.c.l.b16 %v2559
        %v2827 = vunpack.c.h.b16 %v2559
        %v2828 = vunpack.c.l.b16 %v2560
        %v2829 = vunpack.c.h.b16 %v2560
        %v2830 = vunpack.c.l.b16 %v2561
        %v2831 = vunpack.c.h.b16 %v2561
        %v2832 = vunpack.c.l.b16 %v2562
        %v2833 = vunpack.c.h.b16 %v2562
        %v2834 = vunpack.c.l.b16 %v2563
        %v2835 = vunpack.c.h.b16 %v2563
        %v2836 = vunpack.c.l.b16 %v2564
        %v2837 = vunpack.c.h.b16 %v2564
        %v2838 = vunpack.c.l.b16 %v2565
        %v2839 = vunpack.c.h.b16 %v2565
        %v2840 = vunpack.c.l.b16 %v2566
        %v2841 = vunpack.c.h.b16 %v2566
        %v2842 = vunpack.c.l.b16 %v2567
        %v2843 = vunpack.c.h.b16 %v2567
        %v2844 = vunpack.c.l.b16 %v2568
        %v2845 = vunpack.c.h.b16 %v2568
        %v2846 = vunpack.c.l.b16 %v2569
        %v2847 = vunpack.c.h.b16 %v2569
        %v2848 = vunpack.c.l.b16 %v2570
        %v2849 = vunpack.c.h.b16 %v2570
        %v2850 = vunpack.c.l.b16 %v2571
        %v2851 = vunpack.c.h.b16 %v2571
        %v2852 = vunpack.c.l.b16 %v2572
        %v2853 = vunpack.c.h.b16 %v2572
        %v2854 = vunpack.c.l.b16 %v2573
        %v2855 = vunpack.c.h.b16 %v2573
        %v2856 = vunpack.c.l.b16 %v2574
        %v2857 = vunpack.c.h.b16 %v2574
        %v2858 = vunpack.c.l.b16 %v2575
        %v2859 = vunpack.c.h.b16 %v2575
        %v2860 = vunpack.c.l.b16 %v2576
        %v2861 = vunpack.c.h.b16 %v2576
        %v2862 = vunpack.c.l.b16 %v2577
        %v2863 = vunpack.c.h.b16 %v2577
        %v2864 = vunpack.c.l.b16 %v2578
        %v2865 = vunpack.c.h.b16 %v2578
        %v2866 = vunpack.c.l.b16 %v2579
        %v2867 = vunpack.c.h.b16 %v2579
        %v2868 = vunpack.c.l.b16 %v2580
        %v2869 = vunpack.c.h.b16 %v2580
        %v2870 = vunpack.c.l.b16 %v2581
        %v2871 = vunpack.c.h.b16 %v2581
        %v2872 = vunpack.c.l.b16 %v2582
        %v2873 = vunpack.c.h.b16 %v2582
        %v2874 = vunpack.c.l.b16 %v2583
        %v2875 = vunpack.c.h.b16 %v2583
        %v2876 = vunpack.c.l.b16 %v2584
        %v2877 = vunpack.c.h.b16 %v2584
        %v2878 = vunpack.c.l.b16 %v2585
        %v2879 = vunpack.c.h.b16 %v2585
        %v2880 = vunpack.c.l.b16 %v2586
        %v2881 = vunpack.c.h.b16 %v2586
        %v2882 = vunpack.c.l.b16 %v2587
        %v2883 = vunpack.c.h.b16 %v2587
        %v2884 = vunpack.c.l.b16 %v2588
        %v2885 = vunpack.c.h.b16 %v2588
        %v2886 = vunpack.c.l.b16 %v2589
        %v2887 = vunpack.c.h.b16 %v2589
        %v2888 = vunpack.c.l.b16 %v2590
        %v2889 = vunpack.c.h.b16 %v2590
        %v2890 = vunpack.c.l.b16 %v2591
        %v2891 = vunpack.c.h.b16 %v2591
        %v2892 = vunpack.c.l.b16 %v2592
        %v2893 = vunpack.c.h.b16 %v2592
        %v2894 = vunpack.c.l.b16 %v2593
        %v2895 = vunpack.c.h.b16 %v2593
        %v2896 = vunpack.c.l.b16 %v2594
        %v2897 = vunpack.c.h.b16 %v2594
        %v2898 = vunpack.c.l.b16 %v2595
        %v2899 = vunpack.c.h.b16 %v2595
        %v2900 = vunpack.c.l.b16 %v2596
        %v2901 = vunpack.c.h.b16 %v2596
        %v2902 = vunpack.c.l.b16 %v2597
        %v2903 = vunpack.c.h.b16 %v2597
        %v2904 = vunpack.c.l.b16 %v2598
        %v2905 = vunpack.c.h.b16 %v2598
        %v2906 = vunpack.c.l.b16 %v2599
        %v2907 = vunpack.c.h.b16 %v2599
        %v2908 = vunpack.c.l.b16 %v2600
        %v2909 = vunpack.c.h.b16 %v2600
        %v2910 = vunpack.c.l.b16 %v2601
        %v2911 = vunpack.c.h.b16 %v2601
        %v2912 = vunpack.c.l.b16 %v2602
        %v2913 = vunpack.c.h.b16 %v2602
        %v2914 = vunpack.c.l.b16 %v2603
        %v2915 = vunpack.c.h.b16 %v2603
        %v2916 = vunpack.c.l.b16 %v2604
        %v2917 = vunpack.c.h.b16 %v2604
        %v2918 = vunpack.c.l.b16 %v2605
        %v2919 = vunpack.c.h.b16 %v2605
        %v2920 = vunpack.c.l.b16 %v2606
        %v2921 = vunpack.c.h.b16 %v2606
        %v2922 = vunpack.c.l.b16 %v2607
        %v2923 = vunpack.c.h.b16 %v2607
        %v2924 = vunpack.c.l.b16 %v2608
        %v2925 = vunpack.c.h.b16 %v2608
        %v2926 = vunpack.c.l.b16 %v2609
        %v2927 = vunpack.c.h.b16 %v2609
        %v2928 = vunpack.c.l.b16 %v2610
        %v2929 = vunpack.c.h.b16 %v2610
        %v2930 = vunpack.c.l.b16 %v2611
        %v2931 = vunpack.c.h.b16 %v2611
        %v2932 = vunpack.c.l.b16 %v2612
        %v2933 = vunpack.c.h.b16 %v2612
        %v2934 = vunpack.c.l.b16 %v2613
        %v2935 = vunpack.c.h.b16 %v2613
        %v2936 = vpack.c.b16 %v2740, %v2736
        %v2937 = vpack.c.b16 %v2741, %v2737
        %v2938 = vpack.c.b16 %v2742, %v2738
        %v2939 = vpack.c.b16 %v2743, %v2739
        %v2940 = vpack.c.b16 %v2748, %v2744
        %v2941 = vpack.c.b16 %v2749, %v2745
        %v2942 = vpack.c.b16 %v2750, %v2746
        %v2943 = vpack.c.b16 %v2751, %v2747
        %v2944 = vpack.c.b16 %v2756, %v2752
        %v2945 = vpack.c.b16 %v2757, %v2753
        %v2946 = vpack.c.b16 %v2758, %v2754
        %v2947 = vpack.c.b16 %v2759, %v2755
        %v2948 = vpack.c.b16 %v2764, %v2760
        %v2949 = vpack.c.b16 %v2765, %v2761
        %v2950 = vpack.c.b16 %v2766, %v2762
        %v2951 = vpack.c.b16 %v2767, %v2763
        %v2952 = vpack.c.b16 %v2772, %v2768
        %v2953 = vpack.c.b16 %v2773, %v2769
        %v2954 = vpack.c.b16 %v2774, %v2770
        %v2955 = vpack.c.b16 %v2775, %v2771
        %v2956 = vpack.c.b16 %v2780, %v2776
        %v2957 = vpack.c.b16 %v2781, %v2777
        %v2958 = vpack.c.b16 %v2782, %v2778
        %v2959 = vpack.c.b16 %v2783, %v2779
        %v2960 = vpack.c.b16 %v2788, %v2784
        %v2961 = vpack.c.b16 %v2789, %v2785
        %v2962 = vpack.c.b16 %v2790, %v2786
        %v2963 = vpack.c.b16 %v2791, %v2787
        %v2964 = vpack.c.b16 %v2796, %v2792
        %v2965 = vpack.c.b16 %v2797, %v2793
        %v2966 = vpack.c.b16 %v2798, %v2794
        %v2967 = vpack.c.b16 %v2799, %v2795
        %v2968 = vpack.c.b16 %v2804, %v2800
        %v2969 = vpack.c.b16 %v2805, %v2801
        %v2970 = vpack.c.b16 %v2806, %v2802
        %v2971 = vpack.c.b16 %v2807, %v2803
        %v2972 = vpack.c.b16 %v2812, %v2808
        %v2973 = vpack.c.b16 %v2813, %v2809
        %v2974 = vpack.c.b16 %v2814, %v2810
        %v2975 = vpack.c.b16 %v2815, %v2811
        %v2976 = vpack.c.b16 %v2820, %v2816
        %v2977 = vpack.c.b16 %v2821, %v2817
        %v2978 = vpack.c.b16 %v2822, %v2818
        %v2979 = vpack.c.b16 %v2823, %v2819
        %v2980 = vpack.c.b16 %v2828, %v2824
        %v2981 = vpack.c.b16 %v2829, %v2825
        %v2982 = vpack.c.b16 %v2830, %v2826
        %v2983 = vpack.c.b16 %v2831, %v2827
        %v2984 = vpack.c.b16 %v2836, %v2832
        %v2985 = vpack.c.b16 %v2837, %v2833
        %v2986 = vpack.c.b16 %v2838, %v2834
        %v2987 = vpack.c.b16 %v2839, %v2835
        %v2988 = vpack.c.b16 %v2844, %v2840
        %v2989 = vpack.c.b16 %v2845, %v2841
        %v2990 = vpack.c.b16 %v2846, %v2842
        %v2991 = vpack.c.b16 %v2847, %v2843
        %v2992 = vpack.c.b16 %v2852, %v2848
        %v2993 = vpack.c.b16 %v2853, %v2849
        %v2994 = vpack.c.b16 %v2854, %v2850
        %v2995 = vpack.c.b16 %v2855, %v2851
        %v2996 = vpack.c.b16 %v2860, %v2856
        %v2997 = vpack.c.b16 %v2861, %v2857
        %v2998 = vpack.c.b16 %v2862, %v2858
        %v2999 = vpack.c.b16 %v2863, %v2859
        %v3000 = vpack.c.b16 %v2868, %v2864
        %v3001 = vpack.c.b16 %v2869, %v2865
        %v3002 = vpack.c.b16 %v2870, %v2866
        %v3003 = vpack.c.b16 %v2871, %v2867
        %v3004 = vpack.c.b16 %v2876, %v2872
        %v3005 = vpack.c.b16 %v2877, %v2873
        %v3006 = vpack.c.b16 %v2878, %v2874
        %v3007 = vpack.c.b16 %v2879, %v2875
        %v3008 = vpack.c.b16 %v2884, %v2880
        %v3009 = vpack.c.b16 %v2885, %v2881
        %v3010 = vpack.c.b16 %v2886, %v2882
        %v3011 = vpack.c.b16 %v2887, %v2883
        %v3012 = vpack.c.b16 %v2892, %v2888
        %v3013 = vpack.c.b16 %v2893, %v2889
        %v3014 = vpack.c.b16 %v2894, %v2890
        %v3015 = vpack.c.b16 %v2895, %v2891
        %v3016 = vpack.c.b16 %v2900, %v2896
        %v3017 = vpack.c.b16 %v2901, %v2897
        %v3018 = vpack.c.b16 %v2902, %v2898
        %v3019 = vpack.c.b16 %v2903, %v2899
        %v3020 = vpack.c.b16 %v2908, %v2904
        %v3021 = vpack.c.b16 %v2909, %v2905
        %v3022 = vpack.c.b16 %v2910, %v2906
        %v3023 = vpack.c.b16 %v2911, %v2907
        %v3024 = vpack.c.b16 %v2916, %v2912
        %v3025 = vpack.c.b16 %v2917, %v2913
        %v3026 = vpack.c.b16 %v2918, %v2914
        %v3027 = vpack.c.b16 %v2919, %v2915
        %v3028 = vpack.c.b16 %v2924, %v2920
        %v3029 = vpack.c.b16 %v2925, %v2921
        %v3030 = vpack.c.b16 %v2926, %v2922
        %v3031 = vpack.c.b16 %v2927, %v2923
        %v3032 = vpack.c.b16 %v2932, %v2928
        %v3033 = vpack.c.b16 %v2933, %v2929
        %v3034 = vpack.c.b16 %v2934, %v2930
        %v3035 = vpack.c.b16 %v2935, %v2931
        %3136 = vmatprep.subr.bf16.mxu0 %v2937
        %3137 = vmatpush1.bf16.msra.mxu0 %v2936
        %3138 = vmatprep.subr.bf16.mxu0 %v2941
        %3139 = vmatpush1.bf16.msra.mxu0 %v2940
        %3140 = vmatprep.subr.bf16.mxu0 %v2945
        %3141 = vmatpush1.bf16.msra.mxu0 %v2944
        %3142 = vmatprep.subr.bf16.mxu0 %v2949
        %3143 = vmatpush1.bf16.msra.mxu0 %v2948
        %3144 = vmatprep.subr.bf16.mxu0 %v2953
        %3145 = vmatpush1.bf16.msra.mxu0 %v2952
        %3146 = vmatprep.subr.bf16.mxu0 %v2957
        %3147 = vmatpush1.bf16.msra.mxu0 %v2956
        %3148 = vmatprep.subr.bf16.mxu0 %v2961
        %3149 = vmatpush1.bf16.msra.mxu0 %v2960
        %3150 = vmatprep.subr.bf16.mxu0 %v2965
        %3151 = vmatpush1.bf16.msra.mxu0 %v2964
        %3152 = vmatprep.subr.bf16.mxu0 %v2969
        %3153 = vmatpush1.bf16.msra.mxu0 %v2968
        %3154 = vmatprep.subr.bf16.mxu0 %v2973
        %3155 = vmatpush1.bf16.msra.mxu0 %v2972
        %3156 = vmatprep.subr.bf16.mxu0 %v2977
        %3157 = vmatpush1.bf16.msra.mxu0 %v2976
        %3158 = vmatprep.subr.bf16.mxu0 %v2981
        %3159 = vmatpush1.bf16.msra.mxu0 %v2980
        %3160 = vmatprep.subr.bf16.mxu0 %v2985
        %3161 = vmatpush1.bf16.msra.mxu0 %v2984
        %3162 = vmatprep.subr.bf16.mxu0 %v2989
        %3163 = vmatpush1.bf16.msra.mxu0 %v2988
        %3164 = vmatprep.subr.bf16.mxu0 %v2993
        %3165 = vmatpush1.bf16.msra.mxu0 %v2992
        %3166 = vmatprep.subr.bf16.mxu0 %v2997
        %3167 = vmatpush1.bf16.msra.mxu0 %v2996
        %3168 = vmatprep.mubr.bf16.mxu0 %v1722
        %3169 = vmatmul.mubr.bf16.gmra.mrb[0].mxu0 %v1721
        %v3170 = vpop.f32.mrb[0].mxu0
        %v3171 = vadd.f32 %v2619, %v3170
        %v3172 = vpop.f32.mrb[0].mxu0
        %v3173 = vadd.f32 %v2623, %v3172
        %v3174 = vpop.f32.mrb[0].mxu0
        %v3175 = vpop.f32.mrb[0].mxu0
        %3176 = vdwg.mxu0
        %3177 = vmatprep.subr.bf16.mxu0 %v3001
        %3178 = vmatpush1.bf16.msra.mxu0 %v3000
        %3179 = vmatprep.subr.bf16.mxu0 %v3005
        %3180 = vmatpush1.bf16.msra.mxu0 %v3004
        %3181 = vmatprep.subr.bf16.mxu0 %v3009
        %3182 = vmatpush1.bf16.msra.mxu0 %v3008
        %3183 = vmatprep.subr.bf16.mxu0 %v3013
        %3184 = vmatpush1.bf16.msra.mxu0 %v3012
        %3185 = vmatprep.subr.bf16.mxu0 %v3017
        %3186 = vmatpush1.bf16.msra.mxu0 %v3016
        %3187 = vmatprep.subr.bf16.mxu0 %v3021
        %3188 = vmatpush1.bf16.msra.mxu0 %v3020
        %3189 = vmatprep.subr.bf16.mxu0 %v3025
        %3190 = vmatpush1.bf16.msra.mxu0 %v3024
        %3191 = vmatprep.subr.bf16.mxu0 %v3029
        %3192 = vmatpush1.bf16.msra.mxu0 %v3028
        %3193 = vmatprep.subr.bf16.mxu0 %v3033
        %3194 = vmatpush1.bf16.msra.mxu0 %v3032
        %3195 = vmatprep.subr.bf16.mxu0 0
        %3196 = vmatpush1.bf16.msra.mxu0 0
        %3197 = vmatprep.subr.bf16.mxu0 0
        %3198 = vmatpush1.bf16.msra.mxu0 0
        %3199 = vmatprep.subr.bf16.mxu0 0
        %3200 = vmatpush1.bf16.msra.mxu0 0
        %3201 = vmatprep.subr.bf16.mxu0 0
        %3202 = vmatpush1.bf16.msra.mxu0 0
        %3203 = vmatprep.subr.bf16.mxu0 0
        %3204 = vmatpush1.bf16.msra.mxu0 0
        %3205 = vmatprep.subr.bf16.mxu0 0
        %3206 = vmatpush1.bf16.msra.mxu0 0
        %3207 = vmatprep.subr.bf16.mxu0 0
        %3208 = vmatpush1.bf16.msra.mxu0 0
        %3209 = vmatprep.mubr.bf16.mxu0 %v2348
        %3210 = vmatmul.mubr.bf16.gmra.mrb[0].mxu0 %v1723
        %v3211 = vpop.f32.mrb[0].mxu0
        %v3212 = vadd.f32 %v3171, %v3211
        %v3213 = vpop.f32.mrb[0].mxu0
        %v3214 = vadd.f32 %v3173, %v3213
        %v3215 = vpop.f32.mrb[0].mxu0
        %v3216 = vpop.f32.mrb[0].mxu0
        %3217 = vdwg.mxu0
        %3218 = vmatprep.subr.bf16.mxu0 %v2939
        %3219 = vmatpush1.bf16.msra.mxu0 %v2938
        %3220 = vmatprep.subr.bf16.mxu0 %v2943
        %3221 = vmatpush1.bf16.msra.mxu0 %v2942
        %3222 = vmatprep.subr.bf16.mxu0 %v2947
        %3223 = vmatpush1.bf16.msra.mxu0 %v2946
        %3224 = vmatprep.subr.bf16.mxu0 %v2951
        %3225 = vmatpush1.bf16.msra.mxu0 %v2950
        %3226 = vmatprep.subr.bf16.mxu0 %v2955
        %3227 = vmatpush1.bf16.msra.mxu0 %v2954
        %3228 = vmatprep.subr.bf16.mxu0 %v2959
        %3229 = vmatpush1.bf16.msra.mxu0 %v2958
        %3230 = vmatprep.subr.bf16.mxu0 %v2963
        %3231 = vmatpush1.bf16.msra.mxu0 %v2962
        %3232 = vmatprep.subr.bf16.mxu0 %v2967
        %3233 = vmatpush1.bf16.msra.mxu0 %v2966
        %3234 = vmatprep.subr.bf16.mxu0 %v2971
        %3235 = vmatpush1.bf16.msra.mxu0 %v2970
        %3236 = vmatprep.subr.bf16.mxu0 %v2975
        %3237 = vmatpush1.bf16.msra.mxu0 %v2974
        %3238 = vmatprep.subr.bf16.mxu0 %v2979
        %3239 = vmatpush1.bf16.msra.mxu0 %v2978
        %3240 = vmatprep.subr.bf16.mxu0 %v2983
        %3241 = vmatpush1.bf16.msra.mxu0 %v2982
        %3242 = vmatprep.subr.bf16.mxu0 %v2987
        %3243 = vmatpush1.bf16.msra.mxu0 %v2986
        %3244 = vmatprep.subr.bf16.mxu0 %v2991
        %3245 = vmatpush1.bf16.msra.mxu0 %v2990
        %3246 = vmatprep.subr.bf16.mxu0 %v2995
        %3247 = vmatpush1.bf16.msra.mxu0 %v2994
        %3248 = vmatprep.subr.bf16.mxu0 %v2999
        %3249 = vmatpush1.bf16.msra.mxu0 %v2998
        %3250 = vmatprep.mubr.bf16.mxu0 %v1722
        %3251 = vmatmul.mubr.bf16.gmra.mrb[0].mxu0 %v1721
        %v3252 = vpop.f32.mrb[0].mxu0
        %v3253 = vadd.f32 %v2627, %v3252
        %v3254 = vpop.f32.mrb[0].mxu0
        %v3255 = vadd.f32 %v2631, %v3254
        %v3256 = vpop.f32.mrb[0].mxu0
        %v3257 = vpop.f32.mrb[0].mxu0
        %3258 = vdwg.mxu0
        %3259 = vmatprep.subr.bf16.mxu0 %v3003
        %3260 = vmatpush1.bf16.msra.mxu0 %v3002
        %3261 = vmatprep.subr.bf16.mxu0 %v3007
        %3262 = vmatpush1.bf16.msra.mxu0 %v3006
        %3263 = vmatprep.subr.bf16.mxu0 %v3011
        %3264 = vmatpush1.bf16.msra.mxu0 %v3010
        %3265 = vmatprep.subr.bf16.mxu0 %v3015
        %3266 = vmatpush1.bf16.msra.mxu0 %v3014
        %3267 = vmatprep.subr.bf16.mxu0 %v3019
        %3268 = vmatpush1.bf16.msra.mxu0 %v3018
        %3269 = vmatprep.subr.bf16.mxu0 %v3023
        %3270 = vmatpush1.bf16.msra.mxu0 %v3022
        %3271 = vmatprep.subr.bf16.mxu0 %v3027
        %3272 = vmatpush1.bf16.msra.mxu0 %v3026
        %3273 = vmatprep.subr.bf16.mxu0 %v3031
        %3274 = vmatpush1.bf16.msra.mxu0 %v3030
        %3275 = vmatprep.subr.bf16.mxu0 %v3035
        %3276 = vmatpush1.bf16.msra.mxu0 %v3034
        %3277 = vmatprep.subr.bf16.mxu0 0
        %3278 = vmatpush1.bf16.msra.mxu0 0
        %3279 = vmatprep.subr.bf16.mxu0 0
        %3280 = vmatpush1.bf16.msra.mxu0 0
        %3281 = vmatprep.subr.bf16.mxu0 0
        %3282 = vmatpush1.bf16.msra.mxu0 0
        %3283 = vmatprep.subr.bf16.mxu0 0
        %3284 = vmatpush1.bf16.msra.mxu0 0
        %3285 = vmatprep.subr.bf16.mxu0 0
        %3286 = vmatpush1.bf16.msra.mxu0 0
        %3287 = vmatprep.subr.bf16.mxu0 0
        %3288 = vmatpush1.bf16.msra.mxu0 0
        %3289 = vmatprep.subr.bf16.mxu0 0
        %3290 = vmatpush1.bf16.msra.mxu0 0
        %3291 = vmatprep.mubr.bf16.mxu0 %v2348
        %3292 = vmatmul.mubr.bf16.gmra.mrb[0].mxu0 %v1723
        %v3293 = vpop.f32.mrb[0].mxu0
        %v3294 = vadd.f32 %v3253, %v3293
        %v3295 = vpop.f32.mrb[0].mxu0
        %v3296 = vadd.f32 %v3255, %v3295
        %v3297 = vpop.f32.mrb[0].mxu0
        %v3298 = vpop.f32.mrb[0].mxu0
        %3299 = vdwg.mxu0
        %v3300 = vld [vmem:[#allocation10] sm:$0xff]
        %v3301 = vld [vmem:[#allocation10 + $0x8] sm:$0xff]
        %v3302 = vld [vmem:[#allocation10 + $0x10] sm:$0xff]
        %v3303 = vld [vmem:[#allocation10 + $0x18] sm:$0xff]
        %v3304 = vld [vmem:[#allocation10 + $0x20] sm:$0xff]
        %v3305 = vld [vmem:[#allocation10 + $0x28] sm:$0xff]
        %v3306 = vld [vmem:[#allocation10 + $0x30] sm:$0xff]
        %v3307 = vld [vmem:[#allocation10 + $0x38] sm:$0xff]
        %v3308 = vld [vmem:[#allocation10 + $0x40] sm:$0xff]
        %v3309 = vld [vmem:[#allocation10 + $0x48] sm:$0xff]
        %v3310 = vld [vmem:[#allocation10 + $0x50] sm:$0xff]
        %v3311 = vld [vmem:[#allocation10 + $0x58] sm:$0xff]
        %v3312 = vld [vmem:[#allocation10 + $0x60] sm:$0xff]
        %v3313 = vld [vmem:[#allocation10 + $0x68] sm:$0xff]
        %v3314 = vld [vmem:[#allocation10 + $0x70] sm:$0xff]
        %v3315 = vld [vmem:[#allocation10 + $0x78] sm:$0xff]
        %v3316 = vld [vmem:[#allocation10 + $0x80] sm:$0xff]
        %v3317 = vld [vmem:[#allocation10 + $0x88] sm:$0xff]
        %v3318 = vld [vmem:[#allocation10 + $0x90] sm:$0xff]
        %v3319 = vld [vmem:[#allocation10 + $0x98] sm:$0xff]
        %v3320 = vld [vmem:[#allocation10 + $0xa0] sm:$0xff]
        %v3321 = vld [vmem:[#allocation10 + $0xa8] sm:$0xff]
        %v3322 = vld [vmem:[#allocation10 + $0xb0] sm:$0xff]
        %v3323 = vld [vmem:[#allocation10 + $0xb8] sm:$0xff]
        %v3324 = vld [vmem:[#allocation10 + $0xc0] sm:$0xff]
        %v3325 = vld [vmem:[#allocation10 + $0xc8] sm:$0xff]
        %v3326 = vld [vmem:[#allocation10 + $0xd0] sm:$0xff]
        %v3327 = vld [vmem:[#allocation10 + $0xd8] sm:$0xff]
        %v3328 = vld [vmem:[#allocation10 + $0xe0] sm:$0xff]
        %v3329 = vld [vmem:[#allocation10 + $0xe8] sm:$0xff]
        %v3330 = vld [vmem:[#allocation10 + $0xf0] sm:$0xff]
        %v3331 = vld [vmem:[#allocation10 + $0xf8] sm:$0xff]
        %v3332 = vld [vmem:[#allocation10 + $0x100] sm:$0xff]
        %v3333 = vld [vmem:[#allocation10 + $0x108] sm:$0xff]
        %v3334 = vld [vmem:[#allocation10 + $0x110] sm:$0xff]
        %v3335 = vld [vmem:[#allocation10 + $0x118] sm:$0xff]
        %v3336 = vld [vmem:[#allocation10 + $0x120] sm:$0xff]
        %v3337 = vld [vmem:[#allocation10 + $0x128] sm:$0xff]
        %v3338 = vld [vmem:[#allocation10 + $0x130] sm:$0xff]
        %v3339 = vld [vmem:[#allocation10 + $0x138] sm:$0xff]
        %v3340 = vld [vmem:[#allocation10 + $0x140] sm:$0xff]
        %v3341 = vld [vmem:[#allocation10 + $0x148] sm:$0xff]
        %v3342 = vld [vmem:[#allocation10 + $0x150] sm:$0xff]
        %v3343 = vld [vmem:[#allocation10 + $0x158] sm:$0xff]
        %v3344 = vld [vmem:[#allocation10 + $0x160] sm:$0xff]
        %v3345 = vld [vmem:[#allocation10 + $0x168] sm:$0xff]
        %v3346 = vld [vmem:[#allocation10 + $0x170] sm:$0xff]
        %v3347 = vld [vmem:[#allocation10 + $0x178] sm:$0xff]
        %v3348 = vld [vmem:[#allocation10 + $0x180] sm:$0xff]
        %v3349 = vld [vmem:[#allocation10 + $0x188] sm:$0xff]
        %v3350 = vld [vmem:[#allocation10 + $0x190] sm:$0xff]
        %v3351 = vld [vmem:[#allocation10 + $0x198] sm:$0xff]
        %v3352 = vld [vmem:[#allocation10 + $0x1a0] sm:$0xff]
        %v3353 = vld [vmem:[#allocation10 + $0x1a8] sm:$0xff]
        %v3354 = vld [vmem:[#allocation10 + $0x1b0] sm:$0xff]
        %v3355 = vld [vmem:[#allocation10 + $0x1b8] sm:$0xff]
        %v3356 = vld [vmem:[#allocation10 + $0x1c0] sm:$0xff]
        %v3357 = vld [vmem:[#allocation10 + $0x1c8] sm:$0xff]
        %v3358 = vld [vmem:[#allocation10 + $0x1d0] sm:$0xff]
        %v3359 = vld [vmem:[#allocation10 + $0x1d8] sm:$0xff]
        %v3360 = vld [vmem:[#allocation10 + $0x1e0] sm:$0xff]
        %v3361 = vld [vmem:[#allocation10 + $0x1e8] sm:$0xff]
        %v3362 = vld [vmem:[#allocation10 + $0x1f0] sm:$0xff]
        %v3363 = vld [vmem:[#allocation10 + $0x1f8] sm:$0xff]
        %v3364 = vld [vmem:[#allocation10 + $0x200] sm:$0xff]
        %v3365 = vld [vmem:[#allocation10 + $0x208] sm:$0xff]
        %v3366 = vld [vmem:[#allocation10 + $0x210] sm:$0xff]
        %v3367 = vld [vmem:[#allocation10 + $0x218] sm:$0xff]
        %v3368 = vld [vmem:[#allocation10 + $0x220] sm:$0xff]
        %v3369 = vld [vmem:[#allocation10 + $0x228] sm:$0xff]
        %v3370 = vld [vmem:[#allocation10 + $0x230] sm:$0xff]
        %v3371 = vld [vmem:[#allocation10 + $0x238] sm:$0xff]
        %v3372 = vld [vmem:[#allocation10 + $0x240] sm:$0xff]
        %v3373 = vld [vmem:[#allocation10 + $0x248] sm:$0xff]
        %v3374 = vld [vmem:[#allocation10 + $0x250] sm:$0xff]
        %v3375 = vld [vmem:[#allocation10 + $0x258] sm:$0xff]
        %v3376 = vld [vmem:[#allocation10 + $0x260] sm:$0xff]
        %v3377 = vld [vmem:[#allocation10 + $0x268] sm:$0xff]
        %v3378 = vld [vmem:[#allocation10 + $0x270] sm:$0xff]
        %v3379 = vld [vmem:[#allocation10 + $0x278] sm:$0xff]
        %v3380 = vld [vmem:[#allocation10 + $0x280] sm:$0xff]
        %v3381 = vld [vmem:[#allocation10 + $0x288] sm:$0xff]
        %v3382 = vld [vmem:[#allocation10 + $0x290] sm:$0xff]
        %v3383 = vld [vmem:[#allocation10 + $0x298] sm:$0xff]
        %v3384 = vld [vmem:[#allocation10 + $0x2a0] sm:$0xff]
        %v3385 = vld [vmem:[#allocation10 + $0x2a8] sm:$0xff]
        %v3386 = vld [vmem:[#allocation10 + $0x2b0] sm:$0xff]
        %v3387 = vld [vmem:[#allocation10 + $0x2b8] sm:$0xff]
        %v3388 = vld [vmem:[#allocation10 + $0x2c0] sm:$0xff]
        %v3389 = vld [vmem:[#allocation10 + $0x2c8] sm:$0xff]
        %v3390 = vld [vmem:[#allocation10 + $0x2d0] sm:$0xff]
        %v3391 = vld [vmem:[#allocation10 + $0x2d8] sm:$0xff]
        %v3392 = vld [vmem:[#allocation10 + $0x2e0] sm:$0xff]
        %v3393 = vld [vmem:[#allocation10 + $0x2e8] sm:$0xff]
        %v3394 = vld [vmem:[#allocation10 + $0x2f0] sm:$0xff]
        %v3395 = vld [vmem:[#allocation10 + $0x2f8] sm:$0xff]
        %v3396 = vld [vmem:[#allocation10 + $0x300] sm:$0xff]
        %v3397 = vld [vmem:[#allocation10 + $0x308] sm:$0xff]
        %v3398 = vld [vmem:[#allocation10 + $0x310] sm:$0xff]
        %v3399 = vld [vmem:[#allocation10 + $0x318] sm:$0xff]
        %v3400 = vld [vmem:[%s8] sm:$0xf]
        %v3402 = vlaneseq
        %v3403 = vshrl.u32 %v3402, 7
        %v3404 = vsub.s32 0, %v3403
        %v3405 = vrot.slane %v3400, %v3404
        %v3406 = vlaneseq
        %v3407 = vshrl.u32 %v3406, 7
        %v3408 = vsub.s32 1, %v3407
        %v3409 = vrot.slane %v3400, %v3408
        %v3410 = vlaneseq
        %v3411 = vshrl.u32 %v3410, 7
        %v3412 = vsub.s32 2, %v3411
        %v3413 = vrot.slane %v3400, %v3412
        %v3414 = vlaneseq
        %v3415 = vshrl.u32 %v3414, 7
        %v3416 = vsub.s32 3, %v3415
        %v3417 = vrot.slane %v3400, %v3416
        %v3522 = vunpack.c.l.b16 %v3300
        %v3523 = vunpack.c.h.b16 %v3300
        %v3524 = vunpack.c.l.b16 %v3301
        %v3525 = vunpack.c.h.b16 %v3301
        %v3526 = vunpack.c.l.b16 %v3302
        %v3527 = vunpack.c.h.b16 %v3302
        %v3528 = vunpack.c.l.b16 %v3303
        %v3529 = vunpack.c.h.b16 %v3303
        %v3530 = vunpack.c.l.b16 %v3304
        %v3531 = vunpack.c.h.b16 %v3304
        %v3532 = vunpack.c.l.b16 %v3305
        %v3533 = vunpack.c.h.b16 %v3305
        %v3534 = vunpack.c.l.b16 %v3306
        %v3535 = vunpack.c.h.b16 %v3306
        %v3536 = vunpack.c.l.b16 %v3307
        %v3537 = vunpack.c.h.b16 %v3307
        %v3538 = vunpack.c.l.b16 %v3308
        %v3539 = vunpack.c.h.b16 %v3308
        %v3540 = vunpack.c.l.b16 %v3309
        %v3541 = vunpack.c.h.b16 %v3309
        %v3542 = vunpack.c.l.b16 %v3310
        %v3543 = vunpack.c.h.b16 %v3310
        %v3544 = vunpack.c.l.b16 %v3311
        %v3545 = vunpack.c.h.b16 %v3311
        %v3546 = vunpack.c.l.b16 %v3312
        %v3547 = vunpack.c.h.b16 %v3312
        %v3548 = vunpack.c.l.b16 %v3313
        %v3549 = vunpack.c.h.b16 %v3313
        %v3550 = vunpack.c.l.b16 %v3314
        %v3551 = vunpack.c.h.b16 %v3314
        %v3552 = vunpack.c.l.b16 %v3315
        %v3553 = vunpack.c.h.b16 %v3315
        %v3554 = vunpack.c.l.b16 %v3316
        %v3555 = vunpack.c.h.b16 %v3316
        %v3556 = vunpack.c.l.b16 %v3317
        %v3557 = vunpack.c.h.b16 %v3317
        %v3558 = vunpack.c.l.b16 %v3318
        %v3559 = vunpack.c.h.b16 %v3318
        %v3560 = vunpack.c.l.b16 %v3319
        %v3561 = vunpack.c.h.b16 %v3319
        %v3562 = vunpack.c.l.b16 %v3320
        %v3563 = vunpack.c.h.b16 %v3320
        %v3564 = vunpack.c.l.b16 %v3321
        %v3565 = vunpack.c.h.b16 %v3321
        %v3566 = vunpack.c.l.b16 %v3322
        %v3567 = vunpack.c.h.b16 %v3322
        %v3568 = vunpack.c.l.b16 %v3323
        %v3569 = vunpack.c.h.b16 %v3323
        %v3570 = vunpack.c.l.b16 %v3324
        %v3571 = vunpack.c.h.b16 %v3324
        %v3572 = vunpack.c.l.b16 %v3325
        %v3573 = vunpack.c.h.b16 %v3325
        %v3574 = vunpack.c.l.b16 %v3326
        %v3575 = vunpack.c.h.b16 %v3326
        %v3576 = vunpack.c.l.b16 %v3327
        %v3577 = vunpack.c.h.b16 %v3327
        %v3578 = vunpack.c.l.b16 %v3328
        %v3579 = vunpack.c.h.b16 %v3328
        %v3580 = vunpack.c.l.b16 %v3329
        %v3581 = vunpack.c.h.b16 %v3329
        %v3582 = vunpack.c.l.b16 %v3330
        %v3583 = vunpack.c.h.b16 %v3330
        %v3584 = vunpack.c.l.b16 %v3331
        %v3585 = vunpack.c.h.b16 %v3331
        %v3586 = vunpack.c.l.b16 %v3332
        %v3587 = vunpack.c.h.b16 %v3332
        %v3588 = vunpack.c.l.b16 %v3333
        %v3589 = vunpack.c.h.b16 %v3333
        %v3590 = vunpack.c.l.b16 %v3334
        %v3591 = vunpack.c.h.b16 %v3334
        %v3592 = vunpack.c.l.b16 %v3335
        %v3593 = vunpack.c.h.b16 %v3335
        %v3594 = vunpack.c.l.b16 %v3336
        %v3595 = vunpack.c.h.b16 %v3336
        %v3596 = vunpack.c.l.b16 %v3337
        %v3597 = vunpack.c.h.b16 %v3337
        %v3598 = vunpack.c.l.b16 %v3338
        %v3599 = vunpack.c.h.b16 %v3338
        %v3600 = vunpack.c.l.b16 %v3339
        %v3601 = vunpack.c.h.b16 %v3339
        %v3602 = vunpack.c.l.b16 %v3340
        %v3603 = vunpack.c.h.b16 %v3340
        %v3604 = vunpack.c.l.b16 %v3341
        %v3605 = vunpack.c.h.b16 %v3341
        %v3606 = vunpack.c.l.b16 %v3342
        %v3607 = vunpack.c.h.b16 %v3342
        %v3608 = vunpack.c.l.b16 %v3343
        %v3609 = vunpack.c.h.b16 %v3343
        %v3610 = vunpack.c.l.b16 %v3344
        %v3611 = vunpack.c.h.b16 %v3344
        %v3612 = vunpack.c.l.b16 %v3345
        %v3613 = vunpack.c.h.b16 %v3345
        %v3614 = vunpack.c.l.b16 %v3346
        %v3615 = vunpack.c.h.b16 %v3346
        %v3616 = vunpack.c.l.b16 %v3347
        %v3617 = vunpack.c.h.b16 %v3347
        %v3618 = vunpack.c.l.b16 %v3348
        %v3619 = vunpack.c.h.b16 %v3348
        %v3620 = vunpack.c.l.b16 %v3349
        %v3621 = vunpack.c.h.b16 %v3349
        %v3622 = vunpack.c.l.b16 %v3350
        %v3623 = vunpack.c.h.b16 %v3350
        %v3624 = vunpack.c.l.b16 %v3351
        %v3625 = vunpack.c.h.b16 %v3351
        %v3626 = vunpack.c.l.b16 %v3352
        %v3627 = vunpack.c.h.b16 %v3352
        %v3628 = vunpack.c.l.b16 %v3353
        %v3629 = vunpack.c.h.b16 %v3353
        %v3630 = vunpack.c.l.b16 %v3354
        %v3631 = vunpack.c.h.b16 %v3354
        %v3632 = vunpack.c.l.b16 %v3355
        %v3633 = vunpack.c.h.b16 %v3355
        %v3634 = vunpack.c.l.b16 %v3356
        %v3635 = vunpack.c.h.b16 %v3356
        %v3636 = vunpack.c.l.b16 %v3357
        %v3637 = vunpack.c.h.b16 %v3357
        %v3638 = vunpack.c.l.b16 %v3358
        %v3639 = vunpack.c.h.b16 %v3358
        %v3640 = vunpack.c.l.b16 %v3359
        %v3641 = vunpack.c.h.b16 %v3359
        %v3642 = vunpack.c.l.b16 %v3360
        %v3643 = vunpack.c.h.b16 %v3360
        %v3644 = vunpack.c.l.b16 %v3361
        %v3645 = vunpack.c.h.b16 %v3361
        %v3646 = vunpack.c.l.b16 %v3362
        %v3647 = vunpack.c.h.b16 %v3362
        %v3648 = vunpack.c.l.b16 %v3363
        %v3649 = vunpack.c.h.b16 %v3363
        %v3650 = vunpack.c.l.b16 %v3364
        %v3651 = vunpack.c.h.b16 %v3364
        %v3652 = vunpack.c.l.b16 %v3365
        %v3653 = vunpack.c.h.b16 %v3365
        %v3654 = vunpack.c.l.b16 %v3366
        %v3655 = vunpack.c.h.b16 %v3366
        %v3656 = vunpack.c.l.b16 %v3367
        %v3657 = vunpack.c.h.b16 %v3367
        %v3658 = vunpack.c.l.b16 %v3368
        %v3659 = vunpack.c.h.b16 %v3368
        %v3660 = vunpack.c.l.b16 %v3369
        %v3661 = vunpack.c.h.b16 %v3369
        %v3662 = vunpack.c.l.b16 %v3370
        %v3663 = vunpack.c.h.b16 %v3370
        %v3664 = vunpack.c.l.b16 %v3371
        %v3665 = vunpack.c.h.b16 %v3371
        %v3666 = vunpack.c.l.b16 %v3372
        %v3667 = vunpack.c.h.b16 %v3372
        %v3668 = vunpack.c.l.b16 %v3373
        %v3669 = vunpack.c.h.b16 %v3373
        %v3670 = vunpack.c.l.b16 %v3374
        %v3671 = vunpack.c.h.b16 %v3374
        %v3672 = vunpack.c.l.b16 %v3375
        %v3673 = vunpack.c.h.b16 %v3375
        %v3674 = vunpack.c.l.b16 %v3376
        %v3675 = vunpack.c.h.b16 %v3376
        %v3676 = vunpack.c.l.b16 %v3377
        %v3677 = vunpack.c.h.b16 %v3377
        %v3678 = vunpack.c.l.b16 %v3378
        %v3679 = vunpack.c.h.b16 %v3378
        %v3680 = vunpack.c.l.b16 %v3379
        %v3681 = vunpack.c.h.b16 %v3379
        %v3682 = vunpack.c.l.b16 %v3380
        %v3683 = vunpack.c.h.b16 %v3380
        %v3684 = vunpack.c.l.b16 %v3381
        %v3685 = vunpack.c.h.b16 %v3381
        %v3686 = vunpack.c.l.b16 %v3382
        %v3687 = vunpack.c.h.b16 %v3382
        %v3688 = vunpack.c.l.b16 %v3383
        %v3689 = vunpack.c.h.b16 %v3383
        %v3690 = vunpack.c.l.b16 %v3384
        %v3691 = vunpack.c.h.b16 %v3384
        %v3692 = vunpack.c.l.b16 %v3385
        %v3693 = vunpack.c.h.b16 %v3385
        %v3694 = vunpack.c.l.b16 %v3386
        %v3695 = vunpack.c.h.b16 %v3386
        %v3696 = vunpack.c.l.b16 %v3387
        %v3697 = vunpack.c.h.b16 %v3387
        %v3698 = vunpack.c.l.b16 %v3388
        %v3699 = vunpack.c.h.b16 %v3388
        %v3700 = vunpack.c.l.b16 %v3389
        %v3701 = vunpack.c.h.b16 %v3389
        %v3702 = vunpack.c.l.b16 %v3390
        %v3703 = vunpack.c.h.b16 %v3390
        %v3704 = vunpack.c.l.b16 %v3391
        %v3705 = vunpack.c.h.b16 %v3391
        %v3706 = vunpack.c.l.b16 %v3392
        %v3707 = vunpack.c.h.b16 %v3392
        %v3708 = vunpack.c.l.b16 %v3393
        %v3709 = vunpack.c.h.b16 %v3393
        %v3710 = vunpack.c.l.b16 %v3394
        %v3711 = vunpack.c.h.b16 %v3394
        %v3712 = vunpack.c.l.b16 %v3395
        %v3713 = vunpack.c.h.b16 %v3395
        %v3714 = vunpack.c.l.b16 %v3396
        %v3715 = vunpack.c.h.b16 %v3396
        %v3716 = vunpack.c.l.b16 %v3397
        %v3717 = vunpack.c.h.b16 %v3397
        %v3718 = vunpack.c.l.b16 %v3398
        %v3719 = vunpack.c.h.b16 %v3398
        %v3720 = vunpack.c.l.b16 %v3399
        %v3721 = vunpack.c.h.b16 %v3399
        %v3722 = vpack.c.b16 %v3526, %v3522
        %v3723 = vpack.c.b16 %v3527, %v3523
        %v3724 = vpack.c.b16 %v3528, %v3524
        %v3725 = vpack.c.b16 %v3529, %v3525
        %v3726 = vpack.c.b16 %v3534, %v3530
        %v3727 = vpack.c.b16 %v3535, %v3531
        %v3728 = vpack.c.b16 %v3536, %v3532
        %v3729 = vpack.c.b16 %v3537, %v3533
        %v3730 = vpack.c.b16 %v3542, %v3538
        %v3731 = vpack.c.b16 %v3543, %v3539
        %v3732 = vpack.c.b16 %v3544, %v3540
        %v3733 = vpack.c.b16 %v3545, %v3541
        %v3734 = vpack.c.b16 %v3550, %v3546
        %v3735 = vpack.c.b16 %v3551, %v3547
        %v3736 = vpack.c.b16 %v3552, %v3548
        %v3737 = vpack.c.b16 %v3553, %v3549
        %v3738 = vpack.c.b16 %v3558, %v3554
        %v3739 = vpack.c.b16 %v3559, %v3555
        %v3740 = vpack.c.b16 %v3560, %v3556
        %v3741 = vpack.c.b16 %v3561, %v3557
        %v3742 = vpack.c.b16 %v3566, %v3562
        %v3743 = vpack.c.b16 %v3567, %v3563
        %v3744 = vpack.c.b16 %v3568, %v3564
        %v3745 = vpack.c.b16 %v3569, %v3565
        %v3746 = vpack.c.b16 %v3574, %v3570
        %v3747 = vpack.c.b16 %v3575, %v3571
        %v3748 = vpack.c.b16 %v3576, %v3572
        %v3749 = vpack.c.b16 %v3577, %v3573
        %v3750 = vpack.c.b16 %v3582, %v3578
        %v3751 = vpack.c.b16 %v3583, %v3579
        %v3752 = vpack.c.b16 %v3584, %v3580
        %v3753 = vpack.c.b16 %v3585, %v3581
        %v3754 = vpack.c.b16 %v3590, %v3586
        %v3755 = vpack.c.b16 %v3591, %v3587
        %v3756 = vpack.c.b16 %v3592, %v3588
        %v3757 = vpack.c.b16 %v3593, %v3589
        %v3758 = vpack.c.b16 %v3598, %v3594
        %v3759 = vpack.c.b16 %v3599, %v3595
        %v3760 = vpack.c.b16 %v3600, %v3596
        %v3761 = vpack.c.b16 %v3601, %v3597
        %v3762 = vpack.c.b16 %v3606, %v3602
        %v3763 = vpack.c.b16 %v3607, %v3603
        %v3764 = vpack.c.b16 %v3608, %v3604
        %v3765 = vpack.c.b16 %v3609, %v3605
        %v3766 = vpack.c.b16 %v3614, %v3610
        %v3767 = vpack.c.b16 %v3615, %v3611
        %v3768 = vpack.c.b16 %v3616, %v3612
        %v3769 = vpack.c.b16 %v3617, %v3613
        %v3770 = vpack.c.b16 %v3622, %v3618
        %v3771 = vpack.c.b16 %v3623, %v3619
        %v3772 = vpack.c.b16 %v3624, %v3620
        %v3773 = vpack.c.b16 %v3625, %v3621
        %v3774 = vpack.c.b16 %v3630, %v3626
        %v3775 = vpack.c.b16 %v3631, %v3627
        %v3776 = vpack.c.b16 %v3632, %v3628
        %v3777 = vpack.c.b16 %v3633, %v3629
        %v3778 = vpack.c.b16 %v3638, %v3634
        %v3779 = vpack.c.b16 %v3639, %v3635
        %v3780 = vpack.c.b16 %v3640, %v3636
        %v3781 = vpack.c.b16 %v3641, %v3637
        %v3782 = vpack.c.b16 %v3646, %v3642
        %v3783 = vpack.c.b16 %v3647, %v3643
        %v3784 = vpack.c.b16 %v3648, %v3644
        %v3785 = vpack.c.b16 %v3649, %v3645
        %v3786 = vpack.c.b16 %v3654, %v3650
        %v3787 = vpack.c.b16 %v3655, %v3651
        %v3788 = vpack.c.b16 %v3656, %v3652
        %v3789 = vpack.c.b16 %v3657, %v3653
        %v3790 = vpack.c.b16 %v3662, %v3658
        %v3791 = vpack.c.b16 %v3663, %v3659
        %v3792 = vpack.c.b16 %v3664, %v3660
        %v3793 = vpack.c.b16 %v3665, %v3661
        %v3794 = vpack.c.b16 %v3670, %v3666
        %v3795 = vpack.c.b16 %v3671, %v3667
        %v3796 = vpack.c.b16 %v3672, %v3668
        %v3797 = vpack.c.b16 %v3673, %v3669
        %v3798 = vpack.c.b16 %v3678, %v3674
        %v3799 = vpack.c.b16 %v3679, %v3675
        %v3800 = vpack.c.b16 %v3680, %v3676
        %v3801 = vpack.c.b16 %v3681, %v3677
        %v3802 = vpack.c.b16 %v3686, %v3682
        %v3803 = vpack.c.b16 %v3687, %v3683
        %v3804 = vpack.c.b16 %v3688, %v3684
        %v3805 = vpack.c.b16 %v3689, %v3685
        %v3806 = vpack.c.b16 %v3694, %v3690
        %v3807 = vpack.c.b16 %v3695, %v3691
        %v3808 = vpack.c.b16 %v3696, %v3692
        %v3809 = vpack.c.b16 %v3697, %v3693
        %v3810 = vpack.c.b16 %v3702, %v3698
        %v3811 = vpack.c.b16 %v3703, %v3699
        %v3812 = vpack.c.b16 %v3704, %v3700
        %v3813 = vpack.c.b16 %v3705, %v3701
        %v3814 = vpack.c.b16 %v3710, %v3706
        %v3815 = vpack.c.b16 %v3711, %v3707
        %v3816 = vpack.c.b16 %v3712, %v3708
        %v3817 = vpack.c.b16 %v3713, %v3709
        %v3818 = vpack.c.b16 %v3718, %v3714
        %v3819 = vpack.c.b16 %v3719, %v3715
        %v3820 = vpack.c.b16 %v3720, %v3716
        %v3821 = vpack.c.b16 %v3721, %v3717
        %3922 = vmatprep.subr.bf16.mxu0 %v3723
        %3923 = vmatpush1.bf16.msra.mxu0 %v3722
        %3924 = vmatprep.subr.bf16.mxu0 %v3727
        %3925 = vmatpush1.bf16.msra.mxu0 %v3726
        %3926 = vmatprep.subr.bf16.mxu0 %v3731
        %3927 = vmatpush1.bf16.msra.mxu0 %v3730
        %3928 = vmatprep.subr.bf16.mxu0 %v3735
        %3929 = vmatpush1.bf16.msra.mxu0 %v3734
        %3930 = vmatprep.subr.bf16.mxu0 %v3739
        %3931 = vmatpush1.bf16.msra.mxu0 %v3738
        %3932 = vmatprep.subr.bf16.mxu0 %v3743
        %3933 = vmatpush1.bf16.msra.mxu0 %v3742
        %3934 = vmatprep.subr.bf16.mxu0 %v3747
        %3935 = vmatpush1.bf16.msra.mxu0 %v3746
        %3936 = vmatprep.subr.bf16.mxu0 %v3751
        %3937 = vmatpush1.bf16.msra.mxu0 %v3750
        %3938 = vmatprep.subr.bf16.mxu0 %v3755
        %3939 = vmatpush1.bf16.msra.mxu0 %v3754
        %3940 = vmatprep.subr.bf16.mxu0 %v3759
        %3941 = vmatpush1.bf16.msra.mxu0 %v3758
        %3942 = vmatprep.subr.bf16.mxu0 %v3763
        %3943 = vmatpush1.bf16.msra.mxu0 %v3762
        %3944 = vmatprep.subr.bf16.mxu0 %v3767
        %3945 = vmatpush1.bf16.msra.mxu0 %v3766
        %3946 = vmatprep.subr.bf16.mxu0 %v3771
        %3947 = vmatpush1.bf16.msra.mxu0 %v3770
        %3948 = vmatprep.subr.bf16.mxu0 %v3775
        %3949 = vmatpush1.bf16.msra.mxu0 %v3774
        %3950 = vmatprep.subr.bf16.mxu0 %v3779
        %3951 = vmatpush1.bf16.msra.mxu0 %v3778
        %3952 = vmatprep.subr.bf16.mxu0 %v3783
        %3953 = vmatpush1.bf16.msra.mxu0 %v3782
        %3954 = vmatprep.mubr.bf16.mxu0 %v1722
        %3955 = vmatmul.mubr.bf16.gmra.mrb[0].mxu0 %v1721
        %v3956 = vpop.f32.mrb[0].mxu0
        %v3957 = vadd.f32 %v3405, %v3956
        %v3958 = vpop.f32.mrb[0].mxu0
        %v3959 = vadd.f32 %v3409, %v3958
        %v3960 = vpop.f32.mrb[0].mxu0
        %v3961 = vpop.f32.mrb[0].mxu0
        %3962 = vdwg.mxu0
        %3963 = vmatprep.subr.bf16.mxu0 %v3787
        %3964 = vmatpush1.bf16.msra.mxu0 %v3786
        %3965 = vmatprep.subr.bf16.mxu0 %v3791
        %3966 = vmatpush1.bf16.msra.mxu0 %v3790
        %3967 = vmatprep.subr.bf16.mxu0 %v3795
        %3968 = vmatpush1.bf16.msra.mxu0 %v3794
        %3969 = vmatprep.subr.bf16.mxu0 %v3799
        %3970 = vmatpush1.bf16.msra.mxu0 %v3798
        %3971 = vmatprep.subr.bf16.mxu0 %v3803
        %3972 = vmatpush1.bf16.msra.mxu0 %v3802
        %3973 = vmatprep.subr.bf16.mxu0 %v3807
        %3974 = vmatpush1.bf16.msra.mxu0 %v3806
        %3975 = vmatprep.subr.bf16.mxu0 %v3811
        %3976 = vmatpush1.bf16.msra.mxu0 %v3810
        %3977 = vmatprep.subr.bf16.mxu0 %v3815
        %3978 = vmatpush1.bf16.msra.mxu0 %v3814
        %3979 = vmatprep.subr.bf16.mxu0 %v3819
        %3980 = vmatpush1.bf16.msra.mxu0 %v3818
        %3981 = vmatprep.subr.bf16.mxu0 0
        %3982 = vmatpush1.bf16.msra.mxu0 0
        %3983 = vmatprep.subr.bf16.mxu0 0
        %3984 = vmatpush1.bf16.msra.mxu0 0
        %3985 = vmatprep.subr.bf16.mxu0 0
        %3986 = vmatpush1.bf16.msra.mxu0 0
        %3987 = vmatprep.subr.bf16.mxu0 0
        %3988 = vmatpush1.bf16.msra.mxu0 0
        %3989 = vmatprep.subr.bf16.mxu0 0
        %3990 = vmatpush1.bf16.msra.mxu0 0
        %3991 = vmatprep.subr.bf16.mxu0 0
        %3992 = vmatpush1.bf16.msra.mxu0 0
        %3993 = vmatprep.subr.bf16.mxu0 0
        %3994 = vmatpush1.bf16.msra.mxu0 0
        %3995 = vmatprep.mubr.bf16.mxu0 %v2348
        %3996 = vmatmul.mubr.bf16.gmra.mrb[0].mxu0 %v1723
        %v3997 = vpop.f32.mrb[0].mxu0
        %v3998 = vadd.f32 %v3957, %v3997
        %v3999 = vpop.f32.mrb[0].mxu0
        %v4000 = vadd.f32 %v3959, %v3999
        %v4001 = vpop.f32.mrb[0].mxu0
        %v4002 = vpop.f32.mrb[0].mxu0
        %4003 = vdwg.mxu0
        %4004 = vmatprep.subr.bf16.mxu0 %v3725
        %4005 = vmatpush1.bf16.msra.mxu0 %v3724
        %4006 = vmatprep.subr.bf16.mxu0 %v3729
        %4007 = vmatpush1.bf16.msra.mxu0 %v3728
        %4008 = vmatprep.subr.bf16.mxu0 %v3733
        %4009 = vmatpush1.bf16.msra.mxu0 %v3732
        %4010 = vmatprep.subr.bf16.mxu0 %v3737
        %4011 = vmatpush1.bf16.msra.mxu0 %v3736
        %4012 = vmatprep.subr.bf16.mxu0 %v3741
        %4013 = vmatpush1.bf16.msra.mxu0 %v3740
        %4014 = vmatprep.subr.bf16.mxu0 %v3745
        %4015 = vmatpush1.bf16.msra.mxu0 %v3744
        %4016 = vmatprep.subr.bf16.mxu0 %v3749
        %4017 = vmatpush1.bf16.msra.mxu0 %v3748
        %4018 = vmatprep.subr.bf16.mxu0 %v3753
        %4019 = vmatpush1.bf16.msra.mxu0 %v3752
        %4020 = vmatprep.subr.bf16.mxu0 %v3757
        %4021 = vmatpush1.bf16.msra.mxu0 %v3756
        %4022 = vmatprep.subr.bf16.mxu0 %v3761
        %4023 = vmatpush1.bf16.msra.mxu0 %v3760
        %4024 = vmatprep.subr.bf16.mxu0 %v3765
        %4025 = vmatpush1.bf16.msra.mxu0 %v3764
        %4026 = vmatprep.subr.bf16.mxu0 %v3769
        %4027 = vmatpush1.bf16.msra.mxu0 %v3768
        %4028 = vmatprep.subr.bf16.mxu0 %v3773
        %4029 = vmatpush1.bf16.msra.mxu0 %v3772
        %4030 = vmatprep.subr.bf16.mxu0 %v3777
        %4031 = vmatpush1.bf16.msra.mxu0 %v3776
        %4032 = vmatprep.subr.bf16.mxu0 %v3781
        %4033 = vmatpush1.bf16.msra.mxu0 %v3780
        %4034 = vmatprep.subr.bf16.mxu0 %v3785
        %4035 = vmatpush1.bf16.msra.mxu0 %v3784
        %4036 = vmatprep.mubr.bf16.mxu0 %v1722
        %4037 = vmatmul.mubr.bf16.gmra.mrb[0].mxu0 %v1721
        %v4038 = vpop.f32.mrb[0].mxu0
        %v4039 = vadd.f32 %v3413, %v4038
        %v4040 = vpop.f32.mrb[0].mxu0
        %v4041 = vadd.f32 %v3417, %v4040
        %v4042 = vpop.f32.mrb[0].mxu0
        %v4043 = vpop.f32.mrb[0].mxu0
        %4044 = vdwg.mxu0
        %4045 = vmatprep.subr.bf16.mxu0 %v3789
        %4046 = vmatpush1.bf16.msra.mxu0 %v3788
        %4047 = vmatprep.subr.bf16.mxu0 %v3793
        %4048 = vmatpush1.bf16.msra.mxu0 %v3792
        %4049 = vmatprep.subr.bf16.mxu0 %v3797
        %4050 = vmatpush1.bf16.msra.mxu0 %v3796
        %4051 = vmatprep.subr.bf16.mxu0 %v3801
        %4052 = vmatpush1.bf16.msra.mxu0 %v3800
        %4053 = vmatprep.subr.bf16.mxu0 %v3805
        %4054 = vmatpush1.bf16.msra.mxu0 %v3804
        %4055 = vmatprep.subr.bf16.mxu0 %v3809
        %4056 = vmatpush1.bf16.msra.mxu0 %v3808
        %4057 = vmatprep.subr.bf16.mxu0 %v3813
        %4058 = vmatpush1.bf16.msra.mxu0 %v3812
        %4059 = vmatprep.subr.bf16.mxu0 %v3817
        %4060 = vmatpush1.bf16.msra.mxu0 %v3816
        %4061 = vmatprep.subr.bf16.mxu0 %v3821
        %4062 = vmatpush1.bf16.msra.mxu0 %v3820
        %4063 = vmatprep.subr.bf16.mxu0 0
        %4064 = vmatpush1.bf16.msra.mxu0 0
        %4065 = vmatprep.subr.bf16.mxu0 0
        %4066 = vmatpush1.bf16.msra.mxu0 0
        %4067 = vmatprep.subr.bf16.mxu0 0
        %4068 = vmatpush1.bf16.msra.mxu0 0
        %4069 = vmatprep.subr.bf16.mxu0 0
        %4070 = vmatpush1.bf16.msra.mxu0 0
        %4071 = vmatprep.subr.bf16.mxu0 0
        %4072 = vmatpush1.bf16.msra.mxu0 0
        %4073 = vmatprep.subr.bf16.mxu0 0
        %4074 = vmatpush1.bf16.msra.mxu0 0
        %4075 = vmatprep.subr.bf16.mxu0 0
        %4076 = vmatpush1.bf16.msra.mxu0 0
        %4077 = vmatprep.mubr.bf16.mxu0 %v2348
        %4078 = vmatmul.mubr.bf16.gmra.mrb[0].mxu0 %v1723
        %v4079 = vpop.f32.mrb[0].mxu0
        %v4080 = vadd.f32 %v4039, %v4079
        %v4081 = vpop.f32.mrb[0].mxu0
        %v4082 = vadd.f32 %v4041, %v4081
        %v4083 = vpop.f32.mrb[0].mxu0
        %v4084 = vpop.f32.mrb[0].mxu0
        %4085 = vdwg.mxu0
        %v4087 = vsel %vm1549, %v2510, 0
        %v4090 = vsel %vm1549, %v3296, 0
        %4092 = vmatprep.subr.mxu0 %v3214
        %4093 = vmatpush1.xpose.msra.mxu0 %v3212
        %4094 = vmatprep.subr.mxu0 0.0
        %4095 = vmatpush1.xpose.msra.mxu0 0.0
        %4096 = vmatprep.subr.mxu0 0.0
        %4097 = vmatpush1.xpose.msra.mxu0 0.0
        %4098 = vmatprep.subr.mxu0 0.0
        %4099 = vmatpush1.xpose.msra.mxu0 0.0
        %4100 = vmatprep.subr.mxu0 0.0
        %4101 = vmatpush1.xpose.msra.mxu0 0.0
        %4102 = vmatprep.subr.mxu0 0.0
        %4103 = vmatpush1.xpose.msra.mxu0 0.0
        %4104 = vmatprep.subr.mxu0 0.0
        %4105 = vmatpush1.xpose.msra.mxu0 0.0
        %4106 = vmatprep.subr.mxu0 0.0
        %4107 = vmatpush1.xpose.msra.mxu0 0.0
        %4108 = vmatprep.subr.mxu0 0.0
        %4109 = vmatpush1.xpose.msra.mxu0 0.0
        %4110 = vmatprep.subr.mxu0 0.0
        %4111 = vmatpush1.xpose.msra.mxu0 0.0
        %4112 = vmatprep.subr.mxu0 0.0
        %4113 = vmatpush1.xpose.msra.mxu0 0.0
        %4114 = vmatprep.subr.mxu0 0.0
        %4115 = vmatpush1.xpose.msra.mxu0 0.0
        %4116 = vmatprep.subr.mxu0 0.0
        %4117 = vmatpush1.xpose.msra.mxu0 0.0
        %4118 = vmatprep.subr.mxu0 0.0
        %4119 = vmatpush1.xpose.msra.mxu0 0.0
        %4120 = vmatprep.subr.mxu0 0.0
        %4121 = vmatpush1.xpose.msra.mxu0 0.0
        %4122 = vmatprep.subr.mxu0 0.0
        %4123 = vmatpush1.xpose.msra.mxu0 0.0
        %4124 = vmatprep.subr.mxu0 0.0
        %4125 = vmatpush1.xpose.msra.mxu0 0.0
        %4126 = vmatprep.subr.mxu0 0.0
        %4127 = vmatpush1.xpose.msra.mxu0 0.0
        %4128 = vmatprep.subr.mxu0 0.0
        %4129 = vmatpush1.xpose.msra.mxu0 0.0
        %4130 = vmatprep.subr.mxu0 0.0
        %4131 = vmatpush1.xpose.msra.mxu0 0.0
        %4132 = vmatprep.subr.mxu0 0.0
        %4133 = vmatpush1.xpose.msra.mxu0 0.0
        %4134 = vmatprep.subr.mxu0 0.0
        %4135 = vmatpush1.xpose.msra.mxu0 0.0
        %4136 = vmatprep.subr.mxu0 0.0
        %4137 = vmatpush1.xpose.msra.mxu0 0.0
        %4138 = vmatprep.subr.mxu0 0.0
        %4139 = vmatpush1.xpose.msra.mxu0 0.0
        %4140 = vmatprep.subr.mxu0 0.0
        %4141 = vmatpush1.xpose.msra.mxu0 0.0
        %4142 = vmatprep.subr.mxu0 0.0
        %4143 = vmatpush1.xpose.msra.mxu0 0.0
        %4144 = vmatprep.subr.mxu0 0.0
        %4145 = vmatpush1.xpose.msra.mxu0 0.0
        %4146 = vmatprep.subr.mxu0 0.0
        %4147 = vmatpush1.xpose.msra.mxu0 0.0
        %4148 = vmatprep.subr.mxu0 0.0
        %4149 = vmatpush1.xpose.msra.mxu0 0.0
        %4150 = vmatprep.subr.mxu0 0.0
        %4151 = vmatpush1.xpose.msra.mxu0 0.0
        %4152 = vmatprep.subr.mxu0 0.0
        %4153 = vmatpush1.xpose.msra.mxu0 0.0
        %4154 = vmatprep.subr.mxu0 0.0
        %4155 = vmatpush1.xpose.msra.mxu0 0.0
        %4156 = vmatprep.mubr.f32.mxu0 %v2428
        %4157 = vmatmul.mubr.f32.gmra.mrb[0].mxu0 %v2426
        %v4158 = vpop.f32.mrb[0].mxu0
        %v4159 = vadd.f32 0.0, %v4158
        %v4160 = vpop.f32.mrb[0].mxu0
        %4161 = vdwg.mxu0
        %4162 = vmatprep.subr.mxu0 %v4090
        %4163 = vmatpush1.xpose.msra.mxu0 %v3294
        %4164 = vmatprep.subr.mxu0 0.0
        %4165 = vmatpush1.xpose.msra.mxu0 0.0
        %4166 = vmatprep.subr.mxu0 0.0
        %4167 = vmatpush1.xpose.msra.mxu0 0.0
        %4168 = vmatprep.subr.mxu0 0.0
        %4169 = vmatpush1.xpose.msra.mxu0 0.0
        %4170 = vmatprep.subr.mxu0 0.0
        %4171 = vmatpush1.xpose.msra.mxu0 0.0
        %4172 = vmatprep.subr.mxu0 0.0
        %4173 = vmatpush1.xpose.msra.mxu0 0.0
        %4174 = vmatprep.subr.mxu0 0.0
        %4175 = vmatpush1.xpose.msra.mxu0 0.0
        %4176 = vmatprep.subr.mxu0 0.0
        %4177 = vmatpush1.xpose.msra.mxu0 0.0
        %4178 = vmatprep.subr.mxu0 0.0
        %4179 = vmatpush1.xpose.msra.mxu0 0.0
        %4180 = vmatprep.subr.mxu0 0.0
        %4181 = vmatpush1.xpose.msra.mxu0 0.0
        %4182 = vmatprep.subr.mxu0 0.0
        %4183 = vmatpush1.xpose.msra.mxu0 0.0
        %4184 = vmatprep.subr.mxu0 0.0
        %4185 = vmatpush1.xpose.msra.mxu0 0.0
        %4186 = vmatprep.subr.mxu0 0.0
        %4187 = vmatpush1.xpose.msra.mxu0 0.0
        %4188 = vmatprep.subr.mxu0 0.0
        %4189 = vmatpush1.xpose.msra.mxu0 0.0
        %4190 = vmatprep.subr.mxu0 0.0
        %4191 = vmatpush1.xpose.msra.mxu0 0.0
        %4192 = vmatprep.subr.mxu0 0.0
        %4193 = vmatpush1.xpose.msra.mxu0 0.0
        %4194 = vmatprep.subr.mxu0 0.0
        %4195 = vmatpush1.xpose.msra.mxu0 0.0
        %4196 = vmatprep.subr.mxu0 0.0
        %4197 = vmatpush1.xpose.msra.mxu0 0.0
        %4198 = vmatprep.subr.mxu0 0.0
        %4199 = vmatpush1.xpose.msra.mxu0 0.0
        %4200 = vmatprep.subr.mxu0 0.0
        %4201 = vmatpush1.xpose.msra.mxu0 0.0
        %4202 = vmatprep.subr.mxu0 0.0
        %4203 = vmatpush1.xpose.msra.mxu0 0.0
        %4204 = vmatprep.subr.mxu0 0.0
        %4205 = vmatpush1.xpose.msra.mxu0 0.0
        %4206 = vmatprep.subr.mxu0 0.0
        %4207 = vmatpush1.xpose.msra.mxu0 0.0
        %4208 = vmatprep.subr.mxu0 0.0
        %4209 = vmatpush1.xpose.msra.mxu0 0.0
        %4210 = vmatprep.subr.mxu0 0.0
        %4211 = vmatpush1.xpose.msra.mxu0 0.0
        %4212 = vmatprep.subr.mxu0 0.0
        %4213 = vmatpush1.xpose.msra.mxu0 0.0
        %4214 = vmatprep.subr.mxu0 0.0
        %4215 = vmatpush1.xpose.msra.mxu0 0.0
        %4216 = vmatprep.subr.mxu0 0.0
        %4217 = vmatpush1.xpose.msra.mxu0 0.0
        %4218 = vmatprep.subr.mxu0 0.0
        %4219 = vmatpush1.xpose.msra.mxu0 0.0
        %4220 = vmatprep.subr.mxu0 0.0
        %4221 = vmatpush1.xpose.msra.mxu0 0.0
        %4222 = vmatprep.subr.mxu0 0.0
        %4223 = vmatpush1.xpose.msra.mxu0 0.0
        %4224 = vmatprep.subr.mxu0 0.0
        %4225 = vmatpush1.xpose.msra.mxu0 0.0
        %4226 = vmatprep.mubr.f32.mxu0 %v4087
        %4227 = vmatmul.mubr.f32.gmra.mrb[0].mxu0 %v2508
        %v4228 = vpop.f32.mrb[0].mxu0
        %v4229 = vadd.f32 %v4159, %v4228
        %v4230 = vpop.f32.mrb[0].mxu0
        %4231 = vdwg.mxu0
        %vm4232 = vcmask 64512
        %v4233 = vsel %vm4232, %v4229, -inf
        %4234 = vmax.xlane.f32.xlu0 %v4233
        %v4235 = vpop.xlane.xlu0 %4234
        %v4236 = vsub.f32 %v4229, %v4235
        %v4237 = vmul.f32 %v4236, 1.442695
        %v4238 = vpow.pop %v4237
        %v4239 = vsel %vm4232, %v4238, 0.0
        %4240 = vadd.xlane.f32.xlu0 %v4239
        %v4241 = vpop.xlane.xlu0 %4240
        %v4242 = vrcp.pop %v4241
        %v4243 = vmul.f32 %v4238, %v4242
        %v4245 = vsel %vm4232, %v4243, 0
        %4247 = vmatprep.subr.mxu0 %v4000
        %4248 = vmatpush1.msra.mxu0 %v3998
        %4249 = vmatprep.subr.mxu0 0.0
        %4250 = vmatpush1.msra.mxu0 0.0
        %4251 = vmatprep.subr.mxu0 0.0
        %4252 = vmatpush1.msra.mxu0 0.0
        %4253 = vmatprep.subr.mxu0 0.0
        %4254 = vmatpush1.msra.mxu0 0.0
        %4255 = vmatprep.subr.mxu0 0.0
        %4256 = vmatpush1.msra.mxu0 0.0
        %4257 = vmatprep.subr.mxu0 0.0
        %4258 = vmatpush1.msra.mxu0 0.0
        %4259 = vmatprep.subr.mxu0 0.0
        %4260 = vmatpush1.msra.mxu0 0.0
        %4261 = vmatprep.subr.mxu0 0.0
        %4262 = vmatpush1.msra.mxu0 0.0
        %4263 = vmatprep.subr.mxu0 0.0
        %4264 = vmatpush1.msra.mxu0 0.0
        %4265 = vmatprep.subr.mxu0 0.0
        %4266 = vmatpush1.msra.mxu0 0.0
        %4267 = vmatprep.subr.mxu0 0.0
        %4268 = vmatpush1.msra.mxu0 0.0
        %4269 = vmatprep.subr.mxu0 0.0
        %4270 = vmatpush1.msra.mxu0 0.0
        %4271 = vmatprep.subr.mxu0 0.0
        %4272 = vmatpush1.msra.mxu0 0.0
        %4273 = vmatprep.subr.mxu0 0.0
        %4274 = vmatpush1.msra.mxu0 0.0
        %4275 = vmatprep.subr.mxu0 0.0
        %4276 = vmatpush1.msra.mxu0 0.0
        %4277 = vmatprep.subr.mxu0 0.0
        %4278 = vmatpush1.msra.mxu0 0.0
        %4279 = vmatprep.subr.mxu0 0.0
        %4280 = vmatpush1.msra.mxu0 0.0
        %4281 = vmatprep.subr.mxu0 0.0
        %4282 = vmatpush1.msra.mxu0 0.0
        %4283 = vmatprep.subr.mxu0 0.0
        %4284 = vmatpush1.msra.mxu0 0.0
        %4285 = vmatprep.subr.mxu0 0.0
        %4286 = vmatpush1.msra.mxu0 0.0
        %4287 = vmatprep.subr.mxu0 0.0
        %4288 = vmatpush1.msra.mxu0 0.0
        %4289 = vmatprep.subr.mxu0 0.0
        %4290 = vmatpush1.msra.mxu0 0.0
        %4291 = vmatprep.subr.mxu0 0.0
        %4292 = vmatpush1.msra.mxu0 0.0
        %4293 = vmatprep.subr.mxu0 0.0
        %4294 = vmatpush1.msra.mxu0 0.0
        %4295 = vmatprep.subr.mxu0 0.0
        %4296 = vmatpush1.msra.mxu0 0.0
        %4297 = vmatprep.subr.mxu0 0.0
        %4298 = vmatpush1.msra.mxu0 0.0
        %4299 = vmatprep.subr.mxu0 0.0
        %4300 = vmatpush1.msra.mxu0 0.0
        %4301 = vmatprep.subr.mxu0 0.0
        %4302 = vmatpush1.msra.mxu0 0.0
        %4303 = vmatprep.subr.mxu0 0.0
        %4304 = vmatpush1.msra.mxu0 0.0
        %4305 = vmatprep.subr.mxu0 0.0
        %4306 = vmatpush1.msra.mxu0 0.0
        %4307 = vmatprep.subr.mxu0 0.0
        %4308 = vmatpush1.msra.mxu0 0.0
        %4309 = vmatprep.subr.mxu0 0.0
        %4310 = vmatpush1.msra.mxu0 0.0
        %4311 = vmatprep.mubr.f32.mxu0 0.0
        %4312 = vmatmul.mubr.f32.gmra.mrb[0].mxu0 %v4245
        %v4313 = vpop.f32.mrb[0].mxu0
        %v4314 = vadd.f32 0.0, %v4313
        %v4315 = vpop.f32.mrb[0].mxu0
        %v4316 = vadd.f32 0.0, %v4315
        %4317 = vdwg.mxu0
        %4318 = vmatprep.subr.mxu0 %v4082
        %4319 = vmatpush1.msra.mxu0 %v4080
        %4320 = vmatprep.subr.mxu0 0.0
        %4321 = vmatpush1.msra.mxu0 0.0
        %4322 = vmatprep.subr.mxu0 0.0
        %4323 = vmatpush1.msra.mxu0 0.0
        %4324 = vmatprep.subr.mxu0 0.0
        %4325 = vmatpush1.msra.mxu0 0.0
        %4326 = vmatprep.subr.mxu0 0.0
        %4327 = vmatpush1.msra.mxu0 0.0
        %4328 = vmatprep.subr.mxu0 0.0
        %4329 = vmatpush1.msra.mxu0 0.0
        %4330 = vmatprep.subr.mxu0 0.0
        %4331 = vmatpush1.msra.mxu0 0.0
        %4332 = vmatprep.subr.mxu0 0.0
        %4333 = vmatpush1.msra.mxu0 0.0
        %4334 = vmatprep.subr.mxu0 0.0
        %4335 = vmatpush1.msra.mxu0 0.0
        %4336 = vmatprep.subr.mxu0 0.0
        %4337 = vmatpush1.msra.mxu0 0.0
        %4338 = vmatprep.subr.mxu0 0.0
        %4339 = vmatpush1.msra.mxu0 0.0
        %4340 = vmatprep.subr.mxu0 0.0
        %4341 = vmatpush1.msra.mxu0 0.0
        %4342 = vmatprep.subr.mxu0 0.0
        %4343 = vmatpush1.msra.mxu0 0.0
        %4344 = vmatprep.subr.mxu0 0.0
        %4345 = vmatpush1.msra.mxu0 0.0
        %4346 = vmatprep.subr.mxu0 0.0
        %4347 = vmatpush1.msra.mxu0 0.0
        %4348 = vmatprep.subr.mxu0 0.0
        %4349 = vmatpush1.msra.mxu0 0.0
        %4350 = vmatprep.subr.mxu0 0.0
        %4351 = vmatpush1.msra.mxu0 0.0
        %4352 = vmatprep.subr.mxu0 0.0
        %4353 = vmatpush1.msra.mxu0 0.0
        %4354 = vmatprep.subr.mxu0 0.0
        %4355 = vmatpush1.msra.mxu0 0.0
        %4356 = vmatprep.subr.mxu0 0.0
        %4357 = vmatpush1.msra.mxu0 0.0
        %4358 = vmatprep.subr.mxu0 0.0
        %4359 = vmatpush1.msra.mxu0 0.0
        %4360 = vmatprep.subr.mxu0 0.0
        %4361 = vmatpush1.msra.mxu0 0.0
        %4362 = vmatprep.subr.mxu0 0.0
        %4363 = vmatpush1.msra.mxu0 0.0
        %4364 = vmatprep.subr.mxu0 0.0
        %4365 = vmatpush1.msra.mxu0 0.0
        %4366 = vmatprep.subr.mxu0 0.0
        %4367 = vmatpush1.msra.mxu0 0.0
        %4368 = vmatprep.subr.mxu0 0.0
        %4369 = vmatpush1.msra.mxu0 0.0
        %4370 = vmatprep.subr.mxu0 0.0
        %4371 = vmatpush1.msra.mxu0 0.0
        %4372 = vmatprep.subr.mxu0 0.0
        %4373 = vmatpush1.msra.mxu0 0.0
        %4374 = vmatprep.subr.mxu0 0.0
        %4375 = vmatpush1.msra.mxu0 0.0
        %4376 = vmatprep.subr.mxu0 0.0
        %4377 = vmatpush1.msra.mxu0 0.0
        %4378 = vmatprep.subr.mxu0 0.0
        %4379 = vmatpush1.msra.mxu0 0.0
        %4380 = vmatprep.subr.mxu0 0.0
        %4381 = vmatpush1.msra.mxu0 0.0
        %4382 = vmatprep.mubr.f32.mxu0 0.0
        %4383 = vmatmul.mubr.f32.gmra.mrb[0].mxu0 %v4245
        %v4384 = vpop.f32.mrb[0].mxu0
        %v4385 = vadd.f32 0.0, %v4384
        %v4386 = vpop.f32.mrb[0].mxu0
        %v4387 = vadd.f32 0.0, %v4386
        %4388 = vdwg.mxu0
        %v4389 = vpack.c.bf16 %v4314, %v4314
        %v4390 = vpack.c.bf16 %v4316, %v4316
        %v4391 = vpack.c.bf16 %v4385, %v4385
        %v4392 = vpack.c.bf16 %v4387, %v4387
        %v4393 = vld [vmem:[#allocation11] sm:$0xff]
        %v4394 = vld [vmem:[#allocation11 + $0x8] sm:$0xff]
        %v4395 = vld [vmem:[#allocation11 + $0x10] sm:$0xff]
        %v4396 = vld [vmem:[#allocation11 + $0x18] sm:$0xff]
        %v4397 = vld [vmem:[#allocation11 + $0x20] sm:$0xff]
        %v4398 = vld [vmem:[#allocation11 + $0x28] sm:$0xff]
        %v4399 = vld [vmem:[#allocation11 + $0x30] sm:$0xff]
        %v4400 = vld [vmem:[#allocation11 + $0x38] sm:$0xff]
        %v4401 = vld [vmem:[#allocation11 + $0x40] sm:$0xff]
        %v4402 = vld [vmem:[#allocation11 + $0x48] sm:$0xff]
        %v4403 = vld [vmem:[#allocation11 + $0x50] sm:$0xff]
        %v4404 = vld [vmem:[#allocation11 + $0x58] sm:$0xff]
        %v4405 = vld [vmem:[#allocation11 + $0x60] sm:$0xff]
        %v4406 = vld [vmem:[#allocation11 + $0x68] sm:$0xff]
        %v4407 = vld [vmem:[#allocation11 + $0x70] sm:$0xff]
        %v4408 = vld [vmem:[#allocation11 + $0x78] sm:$0xff]
        %v4409 = vld [vmem:[#allocation11 + $0x80] sm:$0xff]
        %v4410 = vld [vmem:[#allocation11 + $0x88] sm:$0xff]
        %v4411 = vld [vmem:[#allocation11 + $0x90] sm:$0xff]
        %v4412 = vld [vmem:[#allocation11 + $0x98] sm:$0xff]
        %v4413 = vld [vmem:[#allocation11 + $0xa0] sm:$0xff]
        %v4414 = vld [vmem:[#allocation11 + $0xa8] sm:$0xff]
        %v4415 = vld [vmem:[#allocation11 + $0xb0] sm:$0xff]
        %v4416 = vld [vmem:[#allocation11 + $0xb8] sm:$0xff]
        %v4417 = vld [vmem:[#allocation11 + $0xc0] sm:$0xff]
        %v4418 = vld [vmem:[#allocation11 + $0xc8] sm:$0xff]
        %v4419 = vld [vmem:[#allocation11 + $0xd0] sm:$0xff]
        %v4420 = vld [vmem:[#allocation11 + $0xd8] sm:$0xff]
        %v4421 = vld [vmem:[#allocation11 + $0xe0] sm:$0xff]
        %v4422 = vld [vmem:[#allocation11 + $0xe8] sm:$0xff]
        %v4423 = vld [vmem:[#allocation11 + $0xf0] sm:$0xff]
        %v4424 = vld [vmem:[#allocation11 + $0xf8] sm:$0xff]
        %v4425 = vld [vmem:[#allocation11 + $0x100] sm:$0xff]
        %v4426 = vld [vmem:[#allocation11 + $0x108] sm:$0xff]
        %v4427 = vld [vmem:[#allocation11 + $0x110] sm:$0xff]
        %v4428 = vld [vmem:[#allocation11 + $0x118] sm:$0xff]
        %v4429 = vld [vmem:[#allocation11 + $0x120] sm:$0xff]
        %v4430 = vld [vmem:[#allocation11 + $0x128] sm:$0xff]
        %v4431 = vld [vmem:[#allocation11 + $0x130] sm:$0xff]
        %v4432 = vld [vmem:[#allocation11 + $0x138] sm:$0xff]
        %v4433 = vld [vmem:[#allocation11 + $0x140] sm:$0xff]
        %v4434 = vld [vmem:[#allocation11 + $0x148] sm:$0xff]
        %v4435 = vld [vmem:[#allocation11 + $0x150] sm:$0xff]
        %v4436 = vld [vmem:[#allocation11 + $0x158] sm:$0xff]
        %v4437 = vld [vmem:[#allocation11 + $0x160] sm:$0xff]
        %v4438 = vld [vmem:[#allocation11 + $0x168] sm:$0xff]
        %v4439 = vld [vmem:[#allocation11 + $0x170] sm:$0xff]
        %v4440 = vld [vmem:[#allocation11 + $0x178] sm:$0xff]
        %v4441 = vld [vmem:[#allocation11 + $0x180] sm:$0xff]
        %v4442 = vld [vmem:[#allocation11 + $0x188] sm:$0xff]
        %v4443 = vld [vmem:[#allocation11 + $0x190] sm:$0xff]
        %v4444 = vld [vmem:[#allocation11 + $0x198] sm:$0xff]
        %v4445 = vld [vmem:[#allocation11 + $0x1a0] sm:$0xff]
        %v4446 = vld [vmem:[#allocation11 + $0x1a8] sm:$0xff]
        %v4447 = vld [vmem:[#allocation11 + $0x1b0] sm:$0xff]
        %v4448 = vld [vmem:[#allocation11 + $0x1b8] sm:$0xff]
        %v4449 = vld [vmem:[#allocation11 + $0x1c0] sm:$0xff]
        %v4450 = vld [vmem:[#allocation11 + $0x1c8] sm:$0xff]
        %v4451 = vld [vmem:[#allocation11 + $0x1d0] sm:$0xff]
        %v4452 = vld [vmem:[#allocation11 + $0x1d8] sm:$0xff]
        %v4453 = vld [vmem:[#allocation11 + $0x1e0] sm:$0xff]
        %v4454 = vld [vmem:[#allocation11 + $0x1e8] sm:$0xff]
        %v4455 = vld [vmem:[#allocation11 + $0x1f0] sm:$0xff]
        %v4456 = vld [vmem:[#allocation11 + $0x1f8] sm:$0xff]
        %v4457 = vld [vmem:[#allocation11 + $0x200] sm:$0xff]
        %v4458 = vld [vmem:[#allocation11 + $0x208] sm:$0xff]
        %v4459 = vld [vmem:[#allocation11 + $0x210] sm:$0xff]
        %v4460 = vld [vmem:[#allocation11 + $0x218] sm:$0xff]
        %v4461 = vld [vmem:[#allocation11 + $0x220] sm:$0xff]
        %v4462 = vld [vmem:[#allocation11 + $0x228] sm:$0xff]
        %v4463 = vld [vmem:[#allocation11 + $0x230] sm:$0xff]
        %v4464 = vld [vmem:[#allocation11 + $0x238] sm:$0xff]
        %v4465 = vld [vmem:[#allocation11 + $0x240] sm:$0xff]
        %v4466 = vld [vmem:[#allocation11 + $0x248] sm:$0xff]
        %v4467 = vld [vmem:[#allocation11 + $0x250] sm:$0xff]
        %v4468 = vld [vmem:[#allocation11 + $0x258] sm:$0xff]
        %v4469 = vld [vmem:[#allocation11 + $0x260] sm:$0xff]
        %v4470 = vld [vmem:[#allocation11 + $0x268] sm:$0xff]
        %v4471 = vld [vmem:[#allocation11 + $0x270] sm:$0xff]
        %v4472 = vld [vmem:[#allocation11 + $0x278] sm:$0xff]
        %v4473 = vld [vmem:[#allocation11 + $0x280] sm:$0xff]
        %v4474 = vld [vmem:[#allocation11 + $0x288] sm:$0xff]
        %v4475 = vld [vmem:[#allocation11 + $0x290] sm:$0xff]
        %v4476 = vld [vmem:[#allocation11 + $0x298] sm:$0xff]
        %v4477 = vld [vmem:[#allocation11 + $0x2a0] sm:$0xff]
        %v4478 = vld [vmem:[#allocation11 + $0x2a8] sm:$0xff]
        %v4479 = vld [vmem:[#allocation11 + $0x2b0] sm:$0xff]
        %v4480 = vld [vmem:[#allocation11 + $0x2b8] sm:$0xff]
        %v4481 = vld [vmem:[#allocation11 + $0x2c0] sm:$0xff]
        %v4482 = vld [vmem:[#allocation11 + $0x2c8] sm:$0xff]
        %v4483 = vld [vmem:[#allocation11 + $0x2d0] sm:$0xff]
        %v4484 = vld [vmem:[#allocation11 + $0x2d8] sm:$0xff]
        %v4485 = vld [vmem:[#allocation11 + $0x2e0] sm:$0xff]
        %v4486 = vld [vmem:[#allocation11 + $0x2e8] sm:$0xff]
        %v4487 = vld [vmem:[#allocation11 + $0x2f0] sm:$0xff]
        %v4488 = vld [vmem:[#allocation11 + $0x2f8] sm:$0xff]
        %v4489 = vld [vmem:[#allocation11 + $0x300] sm:$0xff]
        %v4490 = vld [vmem:[#allocation11 + $0x308] sm:$0xff]
        %v4491 = vld [vmem:[#allocation11 + $0x310] sm:$0xff]
        %v4492 = vld [vmem:[#allocation11 + $0x318] sm:$0xff]
        %v4493 = vld [vmem:[%s10] sm:$0xf]
        %v4495 = vlaneseq
        %v4496 = vshrl.u32 %v4495, 7
        %v4497 = vsub.s32 0, %v4496
        %v4498 = vrot.slane %v4493, %v4497
        %v4499 = vlaneseq
        %v4500 = vshrl.u32 %v4499, 7
        %v4501 = vsub.s32 1, %v4500
        %v4502 = vrot.slane %v4493, %v4501
        %v4503 = vlaneseq
        %v4504 = vshrl.u32 %v4503, 7
        %v4505 = vsub.s32 2, %v4504
        %v4506 = vrot.slane %v4493, %v4505
        %v4507 = vlaneseq
        %v4508 = vshrl.u32 %v4507, 7
        %v4509 = vsub.s32 3, %v4508
        %v4510 = vrot.slane %v4493, %v4509
        %v4615 = vunpack.c.l.b16 %v4393
        %v4616 = vunpack.c.h.b16 %v4393
        %v4617 = vunpack.c.l.b16 %v4394
        %v4618 = vunpack.c.h.b16 %v4394
        %v4619 = vunpack.c.l.b16 %v4395
        %v4620 = vunpack.c.h.b16 %v4395
        %v4621 = vunpack.c.l.b16 %v4396
        %v4622 = vunpack.c.h.b16 %v4396
        %v4623 = vunpack.c.l.b16 %v4397
        %v4624 = vunpack.c.h.b16 %v4397
        %v4625 = vunpack.c.l.b16 %v4398
        %v4626 = vunpack.c.h.b16 %v4398
        %v4627 = vunpack.c.l.b16 %v4399
        %v4628 = vunpack.c.h.b16 %v4399
        %v4629 = vunpack.c.l.b16 %v4400
        %v4630 = vunpack.c.h.b16 %v4400
        %v4631 = vunpack.c.l.b16 %v4401
        %v4632 = vunpack.c.h.b16 %v4401
        %v4633 = vunpack.c.l.b16 %v4402
        %v4634 = vunpack.c.h.b16 %v4402
        %v4635 = vunpack.c.l.b16 %v4403
        %v4636 = vunpack.c.h.b16 %v4403
        %v4637 = vunpack.c.l.b16 %v4404
        %v4638 = vunpack.c.h.b16 %v4404
        %v4639 = vunpack.c.l.b16 %v4405
        %v4640 = vunpack.c.h.b16 %v4405
        %v4641 = vunpack.c.l.b16 %v4406
        %v4642 = vunpack.c.h.b16 %v4406
        %v4643 = vunpack.c.l.b16 %v4407
        %v4644 = vunpack.c.h.b16 %v4407
        %v4645 = vunpack.c.l.b16 %v4408
        %v4646 = vunpack.c.h.b16 %v4408
        %v4647 = vunpack.c.l.b16 %v4409
        %v4648 = vunpack.c.h.b16 %v4409
        %v4649 = vunpack.c.l.b16 %v4410
        %v4650 = vunpack.c.h.b16 %v4410
        %v4651 = vunpack.c.l.b16 %v4411
        %v4652 = vunpack.c.h.b16 %v4411
        %v4653 = vunpack.c.l.b16 %v4412
        %v4654 = vunpack.c.h.b16 %v4412
        %v4655 = vunpack.c.l.b16 %v4413
        %v4656 = vunpack.c.h.b16 %v4413
        %v4657 = vunpack.c.l.b16 %v4414
        %v4658 = vunpack.c.h.b16 %v4414
        %v4659 = vunpack.c.l.b16 %v4415
        %v4660 = vunpack.c.h.b16 %v4415
        %v4661 = vunpack.c.l.b16 %v4416
        %v4662 = vunpack.c.h.b16 %v4416
        %v4663 = vunpack.c.l.b16 %v4417
        %v4664 = vunpack.c.h.b16 %v4417
        %v4665 = vunpack.c.l.b16 %v4418
        %v4666 = vunpack.c.h.b16 %v4418
        %v4667 = vunpack.c.l.b16 %v4419
        %v4668 = vunpack.c.h.b16 %v4419
        %v4669 = vunpack.c.l.b16 %v4420
        %v4670 = vunpack.c.h.b16 %v4420
        %v4671 = vunpack.c.l.b16 %v4421
        %v4672 = vunpack.c.h.b16 %v4421
        %v4673 = vunpack.c.l.b16 %v4422
        %v4674 = vunpack.c.h.b16 %v4422
        %v4675 = vunpack.c.l.b16 %v4423
        %v4676 = vunpack.c.h.b16 %v4423
        %v4677 = vunpack.c.l.b16 %v4424
        %v4678 = vunpack.c.h.b16 %v4424
        %v4679 = vunpack.c.l.b16 %v4425
        %v4680 = vunpack.c.h.b16 %v4425
        %v4681 = vunpack.c.l.b16 %v4426
        %v4682 = vunpack.c.h.b16 %v4426
        %v4683 = vunpack.c.l.b16 %v4427
        %v4684 = vunpack.c.h.b16 %v4427
        %v4685 = vunpack.c.l.b16 %v4428
        %v4686 = vunpack.c.h.b16 %v4428
        %v4687 = vunpack.c.l.b16 %v4429
        %v4688 = vunpack.c.h.b16 %v4429
        %v4689 = vunpack.c.l.b16 %v4430
        %v4690 = vunpack.c.h.b16 %v4430
        %v4691 = vunpack.c.l.b16 %v4431
        %v4692 = vunpack.c.h.b16 %v4431
        %v4693 = vunpack.c.l.b16 %v4432
        %v4694 = vunpack.c.h.b16 %v4432
        %v4695 = vunpack.c.l.b16 %v4433
        %v4696 = vunpack.c.h.b16 %v4433
        %v4697 = vunpack.c.l.b16 %v4434
        %v4698 = vunpack.c.h.b16 %v4434
        %v4699 = vunpack.c.l.b16 %v4435
        %v4700 = vunpack.c.h.b16 %v4435
        %v4701 = vunpack.c.l.b16 %v4436
        %v4702 = vunpack.c.h.b16 %v4436
        %v4703 = vunpack.c.l.b16 %v4437
        %v4704 = vunpack.c.h.b16 %v4437
        %v4705 = vunpack.c.l.b16 %v4438
        %v4706 = vunpack.c.h.b16 %v4438
        %v4707 = vunpack.c.l.b16 %v4439
        %v4708 = vunpack.c.h.b16 %v4439
        %v4709 = vunpack.c.l.b16 %v4440
        %v4710 = vunpack.c.h.b16 %v4440
        %v4711 = vunpack.c.l.b16 %v4441
        %v4712 = vunpack.c.h.b16 %v4441
        %v4713 = vunpack.c.l.b16 %v4442
        %v4714 = vunpack.c.h.b16 %v4442
        %v4715 = vunpack.c.l.b16 %v4443
        %v4716 = vunpack.c.h.b16 %v4443
        %v4717 = vunpack.c.l.b16 %v4444
        %v4718 = vunpack.c.h.b16 %v4444
        %v4719 = vunpack.c.l.b16 %v4445
        %v4720 = vunpack.c.h.b16 %v4445
        %v4721 = vunpack.c.l.b16 %v4446
        %v4722 = vunpack.c.h.b16 %v4446
        %v4723 = vunpack.c.l.b16 %v4447
        %v4724 = vunpack.c.h.b16 %v4447
        %v4725 = vunpack.c.l.b16 %v4448
        %v4726 = vunpack.c.h.b16 %v4448
        %v4727 = vunpack.c.l.b16 %v4449
        %v4728 = vunpack.c.h.b16 %v4449
        %v4729 = vunpack.c.l.b16 %v4450
        %v4730 = vunpack.c.h.b16 %v4450
        %v4731 = vunpack.c.l.b16 %v4451
        %v4732 = vunpack.c.h.b16 %v4451
        %v4733 = vunpack.c.l.b16 %v4452
        %v4734 = vunpack.c.h.b16 %v4452
        %v4735 = vunpack.c.l.b16 %v4453
        %v4736 = vunpack.c.h.b16 %v4453
        %v4737 = vunpack.c.l.b16 %v4454
        %v4738 = vunpack.c.h.b16 %v4454
        %v4739 = vunpack.c.l.b16 %v4455
        %v4740 = vunpack.c.h.b16 %v4455
        %v4741 = vunpack.c.l.b16 %v4456
        %v4742 = vunpack.c.h.b16 %v4456
        %v4743 = vunpack.c.l.b16 %v4457
        %v4744 = vunpack.c.h.b16 %v4457
        %v4745 = vunpack.c.l.b16 %v4458
        %v4746 = vunpack.c.h.b16 %v4458
        %v4747 = vunpack.c.l.b16 %v4459
        %v4748 = vunpack.c.h.b16 %v4459
        %v4749 = vunpack.c.l.b16 %v4460
        %v4750 = vunpack.c.h.b16 %v4460
        %v4751 = vunpack.c.l.b16 %v4461
        %v4752 = vunpack.c.h.b16 %v4461
        %v4753 = vunpack.c.l.b16 %v4462
        %v4754 = vunpack.c.h.b16 %v4462
        %v4755 = vunpack.c.l.b16 %v4463
        %v4756 = vunpack.c.h.b16 %v4463
        %v4757 = vunpack.c.l.b16 %v4464
        %v4758 = vunpack.c.h.b16 %v4464
        %v4759 = vunpack.c.l.b16 %v4465
        %v4760 = vunpack.c.h.b16 %v4465
        %v4761 = vunpack.c.l.b16 %v4466
        %v4762 = vunpack.c.h.b16 %v4466
        %v4763 = vunpack.c.l.b16 %v4467
        %v4764 = vunpack.c.h.b16 %v4467
        %v4765 = vunpack.c.l.b16 %v4468
        %v4766 = vunpack.c.h.b16 %v4468
        %v4767 = vunpack.c.l.b16 %v4469
        %v4768 = vunpack.c.h.b16 %v4469
        %v4769 = vunpack.c.l.b16 %v4470
        %v4770 = vunpack.c.h.b16 %v4470
        %v4771 = vunpack.c.l.b16 %v4471
        %v4772 = vunpack.c.h.b16 %v4471
        %v4773 = vunpack.c.l.b16 %v4472
        %v4774 = vunpack.c.h.b16 %v4472
        %v4775 = vunpack.c.l.b16 %v4473
        %v4776 = vunpack.c.h.b16 %v4473
        %v4777 = vunpack.c.l.b16 %v4474
        %v4778 = vunpack.c.h.b16 %v4474
        %v4779 = vunpack.c.l.b16 %v4475
        %v4780 = vunpack.c.h.b16 %v4475
        %v4781 = vunpack.c.l.b16 %v4476
        %v4782 = vunpack.c.h.b16 %v4476
        %v4783 = vunpack.c.l.b16 %v4477
        %v4784 = vunpack.c.h.b16 %v4477
        %v4785 = vunpack.c.l.b16 %v4478
        %v4786 = vunpack.c.h.b16 %v4478
        %v4787 = vunpack.c.l.b16 %v4479
        %v4788 = vunpack.c.h.b16 %v4479
        %v4789 = vunpack.c.l.b16 %v4480
        %v4790 = vunpack.c.h.b16 %v4480
        %v4791 = vunpack.c.l.b16 %v4481
        %v4792 = vunpack.c.h.b16 %v4481
        %v4793 = vunpack.c.l.b16 %v4482
        %v4794 = vunpack.c.h.b16 %v4482
        %v4795 = vunpack.c.l.b16 %v4483
        %v4796 = vunpack.c.h.b16 %v4483
        %v4797 = vunpack.c.l.b16 %v4484
        %v4798 = vunpack.c.h.b16 %v4484
        %v4799 = vunpack.c.l.b16 %v4485
        %v4800 = vunpack.c.h.b16 %v4485
        %v4801 = vunpack.c.l.b16 %v4486
        %v4802 = vunpack.c.h.b16 %v4486
        %v4803 = vunpack.c.l.b16 %v4487
        %v4804 = vunpack.c.h.b16 %v4487
        %v4805 = vunpack.c.l.b16 %v4488
        %v4806 = vunpack.c.h.b16 %v4488
        %v4807 = vunpack.c.l.b16 %v4489
        %v4808 = vunpack.c.h.b16 %v4489
        %v4809 = vunpack.c.l.b16 %v4490
        %v4810 = vunpack.c.h.b16 %v4490
        %v4811 = vunpack.c.l.b16 %v4491
        %v4812 = vunpack.c.h.b16 %v4491
        %v4813 = vunpack.c.l.b16 %v4492
        %v4814 = vunpack.c.h.b16 %v4492
        %v4815 = vpack.c.b16 %v4619, %v4615
        %v4816 = vpack.c.b16 %v4620, %v4616
        %v4817 = vpack.c.b16 %v4621, %v4617
        %v4818 = vpack.c.b16 %v4622, %v4618
        %v4819 = vpack.c.b16 %v4627, %v4623
        %v4820 = vpack.c.b16 %v4628, %v4624
        %v4821 = vpack.c.b16 %v4629, %v4625
        %v4822 = vpack.c.b16 %v4630, %v4626
        %v4823 = vpack.c.b16 %v4635, %v4631
        %v4824 = vpack.c.b16 %v4636, %v4632
        %v4825 = vpack.c.b16 %v4637, %v4633
        %v4826 = vpack.c.b16 %v4638, %v4634
        %v4827 = vpack.c.b16 %v4643, %v4639
        %v4828 = vpack.c.b16 %v4644, %v4640
        %v4829 = vpack.c.b16 %v4645, %v4641
        %v4830 = vpack.c.b16 %v4646, %v4642
        %v4831 = vpack.c.b16 %v4651, %v4647
        %v4832 = vpack.c.b16 %v4652, %v4648
        %v4833 = vpack.c.b16 %v4653, %v4649
        %v4834 = vpack.c.b16 %v4654, %v4650
        %v4835 = vpack.c.b16 %v4659, %v4655
        %v4836 = vpack.c.b16 %v4660, %v4656
        %v4837 = vpack.c.b16 %v4661, %v4657
        %v4838 = vpack.c.b16 %v4662, %v4658
        %v4839 = vpack.c.b16 %v4667, %v4663
        %v4840 = vpack.c.b16 %v4668, %v4664
        %v4841 = vpack.c.b16 %v4669, %v4665
        %v4842 = vpack.c.b16 %v4670, %v4666
        %v4843 = vpack.c.b16 %v4675, %v4671
        %v4844 = vpack.c.b16 %v4676, %v4672
        %v4845 = vpack.c.b16 %v4677, %v4673
        %v4846 = vpack.c.b16 %v4678, %v4674
        %v4847 = vpack.c.b16 %v4683, %v4679
        %v4848 = vpack.c.b16 %v4684, %v4680
        %v4849 = vpack.c.b16 %v4685, %v4681
        %v4850 = vpack.c.b16 %v4686, %v4682
        %v4851 = vpack.c.b16 %v4691, %v4687
        %v4852 = vpack.c.b16 %v4692, %v4688
        %v4853 = vpack.c.b16 %v4693, %v4689
        %v4854 = vpack.c.b16 %v4694, %v4690
        %v4855 = vpack.c.b16 %v4699, %v4695
        %v4856 = vpack.c.b16 %v4700, %v4696
        %v4857 = vpack.c.b16 %v4701, %v4697
        %v4858 = vpack.c.b16 %v4702, %v4698
        %v4859 = vpack.c.b16 %v4707, %v4703
        %v4860 = vpack.c.b16 %v4708, %v4704
        %v4861 = vpack.c.b16 %v4709, %v4705
        %v4862 = vpack.c.b16 %v4710, %v4706
        %v4863 = vpack.c.b16 %v4715, %v4711
        %v4864 = vpack.c.b16 %v4716, %v4712
        %v4865 = vpack.c.b16 %v4717, %v4713
        %v4866 = vpack.c.b16 %v4718, %v4714
        %v4867 = vpack.c.b16 %v4723, %v4719
        %v4868 = vpack.c.b16 %v4724, %v4720
        %v4869 = vpack.c.b16 %v4725, %v4721
        %v4870 = vpack.c.b16 %v4726, %v4722
        %v4871 = vpack.c.b16 %v4731, %v4727
        %v4872 = vpack.c.b16 %v4732, %v4728
        %v4873 = vpack.c.b16 %v4733, %v4729
        %v4874 = vpack.c.b16 %v4734, %v4730
        %v4875 = vpack.c.b16 %v4739, %v4735
        %v4876 = vpack.c.b16 %v4740, %v4736
        %v4877 = vpack.c.b16 %v4741, %v4737
        %v4878 = vpack.c.b16 %v4742, %v4738
        %v4879 = vpack.c.b16 %v4747, %v4743
        %v4880 = vpack.c.b16 %v4748, %v4744
        %v4881 = vpack.c.b16 %v4749, %v4745
        %v4882 = vpack.c.b16 %v4750, %v4746
        %v4883 = vpack.c.b16 %v4755, %v4751
        %v4884 = vpack.c.b16 %v4756, %v4752
        %v4885 = vpack.c.b16 %v4757, %v4753
        %v4886 = vpack.c.b16 %v4758, %v4754
        %v4887 = vpack.c.b16 %v4763, %v4759
        %v4888 = vpack.c.b16 %v4764, %v4760
        %v4889 = vpack.c.b16 %v4765, %v4761
        %v4890 = vpack.c.b16 %v4766, %v4762
        %v4891 = vpack.c.b16 %v4771, %v4767
        %v4892 = vpack.c.b16 %v4772, %v4768
        %v4893 = vpack.c.b16 %v4773, %v4769
        %v4894 = vpack.c.b16 %v4774, %v4770
        %v4895 = vpack.c.b16 %v4779, %v4775
        %v4896 = vpack.c.b16 %v4780, %v4776
        %v4897 = vpack.c.b16 %v4781, %v4777
        %v4898 = vpack.c.b16 %v4782, %v4778
        %v4899 = vpack.c.b16 %v4787, %v4783
        %v4900 = vpack.c.b16 %v4788, %v4784
        %v4901 = vpack.c.b16 %v4789, %v4785
        %v4902 = vpack.c.b16 %v4790, %v4786
        %v4903 = vpack.c.b16 %v4795, %v4791
        %v4904 = vpack.c.b16 %v4796, %v4792
        %v4905 = vpack.c.b16 %v4797, %v4793
        %v4906 = vpack.c.b16 %v4798, %v4794
        %v4907 = vpack.c.b16 %v4803, %v4799
        %v4908 = vpack.c.b16 %v4804, %v4800
        %v4909 = vpack.c.b16 %v4805, %v4801
        %v4910 = vpack.c.b16 %v4806, %v4802
        %v4911 = vpack.c.b16 %v4811, %v4807
        %v4912 = vpack.c.b16 %v4812, %v4808
        %v4913 = vpack.c.b16 %v4813, %v4809
        %v4914 = vpack.c.b16 %v4814, %v4810
        %v5016 = vsel %vm1549, %v4392, 0
        %5018 = vmatprep.subr.bf16.mxu0 %v4816
        %5019 = vmatpush1.bf16.msra.mxu0 %v4815
        %5020 = vmatprep.subr.bf16.mxu0 %v4820
        %5021 = vmatpush1.bf16.msra.mxu0 %v4819
        %5022 = vmatprep.subr.bf16.mxu0 %v4824
        %5023 = vmatpush1.bf16.msra.mxu0 %v4823
        %5024 = vmatprep.subr.bf16.mxu0 %v4828
        %5025 = vmatpush1.bf16.msra.mxu0 %v4827
        %5026 = vmatprep.subr.bf16.mxu0 %v4832
        %5027 = vmatpush1.bf16.msra.mxu0 %v4831
        %5028 = vmatprep.subr.bf16.mxu0 %v4836
        %5029 = vmatpush1.bf16.msra.mxu0 %v4835
        %5030 = vmatprep.subr.bf16.mxu0 %v4840
        %5031 = vmatpush1.bf16.msra.mxu0 %v4839
        %5032 = vmatprep.subr.bf16.mxu0 %v4844
        %5033 = vmatpush1.bf16.msra.mxu0 %v4843
        %5034 = vmatprep.subr.bf16.mxu0 %v4848
        %5035 = vmatpush1.bf16.msra.mxu0 %v4847
        %5036 = vmatprep.subr.bf16.mxu0 %v4852
        %5037 = vmatpush1.bf16.msra.mxu0 %v4851
        %5038 = vmatprep.subr.bf16.mxu0 %v4856
        %5039 = vmatpush1.bf16.msra.mxu0 %v4855
        %5040 = vmatprep.subr.bf16.mxu0 %v4860
        %5041 = vmatpush1.bf16.msra.mxu0 %v4859
        %5042 = vmatprep.subr.bf16.mxu0 %v4864
        %5043 = vmatpush1.bf16.msra.mxu0 %v4863
        %5044 = vmatprep.subr.bf16.mxu0 %v4868
        %5045 = vmatpush1.bf16.msra.mxu0 %v4867
        %5046 = vmatprep.subr.bf16.mxu0 %v4872
        %5047 = vmatpush1.bf16.msra.mxu0 %v4871
        %5048 = vmatprep.subr.bf16.mxu0 %v4876
        %5049 = vmatpush1.bf16.msra.mxu0 %v4875
        %5050 = vmatprep.mubr.bf16.mxu0 %v4390
        %5051 = vmatmul.mubr.bf16.gmra.mrb[0].mxu0 %v4389
        %v5052 = vpop.f32.mrb[0].mxu0
        %v5053 = vadd.f32 %v4498, %v5052
        %v5054 = vpop.f32.mrb[0].mxu0
        %v5055 = vadd.f32 %v4502, %v5054
        %v5056 = vpop.f32.mrb[0].mxu0
        %v5057 = vpop.f32.mrb[0].mxu0
        %5058 = vdwg.mxu0
        %5059 = vmatprep.subr.bf16.mxu0 %v4880
        %5060 = vmatpush1.bf16.msra.mxu0 %v4879
        %5061 = vmatprep.subr.bf16.mxu0 %v4884
        %5062 = vmatpush1.bf16.msra.mxu0 %v4883
        %5063 = vmatprep.subr.bf16.mxu0 %v4888
        %5064 = vmatpush1.bf16.msra.mxu0 %v4887
        %5065 = vmatprep.subr.bf16.mxu0 %v4892
        %5066 = vmatpush1.bf16.msra.mxu0 %v4891
        %5067 = vmatprep.subr.bf16.mxu0 %v4896
        %5068 = vmatpush1.bf16.msra.mxu0 %v4895
        %5069 = vmatprep.subr.bf16.mxu0 %v4900
        %5070 = vmatpush1.bf16.msra.mxu0 %v4899
        %5071 = vmatprep.subr.bf16.mxu0 %v4904
        %5072 = vmatpush1.bf16.msra.mxu0 %v4903
        %5073 = vmatprep.subr.bf16.mxu0 %v4908
        %5074 = vmatpush1.bf16.msra.mxu0 %v4907
        %5075 = vmatprep.subr.bf16.mxu0 %v4912
        %5076 = vmatpush1.bf16.msra.mxu0 %v4911
        %5077 = vmatprep.subr.bf16.mxu0 0
        %5078 = vmatpush1.bf16.msra.mxu0 0
        %5079 = vmatprep.subr.bf16.mxu0 0
        %5080 = vmatpush1.bf16.msra.mxu0 0
        %5081 = vmatprep.subr.bf16.mxu0 0
        %5082 = vmatpush1.bf16.msra.mxu0 0
        %5083 = vmatprep.subr.bf16.mxu0 0
        %5084 = vmatpush1.bf16.msra.mxu0 0
        %5085 = vmatprep.subr.bf16.mxu0 0
        %5086 = vmatpush1.bf16.msra.mxu0 0
        %5087 = vmatprep.subr.bf16.mxu0 0
        %5088 = vmatpush1.bf16.msra.mxu0 0
        %5089 = vmatprep.subr.bf16.mxu0 0
        %5090 = vmatpush1.bf16.msra.mxu0 0
        %5091 = vmatprep.mubr.bf16.mxu0 %v5016
        %5092 = vmatmul.mubr.bf16.gmra.mrb[0].mxu0 %v4391
        %v5093 = vpop.f32.mrb[0].mxu0
        %v5094 = vadd.f32 %v5053, %v5093
        %v5095 = vpop.f32.mrb[0].mxu0
        %v5096 = vadd.f32 %v5055, %v5095
        %v5097 = vpop.f32.mrb[0].mxu0
        %v5098 = vpop.f32.mrb[0].mxu0
        %5099 = vdwg.mxu0
        %5100 = vmatprep.subr.bf16.mxu0 %v4818
        %5101 = vmatpush1.bf16.msra.mxu0 %v4817
        %5102 = vmatprep.subr.bf16.mxu0 %v4822
        %5103 = vmatpush1.bf16.msra.mxu0 %v4821
        %5104 = vmatprep.subr.bf16.mxu0 %v4826
        %5105 = vmatpush1.bf16.msra.mxu0 %v4825
        %5106 = vmatprep.subr.bf16.mxu0 %v4830
        %5107 = vmatpush1.bf16.msra.mxu0 %v4829
        %5108 = vmatprep.subr.bf16.mxu0 %v4834
        %5109 = vmatpush1.bf16.msra.mxu0 %v4833
        %5110 = vmatprep.subr.bf16.mxu0 %v4838
        %5111 = vmatpush1.bf16.msra.mxu0 %v4837
        %5112 = vmatprep.subr.bf16.mxu0 %v4842
        %5113 = vmatpush1.bf16.msra.mxu0 %v4841
        %5114 = vmatprep.subr.bf16.mxu0 %v4846
        %5115 = vmatpush1.bf16.msra.mxu0 %v4845
        %5116 = vmatprep.subr.bf16.mxu0 %v4850
        %5117 = vmatpush1.bf16.msra.mxu0 %v4849
        %5118 = vmatprep.subr.bf16.mxu0 %v4854
        %5119 = vmatpush1.bf16.msra.mxu0 %v4853
        %5120 = vmatprep.subr.bf16.mxu0 %v4858
        %5121 = vmatpush1.bf16.msra.mxu0 %v4857
        %5122 = vmatprep.subr.bf16.mxu0 %v4862
        %5123 = vmatpush1.bf16.msra.mxu0 %v4861
        %5124 = vmatprep.subr.bf16.mxu0 %v4866
        %5125 = vmatpush1.bf16.msra.mxu0 %v4865
        %5126 = vmatprep.subr.bf16.mxu0 %v4870
        %5127 = vmatpush1.bf16.msra.mxu0 %v4869
        %5128 = vmatprep.subr.bf16.mxu0 %v4874
        %5129 = vmatpush1.bf16.msra.mxu0 %v4873
        %5130 = vmatprep.subr.bf16.mxu0 %v4878
        %5131 = vmatpush1.bf16.msra.mxu0 %v4877
        %5132 = vmatprep.mubr.bf16.mxu0 %v4390
        %5133 = vmatmul.mubr.bf16.gmra.mrb[0].mxu0 %v4389
        %v5134 = vpop.f32.mrb[0].mxu0
        %v5135 = vadd.f32 %v4506, %v5134
        %v5136 = vpop.f32.mrb[0].mxu0
        %v5137 = vadd.f32 %v4510, %v5136
        %v5138 = vpop.f32.mrb[0].mxu0
        %v5139 = vpop.f32.mrb[0].mxu0
        %5140 = vdwg.mxu0
        %5141 = vmatprep.subr.bf16.mxu0 %v4882
        %5142 = vmatpush1.bf16.msra.mxu0 %v4881
        %5143 = vmatprep.subr.bf16.mxu0 %v4886
        %5144 = vmatpush1.bf16.msra.mxu0 %v4885
        %5145 = vmatprep.subr.bf16.mxu0 %v4890
        %5146 = vmatpush1.bf16.msra.mxu0 %v4889
        %5147 = vmatprep.subr.bf16.mxu0 %v4894
        %5148 = vmatpush1.bf16.msra.mxu0 %v4893
        %5149 = vmatprep.subr.bf16.mxu0 %v4898
        %5150 = vmatpush1.bf16.msra.mxu0 %v4897
        %5151 = vmatprep.subr.bf16.mxu0 %v4902
        %5152 = vmatpush1.bf16.msra.mxu0 %v4901
        %5153 = vmatprep.subr.bf16.mxu0 %v4906
        %5154 = vmatpush1.bf16.msra.mxu0 %v4905
        %5155 = vmatprep.subr.bf16.mxu0 %v4910
        %5156 = vmatpush1.bf16.msra.mxu0 %v4909
        %5157 = vmatprep.subr.bf16.mxu0 %v4914
        %5158 = vmatpush1.bf16.msra.mxu0 %v4913
        %5159 = vmatprep.subr.bf16.mxu0 0
        %5160 = vmatpush1.bf16.msra.mxu0 0
        %5161 = vmatprep.subr.bf16.mxu0 0
        %5162 = vmatpush1.bf16.msra.mxu0 0
        %5163 = vmatprep.subr.bf16.mxu0 0
        %5164 = vmatpush1.bf16.msra.mxu0 0
        %5165 = vmatprep.subr.bf16.mxu0 0
        %5166 = vmatpush1.bf16.msra.mxu0 0
        %5167 = vmatprep.subr.bf16.mxu0 0
        %5168 = vmatpush1.bf16.msra.mxu0 0
        %5169 = vmatprep.subr.bf16.mxu0 0
        %5170 = vmatpush1.bf16.msra.mxu0 0
        %5171 = vmatprep.subr.bf16.mxu0 0
        %5172 = vmatpush1.bf16.msra.mxu0 0
        %5173 = vmatprep.mubr.bf16.mxu0 %v5016
        %5174 = vmatmul.mubr.bf16.gmra.mrb[0].mxu0 %v4391
        %v5175 = vpop.f32.mrb[0].mxu0
        %v5176 = vadd.f32 %v5135, %v5175
        %v5177 = vpop.f32.mrb[0].mxu0
        %v5178 = vadd.f32 %v5137, %v5177
        %v5179 = vpop.f32.mrb[0].mxu0
        %v5180 = vpop.f32.mrb[0].mxu0
        %5181 = vdwg.mxu0
        %v5182 = vadd.f32 %v1717, %v5094
        %v5183 = vadd.f32 %v1718, %v5096
        %v5184 = vadd.f32 %v1719, %v5176
        %v5185 = vadd.f32 %v1720, %v5178
        %v5186 = vld [vmem:[%s11] sm:$0xf]
        %v5187 = vld [vmem:[%s12] sm:$0xf]
        %v5188 = vadd.f32 %v5182, %v5183
        %v5189 = vadd.f32 %v5188, %v5184
        %v5190 = vsel %vm1549, %v5185, 0.0
        %v5191 = vadd.f32 %v5189, %v5190
        %5192 = vadd.xlane.f32.xlu0 %v5191
        %v5193 = vpop.xlane.xlu0 %5192
        %v5194 = vrcp.pop 400.0
        %v5195 = vmul.f32 %v5193, %v5194
        %v5196 = vsub.f32 %v5182, %v5195
        %v5197 = vsub.f32 %v5183, %v5195
        %v5198 = vsub.f32 %v5184, %v5195
        %v5199 = vsub.f32 %v5185, %v5195
        %v5200 = vmul.f32 %v5196, %v5196
        %v5201 = vmul.f32 %v5197, %v5197
        %v5202 = vmul.f32 %v5198, %v5198
        %v5203 = vmul.f32 %v5199, %v5199
        %v5204 = vadd.f32 %v5200, %v5201
        %v5205 = vadd.f32 %v5204, %v5202
        %v5206 = vsel %vm1549, %v5203, 0.0
        %v5207 = vadd.f32 %v5205, %v5206
        %5208 = vadd.xlane.f32.xlu0 %v5207
        %v5209 = vpop.xlane.xlu0 %5208
        %v5210 = vmul.f32 %v5209, %v5194
        %v5211 = vadd.f32 %v5210, 1e-05
        %v5212 = vrsqrt.pop %v5211
        %v5213 = vmul.f32 %v5196, %v5212
        %v5214 = vmul.f32 %v5197, %v5212
        %v5215 = vmul.f32 %v5198, %v5212
        %v5216 = vmul.f32 %v5199, %v5212
        %v5218 = vlaneseq
        %v5219 = vshrl.u32 %v5218, 7
        %v5220 = vsub.s32 0, %v5219
        %v5221 = vrot.slane %v5186, %v5220
        %v5222 = vlaneseq
        %v5223 = vshrl.u32 %v5222, 7
        %v5224 = vsub.s32 1, %v5223
        %v5225 = vrot.slane %v5186, %v5224
        %v5226 = vlaneseq
        %v5227 = vshrl.u32 %v5226, 7
        %v5228 = vsub.s32 2, %v5227
        %v5229 = vrot.slane %v5186, %v5228
        %v5230 = vlaneseq
        %v5231 = vshrl.u32 %v5230, 7
        %v5232 = vsub.s32 3, %v5231
        %v5233 = vrot.slane %v5186, %v5232
        %v5238 = vmul.f32 %v5213, %v5221
        %v5239 = vmul.f32 %v5214, %v5225
        %v5240 = vmul.f32 %v5215, %v5229
        %v5241 = vmul.f32 %v5216, %v5233
        %v5243 = vlaneseq
        %v5244 = vshrl.u32 %v5243, 7
        %v5245 = vsub.s32 0, %v5244
        %v5246 = vrot.slane %v5187, %v5245
        %v5247 = vlaneseq
        %v5248 = vshrl.u32 %v5247, 7
        %v5249 = vsub.s32 1, %v5248
        %v5250 = vrot.slane %v5187, %v5249
        %v5251 = vlaneseq
        %v5252 = vshrl.u32 %v5251, 7
        %v5253 = vsub.s32 2, %v5252
        %v5254 = vrot.slane %v5187, %v5253
        %v5255 = vlaneseq
        %v5256 = vshrl.u32 %v5255, 7
        %v5257 = vsub.s32 3, %v5256
        %v5258 = vrot.slane %v5187, %v5257
        %v5263 = vadd.f32 %v5238, %v5246
        %v5264 = vadd.f32 %v5239, %v5250
        %v5265 = vadd.f32 %v5240, %v5254
        %v5266 = vadd.f32 %v5241, %v5258
        %v5267 = vpack.c.bf16 %v5263, %v5263
        %v5268 = vpack.c.bf16 %v5264, %v5264
        %v5269 = vpack.c.bf16 %v5265, %v5265
        %v5270 = vpack.c.bf16 %v5266, %v5266
        %v5271 = vld [vmem:[#allocation13] sm:$0xff]
        %v5272 = vld [vmem:[#allocation13 + $0x8] sm:$0xff]
        %v5273 = vld [vmem:[#allocation13 + $0x10] sm:$0xff]
        %v5274 = vld [vmem:[#allocation13 + $0x18] sm:$0xff]
        %v5275 = vld [vmem:[#allocation13 + $0x20] sm:$0xff]
        %v5276 = vld [vmem:[#allocation13 + $0x28] sm:$0xff]
        %v5277 = vld [vmem:[#allocation13 + $0x30] sm:$0xff]
        %v5278 = vld [vmem:[#allocation13 + $0x38] sm:$0xff]
        %v5279 = vld [vmem:[#allocation13 + $0x40] sm:$0xff]
        %v5280 = vld [vmem:[#allocation13 + $0x48] sm:$0xff]
        %v5281 = vld [vmem:[#allocation13 + $0x50] sm:$0xff]
        %v5282 = vld [vmem:[#allocation13 + $0x58] sm:$0xff]
        %v5283 = vld [vmem:[#allocation13 + $0x60] sm:$0xff]
        %v5284 = vld [vmem:[#allocation13 + $0x68] sm:$0xff]
        %v5285 = vld [vmem:[#allocation13 + $0x70] sm:$0xff]
        %v5286 = vld [vmem:[#allocation13 + $0x78] sm:$0xff]
        %v5287 = vld [vmem:[#allocation13 + $0x80] sm:$0xff]
        %v5288 = vld [vmem:[#allocation13 + $0x88] sm:$0xff]
        %v5289 = vld [vmem:[#allocation13 + $0x90] sm:$0xff]
        %v5290 = vld [vmem:[#allocation13 + $0x98] sm:$0xff]
        %v5291 = vld [vmem:[#allocation13 + $0xa0] sm:$0xff]
        %v5292 = vld [vmem:[#allocation13 + $0xa8] sm:$0xff]
        %v5293 = vld [vmem:[#allocation13 + $0xb0] sm:$0xff]
        %v5294 = vld [vmem:[#allocation13 + $0xb8] sm:$0xff]
        %v5295 = vld [vmem:[#allocation13 + $0xc0] sm:$0xff]
        %v5296 = vld [vmem:[#allocation13 + $0xc8] sm:$0xff]
        %v5297 = vld [vmem:[#allocation13 + $0xd0] sm:$0xff]
        %v5298 = vld [vmem:[#allocation13 + $0xd8] sm:$0xff]
        %v5299 = vld [vmem:[#allocation13 + $0xe0] sm:$0xff]
        %v5300 = vld [vmem:[#allocation13 + $0xe8] sm:$0xff]
        %v5301 = vld [vmem:[#allocation13 + $0xf0] sm:$0xff]
        %v5302 = vld [vmem:[#allocation13 + $0xf8] sm:$0xff]
        %v5303 = vld [vmem:[#allocation13 + $0x100] sm:$0xff]
        %v5304 = vld [vmem:[#allocation13 + $0x108] sm:$0xff]
        %v5305 = vld [vmem:[#allocation13 + $0x110] sm:$0xff]
        %v5306 = vld [vmem:[#allocation13 + $0x118] sm:$0xff]
        %v5307 = vld [vmem:[#allocation13 + $0x120] sm:$0xff]
        %v5308 = vld [vmem:[#allocation13 + $0x128] sm:$0xff]
        %v5309 = vld [vmem:[#allocation13 + $0x130] sm:$0xff]
        %v5310 = vld [vmem:[#allocation13 + $0x138] sm:$0xff]
        %v5311 = vld [vmem:[#allocation13 + $0x140] sm:$0xff]
        %v5312 = vld [vmem:[#allocation13 + $0x148] sm:$0xff]
        %v5313 = vld [vmem:[#allocation13 + $0x150] sm:$0xff]
        %v5314 = vld [vmem:[#allocation13 + $0x158] sm:$0xff]
        %v5315 = vld [vmem:[#allocation13 + $0x160] sm:$0xff]
        %v5316 = vld [vmem:[#allocation13 + $0x168] sm:$0xff]
        %v5317 = vld [vmem:[#allocation13 + $0x170] sm:$0xff]
        %v5318 = vld [vmem:[#allocation13 + $0x178] sm:$0xff]
        %v5319 = vld [vmem:[#allocation13 + $0x180] sm:$0xff]
        %v5320 = vld [vmem:[#allocation13 + $0x188] sm:$0xff]
        %v5321 = vld [vmem:[#allocation13 + $0x190] sm:$0xff]
        %v5322 = vld [vmem:[#allocation13 + $0x198] sm:$0xff]
        %v5323 = vld [vmem:[#allocation13 + $0x1a0] sm:$0xff]
        %v5324 = vld [vmem:[#allocation13 + $0x1a8] sm:$0xff]
        %v5325 = vld [vmem:[#allocation13 + $0x1b0] sm:$0xff]
        %v5326 = vld [vmem:[#allocation13 + $0x1b8] sm:$0xff]
        %v5327 = vld [vmem:[#allocation13 + $0x1c0] sm:$0xff]
        %v5328 = vld [vmem:[#allocation13 + $0x1c8] sm:$0xff]
        %v5329 = vld [vmem:[#allocation13 + $0x1d0] sm:$0xff]
        %v5330 = vld [vmem:[#allocation13 + $0x1d8] sm:$0xff]
        %v5331 = vld [vmem:[#allocation13 + $0x1e0] sm:$0xff]
        %v5332 = vld [vmem:[#allocation13 + $0x1e8] sm:$0xff]
        %v5333 = vld [vmem:[#allocation13 + $0x1f0] sm:$0xff]
        %v5334 = vld [vmem:[#allocation13 + $0x1f8] sm:$0xff]
        %v5335 = vld [vmem:[#allocation13 + $0x200] sm:$0xff]
        %v5336 = vld [vmem:[#allocation13 + $0x208] sm:$0xff]
        %v5337 = vld [vmem:[#allocation13 + $0x210] sm:$0xff]
        %v5338 = vld [vmem:[#allocation13 + $0x218] sm:$0xff]
        %v5339 = vld [vmem:[#allocation13 + $0x220] sm:$0xff]
        %v5340 = vld [vmem:[#allocation13 + $0x228] sm:$0xff]
        %v5341 = vld [vmem:[#allocation13 + $0x230] sm:$0xff]
        %v5342 = vld [vmem:[#allocation13 + $0x238] sm:$0xff]
        %v5343 = vld [vmem:[#allocation13 + $0x240] sm:$0xff]
        %v5344 = vld [vmem:[#allocation13 + $0x248] sm:$0xff]
        %v5345 = vld [vmem:[#allocation13 + $0x250] sm:$0xff]
        %v5346 = vld [vmem:[#allocation13 + $0x258] sm:$0xff]
        %v5347 = vld [vmem:[#allocation13 + $0x260] sm:$0xff]
        %v5348 = vld [vmem:[#allocation13 + $0x268] sm:$0xff]
        %v5349 = vld [vmem:[#allocation13 + $0x270] sm:$0xff]
        %v5350 = vld [vmem:[#allocation13 + $0x278] sm:$0xff]
        %v5351 = vld [vmem:[#allocation13 + $0x280] sm:$0xff]
        %v5352 = vld [vmem:[#allocation13 + $0x288] sm:$0xff]
        %v5353 = vld [vmem:[#allocation13 + $0x290] sm:$0xff]
        %v5354 = vld [vmem:[#allocation13 + $0x298] sm:$0xff]
        %v5355 = vld [vmem:[#allocation13 + $0x2a0] sm:$0xff]
        %v5356 = vld [vmem:[#allocation13 + $0x2a8] sm:$0xff]
        %v5357 = vld [vmem:[#allocation13 + $0x2b0] sm:$0xff]
        %v5358 = vld [vmem:[#allocation13 + $0x2b8] sm:$0xff]
        %v5359 = vld [vmem:[#allocation13 + $0x2c0] sm:$0xff]
        %v5360 = vld [vmem:[#allocation13 + $0x2c8] sm:$0xff]
        %v5361 = vld [vmem:[#allocation13 + $0x2d0] sm:$0xff]
        %v5362 = vld [vmem:[#allocation13 + $0x2d8] sm:$0xff]
        %v5363 = vld [vmem:[#allocation13 + $0x2e0] sm:$0xff]
        %v5364 = vld [vmem:[#allocation13 + $0x2e8] sm:$0xff]
        %v5365 = vld [vmem:[#allocation13 + $0x2f0] sm:$0xff]
        %v5366 = vld [vmem:[#allocation13 + $0x2f8] sm:$0xff]
        %v5367 = vld [vmem:[#allocation13 + $0x300] sm:$0xff]
        %v5368 = vld [vmem:[#allocation13 + $0x308] sm:$0xff]
        %v5369 = vld [vmem:[#allocation13 + $0x310] sm:$0xff]
        %v5370 = vld [vmem:[#allocation13 + $0x318] sm:$0xff]
        %v5371 = vld [vmem:[%s14] sm:$0xf]
        %v5373 = vlaneseq
        %v5374 = vshrl.u32 %v5373, 7
        %v5375 = vsub.s32 0, %v5374
        %v5376 = vrot.slane %v5371, %v5375
        %v5377 = vlaneseq
        %v5378 = vshrl.u32 %v5377, 7
        %v5379 = vsub.s32 1, %v5378
        %v5380 = vrot.slane %v5371, %v5379
        %v5381 = vlaneseq
        %v5382 = vshrl.u32 %v5381, 7
        %v5383 = vsub.s32 2, %v5382
        %v5384 = vrot.slane %v5371, %v5383
        %v5385 = vlaneseq
        %v5386 = vshrl.u32 %v5385, 7
        %v5387 = vsub.s32 3, %v5386
        %v5388 = vrot.slane %v5371, %v5387
        %v5493 = vunpack.c.l.b16 %v5271
        %v5494 = vunpack.c.h.b16 %v5271
        %v5495 = vunpack.c.l.b16 %v5272
        %v5496 = vunpack.c.h.b16 %v5272
        %v5497 = vunpack.c.l.b16 %v5273
        %v5498 = vunpack.c.h.b16 %v5273
        %v5499 = vunpack.c.l.b16 %v5274
        %v5500 = vunpack.c.h.b16 %v5274
        %v5501 = vunpack.c.l.b16 %v5275
        %v5502 = vunpack.c.h.b16 %v5275
        %v5503 = vunpack.c.l.b16 %v5276
        %v5504 = vunpack.c.h.b16 %v5276
        %v5505 = vunpack.c.l.b16 %v5277
        %v5506 = vunpack.c.h.b16 %v5277
        %v5507 = vunpack.c.l.b16 %v5278
        %v5508 = vunpack.c.h.b16 %v5278
        %v5509 = vunpack.c.l.b16 %v5279
        %v5510 = vunpack.c.h.b16 %v5279
        %v5511 = vunpack.c.l.b16 %v5280
        %v5512 = vunpack.c.h.b16 %v5280
        %v5513 = vunpack.c.l.b16 %v5281
        %v5514 = vunpack.c.h.b16 %v5281
        %v5515 = vunpack.c.l.b16 %v5282
        %v5516 = vunpack.c.h.b16 %v5282
        %v5517 = vunpack.c.l.b16 %v5283
        %v5518 = vunpack.c.h.b16 %v5283
        %v5519 = vunpack.c.l.b16 %v5284
        %v5520 = vunpack.c.h.b16 %v5284
        %v5521 = vunpack.c.l.b16 %v5285
        %v5522 = vunpack.c.h.b16 %v5285
        %v5523 = vunpack.c.l.b16 %v5286
        %v5524 = vunpack.c.h.b16 %v5286
        %v5525 = vunpack.c.l.b16 %v5287
        %v5526 = vunpack.c.h.b16 %v5287
        %v5527 = vunpack.c.l.b16 %v5288
        %v5528 = vunpack.c.h.b16 %v5288
        %v5529 = vunpack.c.l.b16 %v5289
        %v5530 = vunpack.c.h.b16 %v5289
        %v5531 = vunpack.c.l.b16 %v5290
        %v5532 = vunpack.c.h.b16 %v5290
        %v5533 = vunpack.c.l.b16 %v5291
        %v5534 = vunpack.c.h.b16 %v5291
        %v5535 = vunpack.c.l.b16 %v5292
        %v5536 = vunpack.c.h.b16 %v5292
        %v5537 = vunpack.c.l.b16 %v5293
        %v5538 = vunpack.c.h.b16 %v5293
        %v5539 = vunpack.c.l.b16 %v5294
        %v5540 = vunpack.c.h.b16 %v5294
        %v5541 = vunpack.c.l.b16 %v5295
        %v5542 = vunpack.c.h.b16 %v5295
        %v5543 = vunpack.c.l.b16 %v5296
        %v5544 = vunpack.c.h.b16 %v5296
        %v5545 = vunpack.c.l.b16 %v5297
        %v5546 = vunpack.c.h.b16 %v5297
        %v5547 = vunpack.c.l.b16 %v5298
        %v5548 = vunpack.c.h.b16 %v5298
        %v5549 = vunpack.c.l.b16 %v5299
        %v5550 = vunpack.c.h.b16 %v5299
        %v5551 = vunpack.c.l.b16 %v5300
        %v5552 = vunpack.c.h.b16 %v5300
        %v5553 = vunpack.c.l.b16 %v5301
        %v5554 = vunpack.c.h.b16 %v5301
        %v5555 = vunpack.c.l.b16 %v5302
        %v5556 = vunpack.c.h.b16 %v5302
        %v5557 = vunpack.c.l.b16 %v5303
        %v5558 = vunpack.c.h.b16 %v5303
        %v5559 = vunpack.c.l.b16 %v5304
        %v5560 = vunpack.c.h.b16 %v5304
        %v5561 = vunpack.c.l.b16 %v5305
        %v5562 = vunpack.c.h.b16 %v5305
        %v5563 = vunpack.c.l.b16 %v5306
        %v5564 = vunpack.c.h.b16 %v5306
        %v5565 = vunpack.c.l.b16 %v5307
        %v5566 = vunpack.c.h.b16 %v5307
        %v5567 = vunpack.c.l.b16 %v5308
        %v5568 = vunpack.c.h.b16 %v5308
        %v5569 = vunpack.c.l.b16 %v5309
        %v5570 = vunpack.c.h.b16 %v5309
        %v5571 = vunpack.c.l.b16 %v5310
        %v5572 = vunpack.c.h.b16 %v5310
        %v5573 = vunpack.c.l.b16 %v5311
        %v5574 = vunpack.c.h.b16 %v5311
        %v5575 = vunpack.c.l.b16 %v5312
        %v5576 = vunpack.c.h.b16 %v5312
        %v5577 = vunpack.c.l.b16 %v5313
        %v5578 = vunpack.c.h.b16 %v5313
        %v5579 = vunpack.c.l.b16 %v5314
        %v5580 = vunpack.c.h.b16 %v5314
        %v5581 = vunpack.c.l.b16 %v5315
        %v5582 = vunpack.c.h.b16 %v5315
        %v5583 = vunpack.c.l.b16 %v5316
        %v5584 = vunpack.c.h.b16 %v5316
        %v5585 = vunpack.c.l.b16 %v5317
        %v5586 = vunpack.c.h.b16 %v5317
        %v5587 = vunpack.c.l.b16 %v5318
        %v5588 = vunpack.c.h.b16 %v5318
        %v5589 = vunpack.c.l.b16 %v5319
        %v5590 = vunpack.c.h.b16 %v5319
        %v5591 = vunpack.c.l.b16 %v5320
        %v5592 = vunpack.c.h.b16 %v5320
        %v5593 = vunpack.c.l.b16 %v5321
        %v5594 = vunpack.c.h.b16 %v5321
        %v5595 = vunpack.c.l.b16 %v5322
        %v5596 = vunpack.c.h.b16 %v5322
        %v5597 = vunpack.c.l.b16 %v5323
        %v5598 = vunpack.c.h.b16 %v5323
        %v5599 = vunpack.c.l.b16 %v5324
        %v5600 = vunpack.c.h.b16 %v5324
        %v5601 = vunpack.c.l.b16 %v5325
        %v5602 = vunpack.c.h.b16 %v5325
        %v5603 = vunpack.c.l.b16 %v5326
        %v5604 = vunpack.c.h.b16 %v5326
        %v5605 = vunpack.c.l.b16 %v5327
        %v5606 = vunpack.c.h.b16 %v5327
        %v5607 = vunpack.c.l.b16 %v5328
        %v5608 = vunpack.c.h.b16 %v5328
        %v5609 = vunpack.c.l.b16 %v5329
        %v5610 = vunpack.c.h.b16 %v5329
        %v5611 = vunpack.c.l.b16 %v5330
        %v5612 = vunpack.c.h.b16 %v5330
        %v5613 = vunpack.c.l.b16 %v5331
        %v5614 = vunpack.c.h.b16 %v5331
        %v5615 = vunpack.c.l.b16 %v5332
        %v5616 = vunpack.c.h.b16 %v5332
        %v5617 = vunpack.c.l.b16 %v5333
        %v5618 = vunpack.c.h.b16 %v5333
        %v5619 = vunpack.c.l.b16 %v5334
        %v5620 = vunpack.c.h.b16 %v5334
        %v5621 = vunpack.c.l.b16 %v5335
        %v5622 = vunpack.c.h.b16 %v5335
        %v5623 = vunpack.c.l.b16 %v5336
        %v5624 = vunpack.c.h.b16 %v5336
        %v5625 = vunpack.c.l.b16 %v5337
        %v5626 = vunpack.c.h.b16 %v5337
        %v5627 = vunpack.c.l.b16 %v5338
        %v5628 = vunpack.c.h.b16 %v5338
        %v5629 = vunpack.c.l.b16 %v5339
        %v5630 = vunpack.c.h.b16 %v5339
        %v5631 = vunpack.c.l.b16 %v5340
        %v5632 = vunpack.c.h.b16 %v5340
        %v5633 = vunpack.c.l.b16 %v5341
        %v5634 = vunpack.c.h.b16 %v5341
        %v5635 = vunpack.c.l.b16 %v5342
        %v5636 = vunpack.c.h.b16 %v5342
        %v5637 = vunpack.c.l.b16 %v5343
        %v5638 = vunpack.c.h.b16 %v5343
        %v5639 = vunpack.c.l.b16 %v5344
        %v5640 = vunpack.c.h.b16 %v5344
        %v5641 = vunpack.c.l.b16 %v5345
        %v5642 = vunpack.c.h.b16 %v5345
        %v5643 = vunpack.c.l.b16 %v5346
        %v5644 = vunpack.c.h.b16 %v5346
        %v5645 = vunpack.c.l.b16 %v5347
        %v5646 = vunpack.c.h.b16 %v5347
        %v5647 = vunpack.c.l.b16 %v5348
        %v5648 = vunpack.c.h.b16 %v5348
        %v5649 = vunpack.c.l.b16 %v5349
        %v5650 = vunpack.c.h.b16 %v5349
        %v5651 = vunpack.c.l.b16 %v5350
        %v5652 = vunpack.c.h.b16 %v5350
        %v5653 = vunpack.c.l.b16 %v5351
        %v5654 = vunpack.c.h.b16 %v5351
        %v5655 = vunpack.c.l.b16 %v5352
        %v5656 = vunpack.c.h.b16 %v5352
        %v5657 = vunpack.c.l.b16 %v5353
        %v5658 = vunpack.c.h.b16 %v5353
        %v5659 = vunpack.c.l.b16 %v5354
        %v5660 = vunpack.c.h.b16 %v5354
        %v5661 = vunpack.c.l.b16 %v5355
        %v5662 = vunpack.c.h.b16 %v5355
        %v5663 = vunpack.c.l.b16 %v5356
        %v5664 = vunpack.c.h.b16 %v5356
        %v5665 = vunpack.c.l.b16 %v5357
        %v5666 = vunpack.c.h.b16 %v5357
        %v5667 = vunpack.c.l.b16 %v5358
        %v5668 = vunpack.c.h.b16 %v5358
        %v5669 = vunpack.c.l.b16 %v5359
        %v5670 = vunpack.c.h.b16 %v5359
        %v5671 = vunpack.c.l.b16 %v5360
        %v5672 = vunpack.c.h.b16 %v5360
        %v5673 = vunpack.c.l.b16 %v5361
        %v5674 = vunpack.c.h.b16 %v5361
        %v5675 = vunpack.c.l.b16 %v5362
        %v5676 = vunpack.c.h.b16 %v5362
        %v5677 = vunpack.c.l.b16 %v5363
        %v5678 = vunpack.c.h.b16 %v5363
        %v5679 = vunpack.c.l.b16 %v5364
        %v5680 = vunpack.c.h.b16 %v5364
        %v5681 = vunpack.c.l.b16 %v5365
        %v5682 = vunpack.c.h.b16 %v5365
        %v5683 = vunpack.c.l.b16 %v5366
        %v5684 = vunpack.c.h.b16 %v5366
        %v5685 = vunpack.c.l.b16 %v5367
        %v5686 = vunpack.c.h.b16 %v5367
        %v5687 = vunpack.c.l.b16 %v5368
        %v5688 = vunpack.c.h.b16 %v5368
        %v5689 = vunpack.c.l.b16 %v5369
        %v5690 = vunpack.c.h.b16 %v5369
        %v5691 = vunpack.c.l.b16 %v5370
        %v5692 = vunpack.c.h.b16 %v5370
        %v5693 = vpack.c.b16 %v5497, %v5493
        %v5694 = vpack.c.b16 %v5498, %v5494
        %v5695 = vpack.c.b16 %v5499, %v5495
        %v5696 = vpack.c.b16 %v5500, %v5496
        %v5697 = vpack.c.b16 %v5505, %v5501
        %v5698 = vpack.c.b16 %v5506, %v5502
        %v5699 = vpack.c.b16 %v5507, %v5503
        %v5700 = vpack.c.b16 %v5508, %v5504
        %v5701 = vpack.c.b16 %v5513, %v5509
        %v5702 = vpack.c.b16 %v5514, %v5510
        %v5703 = vpack.c.b16 %v5515, %v5511
        %v5704 = vpack.c.b16 %v5516, %v5512
        %v5705 = vpack.c.b16 %v5521, %v5517
        %v5706 = vpack.c.b16 %v5522, %v5518
        %v5707 = vpack.c.b16 %v5523, %v5519
        %v5708 = vpack.c.b16 %v5524, %v5520
        %v5709 = vpack.c.b16 %v5529, %v5525
        %v5710 = vpack.c.b16 %v5530, %v5526
        %v5711 = vpack.c.b16 %v5531, %v5527
        %v5712 = vpack.c.b16 %v5532, %v5528
        %v5713 = vpack.c.b16 %v5537, %v5533
        %v5714 = vpack.c.b16 %v5538, %v5534
        %v5715 = vpack.c.b16 %v5539, %v5535
        %v5716 = vpack.c.b16 %v5540, %v5536
        %v5717 = vpack.c.b16 %v5545, %v5541
        %v5718 = vpack.c.b16 %v5546, %v5542
        %v5719 = vpack.c.b16 %v5547, %v5543
        %v5720 = vpack.c.b16 %v5548, %v5544
        %v5721 = vpack.c.b16 %v5553, %v5549
        %v5722 = vpack.c.b16 %v5554, %v5550
        %v5723 = vpack.c.b16 %v5555, %v5551
        %v5724 = vpack.c.b16 %v5556, %v5552
        %v5725 = vpack.c.b16 %v5561, %v5557
        %v5726 = vpack.c.b16 %v5562, %v5558
        %v5727 = vpack.c.b16 %v5563, %v5559
        %v5728 = vpack.c.b16 %v5564, %v5560
        %v5729 = vpack.c.b16 %v5569, %v5565
        %v5730 = vpack.c.b16 %v5570, %v5566
        %v5731 = vpack.c.b16 %v5571, %v5567
        %v5732 = vpack.c.b16 %v5572, %v5568
        %v5733 = vpack.c.b16 %v5577, %v5573
        %v5734 = vpack.c.b16 %v5578, %v5574
        %v5735 = vpack.c.b16 %v5579, %v5575
        %v5736 = vpack.c.b16 %v5580, %v5576
        %v5737 = vpack.c.b16 %v5585, %v5581
        %v5738 = vpack.c.b16 %v5586, %v5582
        %v5739 = vpack.c.b16 %v5587, %v5583
        %v5740 = vpack.c.b16 %v5588, %v5584
        %v5741 = vpack.c.b16 %v5593, %v5589
        %v5742 = vpack.c.b16 %v5594, %v5590
        %v5743 = vpack.c.b16 %v5595, %v5591
        %v5744 = vpack.c.b16 %v5596, %v5592
        %v5745 = vpack.c.b16 %v5601, %v5597
        %v5746 = vpack.c.b16 %v5602, %v5598
        %v5747 = vpack.c.b16 %v5603, %v5599
        %v5748 = vpack.c.b16 %v5604, %v5600
        %v5749 = vpack.c.b16 %v5609, %v5605
        %v5750 = vpack.c.b16 %v5610, %v5606
        %v5751 = vpack.c.b16 %v5611, %v5607
        %v5752 = vpack.c.b16 %v5612, %v5608
        %v5753 = vpack.c.b16 %v5617, %v5613
        %v5754 = vpack.c.b16 %v5618, %v5614
        %v5755 = vpack.c.b16 %v5619, %v5615
        %v5756 = vpack.c.b16 %v5620, %v5616
        %v5757 = vpack.c.b16 %v5625, %v5621
        %v5758 = vpack.c.b16 %v5626, %v5622
        %v5759 = vpack.c.b16 %v5627, %v5623
        %v5760 = vpack.c.b16 %v5628, %v5624
        %v5761 = vpack.c.b16 %v5633, %v5629
        %v5762 = vpack.c.b16 %v5634, %v5630
        %v5763 = vpack.c.b16 %v5635, %v5631
        %v5764 = vpack.c.b16 %v5636, %v5632
        %v5765 = vpack.c.b16 %v5641, %v5637
        %v5766 = vpack.c.b16 %v5642, %v5638
        %v5767 = vpack.c.b16 %v5643, %v5639
        %v5768 = vpack.c.b16 %v5644, %v5640
        %v5769 = vpack.c.b16 %v5649, %v5645
        %v5770 = vpack.c.b16 %v5650, %v5646
        %v5771 = vpack.c.b16 %v5651, %v5647
        %v5772 = vpack.c.b16 %v5652, %v5648
        %v5773 = vpack.c.b16 %v5657, %v5653
        %v5774 = vpack.c.b16 %v5658, %v5654
        %v5775 = vpack.c.b16 %v5659, %v5655
        %v5776 = vpack.c.b16 %v5660, %v5656
        %v5777 = vpack.c.b16 %v5665, %v5661
        %v5778 = vpack.c.b16 %v5666, %v5662
        %v5779 = vpack.c.b16 %v5667, %v5663
        %v5780 = vpack.c.b16 %v5668, %v5664
        %v5781 = vpack.c.b16 %v5673, %v5669
        %v5782 = vpack.c.b16 %v5674, %v5670
        %v5783 = vpack.c.b16 %v5675, %v5671
        %v5784 = vpack.c.b16 %v5676, %v5672
        %v5785 = vpack.c.b16 %v5681, %v5677
        %v5786 = vpack.c.b16 %v5682, %v5678
        %v5787 = vpack.c.b16 %v5683, %v5679
        %v5788 = vpack.c.b16 %v5684, %v5680
        %v5789 = vpack.c.b16 %v5689, %v5685
        %v5790 = vpack.c.b16 %v5690, %v5686
        %v5791 = vpack.c.b16 %v5691, %v5687
        %v5792 = vpack.c.b16 %v5692, %v5688
        %v5894 = vsel %vm1549, %v5270, 0
        %5896 = vmatprep.subr.bf16.mxu0 %v5694
        %5897 = vmatpush1.bf16.msra.mxu0 %v5693
        %5898 = vmatprep.subr.bf16.mxu0 %v5698
        %5899 = vmatpush1.bf16.msra.mxu0 %v5697
        %5900 = vmatprep.subr.bf16.mxu0 %v5702
        %5901 = vmatpush1.bf16.msra.mxu0 %v5701
        %5902 = vmatprep.subr.bf16.mxu0 %v5706
        %5903 = vmatpush1.bf16.msra.mxu0 %v5705
        %5904 = vmatprep.subr.bf16.mxu0 %v5710
        %5905 = vmatpush1.bf16.msra.mxu0 %v5709
        %5906 = vmatprep.subr.bf16.mxu0 %v5714
        %5907 = vmatpush1.bf16.msra.mxu0 %v5713
        %5908 = vmatprep.subr.bf16.mxu0 %v5718
        %5909 = vmatpush1.bf16.msra.mxu0 %v5717
        %5910 = vmatprep.subr.bf16.mxu0 %v5722
        %5911 = vmatpush1.bf16.msra.mxu0 %v5721
        %5912 = vmatprep.subr.bf16.mxu0 %v5726
        %5913 = vmatpush1.bf16.msra.mxu0 %v5725
        %5914 = vmatprep.subr.bf16.mxu0 %v5730
        %5915 = vmatpush1.bf16.msra.mxu0 %v5729
        %5916 = vmatprep.subr.bf16.mxu0 %v5734
        %5917 = vmatpush1.bf16.msra.mxu0 %v5733
        %5918 = vmatprep.subr.bf16.mxu0 %v5738
        %5919 = vmatpush1.bf16.msra.mxu0 %v5737
        %5920 = vmatprep.subr.bf16.mxu0 %v5742
        %5921 = vmatpush1.bf16.msra.mxu0 %v5741
        %5922 = vmatprep.subr.bf16.mxu0 %v5746
        %5923 = vmatpush1.bf16.msra.mxu0 %v5745
        %5924 = vmatprep.subr.bf16.mxu0 %v5750
        %5925 = vmatpush1.bf16.msra.mxu0 %v5749
        %5926 = vmatprep.subr.bf16.mxu0 %v5754
        %5927 = vmatpush1.bf16.msra.mxu0 %v5753
        %5928 = vmatprep.mubr.bf16.mxu0 %v5268
        %5929 = vmatmul.mubr.bf16.gmra.mrb[0].mxu0 %v5267
        %v5930 = vpop.f32.mrb[0].mxu0
        %v5931 = vadd.f32 %v5376, %v5930
        %v5932 = vpop.f32.mrb[0].mxu0
        %v5933 = vadd.f32 %v5380, %v5932
        %v5934 = vpop.f32.mrb[0].mxu0
        %v5935 = vpop.f32.mrb[0].mxu0
        %5936 = vdwg.mxu0
        %5937 = vmatprep.subr.bf16.mxu0 %v5758
        %5938 = vmatpush1.bf16.msra.mxu0 %v5757
        %5939 = vmatprep.subr.bf16.mxu0 %v5762
        %5940 = vmatpush1.bf16.msra.mxu0 %v5761
        %5941 = vmatprep.subr.bf16.mxu0 %v5766
        %5942 = vmatpush1.bf16.msra.mxu0 %v5765
        %5943 = vmatprep.subr.bf16.mxu0 %v5770
        %5944 = vmatpush1.bf16.msra.mxu0 %v5769
        %5945 = vmatprep.subr.bf16.mxu0 %v5774
        %5946 = vmatpush1.bf16.msra.mxu0 %v5773
        %5947 = vmatprep.subr.bf16.mxu0 %v5778
        %5948 = vmatpush1.bf16.msra.mxu0 %v5777
        %5949 = vmatprep.subr.bf16.mxu0 %v5782
        %5950 = vmatpush1.bf16.msra.mxu0 %v5781
        %5951 = vmatprep.subr.bf16.mxu0 %v5786
        %5952 = vmatpush1.bf16.msra.mxu0 %v5785
        %5953 = vmatprep.subr.bf16.mxu0 %v5790
        %5954 = vmatpush1.bf16.msra.mxu0 %v5789
        %5955 = vmatprep.subr.bf16.mxu0 0
        %5956 = vmatpush1.bf16.msra.mxu0 0
        %5957 = vmatprep.subr.bf16.mxu0 0
        %5958 = vmatpush1.bf16.msra.mxu0 0
        %5959 = vmatprep.subr.bf16.mxu0 0
        %5960 = vmatpush1.bf16.msra.mxu0 0
        %5961 = vmatprep.subr.bf16.mxu0 0
        %5962 = vmatpush1.bf16.msra.mxu0 0
        %5963 = vmatprep.subr.bf16.mxu0 0
        %5964 = vmatpush1.bf16.msra.mxu0 0
        %5965 = vmatprep.subr.bf16.mxu0 0
        %5966 = vmatpush1.bf16.msra.mxu0 0
        %5967 = vmatprep.subr.bf16.mxu0 0
        %5968 = vmatpush1.bf16.msra.mxu0 0
        %5969 = vmatprep.mubr.bf16.mxu0 %v5894
        %5970 = vmatmul.mubr.bf16.gmra.mrb[0].mxu0 %v5269
        %v5971 = vpop.f32.mrb[0].mxu0
        %v5972 = vadd.f32 %v5931, %v5971
        %v5973 = vpop.f32.mrb[0].mxu0
        %v5974 = vadd.f32 %v5933, %v5973
        %v5975 = vpop.f32.mrb[0].mxu0
        %v5976 = vpop.f32.mrb[0].mxu0
        %5977 = vdwg.mxu0
        %5978 = vmatprep.subr.bf16.mxu0 %v5696
        %5979 = vmatpush1.bf16.msra.mxu0 %v5695
        %5980 = vmatprep.subr.bf16.mxu0 %v5700
        %5981 = vmatpush1.bf16.msra.mxu0 %v5699
        %5982 = vmatprep.subr.bf16.mxu0 %v5704
        %5983 = vmatpush1.bf16.msra.mxu0 %v5703
        %5984 = vmatprep.subr.bf16.mxu0 %v5708
        %5985 = vmatpush1.bf16.msra.mxu0 %v5707
        %5986 = vmatprep.subr.bf16.mxu0 %v5712
        %5987 = vmatpush1.bf16.msra.mxu0 %v5711
        %5988 = vmatprep.subr.bf16.mxu0 %v5716
        %5989 = vmatpush1.bf16.msra.mxu0 %v5715
        %5990 = vmatprep.subr.bf16.mxu0 %v5720
        %5991 = vmatpush1.bf16.msra.mxu0 %v5719
        %5992 = vmatprep.subr.bf16.mxu0 %v5724
        %5993 = vmatpush1.bf16.msra.mxu0 %v5723
        %5994 = vmatprep.subr.bf16.mxu0 %v5728
        %5995 = vmatpush1.bf16.msra.mxu0 %v5727
        %5996 = vmatprep.subr.bf16.mxu0 %v5732
        %5997 = vmatpush1.bf16.msra.mxu0 %v5731
        %5998 = vmatprep.subr.bf16.mxu0 %v5736
        %5999 = vmatpush1.bf16.msra.mxu0 %v5735
        %6000 = vmatprep.subr.bf16.mxu0 %v5740
        %6001 = vmatpush1.bf16.msra.mxu0 %v5739
        %6002 = vmatprep.subr.bf16.mxu0 %v5744
        %6003 = vmatpush1.bf16.msra.mxu0 %v5743
        %6004 = vmatprep.subr.bf16.mxu0 %v5748
        %6005 = vmatpush1.bf16.msra.mxu0 %v5747
        %6006 = vmatprep.subr.bf16.mxu0 %v5752
        %6007 = vmatpush1.bf16.msra.mxu0 %v5751
        %6008 = vmatprep.subr.bf16.mxu0 %v5756
        %6009 = vmatpush1.bf16.msra.mxu0 %v5755
        %6010 = vmatprep.mubr.bf16.mxu0 %v5268
        %6011 = vmatmul.mubr.bf16.gmra.mrb[0].mxu0 %v5267
        %v6012 = vpop.f32.mrb[0].mxu0
        %v6013 = vadd.f32 %v5384, %v6012
        %v6014 = vpop.f32.mrb[0].mxu0
        %v6015 = vadd.f32 %v5388, %v6014
        %v6016 = vpop.f32.mrb[0].mxu0
        %v6017 = vpop.f32.mrb[0].mxu0
        %6018 = vdwg.mxu0
        %6019 = vmatprep.subr.bf16.mxu0 %v5760
        %6020 = vmatpush1.bf16.msra.mxu0 %v5759
        %6021 = vmatprep.subr.bf16.mxu0 %v5764
        %6022 = vmatpush1.bf16.msra.mxu0 %v5763
        %6023 = vmatprep.subr.bf16.mxu0 %v5768
        %6024 = vmatpush1.bf16.msra.mxu0 %v5767
        %6025 = vmatprep.subr.bf16.mxu0 %v5772
        %6026 = vmatpush1.bf16.msra.mxu0 %v5771
        %6027 = vmatprep.subr.bf16.mxu0 %v5776
        %6028 = vmatpush1.bf16.msra.mxu0 %v5775
        %6029 = vmatprep.subr.bf16.mxu0 %v5780
        %6030 = vmatpush1.bf16.msra.mxu0 %v5779
        %6031 = vmatprep.subr.bf16.mxu0 %v5784
        %6032 = vmatpush1.bf16.msra.mxu0 %v5783
        %6033 = vmatprep.subr.bf16.mxu0 %v5788
        %6034 = vmatpush1.bf16.msra.mxu0 %v5787
        %6035 = vmatprep.subr.bf16.mxu0 %v5792
        %6036 = vmatpush1.bf16.msra.mxu0 %v5791
        %6037 = vmatprep.subr.bf16.mxu0 0
        %6038 = vmatpush1.bf16.msra.mxu0 0
        %6039 = vmatprep.subr.bf16.mxu0 0
        %6040 = vmatpush1.bf16.msra.mxu0 0
        %6041 = vmatprep.subr.bf16.mxu0 0
        %6042 = vmatpush1.bf16.msra.mxu0 0
        %6043 = vmatprep.subr.bf16.mxu0 0
        %6044 = vmatpush1.bf16.msra.mxu0 0
        %6045 = vmatprep.subr.bf16.mxu0 0
        %6046 = vmatpush1.bf16.msra.mxu0 0
        %6047 = vmatprep.subr.bf16.mxu0 0
        %6048 = vmatpush1.bf16.msra.mxu0 0
        %6049 = vmatprep.subr.bf16.mxu0 0
        %6050 = vmatpush1.bf16.msra.mxu0 0
        %6051 = vmatprep.mubr.bf16.mxu0 %v5894
        %6052 = vmatmul.mubr.bf16.gmra.mrb[0].mxu0 %v5269
        %v6053 = vpop.f32.mrb[0].mxu0
        %v6054 = vadd.f32 %v6013, %v6053
        %v6055 = vpop.f32.mrb[0].mxu0
        %v6056 = vadd.f32 %v6015, %v6055
        %v6057 = vpop.f32.mrb[0].mxu0
        %v6058 = vpop.f32.mrb[0].mxu0
        %6059 = vdwg.mxu0
        %v6060 = vmax.f32 %v5972, 0.0
        %v6061 = vmax.f32 %v5974, 0.0
        %v6062 = vmax.f32 %v6054, 0.0
        %v6063 = vmax.f32 %v6056, 0.0
        %v6064 = vpack.c.bf16 %v6060, %v6060
        %v6065 = vpack.c.bf16 %v6061, %v6061
        %v6066 = vpack.c.bf16 %v6062, %v6062
        %v6067 = vpack.c.bf16 %v6063, %v6063
        %v6068 = vld [vmem:[#allocation14] sm:$0xff]
        %v6069 = vld [vmem:[#allocation14 + $0x8] sm:$0xff]
        %v6070 = vld [vmem:[#allocation14 + $0x10] sm:$0xff]
        %v6071 = vld [vmem:[#allocation14 + $0x18] sm:$0xff]
        %v6072 = vld [vmem:[#allocation14 + $0x20] sm:$0xff]
        %v6073 = vld [vmem:[#allocation14 + $0x28] sm:$0xff]
        %v6074 = vld [vmem:[#allocation14 + $0x30] sm:$0xff]
        %v6075 = vld [vmem:[#allocation14 + $0x38] sm:$0xff]
        %v6076 = vld [vmem:[#allocation14 + $0x40] sm:$0xff]
        %v6077 = vld [vmem:[#allocation14 + $0x48] sm:$0xff]
        %v6078 = vld [vmem:[#allocation14 + $0x50] sm:$0xff]
        %v6079 = vld [vmem:[#allocation14 + $0x58] sm:$0xff]
        %v6080 = vld [vmem:[#allocation14 + $0x60] sm:$0xff]
        %v6081 = vld [vmem:[#allocation14 + $0x68] sm:$0xff]
        %v6082 = vld [vmem:[#allocation14 + $0x70] sm:$0xff]
        %v6083 = vld [vmem:[#allocation14 + $0x78] sm:$0xff]
        %v6084 = vld [vmem:[#allocation14 + $0x80] sm:$0xff]
        %v6085 = vld [vmem:[#allocation14 + $0x88] sm:$0xff]
        %v6086 = vld [vmem:[#allocation14 + $0x90] sm:$0xff]
        %v6087 = vld [vmem:[#allocation14 + $0x98] sm:$0xff]
        %v6088 = vld [vmem:[#allocation14 + $0xa0] sm:$0xff]
        %v6089 = vld [vmem:[#allocation14 + $0xa8] sm:$0xff]
        %v6090 = vld [vmem:[#allocation14 + $0xb0] sm:$0xff]
        %v6091 = vld [vmem:[#allocation14 + $0xb8] sm:$0xff]
        %v6092 = vld [vmem:[#allocation14 + $0xc0] sm:$0xff]
        %v6093 = vld [vmem:[#allocation14 + $0xc8] sm:$0xff]
        %v6094 = vld [vmem:[#allocation14 + $0xd0] sm:$0xff]
        %v6095 = vld [vmem:[#allocation14 + $0xd8] sm:$0xff]
        %v6096 = vld [vmem:[#allocation14 + $0xe0] sm:$0xff]
        %v6097 = vld [vmem:[#allocation14 + $0xe8] sm:$0xff]
        %v6098 = vld [vmem:[#allocation14 + $0xf0] sm:$0xff]
        %v6099 = vld [vmem:[#allocation14 + $0xf8] sm:$0xff]
        %v6100 = vld [vmem:[#allocation14 + $0x100] sm:$0xff]
        %v6101 = vld [vmem:[#allocation14 + $0x108] sm:$0xff]
        %v6102 = vld [vmem:[#allocation14 + $0x110] sm:$0xff]
        %v6103 = vld [vmem:[#allocation14 + $0x118] sm:$0xff]
        %v6104 = vld [vmem:[#allocation14 + $0x120] sm:$0xff]
        %v6105 = vld [vmem:[#allocation14 + $0x128] sm:$0xff]
        %v6106 = vld [vmem:[#allocation14 + $0x130] sm:$0xff]
        %v6107 = vld [vmem:[#allocation14 + $0x138] sm:$0xff]
        %v6108 = vld [vmem:[#allocation14 + $0x140] sm:$0xff]
        %v6109 = vld [vmem:[#allocation14 + $0x148] sm:$0xff]
        %v6110 = vld [vmem:[#allocation14 + $0x150] sm:$0xff]
        %v6111 = vld [vmem:[#allocation14 + $0x158] sm:$0xff]
        %v6112 = vld [vmem:[#allocation14 + $0x160] sm:$0xff]
        %v6113 = vld [vmem:[#allocation14 + $0x168] sm:$0xff]
        %v6114 = vld [vmem:[#allocation14 + $0x170] sm:$0xff]
        %v6115 = vld [vmem:[#allocation14 + $0x178] sm:$0xff]
        %v6116 = vld [vmem:[#allocation14 + $0x180] sm:$0xff]
        %v6117 = vld [vmem:[#allocation14 + $0x188] sm:$0xff]
        %v6118 = vld [vmem:[#allocation14 + $0x190] sm:$0xff]
        %v6119 = vld [vmem:[#allocation14 + $0x198] sm:$0xff]
        %v6120 = vld [vmem:[#allocation14 + $0x1a0] sm:$0xff]
        %v6121 = vld [vmem:[#allocation14 + $0x1a8] sm:$0xff]
        %v6122 = vld [vmem:[#allocation14 + $0x1b0] sm:$0xff]
        %v6123 = vld [vmem:[#allocation14 + $0x1b8] sm:$0xff]
        %v6124 = vld [vmem:[#allocation14 + $0x1c0] sm:$0xff]
        %v6125 = vld [vmem:[#allocation14 + $0x1c8] sm:$0xff]
        %v6126 = vld [vmem:[#allocation14 + $0x1d0] sm:$0xff]
        %v6127 = vld [vmem:[#allocation14 + $0x1d8] sm:$0xff]
        %v6128 = vld [vmem:[#allocation14 + $0x1e0] sm:$0xff]
        %v6129 = vld [vmem:[#allocation14 + $0x1e8] sm:$0xff]
        %v6130 = vld [vmem:[#allocation14 + $0x1f0] sm:$0xff]
        %v6131 = vld [vmem:[#allocation14 + $0x1f8] sm:$0xff]
        %v6132 = vld [vmem:[#allocation14 + $0x200] sm:$0xff]
        %v6133 = vld [vmem:[#allocation14 + $0x208] sm:$0xff]
        %v6134 = vld [vmem:[#allocation14 + $0x210] sm:$0xff]
        %v6135 = vld [vmem:[#allocation14 + $0x218] sm:$0xff]
        %v6136 = vld [vmem:[#allocation14 + $0x220] sm:$0xff]
        %v6137 = vld [vmem:[#allocation14 + $0x228] sm:$0xff]
        %v6138 = vld [vmem:[#allocation14 + $0x230] sm:$0xff]
        %v6139 = vld [vmem:[#allocation14 + $0x238] sm:$0xff]
        %v6140 = vld [vmem:[#allocation14 + $0x240] sm:$0xff]
        %v6141 = vld [vmem:[#allocation14 + $0x248] sm:$0xff]
        %v6142 = vld [vmem:[#allocation14 + $0x250] sm:$0xff]
        %v6143 = vld [vmem:[#allocation14 + $0x258] sm:$0xff]
        %v6144 = vld [vmem:[#allocation14 + $0x260] sm:$0xff]
        %v6145 = vld [vmem:[#allocation14 + $0x268] sm:$0xff]
        %v6146 = vld [vmem:[#allocation14 + $0x270] sm:$0xff]
        %v6147 = vld [vmem:[#allocation14 + $0x278] sm:$0xff]
        %v6148 = vld [vmem:[#allocation14 + $0x280] sm:$0xff]
        %v6149 = vld [vmem:[#allocation14 + $0x288] sm:$0xff]
        %v6150 = vld [vmem:[#allocation14 + $0x290] sm:$0xff]
        %v6151 = vld [vmem:[#allocation14 + $0x298] sm:$0xff]
        %v6152 = vld [vmem:[#allocation14 + $0x2a0] sm:$0xff]
        %v6153 = vld [vmem:[#allocation14 + $0x2a8] sm:$0xff]
        %v6154 = vld [vmem:[#allocation14 + $0x2b0] sm:$0xff]
        %v6155 = vld [vmem:[#allocation14 + $0x2b8] sm:$0xff]
        %v6156 = vld [vmem:[#allocation14 + $0x2c0] sm:$0xff]
        %v6157 = vld [vmem:[#allocation14 + $0x2c8] sm:$0xff]
        %v6158 = vld [vmem:[#allocation14 + $0x2d0] sm:$0xff]
        %v6159 = vld [vmem:[#allocation14 + $0x2d8] sm:$0xff]
        %v6160 = vld [vmem:[#allocation14 + $0x2e0] sm:$0xff]
        %v6161 = vld [vmem:[#allocation14 + $0x2e8] sm:$0xff]
        %v6162 = vld [vmem:[#allocation14 + $0x2f0] sm:$0xff]
        %v6163 = vld [vmem:[#allocation14 + $0x2f8] sm:$0xff]
        %v6164 = vld [vmem:[#allocation14 + $0x300] sm:$0xff]
        %v6165 = vld [vmem:[#allocation14 + $0x308] sm:$0xff]
        %v6166 = vld [vmem:[#allocation14 + $0x310] sm:$0xff]
        %v6167 = vld [vmem:[#allocation14 + $0x318] sm:$0xff]
        %v6168 = vld [vmem:[%s16] sm:$0xf]
        %v6170 = vlaneseq
        %v6171 = vshrl.u32 %v6170, 7
        %v6172 = vsub.s32 0, %v6171
        %v6173 = vrot.slane %v6168, %v6172
        %v6174 = vlaneseq
        %v6175 = vshrl.u32 %v6174, 7
        %v6176 = vsub.s32 1, %v6175
        %v6177 = vrot.slane %v6168, %v6176
        %v6178 = vlaneseq
        %v6179 = vshrl.u32 %v6178, 7
        %v6180 = vsub.s32 2, %v6179
        %v6181 = vrot.slane %v6168, %v6180
        %v6182 = vlaneseq
        %v6183 = vshrl.u32 %v6182, 7
        %v6184 = vsub.s32 3, %v6183
        %v6185 = vrot.slane %v6168, %v6184
        %v6290 = vunpack.c.l.b16 %v6068
        %v6291 = vunpack.c.h.b16 %v6068
        %v6292 = vunpack.c.l.b16 %v6069
        %v6293 = vunpack.c.h.b16 %v6069
        %v6294 = vunpack.c.l.b16 %v6070
        %v6295 = vunpack.c.h.b16 %v6070
        %v6296 = vunpack.c.l.b16 %v6071
        %v6297 = vunpack.c.h.b16 %v6071
        %v6298 = vunpack.c.l.b16 %v6072
        %v6299 = vunpack.c.h.b16 %v6072
        %v6300 = vunpack.c.l.b16 %v6073
        %v6301 = vunpack.c.h.b16 %v6073
        %v6302 = vunpack.c.l.b16 %v6074
        %v6303 = vunpack.c.h.b16 %v6074
        %v6304 = vunpack.c.l.b16 %v6075
        %v6305 = vunpack.c.h.b16 %v6075
        %v6306 = vunpack.c.l.b16 %v6076
        %v6307 = vunpack.c.h.b16 %v6076
        %v6308 = vunpack.c.l.b16 %v6077
        %v6309 = vunpack.c.h.b16 %v6077
        %v6310 = vunpack.c.l.b16 %v6078
        %v6311 = vunpack.c.h.b16 %v6078
        %v6312 = vunpack.c.l.b16 %v6079
        %v6313 = vunpack.c.h.b16 %v6079
        %v6314 = vunpack.c.l.b16 %v6080
        %v6315 = vunpack.c.h.b16 %v6080
        %v6316 = vunpack.c.l.b16 %v6081
        %v6317 = vunpack.c.h.b16 %v6081
        %v6318 = vunpack.c.l.b16 %v6082
        %v6319 = vunpack.c.h.b16 %v6082
        %v6320 = vunpack.c.l.b16 %v6083
        %v6321 = vunpack.c.h.b16 %v6083
        %v6322 = vunpack.c.l.b16 %v6084
        %v6323 = vunpack.c.h.b16 %v6084
        %v6324 = vunpack.c.l.b16 %v6085
        %v6325 = vunpack.c.h.b16 %v6085
        %v6326 = vunpack.c.l.b16 %v6086
        %v6327 = vunpack.c.h.b16 %v6086
        %v6328 = vunpack.c.l.b16 %v6087
        %v6329 = vunpack.c.h.b16 %v6087
        %v6330 = vunpack.c.l.b16 %v6088
        %v6331 = vunpack.c.h.b16 %v6088
        %v6332 = vunpack.c.l.b16 %v6089
        %v6333 = vunpack.c.h.b16 %v6089
        %v6334 = vunpack.c.l.b16 %v6090
        %v6335 = vunpack.c.h.b16 %v6090
        %v6336 = vunpack.c.l.b16 %v6091
        %v6337 = vunpack.c.h.b16 %v6091
        %v6338 = vunpack.c.l.b16 %v6092
        %v6339 = vunpack.c.h.b16 %v6092
        %v6340 = vunpack.c.l.b16 %v6093
        %v6341 = vunpack.c.h.b16 %v6093
        %v6342 = vunpack.c.l.b16 %v6094
        %v6343 = vunpack.c.h.b16 %v6094
        %v6344 = vunpack.c.l.b16 %v6095
        %v6345 = vunpack.c.h.b16 %v6095
        %v6346 = vunpack.c.l.b16 %v6096
        %v6347 = vunpack.c.h.b16 %v6096
        %v6348 = vunpack.c.l.b16 %v6097
        %v6349 = vunpack.c.h.b16 %v6097
        %v6350 = vunpack.c.l.b16 %v6098
        %v6351 = vunpack.c.h.b16 %v6098
        %v6352 = vunpack.c.l.b16 %v6099
        %v6353 = vunpack.c.h.b16 %v6099
        %v6354 = vunpack.c.l.b16 %v6100
        %v6355 = vunpack.c.h.b16 %v6100
        %v6356 = vunpack.c.l.b16 %v6101
        %v6357 = vunpack.c.h.b16 %v6101
        %v6358 = vunpack.c.l.b16 %v6102
        %v6359 = vunpack.c.h.b16 %v6102
        %v6360 = vunpack.c.l.b16 %v6103
        %v6361 = vunpack.c.h.b16 %v6103
        %v6362 = vunpack.c.l.b16 %v6104
        %v6363 = vunpack.c.h.b16 %v6104
        %v6364 = vunpack.c.l.b16 %v6105
        %v6365 = vunpack.c.h.b16 %v6105
        %v6366 = vunpack.c.l.b16 %v6106
        %v6367 = vunpack.c.h.b16 %v6106
        %v6368 = vunpack.c.l.b16 %v6107
        %v6369 = vunpack.c.h.b16 %v6107
        %v6370 = vunpack.c.l.b16 %v6108
        %v6371 = vunpack.c.h.b16 %v6108
        %v6372 = vunpack.c.l.b16 %v6109
        %v6373 = vunpack.c.h.b16 %v6109
        %v6374 = vunpack.c.l.b16 %v6110
        %v6375 = vunpack.c.h.b16 %v6110
        %v6376 = vunpack.c.l.b16 %v6111
        %v6377 = vunpack.c.h.b16 %v6111
        %v6378 = vunpack.c.l.b16 %v6112
        %v6379 = vunpack.c.h.b16 %v6112
        %v6380 = vunpack.c.l.b16 %v6113
        %v6381 = vunpack.c.h.b16 %v6113
        %v6382 = vunpack.c.l.b16 %v6114
        %v6383 = vunpack.c.h.b16 %v6114
        %v6384 = vunpack.c.l.b16 %v6115
        %v6385 = vunpack.c.h.b16 %v6115
        %v6386 = vunpack.c.l.b16 %v6116
        %v6387 = vunpack.c.h.b16 %v6116
        %v6388 = vunpack.c.l.b16 %v6117
        %v6389 = vunpack.c.h.b16 %v6117
        %v6390 = vunpack.c.l.b16 %v6118
        %v6391 = vunpack.c.h.b16 %v6118
        %v6392 = vunpack.c.l.b16 %v6119
        %v6393 = vunpack.c.h.b16 %v6119
        %v6394 = vunpack.c.l.b16 %v6120
        %v6395 = vunpack.c.h.b16 %v6120
        %v6396 = vunpack.c.l.b16 %v6121
        %v6397 = vunpack.c.h.b16 %v6121
        %v6398 = vunpack.c.l.b16 %v6122
        %v6399 = vunpack.c.h.b16 %v6122
        %v6400 = vunpack.c.l.b16 %v6123
        %v6401 = vunpack.c.h.b16 %v6123
        %v6402 = vunpack.c.l.b16 %v6124
        %v6403 = vunpack.c.h.b16 %v6124
        %v6404 = vunpack.c.l.b16 %v6125
        %v6405 = vunpack.c.h.b16 %v6125
        %v6406 = vunpack.c.l.b16 %v6126
        %v6407 = vunpack.c.h.b16 %v6126
        %v6408 = vunpack.c.l.b16 %v6127
        %v6409 = vunpack.c.h.b16 %v6127
        %v6410 = vunpack.c.l.b16 %v6128
        %v6411 = vunpack.c.h.b16 %v6128
        %v6412 = vunpack.c.l.b16 %v6129
        %v6413 = vunpack.c.h.b16 %v6129
        %v6414 = vunpack.c.l.b16 %v6130
        %v6415 = vunpack.c.h.b16 %v6130
        %v6416 = vunpack.c.l.b16 %v6131
        %v6417 = vunpack.c.h.b16 %v6131
        %v6418 = vunpack.c.l.b16 %v6132
        %v6419 = vunpack.c.h.b16 %v6132
        %v6420 = vunpack.c.l.b16 %v6133
        %v6421 = vunpack.c.h.b16 %v6133
        %v6422 = vunpack.c.l.b16 %v6134
        %v6423 = vunpack.c.h.b16 %v6134
        %v6424 = vunpack.c.l.b16 %v6135
        %v6425 = vunpack.c.h.b16 %v6135
        %v6426 = vunpack.c.l.b16 %v6136
        %v6427 = vunpack.c.h.b16 %v6136
        %v6428 = vunpack.c.l.b16 %v6137
        %v6429 = vunpack.c.h.b16 %v6137
        %v6430 = vunpack.c.l.b16 %v6138
        %v6431 = vunpack.c.h.b16 %v6138
        %v6432 = vunpack.c.l.b16 %v6139
        %v6433 = vunpack.c.h.b16 %v6139
        %v6434 = vunpack.c.l.b16 %v6140
        %v6435 = vunpack.c.h.b16 %v6140
        %v6436 = vunpack.c.l.b16 %v6141
        %v6437 = vunpack.c.h.b16 %v6141
        %v6438 = vunpack.c.l.b16 %v6142
        %v6439 = vunpack.c.h.b16 %v6142
        %v6440 = vunpack.c.l.b16 %v6143
        %v6441 = vunpack.c.h.b16 %v6143
        %v6442 = vunpack.c.l.b16 %v6144
        %v6443 = vunpack.c.h.b16 %v6144
        %v6444 = vunpack.c.l.b16 %v6145
        %v6445 = vunpack.c.h.b16 %v6145
        %v6446 = vunpack.c.l.b16 %v6146
        %v6447 = vunpack.c.h.b16 %v6146
        %v6448 = vunpack.c.l.b16 %v6147
        %v6449 = vunpack.c.h.b16 %v6147
        %v6450 = vunpack.c.l.b16 %v6148
        %v6451 = vunpack.c.h.b16 %v6148
        %v6452 = vunpack.c.l.b16 %v6149
        %v6453 = vunpack.c.h.b16 %v6149
        %v6454 = vunpack.c.l.b16 %v6150
        %v6455 = vunpack.c.h.b16 %v6150
        %v6456 = vunpack.c.l.b16 %v6151
        %v6457 = vunpack.c.h.b16 %v6151
        %v6458 = vunpack.c.l.b16 %v6152
        %v6459 = vunpack.c.h.b16 %v6152
        %v6460 = vunpack.c.l.b16 %v6153
        %v6461 = vunpack.c.h.b16 %v6153
        %v6462 = vunpack.c.l.b16 %v6154
        %v6463 = vunpack.c.h.b16 %v6154
        %v6464 = vunpack.c.l.b16 %v6155
        %v6465 = vunpack.c.h.b16 %v6155
        %v6466 = vunpack.c.l.b16 %v6156
        %v6467 = vunpack.c.h.b16 %v6156
        %v6468 = vunpack.c.l.b16 %v6157
        %v6469 = vunpack.c.h.b16 %v6157
        %v6470 = vunpack.c.l.b16 %v6158
        %v6471 = vunpack.c.h.b16 %v6158
        %v6472 = vunpack.c.l.b16 %v6159
        %v6473 = vunpack.c.h.b16 %v6159
        %v6474 = vunpack.c.l.b16 %v6160
        %v6475 = vunpack.c.h.b16 %v6160
        %v6476 = vunpack.c.l.b16 %v6161
        %v6477 = vunpack.c.h.b16 %v6161
        %v6478 = vunpack.c.l.b16 %v6162
        %v6479 = vunpack.c.h.b16 %v6162
        %v6480 = vunpack.c.l.b16 %v6163
        %v6481 = vunpack.c.h.b16 %v6163
        %v6482 = vunpack.c.l.b16 %v6164
        %v6483 = vunpack.c.h.b16 %v6164
        %v6484 = vunpack.c.l.b16 %v6165
        %v6485 = vunpack.c.h.b16 %v6165
        %v6486 = vunpack.c.l.b16 %v6166
        %v6487 = vunpack.c.h.b16 %v6166
        %v6488 = vunpack.c.l.b16 %v6167
        %v6489 = vunpack.c.h.b16 %v6167
        %v6490 = vpack.c.b16 %v6294, %v6290
        %v6491 = vpack.c.b16 %v6295, %v6291
        %v6492 = vpack.c.b16 %v6296, %v6292
        %v6493 = vpack.c.b16 %v6297, %v6293
        %v6494 = vpack.c.b16 %v6302, %v6298
        %v6495 = vpack.c.b16 %v6303, %v6299
        %v6496 = vpack.c.b16 %v6304, %v6300
        %v6497 = vpack.c.b16 %v6305, %v6301
        %v6498 = vpack.c.b16 %v6310, %v6306
        %v6499 = vpack.c.b16 %v6311, %v6307
        %v6500 = vpack.c.b16 %v6312, %v6308
        %v6501 = vpack.c.b16 %v6313, %v6309
        %v6502 = vpack.c.b16 %v6318, %v6314
        %v6503 = vpack.c.b16 %v6319, %v6315
        %v6504 = vpack.c.b16 %v6320, %v6316
        %v6505 = vpack.c.b16 %v6321, %v6317
        %v6506 = vpack.c.b16 %v6326, %v6322
        %v6507 = vpack.c.b16 %v6327, %v6323
        %v6508 = vpack.c.b16 %v6328, %v6324
        %v6509 = vpack.c.b16 %v6329, %v6325
        %v6510 = vpack.c.b16 %v6334, %v6330
        %v6511 = vpack.c.b16 %v6335, %v6331
        %v6512 = vpack.c.b16 %v6336, %v6332
        %v6513 = vpack.c.b16 %v6337, %v6333
        %v6514 = vpack.c.b16 %v6342, %v6338
        %v6515 = vpack.c.b16 %v6343, %v6339
        %v6516 = vpack.c.b16 %v6344, %v6340
        %v6517 = vpack.c.b16 %v6345, %v6341
        %v6518 = vpack.c.b16 %v6350, %v6346
        %v6519 = vpack.c.b16 %v6351, %v6347
        %v6520 = vpack.c.b16 %v6352, %v6348
        %v6521 = vpack.c.b16 %v6353, %v6349
        %v6522 = vpack.c.b16 %v6358, %v6354
        %v6523 = vpack.c.b16 %v6359, %v6355
        %v6524 = vpack.c.b16 %v6360, %v6356
        %v6525 = vpack.c.b16 %v6361, %v6357
        %v6526 = vpack.c.b16 %v6366, %v6362
        %v6527 = vpack.c.b16 %v6367, %v6363
        %v6528 = vpack.c.b16 %v6368, %v6364
        %v6529 = vpack.c.b16 %v6369, %v6365
        %v6530 = vpack.c.b16 %v6374, %v6370
        %v6531 = vpack.c.b16 %v6375, %v6371
        %v6532 = vpack.c.b16 %v6376, %v6372
        %v6533 = vpack.c.b16 %v6377, %v6373
        %v6534 = vpack.c.b16 %v6382, %v6378
        %v6535 = vpack.c.b16 %v6383, %v6379
        %v6536 = vpack.c.b16 %v6384, %v6380
        %v6537 = vpack.c.b16 %v6385, %v6381
        %v6538 = vpack.c.b16 %v6390, %v6386
        %v6539 = vpack.c.b16 %v6391, %v6387
        %v6540 = vpack.c.b16 %v6392, %v6388
        %v6541 = vpack.c.b16 %v6393, %v6389
        %v6542 = vpack.c.b16 %v6398, %v6394
        %v6543 = vpack.c.b16 %v6399, %v6395
        %v6544 = vpack.c.b16 %v6400, %v6396
        %v6545 = vpack.c.b16 %v6401, %v6397
        %v6546 = vpack.c.b16 %v6406, %v6402
        %v6547 = vpack.c.b16 %v6407, %v6403
        %v6548 = vpack.c.b16 %v6408, %v6404
        %v6549 = vpack.c.b16 %v6409, %v6405
        %v6550 = vpack.c.b16 %v6414, %v6410
        %v6551 = vpack.c.b16 %v6415, %v6411
        %v6552 = vpack.c.b16 %v6416, %v6412
        %v6553 = vpack.c.b16 %v6417, %v6413
        %v6554 = vpack.c.b16 %v6422, %v6418
        %v6555 = vpack.c.b16 %v6423, %v6419
        %v6556 = vpack.c.b16 %v6424, %v6420
        %v6557 = vpack.c.b16 %v6425, %v6421
        %v6558 = vpack.c.b16 %v6430, %v6426
        %v6559 = vpack.c.b16 %v6431, %v6427
        %v6560 = vpack.c.b16 %v6432, %v6428
        %v6561 = vpack.c.b16 %v6433, %v6429
        %v6562 = vpack.c.b16 %v6438, %v6434
        %v6563 = vpack.c.b16 %v6439, %v6435
        %v6564 = vpack.c.b16 %v6440, %v6436
        %v6565 = vpack.c.b16 %v6441, %v6437
        %v6566 = vpack.c.b16 %v6446, %v6442
        %v6567 = vpack.c.b16 %v6447, %v6443
        %v6568 = vpack.c.b16 %v6448, %v6444
        %v6569 = vpack.c.b16 %v6449, %v6445
        %v6570 = vpack.c.b16 %v6454, %v6450
        %v6571 = vpack.c.b16 %v6455, %v6451
        %v6572 = vpack.c.b16 %v6456, %v6452
        %v6573 = vpack.c.b16 %v6457, %v6453
        %v6574 = vpack.c.b16 %v6462, %v6458
        %v6575 = vpack.c.b16 %v6463, %v6459
        %v6576 = vpack.c.b16 %v6464, %v6460
        %v6577 = vpack.c.b16 %v6465, %v6461
        %v6578 = vpack.c.b16 %v6470, %v6466
        %v6579 = vpack.c.b16 %v6471, %v6467
        %v6580 = vpack.c.b16 %v6472, %v6468
        %v6581 = vpack.c.b16 %v6473, %v6469
        %v6582 = vpack.c.b16 %v6478, %v6474
        %v6583 = vpack.c.b16 %v6479, %v6475
        %v6584 = vpack.c.b16 %v6480, %v6476
        %v6585 = vpack.c.b16 %v6481, %v6477
        %v6586 = vpack.c.b16 %v6486, %v6482
        %v6587 = vpack.c.b16 %v6487, %v6483
        %v6588 = vpack.c.b16 %v6488, %v6484
        %v6589 = vpack.c.b16 %v6489, %v6485
        %v6691 = vsel %vm1549, %v6067, 0
        %6693 = vmatprep.subr.bf16.mxu0 %v6491
        %6694 = vmatpush1.bf16.msra.mxu0 %v6490
        %6695 = vmatprep.subr.bf16.mxu0 %v6495
        %6696 = vmatpush1.bf16.msra.mxu0 %v6494
        %6697 = vmatprep.subr.bf16.mxu0 %v6499
        %6698 = vmatpush1.bf16.msra.mxu0 %v6498
        %6699 = vmatprep.subr.bf16.mxu0 %v6503
        %6700 = vmatpush1.bf16.msra.mxu0 %v6502
        %6701 = vmatprep.subr.bf16.mxu0 %v6507
        %6702 = vmatpush1.bf16.msra.mxu0 %v6506
        %6703 = vmatprep.subr.bf16.mxu0 %v6511
        %6704 = vmatpush1.bf16.msra.mxu0 %v6510
        %6705 = vmatprep.subr.bf16.mxu0 %v6515
        %6706 = vmatpush1.bf16.msra.mxu0 %v6514
        %6707 = vmatprep.subr.bf16.mxu0 %v6519
        %6708 = vmatpush1.bf16.msra.mxu0 %v6518
        %6709 = vmatprep.subr.bf16.mxu0 %v6523
        %6710 = vmatpush1.bf16.msra.mxu0 %v6522
        %6711 = vmatprep.subr.bf16.mxu0 %v6527
        %6712 = vmatpush1.bf16.msra.mxu0 %v6526
        %6713 = vmatprep.subr.bf16.mxu0 %v6531
        %6714 = vmatpush1.bf16.msra.mxu0 %v6530
        %6715 = vmatprep.subr.bf16.mxu0 %v6535
        %6716 = vmatpush1.bf16.msra.mxu0 %v6534
        %6717 = vmatprep.subr.bf16.mxu0 %v6539
        %6718 = vmatpush1.bf16.msra.mxu0 %v6538
        %6719 = vmatprep.subr.bf16.mxu0 %v6543
        %6720 = vmatpush1.bf16.msra.mxu0 %v6542
        %6721 = vmatprep.subr.bf16.mxu0 %v6547
        %6722 = vmatpush1.bf16.msra.mxu0 %v6546
        %6723 = vmatprep.subr.bf16.mxu0 %v6551
        %6724 = vmatpush1.bf16.msra.mxu0 %v6550
        %6725 = vmatprep.mubr.bf16.mxu0 %v6065
        %6726 = vmatmul.mubr.bf16.gmra.mrb[0].mxu0 %v6064
        %v6727 = vpop.f32.mrb[0].mxu0
        %v6728 = vadd.f32 %v6173, %v6727
        %v6729 = vpop.f32.mrb[0].mxu0
        %v6730 = vadd.f32 %v6177, %v6729
        %v6731 = vpop.f32.mrb[0].mxu0
        %v6732 = vpop.f32.mrb[0].mxu0
        %6733 = vdwg.mxu0
        %6734 = vmatprep.subr.bf16.mxu0 %v6555
        %6735 = vmatpush1.bf16.msra.mxu0 %v6554
        %6736 = vmatprep.subr.bf16.mxu0 %v6559
        %6737 = vmatpush1.bf16.msra.mxu0 %v6558
        %6738 = vmatprep.subr.bf16.mxu0 %v6563
        %6739 = vmatpush1.bf16.msra.mxu0 %v6562
        %6740 = vmatprep.subr.bf16.mxu0 %v6567
        %6741 = vmatpush1.bf16.msra.mxu0 %v6566
        %6742 = vmatprep.subr.bf16.mxu0 %v6571
        %6743 = vmatpush1.bf16.msra.mxu0 %v6570
        %6744 = vmatprep.subr.bf16.mxu0 %v6575
        %6745 = vmatpush1.bf16.msra.mxu0 %v6574
        %6746 = vmatprep.subr.bf16.mxu0 %v6579
        %6747 = vmatpush1.bf16.msra.mxu0 %v6578
        %6748 = vmatprep.subr.bf16.mxu0 %v6583
        %6749 = vmatpush1.bf16.msra.mxu0 %v6582
        %6750 = vmatprep.subr.bf16.mxu0 %v6587
        %6751 = vmatpush1.bf16.msra.mxu0 %v6586
        %6752 = vmatprep.subr.bf16.mxu0 0
        %6753 = vmatpush1.bf16.msra.mxu0 0
        %6754 = vmatprep.subr.bf16.mxu0 0
        %6755 = vmatpush1.bf16.msra.mxu0 0
        %6756 = vmatprep.subr.bf16.mxu0 0
        %6757 = vmatpush1.bf16.msra.mxu0 0
        %6758 = vmatprep.subr.bf16.mxu0 0
        %6759 = vmatpush1.bf16.msra.mxu0 0
        %6760 = vmatprep.subr.bf16.mxu0 0
        %6761 = vmatpush1.bf16.msra.mxu0 0
        %6762 = vmatprep.subr.bf16.mxu0 0
        %6763 = vmatpush1.bf16.msra.mxu0 0
        %6764 = vmatprep.subr.bf16.mxu0 0
        %6765 = vmatpush1.bf16.msra.mxu0 0
        %6766 = vmatprep.mubr.bf16.mxu0 %v6691
        %6767 = vmatmul.mubr.bf16.gmra.mrb[0].mxu0 %v6066
        %v6768 = vpop.f32.mrb[0].mxu0
        %v6769 = vadd.f32 %v6728, %v6768
        %v6770 = vpop.f32.mrb[0].mxu0
        %v6771 = vadd.f32 %v6730, %v6770
        %v6772 = vpop.f32.mrb[0].mxu0
        %v6773 = vpop.f32.mrb[0].mxu0
        %6774 = vdwg.mxu0
        %6775 = vmatprep.subr.bf16.mxu0 %v6493
        %6776 = vmatpush1.bf16.msra.mxu0 %v6492
        %6777 = vmatprep.subr.bf16.mxu0 %v6497
        %6778 = vmatpush1.bf16.msra.mxu0 %v6496
        %6779 = vmatprep.subr.bf16.mxu0 %v6501
        %6780 = vmatpush1.bf16.msra.mxu0 %v6500
        %6781 = vmatprep.subr.bf16.mxu0 %v6505
        %6782 = vmatpush1.bf16.msra.mxu0 %v6504
        %6783 = vmatprep.subr.bf16.mxu0 %v6509
        %6784 = vmatpush1.bf16.msra.mxu0 %v6508
        %6785 = vmatprep.subr.bf16.mxu0 %v6513
        %6786 = vmatpush1.bf16.msra.mxu0 %v6512
        %6787 = vmatprep.subr.bf16.mxu0 %v6517
        %6788 = vmatpush1.bf16.msra.mxu0 %v6516
        %6789 = vmatprep.subr.bf16.mxu0 %v6521
        %6790 = vmatpush1.bf16.msra.mxu0 %v6520
        %6791 = vmatprep.subr.bf16.mxu0 %v6525
        %6792 = vmatpush1.bf16.msra.mxu0 %v6524
        %6793 = vmatprep.subr.bf16.mxu0 %v6529
        %6794 = vmatpush1.bf16.msra.mxu0 %v6528
        %6795 = vmatprep.subr.bf16.mxu0 %v6533
        %6796 = vmatpush1.bf16.msra.mxu0 %v6532
        %6797 = vmatprep.subr.bf16.mxu0 %v6537
        %6798 = vmatpush1.bf16.msra.mxu0 %v6536
        %6799 = vmatprep.subr.bf16.mxu0 %v6541
        %6800 = vmatpush1.bf16.msra.mxu0 %v6540
        %6801 = vmatprep.subr.bf16.mxu0 %v6545
        %6802 = vmatpush1.bf16.msra.mxu0 %v6544
        %6803 = vmatprep.subr.bf16.mxu0 %v6549
        %6804 = vmatpush1.bf16.msra.mxu0 %v6548
        %6805 = vmatprep.subr.bf16.mxu0 %v6553
        %6806 = vmatpush1.bf16.msra.mxu0 %v6552
        %6807 = vmatprep.mubr.bf16.mxu0 %v6065
        %6808 = vmatmul.mubr.bf16.gmra.mrb[0].mxu0 %v6064
        %v6809 = vpop.f32.mrb[0].mxu0
        %v6810 = vadd.f32 %v6181, %v6809
        %v6811 = vpop.f32.mrb[0].mxu0
        %v6812 = vadd.f32 %v6185, %v6811
        %v6813 = vpop.f32.mrb[0].mxu0
        %v6814 = vpop.f32.mrb[0].mxu0
        %6815 = vdwg.mxu0
        %6816 = vmatprep.subr.bf16.mxu0 %v6557
        %6817 = vmatpush1.bf16.msra.mxu0 %v6556
        %6818 = vmatprep.subr.bf16.mxu0 %v6561
        %6819 = vmatpush1.bf16.msra.mxu0 %v6560
        %6820 = vmatprep.subr.bf16.mxu0 %v6565
        %6821 = vmatpush1.bf16.msra.mxu0 %v6564
        %6822 = vmatprep.subr.bf16.mxu0 %v6569
        %6823 = vmatpush1.bf16.msra.mxu0 %v6568
        %6824 = vmatprep.subr.bf16.mxu0 %v6573
        %6825 = vmatpush1.bf16.msra.mxu0 %v6572
        %6826 = vmatprep.subr.bf16.mxu0 %v6577
        %6827 = vmatpush1.bf16.msra.mxu0 %v6576
        %6828 = vmatprep.subr.bf16.mxu0 %v6581
        %6829 = vmatpush1.bf16.msra.mxu0 %v6580
        %6830 = vmatprep.subr.bf16.mxu0 %v6585
        %6831 = vmatpush1.bf16.msra.mxu0 %v6584
        %6832 = vmatprep.subr.bf16.mxu0 %v6589
        %6833 = vmatpush1.bf16.msra.mxu0 %v6588
        %6834 = vmatprep.subr.bf16.mxu0 0
        %6835 = vmatpush1.bf16.msra.mxu0 0
        %6836 = vmatprep.subr.bf16.mxu0 0
        %6837 = vmatpush1.bf16.msra.mxu0 0
        %6838 = vmatprep.subr.bf16.mxu0 0
        %6839 = vmatpush1.bf16.msra.mxu0 0
        %6840 = vmatprep.subr.bf16.mxu0 0
        %6841 = vmatpush1.bf16.msra.mxu0 0
        %6842 = vmatprep.subr.bf16.mxu0 0
        %6843 = vmatpush1.bf16.msra.mxu0 0
        %6844 = vmatprep.subr.bf16.mxu0 0
        %6845 = vmatpush1.bf16.msra.mxu0 0
        %6846 = vmatprep.subr.bf16.mxu0 0
        %6847 = vmatpush1.bf16.msra.mxu0 0
        %6848 = vmatprep.mubr.bf16.mxu0 %v6691
        %6849 = vmatmul.mubr.bf16.gmra.mrb[0].mxu0 %v6066
        %v6850 = vpop.f32.mrb[0].mxu0
        %v6851 = vadd.f32 %v6810, %v6850
        %v6852 = vpop.f32.mrb[0].mxu0
        %v6853 = vadd.f32 %v6812, %v6852
        %v6854 = vpop.f32.mrb[0].mxu0
        %v6855 = vpop.f32.mrb[0].mxu0
        %6856 = vdwg.mxu0
        %v6857 = vadd.f32 %v5263, %v6769
        %v6858 = vadd.f32 %v5264, %v6771
        %v6859 = vadd.f32 %v5265, %v6851
        %v6860 = vadd.f32 %v5266, %v6853
        %v6861 = vld [vmem:[%s17] sm:$0xf]
        %v6862 = vld [vmem:[%s18] sm:$0xf]
        %v6863 = vadd.f32 %v6857, %v6858
        %v6864 = vadd.f32 %v6863, %v6859
        %v6865 = vsel %vm1549, %v6860, 0.0
        %v6866 = vadd.f32 %v6864, %v6865
        %6867 = vadd.xlane.f32.xlu0 %v6866
        %v6868 = vpop.xlane.xlu0 %6867
        %v6869 = vmul.f32 %v6868, %v5194
        %v6870 = vsub.f32 %v6857, %v6869
        %v6871 = vsub.f32 %v6858, %v6869
        %v6872 = vsub.f32 %v6859, %v6869
        %v6873 = vsub.f32 %v6860, %v6869
        %v6874 = vmul.f32 %v6870, %v6870
        %v6875 = vmul.f32 %v6871, %v6871
        %v6876 = vmul.f32 %v6872, %v6872
        %v6877 = vmul.f32 %v6873, %v6873
        %v6878 = vadd.f32 %v6874, %v6875
        %v6879 = vadd.f32 %v6878, %v6876
        %v6880 = vsel %vm1549, %v6877, 0.0
        %v6881 = vadd.f32 %v6879, %v6880
        %6882 = vadd.xlane.f32.xlu0 %v6881
        %v6883 = vpop.xlane.xlu0 %6882
        %v6884 = vmul.f32 %v6883, %v5194
        %v6885 = vadd.f32 %v6884, 1e-05
        %v6886 = vrsqrt.pop %v6885
        %v6887 = vmul.f32 %v6870, %v6886
        %v6888 = vmul.f32 %v6871, %v6886
        %v6889 = vmul.f32 %v6872, %v6886
        %v6890 = vmul.f32 %v6873, %v6886
        %v6892 = vlaneseq
        %v6893 = vshrl.u32 %v6892, 7
        %v6894 = vsub.s32 0, %v6893
        %v6895 = vrot.slane %v6861, %v6894
        %v6896 = vlaneseq
        %v6897 = vshrl.u32 %v6896, 7
        %v6898 = vsub.s32 1, %v6897
        %v6899 = vrot.slane %v6861, %v6898
        %v6900 = vlaneseq
        %v6901 = vshrl.u32 %v6900, 7
        %v6902 = vsub.s32 2, %v6901
        %v6903 = vrot.slane %v6861, %v6902
        %v6904 = vlaneseq
        %v6905 = vshrl.u32 %v6904, 7
        %v6906 = vsub.s32 3, %v6905
        %v6907 = vrot.slane %v6861, %v6906
        %v6912 = vmul.f32 %v6887, %v6895
        %v6913 = vmul.f32 %v6888, %v6899
        %v6914 = vmul.f32 %v6889, %v6903
        %v6915 = vmul.f32 %v6890, %v6907
        %v6917 = vlaneseq
        %v6918 = vshrl.u32 %v6917, 7
        %v6919 = vsub.s32 0, %v6918
        %v6920 = vrot.slane %v6862, %v6919
        %v6921 = vlaneseq
        %v6922 = vshrl.u32 %v6921, 7
        %v6923 = vsub.s32 1, %v6922
        %v6924 = vrot.slane %v6862, %v6923
        %v6925 = vlaneseq
        %v6926 = vshrl.u32 %v6925, 7
        %v6927 = vsub.s32 2, %v6926
        %v6928 = vrot.slane %v6862, %v6927
        %v6929 = vlaneseq
        %v6930 = vshrl.u32 %v6929, 7
        %v6931 = vsub.s32 3, %v6930
        %v6932 = vrot.slane %v6862, %v6931
        %v6937 = vadd.f32 %v6912, %v6920
        %v6938 = vadd.f32 %v6913, %v6924
        %v6939 = vadd.f32 %v6914, %v6928
        %v6940 = vadd.f32 %v6915, %v6932
        %v6941 = vadd.f32 %v919, %v6937
        %v6942 = vadd.f32 %v920, %v6938
        %v6943 = vadd.f32 %v921, %v6939
        %v6944 = vadd.f32 %v922, %v6940
        %v6945 = vld [vmem:[%s19] sm:$0xf]
        %v6947 = vlaneseq
        %v6948 = vshrl.u32 %v6947, 7
        %v6949 = vsub.s32 0, %v6948
        %v6950 = vrot.slane %v6945, %v6949
        %v6951 = vlaneseq
        %v6952 = vshrl.u32 %v6951, 7
        %v6953 = vsub.s32 1, %v6952
        %v6954 = vrot.slane %v6945, %v6953
        %v6955 = vlaneseq
        %v6956 = vshrl.u32 %v6955, 7
        %v6957 = vsub.s32 2, %v6956
        %v6958 = vrot.slane %v6945, %v6957
        %v6959 = vlaneseq
        %v6960 = vshrl.u32 %v6959, 7
        %v6961 = vsub.s32 3, %v6960
        %v6962 = vrot.slane %v6945, %v6961
        %v6967 = vmul.f32 %v6941, %v6950
        %v6968 = vmul.f32 %v6942, %v6954
        %v6969 = vmul.f32 %v6943, %v6958
        %v6970 = vmul.f32 %v6944, %v6962
        %v6971 = vld [vmem:[%s20] sm:$0xf]
        %v6973 = vlaneseq
        %v6974 = vshrl.u32 %v6973, 7
        %v6975 = vsub.s32 0, %v6974
        %v6976 = vrot.slane %v6971, %v6975
        %v6977 = vlaneseq
        %v6978 = vshrl.u32 %v6977, 7
        %v6979 = vsub.s32 1, %v6978
        %v6980 = vrot.slane %v6971, %v6979
        %v6981 = vlaneseq
        %v6982 = vshrl.u32 %v6981, 7
        %v6983 = vsub.s32 2, %v6982
        %v6984 = vrot.slane %v6971, %v6983
        %v6985 = vlaneseq
        %v6986 = vshrl.u32 %v6985, 7
        %v6987 = vsub.s32 3, %v6986
        %v6988 = vrot.slane %v6971, %v6987
        %v6993 = vadd.f32 %v6967, %v6976
        %v6994 = vadd.f32 %v6968, %v6980
        %v6995 = vadd.f32 %v6969, %v6984
        %v6996 = vadd.f32 %v6970, %v6988
        %v6997 = vmax.f32 %v6993, 0.0
        %v6998 = vmax.f32 %v6994, 0.0
        %v6999 = vmax.f32 %v6995, 0.0
        %v7000 = vmax.f32 %v6996, 0.0
        %v7001 = vpack.c.bf16 %v6997, %v6997
        %v7002 = vpack.c.bf16 %v6998, %v6998
        %v7003 = vpack.c.bf16 %v6999, %v6999
        %v7004 = vpack.c.bf16 %v7000, %v7000
        %v7005 = vld [vmem:[#allocation16] sm:$0xf]
        %v7006 = vld [vmem:[#allocation16 + $0x4] sm:$0xf]
        %v7007 = vld [vmem:[#allocation16 + $0x8] sm:$0xf]
        %v7008 = vld [vmem:[#allocation16 + $0xc] sm:$0xf]
        %v7009 = vld [vmem:[#allocation16 + $0x10] sm:$0xf]
        %v7010 = vld [vmem:[#allocation16 + $0x14] sm:$0xf]
        %v7011 = vld [vmem:[#allocation16 + $0x18] sm:$0xf]
        %v7012 = vld [vmem:[#allocation16 + $0x1c] sm:$0xf]
        %v7013 = vld [vmem:[#allocation16 + $0x20] sm:$0xf]
        %v7014 = vld [vmem:[#allocation16 + $0x24] sm:$0xf]
        %v7015 = vld [vmem:[#allocation16 + $0x28] sm:$0xf]
        %v7016 = vld [vmem:[#allocation16 + $0x2c] sm:$0xf]
        %v7017 = vld [vmem:[#allocation16 + $0x30] sm:$0xf]
        %v7018 = vld [vmem:[#allocation16 + $0x34] sm:$0xf]
        %v7019 = vld [vmem:[#allocation16 + $0x38] sm:$0xf]
        %v7020 = vld [vmem:[#allocation16 + $0x3c] sm:$0xf]
        %v7021 = vld [vmem:[#allocation16 + $0x40] sm:$0xf]
        %v7022 = vld [vmem:[#allocation16 + $0x44] sm:$0xf]
        %v7023 = vld [vmem:[#allocation16 + $0x48] sm:$0xf]
        %v7024 = vld [vmem:[#allocation16 + $0x4c] sm:$0xf]
        %v7025 = vld [vmem:[#allocation16 + $0x50] sm:$0xf]
        %v7026 = vld [vmem:[#allocation16 + $0x54] sm:$0xf]
        %v7027 = vld [vmem:[#allocation16 + $0x58] sm:$0xf]
        %v7028 = vld [vmem:[#allocation16 + $0x5c] sm:$0xf]
        %v7029 = vld [vmem:[#allocation16 + $0x60] sm:$0xf]
        %v7030 = vld [vmem:[#allocation16 + $0x64] sm:$0xf]
        %v7031 = vld [vmem:[#allocation16 + $0x68] sm:$0xf]
        %v7032 = vld [vmem:[#allocation16 + $0x6c] sm:$0xf]
        %v7033 = vld [vmem:[#allocation16 + $0x70] sm:$0xf]
        %v7034 = vld [vmem:[#allocation16 + $0x74] sm:$0xf]
        %v7035 = vld [vmem:[#allocation16 + $0x78] sm:$0xf]
        %v7036 = vld [vmem:[#allocation16 + $0x7c] sm:$0xf]
        %v7037 = vld [vmem:[#allocation16 + $0x80] sm:$0xf]
        %v7038 = vld [vmem:[#allocation16 + $0x84] sm:$0xf]
        %v7039 = vld [vmem:[#allocation16 + $0x88] sm:$0xf]
        %v7040 = vld [vmem:[#allocation16 + $0x8c] sm:$0xf]
        %v7041 = vld [vmem:[#allocation16 + $0x90] sm:$0xf]
        %v7042 = vld [vmem:[#allocation16 + $0x94] sm:$0xf]
        %v7043 = vld [vmem:[#allocation16 + $0x98] sm:$0xf]
        %v7044 = vld [vmem:[#allocation16 + $0x9c] sm:$0xf]
        %v7045 = vld [vmem:[#allocation16 + $0xa0] sm:$0xf]
        %v7046 = vld [vmem:[#allocation16 + $0xa4] sm:$0xf]
        %v7047 = vld [vmem:[#allocation16 + $0xa8] sm:$0xf]
        %v7048 = vld [vmem:[#allocation16 + $0xac] sm:$0xf]
        %v7049 = vld [vmem:[#allocation16 + $0xb0] sm:$0xf]
        %v7050 = vld [vmem:[#allocation16 + $0xb4] sm:$0xf]
        %v7051 = vld [vmem:[#allocation16 + $0xb8] sm:$0xf]
        %v7052 = vld [vmem:[#allocation16 + $0xbc] sm:$0xf]
        %v7053 = vld [vmem:[#allocation16 + $0xc0] sm:$0xf]
        %v7054 = vld [vmem:[#allocation16 + $0xc4] sm:$0xf]
        %v7105 = vunpack.c.l.b16 %v7005
        %v7106 = vunpack.c.l.b16 %v7006
        %v7107 = vunpack.c.l.b16 %v7007
        %v7108 = vunpack.c.l.b16 %v7008
        %v7109 = vunpack.c.l.b16 %v7009
        %v7110 = vunpack.c.l.b16 %v7010
        %v7111 = vunpack.c.l.b16 %v7011
        %v7112 = vunpack.c.l.b16 %v7012
        %v7113 = vunpack.c.l.b16 %v7013
        %v7114 = vunpack.c.l.b16 %v7014
        %v7115 = vunpack.c.l.b16 %v7015
        %v7116 = vunpack.c.l.b16 %v7016
        %v7117 = vunpack.c.l.b16 %v7017
        %v7118 = vunpack.c.l.b16 %v7018
        %v7119 = vunpack.c.l.b16 %v7019
        %v7120 = vunpack.c.l.b16 %v7020
        %v7121 = vunpack.c.l.b16 %v7021
        %v7122 = vunpack.c.l.b16 %v7022
        %v7123 = vunpack.c.l.b16 %v7023
        %v7124 = vunpack.c.l.b16 %v7024
        %v7125 = vunpack.c.l.b16 %v7025
        %v7126 = vunpack.c.l.b16 %v7026
        %v7127 = vunpack.c.l.b16 %v7027
        %v7128 = vunpack.c.l.b16 %v7028
        %v7129 = vunpack.c.l.b16 %v7029
        %v7130 = vunpack.c.l.b16 %v7030
        %v7131 = vunpack.c.l.b16 %v7031
        %v7132 = vunpack.c.l.b16 %v7032
        %v7133 = vunpack.c.l.b16 %v7033
        %v7134 = vunpack.c.l.b16 %v7034
        %v7135 = vunpack.c.l.b16 %v7035
        %v7136 = vunpack.c.l.b16 %v7036
        %v7137 = vunpack.c.l.b16 %v7037
        %v7138 = vunpack.c.l.b16 %v7038
        %v7139 = vunpack.c.l.b16 %v7039
        %v7140 = vunpack.c.l.b16 %v7040
        %v7141 = vunpack.c.l.b16 %v7041
        %v7142 = vunpack.c.l.b16 %v7042
        %v7143 = vunpack.c.l.b16 %v7043
        %v7144 = vunpack.c.l.b16 %v7044
        %v7145 = vunpack.c.l.b16 %v7045
        %v7146 = vunpack.c.l.b16 %v7046
        %v7147 = vunpack.c.l.b16 %v7047
        %v7148 = vunpack.c.l.b16 %v7048
        %v7149 = vunpack.c.l.b16 %v7049
        %v7150 = vunpack.c.l.b16 %v7050
        %v7151 = vunpack.c.l.b16 %v7051
        %v7152 = vunpack.c.l.b16 %v7052
        %v7153 = vunpack.c.l.b16 %v7053
        %v7154 = vunpack.c.l.b16 %v7054
        %v7155 = vpack.c.b16 %v7106, %v7105
        %v7156 = vpack.c.b16 %v7108, %v7107
        %v7157 = vpack.c.b16 %v7110, %v7109
        %v7158 = vpack.c.b16 %v7112, %v7111
        %v7159 = vpack.c.b16 %v7114, %v7113
        %v7160 = vpack.c.b16 %v7116, %v7115
        %v7161 = vpack.c.b16 %v7118, %v7117
        %v7162 = vpack.c.b16 %v7120, %v7119
        %v7163 = vpack.c.b16 %v7122, %v7121
        %v7164 = vpack.c.b16 %v7124, %v7123
        %v7165 = vpack.c.b16 %v7126, %v7125
        %v7166 = vpack.c.b16 %v7128, %v7127
        %v7167 = vpack.c.b16 %v7130, %v7129
        %v7168 = vpack.c.b16 %v7132, %v7131
        %v7169 = vpack.c.b16 %v7134, %v7133
        %v7170 = vpack.c.b16 %v7136, %v7135
        %v7171 = vpack.c.b16 %v7138, %v7137
        %v7172 = vpack.c.b16 %v7140, %v7139
        %v7173 = vpack.c.b16 %v7142, %v7141
        %v7174 = vpack.c.b16 %v7144, %v7143
        %v7175 = vpack.c.b16 %v7146, %v7145
        %v7176 = vpack.c.b16 %v7148, %v7147
        %v7177 = vpack.c.b16 %v7150, %v7149
        %v7178 = vpack.c.b16 %v7152, %v7151
        %v7179 = vpack.c.b16 %v7154, %v7153
        %v7206 = vsel %vm1549, %v7004, 0
        %7208 = vmatprep.subr.bf16.mxu0 0
        %7209 = vmatpush1.bf16.msra.mxu0 %v7155
        %7210 = vmatprep.subr.bf16.mxu0 0
        %7211 = vmatpush1.bf16.msra.mxu0 %v7156
        %7212 = vmatprep.subr.bf16.mxu0 0
        %7213 = vmatpush1.bf16.msra.mxu0 %v7157
        %7214 = vmatprep.subr.bf16.mxu0 0
        %7215 = vmatpush1.bf16.msra.mxu0 %v7158
        %7216 = vmatprep.subr.bf16.mxu0 0
        %7217 = vmatpush1.bf16.msra.mxu0 %v7159
        %7218 = vmatprep.subr.bf16.mxu0 0
        %7219 = vmatpush1.bf16.msra.mxu0 %v7160
        %7220 = vmatprep.subr.bf16.mxu0 0
        %7221 = vmatpush1.bf16.msra.mxu0 %v7161
        %7222 = vmatprep.subr.bf16.mxu0 0
        %7223 = vmatpush1.bf16.msra.mxu0 %v7162
        %7224 = vmatprep.subr.bf16.mxu0 0
        %7225 = vmatpush1.bf16.msra.mxu0 %v7163
        %7226 = vmatprep.subr.bf16.mxu0 0
        %7227 = vmatpush1.bf16.msra.mxu0 %v7164
        %7228 = vmatprep.subr.bf16.mxu0 0
        %7229 = vmatpush1.bf16.msra.mxu0 %v7165
        %7230 = vmatprep.subr.bf16.mxu0 0
        %7231 = vmatpush1.bf16.msra.mxu0 %v7166
        %7232 = vmatprep.subr.bf16.mxu0 0
        %7233 = vmatpush1.bf16.msra.mxu0 %v7167
        %7234 = vmatprep.subr.bf16.mxu0 0
        %7235 = vmatpush1.bf16.msra.mxu0 %v7168
        %7236 = vmatprep.subr.bf16.mxu0 0
        %7237 = vmatpush1.bf16.msra.mxu0 %v7169
        %7238 = vmatprep.subr.bf16.mxu0 0
        %7239 = vmatpush1.bf16.msra.mxu0 %v7170
        %7240 = vmatprep.mubr.bf16.mxu0 %v7002
        %7241 = vmatmul.mubr.bf16.gmra.mrb[0].mxu0 %v7001
        %v7242 = vpop.f32.mrb[0].mxu0
        %v7243 = vadd.f32 0.0, %v7242
        %v7244 = vpop.f32.mrb[0].mxu0
        %v7245 = vpop.f32.mrb[0].mxu0
        %v7246 = vpop.f32.mrb[0].mxu0
        %7247 = vdwg.mxu0
        %7248 = vmatprep.subr.bf16.mxu0 0
        %7249 = vmatpush1.bf16.msra.mxu0 %v7171
        %7250 = vmatprep.subr.bf16.mxu0 0
        %7251 = vmatpush1.bf16.msra.mxu0 %v7172
        %7252 = vmatprep.subr.bf16.mxu0 0
        %7253 = vmatpush1.bf16.msra.mxu0 %v7173
        %7254 = vmatprep.subr.bf16.mxu0 0
        %7255 = vmatpush1.bf16.msra.mxu0 %v7174
        %7256 = vmatprep.subr.bf16.mxu0 0
        %7257 = vmatpush1.bf16.msra.mxu0 %v7175
        %7258 = vmatprep.subr.bf16.mxu0 0
        %7259 = vmatpush1.bf16.msra.mxu0 %v7176
        %7260 = vmatprep.subr.bf16.mxu0 0
        %7261 = vmatpush1.bf16.msra.mxu0 %v7177
        %7262 = vmatprep.subr.bf16.mxu0 0
        %7263 = vmatpush1.bf16.msra.mxu0 %v7178
        %7264 = vmatprep.subr.bf16.mxu0 0
        %7265 = vmatpush1.bf16.msra.mxu0 %v7179
        %7266 = vmatprep.subr.bf16.mxu0 0
        %7267 = vmatpush1.bf16.msra.mxu0 0
        %7268 = vmatprep.subr.bf16.mxu0 0
        %7269 = vmatpush1.bf16.msra.mxu0 0
        %7270 = vmatprep.subr.bf16.mxu0 0
        %7271 = vmatpush1.bf16.msra.mxu0 0
        %7272 = vmatprep.subr.bf16.mxu0 0
        %7273 = vmatpush1.bf16.msra.mxu0 0
        %7274 = vmatprep.subr.bf16.mxu0 0
        %7275 = vmatpush1.bf16.msra.mxu0 0
        %7276 = vmatprep.subr.bf16.mxu0 0
        %7277 = vmatpush1.bf16.msra.mxu0 0
        %7278 = vmatprep.subr.bf16.mxu0 0
        %7279 = vmatpush1.bf16.msra.mxu0 0
        %7280 = vmatprep.mubr.bf16.mxu0 %v7206
        %7281 = vmatmul.mubr.bf16.gmra.mrb[0].mxu0 %v7003
        %v7282 = vpop.f32.mrb[0].mxu0
        %v7283 = vadd.f32 %v7243, %v7282
        %v7284 = vpop.f32.mrb[0].mxu0
        %v7285 = vpop.f32.mrb[0].mxu0
        %v7286 = vpop.f32.mrb[0].mxu0
        %7287 = vdwg.mxu0
        %v7288 = vld [vmem:[%s22] sm:$0xff]
        %v7289 = vmul.f32 %v7283, %v7288
        %v7290 = vrot.slane %v7289, 4
        %v7291 = vadd.f32 %v7289, %v7290
        %v7292 = vrot.slane %v7291, 2
        %v7293 = vadd.f32 %v7291, %v7292
        %v7294 = vrot.slane %v7293, 1
        %v7295 = vadd.f32 %v7293, %v7294
        %v7296 = vld [vmem:[%s23] sm:$0x1]
        %v7297 = vadd.f32 %v7295, %v7296
        %v7298 = vmax.f32 %v7297, 0.0
        %v7299 = vpack.c.bf16 %v7298, %v7298
        %v7300 = vld [vmem:[%s24] sm:$0xf]
        %v7301 = vld [vmem:[%s24 + $0x4] sm:$0xf]
        %v7302 = vld [vmem:[%s24 + $0x8] sm:$0xf]
        %v7303 = vld [vmem:[%s24 + $0xc] sm:$0xf]
        %v7304 = vld [vmem:[%s24 + $0x10] sm:$0xf]
        %v7305 = vld [vmem:[%s24 + $0x14] sm:$0xf]
        %v7306 = vld [vmem:[%s24 + $0x18] sm:$0xf]
        %v7307 = vld [vmem:[%s24 + $0x1c] sm:$0xf]
        %v7308 = vld [vmem:[%s24 + $0x20] sm:$0xf]
        %v7309 = vld [vmem:[%s24 + $0x24] sm:$0xf]
        %v7310 = vld [vmem:[%s24 + $0x28] sm:$0xf]
        %v7311 = vld [vmem:[%s24 + $0x2c] sm:$0xf]
        %v7312 = vld [vmem:[%s24 + $0x30] sm:$0xf]
        %v7313 = vld [vmem:[%s24 + $0x34] sm:$0xf]
        %v7314 = vld [vmem:[%s24 + $0x38] sm:$0xf]
        %v7315 = vld [vmem:[%s24 + $0x3c] sm:$0xf]
        %v7316 = vld [vmem:[%s25] sm:$0x1]
        %v7333 = vunpack.c.l.b16 %v7300
        %v7334 = vunpack.c.l.b16 %v7301
        %v7335 = vunpack.c.l.b16 %v7302
        %v7336 = vunpack.c.l.b16 %v7303
        %v7337 = vunpack.c.l.b16 %v7304
        %v7338 = vunpack.c.l.b16 %v7305
        %v7339 = vunpack.c.l.b16 %v7306
        %v7340 = vunpack.c.l.b16 %v7307
        %v7341 = vunpack.c.l.b16 %v7308
        %v7342 = vunpack.c.l.b16 %v7309
        %v7343 = vunpack.c.l.b16 %v7310
        %v7344 = vunpack.c.l.b16 %v7311
        %v7345 = vunpack.c.l.b16 %v7312
        %v7346 = vunpack.c.l.b16 %v7313
        %v7347 = vunpack.c.l.b16 %v7314
        %v7348 = vunpack.c.l.b16 %v7315
        %v7349 = vpack.c.b16 %v7334, %v7333
        %v7350 = vpack.c.b16 %v7336, %v7335
        %v7351 = vpack.c.b16 %v7338, %v7337
        %v7352 = vpack.c.b16 %v7340, %v7339
        %v7353 = vpack.c.b16 %v7342, %v7341
        %v7354 = vpack.c.b16 %v7344, %v7343
        %v7355 = vpack.c.b16 %v7346, %v7345
        %v7356 = vpack.c.b16 %v7348, %v7347
        %7365 = vmatprep.subr.bf16.mxu0 0
        %7366 = vmatpush1.bf16.msra.mxu0 %v7349
        %7367 = vmatprep.subr.bf16.mxu0 0
        %7368 = vmatpush1.bf16.msra.mxu0 %v7350
        %7369 = vmatprep.subr.bf16.mxu0 0
        %7370 = vmatpush1.bf16.msra.mxu0 %v7351
        %7371 = vmatprep.subr.bf16.mxu0 0
        %7372 = vmatpush1.bf16.msra.mxu0 %v7352
        %7373 = vmatprep.subr.bf16.mxu0 0
        %7374 = vmatpush1.bf16.msra.mxu0 %v7353
        %7375 = vmatprep.subr.bf16.mxu0 0
        %7376 = vmatpush1.bf16.msra.mxu0 %v7354
        %7377 = vmatprep.subr.bf16.mxu0 0
        %7378 = vmatpush1.bf16.msra.mxu0 %v7355
        %7379 = vmatprep.subr.bf16.mxu0 0
        %7380 = vmatpush1.bf16.msra.mxu0 %v7356
        %7381 = vmatprep.subr.bf16.mxu0 0
        %7382 = vmatpush1.bf16.msra.mxu0 0
        %7383 = vmatprep.subr.bf16.mxu0 0
        %7384 = vmatpush1.bf16.msra.mxu0 0
        %7385 = vmatprep.subr.bf16.mxu0 0
        %7386 = vmatpush1.bf16.msra.mxu0 0
        %7387 = vmatprep.subr.bf16.mxu0 0
        %7388 = vmatpush1.bf16.msra.mxu0 0
        %7389 = vmatprep.subr.bf16.mxu0 0
        %7390 = vmatpush1.bf16.msra.mxu0 0
        %7391 = vmatprep.subr.bf16.mxu0 0
        %7392 = vmatpush1.bf16.msra.mxu0 0
        %7393 = vmatprep.subr.bf16.mxu0 0
        %7394 = vmatpush1.bf16.msra.mxu0 0
        %7395 = vmatprep.subr.bf16.mxu0 0
        %7396 = vmatpush1.bf16.msra.mxu0 0
        %7397 = vmatprep.mubr.bf16.mxu0 0
        %7398 = vmatmul.mubr.bf16.gmra.mrb[0].mxu0 %v7299
        %v7399 = vpop.f32.mrb[0].mxu0
        %v7400 = vadd.f32 %v7316, %v7399
        %v7401 = vpop.f32.mrb[0].mxu0
        %v7402 = vpop.f32.mrb[0].mxu0
        %v7403 = vpop.f32.mrb[0].mxu0
        %7404 = vdwg.mxu0
        %vm7405 = vcmask 73728
        %7406 = vst.msk [vmem:[%s912] sm:$0x1] %vm7405, %v7400
        %s7407 = sand.u32 %s604, 1
        %s7408 = scalar_lea.sflag [#allocation4], %s7407
        %s7409 = sand.u32 %s604, 1
        %s7410 = scalar_lea.vmem [#allocation17], %s7409
        // Predicated region
        $region161: #{tpu_custom_call.1} parent=123 // pred_check
          %p7411 = pneg %p614
        $region162: #{tpu_custom_call.1} parent=123 // pred_check_branch
          %7413 = sbr.rel (%p7411) target = $region164
        $region163: #{tpu_custom_call.1} parent=123 // pred_region
          %s7415 = ssub.s32 16, 16
          %7416 = vsyncadd %s7408, %s7415
          %s7417 = smul.addr %s45, 16
          %s7418 = scalar_lea.hbm %s26, %s7417
          %s7420 = sshll.u32 %s7410, 4
          %s7421 = int_to_ptr.vmem [resolvable:$true] %s7420
          %7423 = dma.vmem_to_hbm [thread:$0]  %s7421, 16, %s7418, %s7408
        $region164: #{tpu_custom_call.1} parent=123 // pred_fallthru
          _
      $region124: #{tpu_custom_call.1} parent=5 // pred_fallthru
        _
      %p7424 = scmp.le.s32.totalorder 2, %s40
      // Predicated region
      $region165: #{tpu_custom_call.1} parent=5 // pred_check
        %p7425 = pneg %p7424
      $region166: #{tpu_custom_call.1} parent=5 // pred_check_branch
        %7427 = sbr.rel (%p7425) target = $region168
      $region167: #{tpu_custom_call.1} parent=5 // pred_region
        %s7428 = ssub.s32 %s40, 2
        // Predicated region
        $region169: #{tpu_custom_call.1} parent=167 // pred_check
          %p7429 = pneg %p620
        $region170: #{tpu_custom_call.1} parent=167 // pred_check_branch
          %7431 = sbr.rel (%p7429) target = $region172
        $region171: #{tpu_custom_call.1} parent=167 // pred_region
          %s7432 = sand.u32 %s605, 1
          %s7433 = scalar_lea.sflag [#allocation4], %s7432
          %s7434 = sand.u32 %s605, 1
          %s7435 = scalar_lea.vmem [#allocation17], %s7434
          %7436 = dma.done %s7433, 16
        $region172: #{tpu_custom_call.1} parent=167 // pred_fallthru
          _
      $region168: #{tpu_custom_call.1} parent=5 // pred_fallthru
        _
    $region6: #{tpu_custom_call.1} parent=1 // loop_footer
      %s44 = sadd.s32 1, %s40
    $region7: #{tpu_custom_call.1} parent=1 // loop_footer_branch
      %39 = sbr.rel target = $region3
    $region8: #{tpu_custom_call.1} parent=1 // loop_exit
      _
    %7437 = vsyncpa [#allocation3], 1
    %s7438 = scalar_lea.sflag [#allocation3], 1
    %7439 = vsyncpa %s7438, 1
    %7440 = vsyncpa [#allocation6], 1
    %7441 = vsyncpa [#allocation9], 1
    %7442 = vsyncpa [#allocation12], 1
    %7443 = vsyncpa [#allocation15], 1
    %7444 = vsyncpa [#allocation4], 1
    %s7445 = scalar_lea.sflag [#allocation4], 1
    %7446 = vsyncpa %s7445, 1

</llo_original>
